<compile_context>
chip_gen: v6e
topology: v6e:2x2x1
jax: 0.10.0
libtpu: 0.0.40
codegen_flags: <defaults>
</compile_context>

<pallas_src>
import functools

import jax
import jax.numpy as jnp
from jax import lax
from jax.experimental import pallas as pl
from jax.experimental.pallas import tpu as pltpu

EPS = 1e-5


def _residual_block_kernel(x_ref, w1_ref, w2_ref, o_ref, *, H, W, compute_dtype):
    """One batch element per grid step (channels-last, C in lanes).

    x_ref : (H, W, C)      input image (f32)
    w1_ref: (3, 3, C, C)   conv1 weights, (kh, kw, c_in, c_out), compute_dtype
    w2_ref: (3, 3, C, C)   conv2 weights, compute_dtype
    o_ref : (H, W, C)      output image
    """
    C = x_ref.shape[-1]
    HW = H * W
    inv_hw = 1.0 / float(HW)

    x = x_ref[...].astype(jnp.float32)                                    # (H, W, C)

    def conv3x3(a, w):
        # a: (H, W, C) already in compute_dtype (cast BEFORE padding/taps so
        # every temporary is built directly in the narrow dtype).
        # PyTorch 'reflect' padding by 1 pixel on both spatial dims.
        ap = jnp.concatenate([a[1:2], a, a[H - 2:H - 1]], axis=0)          # (H+2, W, C)
        ap = jnp.concatenate([ap[:, 1:2], ap, ap[:, W - 2:W - 1]], axis=1)  # (H+2, W+2, C)
        # 9 accumulating (HW, C) @ (C, C) MXU matmuls; f32 accumulation.
        # Bias intentionally omitted (cancelled by InstanceNorm mean subtract).
        acc = jnp.zeros((HW, C), jnp.float32)
        for dy in range(3):
            for dx in range(3):
                tap = ap[dy:dy + H, dx:dx + W, :].reshape(HW, C)           # (HW, C)
                acc = acc + jnp.dot(tap, w[dy, dx],
                                    preferred_element_type=jnp.float32)
        return acc                                                          # (HW, C) f32

    def instance_norm(a):
        # Two-pass per-channel stats (channels = lanes): mean, then centered
        # variance.  Biased variance over H*W, matching InstanceNorm2d.
        mean = jnp.sum(a, axis=0, keepdims=True) * inv_hw
        centered = a - mean
        var = jnp.sum(centered * centered, axis=0, keepdims=True) * inv_hw
        return centered * lax.rsqrt(var + EPS)

    h1 = instance_norm(conv3x3(x.astype(compute_dtype), w1_ref))
    h1 = jnp.maximum(h1, 0.0)                                              # ReLU
    h2 = instance_norm(conv3x3(h1.reshape(H, W, C).astype(compute_dtype), w2_ref))

    o_ref[...] = (x + h2.reshape(H, W, C)).astype(o_ref.dtype)             # residual


def residual_block_pallas(x, w1_oihw, b1, w2_oihw, b2, *,
                          compute_dtype=jnp.bfloat16):
    """x: (N, C, H, W) f32; weights in PyTorch OIHW layout; biases (C,).

    Biases are accepted for API parity with the PyTorch module but are NOT
    used: a Conv bias before InstanceNorm(affine=False) is a mathematical
    no-op (exactly cancelled by the mean subtraction).
    """
    del b1, b2
    N, C, H, W = x.shape

    # Channels-last so C is the lane dimension inside the kernel.
    # TODO(synk): in a full CycleGAN pipeline keep activations NHWC end-to-end
    # instead of transposing at every block boundary.
    x_nhwc = jnp.transpose(x, (0, 2, 3, 1))                   # (N, H, W, C)

    # (O, I, kh, kw) -> (kh, kw, I, O): tap (dy, dx) matmuls as (HW, I) @ (I, O).
    def prep_w(w):
        return jnp.transpose(w, (2, 3, 1, 0)).astype(compute_dtype)

    w1 = prep_w(w1_oihw)
    w2 = prep_w(w2_oihw)

    kernel = functools.partial(_residual_block_kernel,
                               H=H, W=W, compute_dtype=compute_dtype)

    out_nhwc = pl.pallas_call(
        kernel,
        out_shape=jax.ShapeDtypeStruct((N, H, W, C), x.dtype),
        grid_spec=pltpu.PrefetchScalarGridSpec(
            num_scalar_prefetch=0,
            grid=(N,),
            in_specs=[
                pl.BlockSpec((pl.Squeezed(), H, W, C), lambda n: (n, 0, 0, 0)),
                # Constant index_map: weights DMA'd once, resident across batch.
                pl.BlockSpec((3, 3, C, C), lambda n: (0, 0, 0, 0)),
                pl.BlockSpec((3, 3, C, C), lambda n: (0, 0, 0, 0)),
            ],
            out_specs=pl.BlockSpec((pl.Squeezed(), H, W, C),
                                   lambda n: (n, 0, 0, 0)),
        ),
        compiler_params=pltpu.CompilerParams(
            dimension_semantics=("parallel",),
            # ~35-40 MiB production working set; keep <= v7x's 64 MiB physical.
            vmem_limit_bytes=64 * 1024 * 1024,
        ),
    )(x_nhwc, w1, w2)

    return jnp.transpose(out_nhwc, (0, 3, 1, 2))


def residual_block_ref(x, w1, b1, w2, b2):
    """Pure-JAX reference (NCHW, OIHW) matching PyTorch semantics (with bias)."""
    def conv(a, w, b):
        ap = jnp.pad(a, ((0, 0), (0, 0), (1, 1), (1, 1)), mode="reflect")
        out = lax.conv_general_dilated(
            ap, w, window_strides=(1, 1), padding="VALID",
            dimension_numbers=("NCHW", "OIHW", "NCHW"))
        return out + b[None, :, None, None]

    def inorm(a):
        m = a.mean(axis=(2, 3), keepdims=True)
        v = ((a - m) ** 2).mean(axis=(2, 3), keepdims=True)
        return (a - m) / jnp.sqrt(v + EPS)

    h = jnp.maximum(inorm(conv(x, w1, b1)), 0.0)
    h = inorm(conv(h, w2, b2))
    return x + h


if __name__ == "__main__":
    N, C, H, W = 2, 4, 16, 16
    key = jax.random.PRNGKey(0)
    kx, kw1, kb1, kw2, kb2 = jax.random.split(key, 5)

    x = jax.random.normal(kx, (N, C, H, W), dtype=jnp.float32)
    # Deterministic init roughly like PyTorch conv default (uniform, fan_in).
    fan_in = C * 3 * 3
    bound = 1.0 / jnp.sqrt(float(fan_in))
    w1 = jax.random.uniform(kw1, (C, C, 3, 3), jnp.float32, -bound, bound)
    b1 = jax.random.uniform(kb1, (C,), jnp.float32, -bound, bound)
    w2 = jax.random.uniform(kw2, (C, C, 3, 3), jnp.float32, -bound, bound)
    b2 = jax.random.uniform(kb2, (C,), jnp.float32, -bound, bound)

    ref = residual_block_ref(x, w1, b1, w2, b2)

    # f32 MXU path (tight tolerance; also verifies exact bias cancellation).
    out_f32 = jax.block_until_ready(
        residual_block_pallas(x, w1, b1, w2, b2, compute_dtype=jnp.float32))
    if not jnp.allclose(out_f32, ref, atol=2e-3, rtol=2e-3):
        raise AssertionError("f32 Pallas ResidualBlock mismatch vs JAX reference")

    # Default bf16 MXU-operand path; stats / residual stay in f32.
    out_bf16 = jax.block_until_ready(
        residual_block_pallas(x, w1, b1, w2, b2))
    if not jnp.allclose(out_bf16, ref, atol=5e-2, rtol=5e-2):
        raise AssertionError("bf16 Pallas ResidualBlock mismatch vs JAX reference")

    print("KERNEL_OK")
</pallas_src>

<mosaic_0001>
module attributes {stable_mosaic.version = 11 : i64} {
  func.func @_residual_block_kernel(%arg0: i32, %arg1: memref<1x16x16x4xf32, #tpu.memory_space<vmem>>, %arg2: memref<3x3x4x4xf32, #tpu.memory_space<vmem>>, %arg3: memref<3x3x4x4xf32, #tpu.memory_space<vmem>>, %arg4: memref<1x16x16x4xf32, #tpu.memory_space<vmem>>) attributes {dimension_semantics = [#tpu.dimension_semantics<parallel>], iteration_bounds = array<i64: 2>, scalar_prefetch = 0 : i64, scratch_operands = 0 : i64, tpu.core_type = #tpu.core_type<tc>, window_params = [{transform_indices = @transform_0, window_bounds = array<i64: 1, 16, 16, 4>}, {pipeline_mode = #tpu.pipeline_mode<synchronous>, transform_indices = @transform_1, window_bounds = array<i64: 3, 3, 4, 4>}, {pipeline_mode = #tpu.pipeline_mode<synchronous>, transform_indices = @transform_2, window_bounds = array<i64: 3, 3, 4, 4>}, {transform_indices = @transform_3, window_bounds = array<i64: 1, 16, 16, 4>}]} {
    %c0 = arith.constant 0 : index
    %c0_0 = arith.constant 0 : index
    %c0_1 = arith.constant 0 : index
    %c0_2 = arith.constant 0 : index
    %0 = vector.load %arg1[%c0, %c0_0, %c0_1, %c0_2] : memref<1x16x16x4xf32, #tpu.memory_space<vmem>>, vector<1x16x16x4xf32>
    %1 = vector.shape_cast %0 : vector<1x16x16x4xf32> to vector<16x16x4xf32>
    %2 = vector.extract_strided_slice %1 {offsets = [1, 0, 0], sizes = [1, 16, 4], strides = [1, 1, 1]} : vector<16x16x4xf32> to vector<1x16x4xf32>
    %3 = vector.extract_strided_slice %1 {offsets = [14, 0, 0], sizes = [1, 16, 4], strides = [1, 1, 1]} : vector<16x16x4xf32> to vector<1x16x4xf32>
    %4 = tpu.concatenate %2, %1, %3 in 0 : vector<1x16x4xf32>, vector<16x16x4xf32>, vector<1x16x4xf32> -> vector<18x16x4xf32>
    %5 = vector.extract_strided_slice %4 {offsets = [0, 1, 0], sizes = [18, 1, 4], strides = [1, 1, 1]} : vector<18x16x4xf32> to vector<18x1x4xf32>
    %6 = vector.extract_strided_slice %4 {offsets = [0, 14, 0], sizes = [18, 1, 4], strides = [1, 1, 1]} : vector<18x16x4xf32> to vector<18x1x4xf32>
    %7 = tpu.concatenate %5, %4, %6 in 1 : vector<18x1x4xf32>, vector<18x16x4xf32>, vector<18x1x4xf32> -> vector<18x18x4xf32>
    %cst = arith.constant 0.000000e+00 : f32
    %8 = vector.broadcast %cst : f32 to vector<256x4xf32>
    %9 = vector.extract_strided_slice %7 {offsets = [0, 0, 0], sizes = [16, 16, 4], strides = [1, 1, 1]} : vector<18x18x4xf32> to vector<16x16x4xf32>
    %10 = vector.shape_cast %9 : vector<16x16x4xf32> to vector<256x4xf32>
    %c0_3 = arith.constant 0 : index
    %c0_4 = arith.constant 0 : index
    %c0_5 = arith.constant 0 : index
    %c0_6 = arith.constant 0 : index
    %11 = vector.load %arg2[%c0_3, %c0_4, %c0_5, %c0_6] : memref<3x3x4x4xf32, #tpu.memory_space<vmem>>, vector<1x1x4x4xf32>
    %12 = vector.shape_cast %11 : vector<1x1x4x4xf32> to vector<4x4xf32>
    %cst_7 = arith.constant dense<0.000000e+00> : vector<256x4xf32>
    %13 = tpu.matmul %10, %12, %cst_7 {dimension_numbers = #tpu.dot_dimension_numbers<[1], [0], [0], [1], [0, 0, 1, 1], [], []>} : vector<256x4xf32>, vector<4x4xf32>, vector<256x4xf32> -> vector<256x4xf32>
    %14 = arith.addf %8, %13 : vector<256x4xf32>
    %15 = vector.extract_strided_slice %7 {offsets = [0, 1, 0], sizes = [16, 16, 4], strides = [1, 1, 1]} : vector<18x18x4xf32> to vector<16x16x4xf32>
    %16 = vector.shape_cast %15 : vector<16x16x4xf32> to vector<256x4xf32>
    %c0_8 = arith.constant 0 : index
    %c1 = arith.constant 1 : index
    %c0_9 = arith.constant 0 : index
    %c0_10 = arith.constant 0 : index
    %17 = vector.load %arg2[%c0_8, %c1, %c0_9, %c0_10] : memref<3x3x4x4xf32, #tpu.memory_space<vmem>>, vector<1x1x4x4xf32>
    %18 = vector.shape_cast %17 : vector<1x1x4x4xf32> to vector<4x4xf32>
    %cst_11 = arith.constant dense<0.000000e+00> : vector<256x4xf32>
    %19 = tpu.matmul %16, %18, %cst_11 {dimension_numbers = #tpu.dot_dimension_numbers<[1], [0], [0], [1], [0, 0, 1, 1], [], []>} : vector<256x4xf32>, vector<4x4xf32>, vector<256x4xf32> -> vector<256x4xf32>
    %20 = arith.addf %14, %19 : vector<256x4xf32>
    %21 = vector.extract_strided_slice %7 {offsets = [0, 2, 0], sizes = [16, 16, 4], strides = [1, 1, 1]} : vector<18x18x4xf32> to vector<16x16x4xf32>
    %22 = vector.shape_cast %21 : vector<16x16x4xf32> to vector<256x4xf32>
    %c0_12 = arith.constant 0 : index
    %c2 = arith.constant 2 : index
    %c0_13 = arith.constant 0 : index
    %c0_14 = arith.constant 0 : index
    %23 = vector.load %arg2[%c0_12, %c2, %c0_13, %c0_14] : memref<3x3x4x4xf32, #tpu.memory_space<vmem>>, vector<1x1x4x4xf32>
    %24 = vector.shape_cast %23 : vector<1x1x4x4xf32> to vector<4x4xf32>
    %cst_15 = arith.constant dense<0.000000e+00> : vector<256x4xf32>
    %25 = tpu.matmul %22, %24, %cst_15 {dimension_numbers = #tpu.dot_dimension_numbers<[1], [0], [0], [1], [0, 0, 1, 1], [], []>} : vector<256x4xf32>, vector<4x4xf32>, vector<256x4xf32> -> vector<256x4xf32>
    %26 = arith.addf %20, %25 : vector<256x4xf32>
    %27 = vector.extract_strided_slice %7 {offsets = [1, 0, 0], sizes = [16, 16, 4], strides = [1, 1, 1]} : vector<18x18x4xf32> to vector<16x16x4xf32>
    %28 = vector.shape_cast %27 : vector<16x16x4xf32> to vector<256x4xf32>
    %c1_16 = arith.constant 1 : index
    %c0_17 = arith.constant 0 : index
    %c0_18 = arith.constant 0 : index
    %c0_19 = arith.constant 0 : index
    %29 = vector.load %arg2[%c1_16, %c0_17, %c0_18, %c0_19] : memref<3x3x4x4xf32, #tpu.memory_space<vmem>>, vector<1x1x4x4xf32>
    %30 = vector.shape_cast %29 : vector<1x1x4x4xf32> to vector<4x4xf32>
    %cst_20 = arith.constant dense<0.000000e+00> : vector<256x4xf32>
    %31 = tpu.matmul %28, %30, %cst_20 {dimension_numbers = #tpu.dot_dimension_numbers<[1], [0], [0], [1], [0, 0, 1, 1], [], []>} : vector<256x4xf32>, vector<4x4xf32>, vector<256x4xf32> -> vector<256x4xf32>
    %32 = arith.addf %26, %31 : vector<256x4xf32>
    %33 = vector.extract_strided_slice %7 {offsets = [1, 1, 0], sizes = [16, 16, 4], strides = [1, 1, 1]} : vector<18x18x4xf32> to vector<16x16x4xf32>
    %34 = vector.shape_cast %33 : vector<16x16x4xf32> to vector<256x4xf32>
    %c1_21 = arith.constant 1 : index
    %c1_22 = arith.constant 1 : index
    %c0_23 = arith.constant 0 : index
    %c0_24 = arith.constant 0 : index
    %35 = vector.load %arg2[%c1_21, %c1_22, %c0_23, %c0_24] : memref<3x3x4x4xf32, #tpu.memory_space<vmem>>, vector<1x1x4x4xf32>
    %36 = vector.shape_cast %35 : vector<1x1x4x4xf32> to vector<4x4xf32>
    %cst_25 = arith.constant dense<0.000000e+00> : vector<256x4xf32>
    %37 = tpu.matmul %34, %36, %cst_25 {dimension_numbers = #tpu.dot_dimension_numbers<[1], [0], [0], [1], [0, 0, 1, 1], [], []>} : vector<256x4xf32>, vector<4x4xf32>, vector<256x4xf32> -> vector<256x4xf32>
    %38 = arith.addf %32, %37 : vector<256x4xf32>
    %39 = vector.extract_strided_slice %7 {offsets = [1, 2, 0], sizes = [16, 16, 4], strides = [1, 1, 1]} : vector<18x18x4xf32> to vector<16x16x4xf32>
    %40 = vector.shape_cast %39 : vector<16x16x4xf32> to vector<256x4xf32>
    %c1_26 = arith.constant 1 : index
    %c2_27 = arith.constant 2 : index
    %c0_28 = arith.constant 0 : index
    %c0_29 = arith.constant 0 : index
    %41 = vector.load %arg2[%c1_26, %c2_27, %c0_28, %c0_29] : memref<3x3x4x4xf32, #tpu.memory_space<vmem>>, vector<1x1x4x4xf32>
    %42 = vector.shape_cast %41 : vector<1x1x4x4xf32> to vector<4x4xf32>
    %cst_30 = arith.constant dense<0.000000e+00> : vector<256x4xf32>
    %43 = tpu.matmul %40, %42, %cst_30 {dimension_numbers = #tpu.dot_dimension_numbers<[1], [0], [0], [1], [0, 0, 1, 1], [], []>} : vector<256x4xf32>, vector<4x4xf32>, vector<256x4xf32> -> vector<256x4xf32>
    %44 = arith.addf %38, %43 : vector<256x4xf32>
    %45 = vector.extract_strided_slice %7 {offsets = [2, 0, 0], sizes = [16, 16, 4], strides = [1, 1, 1]} : vector<18x18x4xf32> to vector<16x16x4xf32>
    %46 = vector.shape_cast %45 : vector<16x16x4xf32> to vector<256x4xf32>
    %c2_31 = arith.constant 2 : index
    %c0_32 = arith.constant 0 : index
    %c0_33 = arith.constant 0 : index
    %c0_34 = arith.constant 0 : index
    %47 = vector.load %arg2[%c2_31, %c0_32, %c0_33, %c0_34] : memref<3x3x4x4xf32, #tpu.memory_space<vmem>>, vector<1x1x4x4xf32>
    %48 = vector.shape_cast %47 : vector<1x1x4x4xf32> to vector<4x4xf32>
    %cst_35 = arith.constant dense<0.000000e+00> : vector<256x4xf32>
    %49 = tpu.matmul %46, %48, %cst_35 {dimension_numbers = #tpu.dot_dimension_numbers<[1], [0], [0], [1], [0, 0, 1, 1], [], []>} : vector<256x4xf32>, vector<4x4xf32>, vector<256x4xf32> -> vector<256x4xf32>
    %50 = arith.addf %44, %49 : vector<256x4xf32>
    %51 = vector.extract_strided_slice %7 {offsets = [2, 1, 0], sizes = [16, 16, 4], strides = [1, 1, 1]} : vector<18x18x4xf32> to vector<16x16x4xf32>
    %52 = vector.shape_cast %51 : vector<16x16x4xf32> to vector<256x4xf32>
    %c2_36 = arith.constant 2 : index
    %c1_37 = arith.constant 1 : index
    %c0_38 = arith.constant 0 : index
    %c0_39 = arith.constant 0 : index
    %53 = vector.load %arg2[%c2_36, %c1_37, %c0_38, %c0_39] : memref<3x3x4x4xf32, #tpu.memory_space<vmem>>, vector<1x1x4x4xf32>
    %54 = vector.shape_cast %53 : vector<1x1x4x4xf32> to vector<4x4xf32>
    %cst_40 = arith.constant dense<0.000000e+00> : vector<256x4xf32>
    %55 = tpu.matmul %52, %54, %cst_40 {dimension_numbers = #tpu.dot_dimension_numbers<[1], [0], [0], [1], [0, 0, 1, 1], [], []>} : vector<256x4xf32>, vector<4x4xf32>, vector<256x4xf32> -> vector<256x4xf32>
    %56 = arith.addf %50, %55 : vector<256x4xf32>
    %57 = vector.extract_strided_slice %7 {offsets = [2, 2, 0], sizes = [16, 16, 4], strides = [1, 1, 1]} : vector<18x18x4xf32> to vector<16x16x4xf32>
    %58 = vector.shape_cast %57 : vector<16x16x4xf32> to vector<256x4xf32>
    %c2_41 = arith.constant 2 : index
    %c2_42 = arith.constant 2 : index
    %c0_43 = arith.constant 0 : index
    %c0_44 = arith.constant 0 : index
    %59 = vector.load %arg2[%c2_41, %c2_42, %c0_43, %c0_44] : memref<3x3x4x4xf32, #tpu.memory_space<vmem>>, vector<1x1x4x4xf32>
    %60 = vector.shape_cast %59 : vector<1x1x4x4xf32> to vector<4x4xf32>
    %cst_45 = arith.constant dense<0.000000e+00> : vector<256x4xf32>
    %61 = tpu.matmul %58, %60, %cst_45 {dimension_numbers = #tpu.dot_dimension_numbers<[1], [0], [0], [1], [0, 0, 1, 1], [], []>} : vector<256x4xf32>, vector<4x4xf32>, vector<256x4xf32> -> vector<256x4xf32>
    %62 = arith.addf %56, %61 : vector<256x4xf32>
    %cst_46 = arith.constant dense<0.000000e+00> : vector<4xf32>
    %63 = vector.multi_reduction <add>, %62, %cst_46 [0] : vector<256x4xf32> to vector<4xf32>
    %64 = vector.shape_cast %63 : vector<4xf32> to vector<1x4xf32>
    %cst_47 = arith.constant 3.906250e-03 : f32
    %65 = vector.broadcast %cst_47 : f32 to vector<1x4xf32>
    %66 = arith.mulf %64, %65 : vector<1x4xf32>
    %67 = vector.broadcast %66 : vector<1x4xf32> to vector<256x4xf32>
    %68 = arith.subf %62, %67 : vector<256x4xf32>
    %69 = arith.mulf %68, %68 : vector<256x4xf32>
    %cst_48 = arith.constant dense<0.000000e+00> : vector<4xf32>
    %70 = vector.multi_reduction <add>, %69, %cst_48 [0] : vector<256x4xf32> to vector<4xf32>
    %71 = vector.shape_cast %70 : vector<4xf32> to vector<1x4xf32>
    %cst_49 = arith.constant 3.906250e-03 : f32
    %72 = vector.broadcast %cst_49 : f32 to vector<1x4xf32>
    %73 = arith.mulf %71, %72 : vector<1x4xf32>
    %cst_50 = arith.constant 9.99999974E-6 : f32
    %74 = vector.broadcast %cst_50 : f32 to vector<1x4xf32>
    %75 = arith.addf %73, %74 : vector<1x4xf32>
    %76 = math.rsqrt %75 : vector<1x4xf32>
    %77 = vector.broadcast %76 : vector<1x4xf32> to vector<256x4xf32>
    %78 = arith.mulf %68, %77 : vector<256x4xf32>
    %cst_51 = arith.constant 0.000000e+00 : f32
    %79 = vector.broadcast %cst_51 : f32 to vector<256x4xf32>
    %80 = arith.maximumf %78, %79 : vector<256x4xf32>
    %81 = vector.shape_cast %80 : vector<256x4xf32> to vector<16x16x4xf32>
    %82 = vector.extract_strided_slice %81 {offsets = [1, 0, 0], sizes = [1, 16, 4], strides = [1, 1, 1]} : vector<16x16x4xf32> to vector<1x16x4xf32>
    %83 = vector.extract_strided_slice %81 {offsets = [14, 0, 0], sizes = [1, 16, 4], strides = [1, 1, 1]} : vector<16x16x4xf32> to vector<1x16x4xf32>
    %84 = tpu.concatenate %82, %81, %83 in 0 : vector<1x16x4xf32>, vector<16x16x4xf32>, vector<1x16x4xf32> -> vector<18x16x4xf32>
    %85 = vector.extract_strided_slice %84 {offsets = [0, 1, 0], sizes = [18, 1, 4], strides = [1, 1, 1]} : vector<18x16x4xf32> to vector<18x1x4xf32>
    %86 = vector.extract_strided_slice %84 {offsets = [0, 14, 0], sizes = [18, 1, 4], strides = [1, 1, 1]} : vector<18x16x4xf32> to vector<18x1x4xf32>
    %87 = tpu.concatenate %85, %84, %86 in 1 : vector<18x1x4xf32>, vector<18x16x4xf32>, vector<18x1x4xf32> -> vector<18x18x4xf32>
    %cst_52 = arith.constant 0.000000e+00 : f32
    %88 = vector.broadcast %cst_52 : f32 to vector<256x4xf32>
    %89 = vector.extract_strided_slice %87 {offsets = [0, 0, 0], sizes = [16, 16, 4], strides = [1, 1, 1]} : vector<18x18x4xf32> to vector<16x16x4xf32>
    %90 = vector.shape_cast %89 : vector<16x16x4xf32> to vector<256x4xf32>
    %c0_53 = arith.constant 0 : index
    %c0_54 = arith.constant 0 : index
    %c0_55 = arith.constant 0 : index
    %c0_56 = arith.constant 0 : index
    %91 = vector.load %arg3[%c0_53, %c0_54, %c0_55, %c0_56] : memref<3x3x4x4xf32, #tpu.memory_space<vmem>>, vector<1x1x4x4xf32>
    %92 = vector.shape_cast %91 : vector<1x1x4x4xf32> to vector<4x4xf32>
    %cst_57 = arith.constant dense<0.000000e+00> : vector<256x4xf32>
    %93 = tpu.matmul %90, %92, %cst_57 {dimension_numbers = #tpu.dot_dimension_numbers<[1], [0], [0], [1], [0, 0, 1, 1], [], []>} : vector<256x4xf32>, vector<4x4xf32>, vector<256x4xf32> -> vector<256x4xf32>
    %94 = arith.addf %88, %93 : vector<256x4xf32>
    %95 = vector.extract_strided_slice %87 {offsets = [0, 1, 0], sizes = [16, 16, 4], strides = [1, 1, 1]} : vector<18x18x4xf32> to vector<16x16x4xf32>
    %96 = vector.shape_cast %95 : vector<16x16x4xf32> to vector<256x4xf32>
    %c0_58 = arith.constant 0 : index
    %c1_59 = arith.constant 1 : index
    %c0_60 = arith.constant 0 : index
    %c0_61 = arith.constant 0 : index
    %97 = vector.load %arg3[%c0_58, %c1_59, %c0_60, %c0_61] : memref<3x3x4x4xf32, #tpu.memory_space<vmem>>, vector<1x1x4x4xf32>
    %98 = vector.shape_cast %97 : vector<1x1x4x4xf32> to vector<4x4xf32>
    %cst_62 = arith.constant dense<0.000000e+00> : vector<256x4xf32>
    %99 = tpu.matmul %96, %98, %cst_62 {dimension_numbers = #tpu.dot_dimension_numbers<[1], [0], [0], [1], [0, 0, 1, 1], [], []>} : vector<256x4xf32>, vector<4x4xf32>, vector<256x4xf32> -> vector<256x4xf32>
    %100 = arith.addf %94, %99 : vector<256x4xf32>
    %101 = vector.extract_strided_slice %87 {offsets = [0, 2, 0], sizes = [16, 16, 4], strides = [1, 1, 1]} : vector<18x18x4xf32> to vector<16x16x4xf32>
    %102 = vector.shape_cast %101 : vector<16x16x4xf32> to vector<256x4xf32>
    %c0_63 = arith.constant 0 : index
    %c2_64 = arith.constant 2 : index
    %c0_65 = arith.constant 0 : index
    %c0_66 = arith.constant 0 : index
    %103 = vector.load %arg3[%c0_63, %c2_64, %c0_65, %c0_66] : memref<3x3x4x4xf32, #tpu.memory_space<vmem>>, vector<1x1x4x4xf32>
    %104 = vector.shape_cast %103 : vector<1x1x4x4xf32> to vector<4x4xf32>
    %cst_67 = arith.constant dense<0.000000e+00> : vector<256x4xf32>
    %105 = tpu.matmul %102, %104, %cst_67 {dimension_numbers = #tpu.dot_dimension_numbers<[1], [0], [0], [1], [0, 0, 1, 1], [], []>} : vector<256x4xf32>, vector<4x4xf32>, vector<256x4xf32> -> vector<256x4xf32>
    %106 = arith.addf %100, %105 : vector<256x4xf32>
    %107 = vector.extract_strided_slice %87 {offsets = [1, 0, 0], sizes = [16, 16, 4], strides = [1, 1, 1]} : vector<18x18x4xf32> to vector<16x16x4xf32>
    %108 = vector.shape_cast %107 : vector<16x16x4xf32> to vector<256x4xf32>
    %c1_68 = arith.constant 1 : index
    %c0_69 = arith.constant 0 : index
    %c0_70 = arith.constant 0 : index
    %c0_71 = arith.constant 0 : index
    %109 = vector.load %arg3[%c1_68, %c0_69, %c0_70, %c0_71] : memref<3x3x4x4xf32, #tpu.memory_space<vmem>>, vector<1x1x4x4xf32>
    %110 = vector.shape_cast %109 : vector<1x1x4x4xf32> to vector<4x4xf32>
    %cst_72 = arith.constant dense<0.000000e+00> : vector<256x4xf32>
    %111 = tpu.matmul %108, %110, %cst_72 {dimension_numbers = #tpu.dot_dimension_numbers<[1], [0], [0], [1], [0, 0, 1, 1], [], []>} : vector<256x4xf32>, vector<4x4xf32>, vector<256x4xf32> -> vector<256x4xf32>
    %112 = arith.addf %106, %111 : vector<256x4xf32>
    %113 = vector.extract_strided_slice %87 {offsets = [1, 1, 0], sizes = [16, 16, 4], strides = [1, 1, 1]} : vector<18x18x4xf32> to vector<16x16x4xf32>
    %114 = vector.shape_cast %113 : vector<16x16x4xf32> to vector<256x4xf32>
    %c1_73 = arith.constant 1 : index
    %c1_74 = arith.constant 1 : index
    %c0_75 = arith.constant 0 : index
    %c0_76 = arith.constant 0 : index
    %115 = vector.load %arg3[%c1_73, %c1_74, %c0_75, %c0_76] : memref<3x3x4x4xf32, #tpu.memory_space<vmem>>, vector<1x1x4x4xf32>
    %116 = vector.shape_cast %115 : vector<1x1x4x4xf32> to vector<4x4xf32>
    %cst_77 = arith.constant dense<0.000000e+00> : vector<256x4xf32>
    %117 = tpu.matmul %114, %116, %cst_77 {dimension_numbers = #tpu.dot_dimension_numbers<[1], [0], [0], [1], [0, 0, 1, 1], [], []>} : vector<256x4xf32>, vector<4x4xf32>, vector<256x4xf32> -> vector<256x4xf32>
    %118 = arith.addf %112, %117 : vector<256x4xf32>
    %119 = vector.extract_strided_slice %87 {offsets = [1, 2, 0], sizes = [16, 16, 4], strides = [1, 1, 1]} : vector<18x18x4xf32> to vector<16x16x4xf32>
    %120 = vector.shape_cast %119 : vector<16x16x4xf32> to vector<256x4xf32>
    %c1_78 = arith.constant 1 : index
    %c2_79 = arith.constant 2 : index
    %c0_80 = arith.constant 0 : index
    %c0_81 = arith.constant 0 : index
    %121 = vector.load %arg3[%c1_78, %c2_79, %c0_80, %c0_81] : memref<3x3x4x4xf32, #tpu.memory_space<vmem>>, vector<1x1x4x4xf32>
    %122 = vector.shape_cast %121 : vector<1x1x4x4xf32> to vector<4x4xf32>
    %cst_82 = arith.constant dense<0.000000e+00> : vector<256x4xf32>
    %123 = tpu.matmul %120, %122, %cst_82 {dimension_numbers = #tpu.dot_dimension_numbers<[1], [0], [0], [1], [0, 0, 1, 1], [], []>} : vector<256x4xf32>, vector<4x4xf32>, vector<256x4xf32> -> vector<256x4xf32>
    %124 = arith.addf %118, %123 : vector<256x4xf32>
    %125 = vector.extract_strided_slice %87 {offsets = [2, 0, 0], sizes = [16, 16, 4], strides = [1, 1, 1]} : vector<18x18x4xf32> to vector<16x16x4xf32>
    %126 = vector.shape_cast %125 : vector<16x16x4xf32> to vector<256x4xf32>
    %c2_83 = arith.constant 2 : index
    %c0_84 = arith.constant 0 : index
    %c0_85 = arith.constant 0 : index
    %c0_86 = arith.constant 0 : index
    %127 = vector.load %arg3[%c2_83, %c0_84, %c0_85, %c0_86] : memref<3x3x4x4xf32, #tpu.memory_space<vmem>>, vector<1x1x4x4xf32>
    %128 = vector.shape_cast %127 : vector<1x1x4x4xf32> to vector<4x4xf32>
    %cst_87 = arith.constant dense<0.000000e+00> : vector<256x4xf32>
    %129 = tpu.matmul %126, %128, %cst_87 {dimension_numbers = #tpu.dot_dimension_numbers<[1], [0], [0], [1], [0, 0, 1, 1], [], []>} : vector<256x4xf32>, vector<4x4xf32>, vector<256x4xf32> -> vector<256x4xf32>
    %130 = arith.addf %124, %129 : vector<256x4xf32>
    %131 = vector.extract_strided_slice %87 {offsets = [2, 1, 0], sizes = [16, 16, 4], strides = [1, 1, 1]} : vector<18x18x4xf32> to vector<16x16x4xf32>
    %132 = vector.shape_cast %131 : vector<16x16x4xf32> to vector<256x4xf32>
    %c2_88 = arith.constant 2 : index
    %c1_89 = arith.constant 1 : index
    %c0_90 = arith.constant 0 : index
    %c0_91 = arith.constant 0 : index
    %133 = vector.load %arg3[%c2_88, %c1_89, %c0_90, %c0_91] : memref<3x3x4x4xf32, #tpu.memory_space<vmem>>, vector<1x1x4x4xf32>
    %134 = vector.shape_cast %133 : vector<1x1x4x4xf32> to vector<4x4xf32>
    %cst_92 = arith.constant dense<0.000000e+00> : vector<256x4xf32>
    %135 = tpu.matmul %132, %134, %cst_92 {dimension_numbers = #tpu.dot_dimension_numbers<[1], [0], [0], [1], [0, 0, 1, 1], [], []>} : vector<256x4xf32>, vector<4x4xf32>, vector<256x4xf32> -> vector<256x4xf32>
    %136 = arith.addf %130, %135 : vector<256x4xf32>
    %137 = vector.extract_strided_slice %87 {offsets = [2, 2, 0], sizes = [16, 16, 4], strides = [1, 1, 1]} : vector<18x18x4xf32> to vector<16x16x4xf32>
    %138 = vector.shape_cast %137 : vector<16x16x4xf32> to vector<256x4xf32>
    %c2_93 = arith.constant 2 : index
    %c2_94 = arith.constant 2 : index
    %c0_95 = arith.constant 0 : index
    %c0_96 = arith.constant 0 : index
    %139 = vector.load %arg3[%c2_93, %c2_94, %c0_95, %c0_96] : memref<3x3x4x4xf32, #tpu.memory_space<vmem>>, vector<1x1x4x4xf32>
    %140 = vector.shape_cast %139 : vector<1x1x4x4xf32> to vector<4x4xf32>
    %cst_97 = arith.constant dense<0.000000e+00> : vector<256x4xf32>
    %141 = tpu.matmul %138, %140, %cst_97 {dimension_numbers = #tpu.dot_dimension_numbers<[1], [0], [0], [1], [0, 0, 1, 1], [], []>} : vector<256x4xf32>, vector<4x4xf32>, vector<256x4xf32> -> vector<256x4xf32>
    %142 = arith.addf %136, %141 : vector<256x4xf32>
    %cst_98 = arith.constant dense<0.000000e+00> : vector<4xf32>
    %143 = vector.multi_reduction <add>, %142, %cst_98 [0] : vector<256x4xf32> to vector<4xf32>
    %144 = vector.shape_cast %143 : vector<4xf32> to vector<1x4xf32>
    %cst_99 = arith.constant 3.906250e-03 : f32
    %145 = vector.broadcast %cst_99 : f32 to vector<1x4xf32>
    %146 = arith.mulf %144, %145 : vector<1x4xf32>
    %147 = vector.broadcast %146 : vector<1x4xf32> to vector<256x4xf32>
    %148 = arith.subf %142, %147 : vector<256x4xf32>
    %149 = arith.mulf %148, %148 : vector<256x4xf32>
    %cst_100 = arith.constant dense<0.000000e+00> : vector<4xf32>
    %150 = vector.multi_reduction <add>, %149, %cst_100 [0] : vector<256x4xf32> to vector<4xf32>
    %151 = vector.shape_cast %150 : vector<4xf32> to vector<1x4xf32>
    %cst_101 = arith.constant 3.906250e-03 : f32
    %152 = vector.broadcast %cst_101 : f32 to vector<1x4xf32>
    %153 = arith.mulf %151, %152 : vector<1x4xf32>
    %cst_102 = arith.constant 9.99999974E-6 : f32
    %154 = vector.broadcast %cst_102 : f32 to vector<1x4xf32>
    %155 = arith.addf %153, %154 : vector<1x4xf32>
    %156 = math.rsqrt %155 : vector<1x4xf32>
    %157 = vector.broadcast %156 : vector<1x4xf32> to vector<256x4xf32>
    %158 = arith.mulf %148, %157 : vector<256x4xf32>
    %159 = vector.shape_cast %158 : vector<256x4xf32> to vector<16x16x4xf32>
    %160 = arith.addf %1, %159 : vector<16x16x4xf32>
    %c0_103 = arith.constant 0 : index
    %c0_104 = arith.constant 0 : index
    %c0_105 = arith.constant 0 : index
    %c0_106 = arith.constant 0 : index
    %161 = vector.load %arg4[%c0_103, %c0_104, %c0_105, %c0_106] : memref<1x16x16x4xf32, #tpu.memory_space<vmem>>, vector<1x16x16x4xf32>
    %162 = vector.shape_cast %161 : vector<1x16x16x4xf32> to vector<16x16x4xf32>
    %163 = vector.shape_cast %160 : vector<16x16x4xf32> to vector<1x16x16x4xf32>
    tpu.vector_store %arg4[%c0_103, %c0_104, %c0_105, %c0_106], %163 {strides = array<i32>} : memref<1x16x16x4xf32, #tpu.memory_space<vmem>>, vector<1x16x16x4xf32>,
    return
  }
  func.func @transform_0(%arg0: i32) -> (i32, i32, i32, i32) {
    %c0_i32 = arith.constant 0 : i32
    %c0_i32_0 = arith.constant 0 : i32
    %c0_i32_1 = arith.constant 0 : i32
    %c0_i32_2 = arith.constant 0 : i32
    return %arg0, %c0_i32, %c0_i32_0, %c0_i32_1 : i32, i32, i32, i32
  }
  func.func @transform_1(%arg0: i32) -> (i32, i32, i32, i32) {
    %c0_i32 = arith.constant 0 : i32
    %c0_i32_0 = arith.constant 0 : i32
    %c0_i32_1 = arith.constant 0 : i32
    %c0_i32_2 = arith.constant 0 : i32
    %c0_i32_3 = arith.constant 0 : i32
    return %c0_i32, %c0_i32_0, %c0_i32_1, %c0_i32_2 : i32, i32, i32, i32
  }
  func.func @transform_2(%arg0: i32) -> (i32, i32, i32, i32) {
    %c0_i32 = arith.constant 0 : i32
    %c0_i32_0 = arith.constant 0 : i32
    %c0_i32_1 = arith.constant 0 : i32
    %c0_i32_2 = arith.constant 0 : i32
    %c0_i32_3 = arith.constant 0 : i32
    return %c0_i32, %c0_i32_0, %c0_i32_1, %c0_i32_2 : i32, i32, i32, i32
  }
  func.func @transform_3(%arg0: i32) -> (i32, i32, i32, i32) {
    %c0_i32 = arith.constant 0 : i32
    %c0_i32_0 = arith.constant 0 : i32
    %c0_i32_1 = arith.constant 0 : i32
    %c0_i32_2 = arith.constant 0 : i32
    return %arg0, %c0_i32, %c0_i32_0, %c0_i32_1 : i32, i32, i32, i32
  }
}

</mosaic_0001>

<llo_original>
// kernel: tpu_custom_call.1
$region0: #{tpu_custom_call.1}
  #allocation0 [shape = 'u32[]', space=smem, size = 0x4, offset = 0x4, fixed_abs, tag = 'smem constant byte address 0x4 - core index']
  #allocation1 [shape = 'u32[144,128]{1,0:T(1,128)}', space=vmem, size = 0x12000, scoped, tag = 'internal scratch']
  %s0 = inlined_call_operand.vmem [shape: f32[2,16,16,4], index: 0, kind: input, shape index: {}]
  %s1 = inlined_call_operand.vmem [shape: f32[3,3,4,4], index: 1, kind: input, shape index: {}]
  %s2 = inlined_call_operand.vmem [shape: f32[3,3,4,4], index: 2, kind: input, shape index: {}]
  %s3 = inlined_call_operand.vmem [shape: f32[2,16,16,4], index: 3, kind: output, shape index: {}]
  %s4 = sld [smem:[#allocation0]]
  $region45: #{tpu_custom_call.1} parent=0
    _
  %s6 = ssub.s32 1, %s4
  %s7 = scalar_select 0, %s6, %s4
  loop: start=0, step=1, limit=4
  $region2: #{tpu_custom_call.1} parent=0 // loop_pre_header
    _
  $region3: #{tpu_custom_call.1} parent=0 // loop_header
    %s9 = sphi 0, %s13
    %p10 = scmp.ge.s32.totalorder %s9, 4
    %s19 = sphi 0, %s21
    %s22 = sphi 0, %s19
    %s23 = sphi 0, %s22
    %s39 = sphi 0, %s23
    %s43 = sphi 0, %s43
    %s45 = sphi 0, %s43
    %s46 = sphi 0, %s45
    %s60 = sphi 0, %s46
    %s64 = sphi 0, %s64
    %s66 = sphi 0, %s64
    %s67 = sphi 0, %s66
    %s81 = sphi 0, %s67
    %s87 = sphi 0, %s89
    %s90 = sphi 0, %s87
    %s91 = sphi 0, %s90
    %s107 = sphi 0, %s91
  $region4: #{tpu_custom_call.1} parent=0 // loop_header_branch
    %12 = sbr.rel (%p10) target = $region8
  $region5: #{tpu_custom_call.1} parent=0 // loop_body
    %s14 = ssub.s32 %s9, 1
    %s15 = ssub.s32 %s9, 2
    %s16 = sadd.s32 %s9, 1
    %s17 = ssub.s32 %s9, %s16
    %p18 = scmp.eq.s32.totalorder %s17, 0
    %s20 = sadd.s32 %s19, 1
    %s21 = scalar_select %p18, %s19, %s20
    %p24 = pneg %p18
    %p25 = scmp.eq.s32.totalorder %s9, 1
    %p26 = por %p24, %p25
    %p27 = scmp.ne.s32.totalorder %s19, %s22
    %p28 = scmp.eq.s32.totalorder %s9, 0
    %p29 = por %p27, %p28
    %p30 = scmp.ne.s32.totalorder %s19, %s22
    %p31 = scmp.eq.s32.totalorder %s14, 1
    %p32 = por %p30, %p31
    %p33 = scmp.ne.s32.totalorder %s22, %s23
    %p34 = scmp.eq.s32.totalorder %s14, 0
    %p35 = por %p33, %p34
    %p36 = scmp.ne.s32.totalorder %s22, %s23
    %p37 = scmp.eq.s32.totalorder %s15, 1
    %p38 = por %p36, %p37
    %p40 = scmp.ne.s32.totalorder %s23, %s39
    %p41 = scmp.eq.s32.totalorder %s15, 0
    %p42 = por %p40, %p41
    %s44 = sadd.s32 %s43, 1
    %p47 = scmp.eq.s32.totalorder %s9, 1
    %p48 = scmp.ne.s32.totalorder %s43, %s45
    %p49 = scmp.eq.s32.totalorder %s9, 0
    %p50 = por %p48, %p49
    %p51 = scmp.ne.s32.totalorder %s43, %s45
    %p52 = scmp.eq.s32.totalorder %s14, 1
    %p53 = por %p51, %p52
    %p54 = scmp.ne.s32.totalorder %s45, %s46
    %p55 = scmp.eq.s32.totalorder %s14, 0
    %p56 = por %p54, %p55
    %p57 = scmp.ne.s32.totalorder %s45, %s46
    %p58 = scmp.eq.s32.totalorder %s15, 1
    %p59 = por %p57, %p58
    %p61 = scmp.ne.s32.totalorder %s46, %s60
    %p62 = scmp.eq.s32.totalorder %s15, 0
    %p63 = por %p61, %p62
    %s65 = sadd.s32 %s64, 1
    %p68 = scmp.eq.s32.totalorder %s9, 1
    %p69 = scmp.ne.s32.totalorder %s64, %s66
    %p70 = scmp.eq.s32.totalorder %s9, 0
    %p71 = por %p69, %p70
    %p72 = scmp.ne.s32.totalorder %s64, %s66
    %p73 = scmp.eq.s32.totalorder %s14, 1
    %p74 = por %p72, %p73
    %p75 = scmp.ne.s32.totalorder %s66, %s67
    %p76 = scmp.eq.s32.totalorder %s14, 0
    %p77 = por %p75, %p76
    %p78 = scmp.ne.s32.totalorder %s66, %s67
    %p79 = scmp.eq.s32.totalorder %s15, 1
    %p80 = por %p78, %p79
    %p82 = scmp.ne.s32.totalorder %s67, %s81
    %p83 = scmp.eq.s32.totalorder %s15, 0
    %p84 = por %p82, %p83
    %s85 = ssub.s32 %s9, %s16
    %p86 = scmp.eq.s32.totalorder %s85, 0
    %s88 = sadd.s32 %s87, 1
    %s89 = scalar_select %p86, %s87, %s88
    %p92 = pneg %p86
    %p93 = scmp.eq.s32.totalorder %s9, 1
    %p94 = por %p92, %p93
    %p95 = scmp.ne.s32.totalorder %s87, %s90
    %p96 = scmp.eq.s32.totalorder %s9, 0
    %p97 = por %p95, %p96
    %p98 = scmp.ne.s32.totalorder %s87, %s90
    %p99 = scmp.eq.s32.totalorder %s14, 1
    %p100 = por %p98, %p99
    %p101 = scmp.ne.s32.totalorder %s90, %s91
    %p102 = scmp.eq.s32.totalorder %s14, 0
    %p103 = por %p101, %p102
    %p104 = scmp.ne.s32.totalorder %s90, %s91
    %p105 = scmp.eq.s32.totalorder %s15, 1
    %p106 = por %p104, %p105
    %p108 = scmp.ne.s32.totalorder %s91, %s107
    %p109 = scmp.eq.s32.totalorder %s15, 0
    %p110 = por %p108, %p109
    %p111 = scmp.le.s32.totalorder 1, %s9
    %p112 = scmp.lt.s32.totalorder %s9, 3
    %p113 = pnand %p111, %p112
    %p114 = pneg %p113
    // Predicated region
    $region9: #{tpu_custom_call.1} parent=5 // pred_check
      _
    $region10: #{tpu_custom_call.1} parent=5 // pred_check_branch
      %116 = sbr.rel (%p113) target = $region12
    $region11: #{tpu_custom_call.1} parent=5 // pred_region
      %s117 = ssub.s32 %s9, 1
      // Predicated region
      $region13: #{tpu_custom_call.1} parent=11 // pred_check
        %p118 = pneg %p56
      $region14: #{tpu_custom_call.1} parent=11 // pred_check_branch
        %120 = sbr.rel (%p118) target = $region16
      $region15: #{tpu_custom_call.1} parent=11 // pred_region
        _
      $region16: #{tpu_custom_call.1} parent=11 // pred_fallthru
        _
      // Predicated region
      $region17: #{tpu_custom_call.1} parent=11 // pred_check
        %p121 = pneg %p77
      $region18: #{tpu_custom_call.1} parent=11 // pred_check_branch
        %123 = sbr.rel (%p121) target = $region20
      $region19: #{tpu_custom_call.1} parent=11 // pred_region
        _
      $region20: #{tpu_custom_call.1} parent=11 // pred_fallthru
        _
    $region12: #{tpu_custom_call.1} parent=5 // pred_fallthru
      _
    %p124 = scmp.lt.s32.totalorder %s9, 2
    // Predicated region
    $region21: #{tpu_custom_call.1} parent=5 // pred_check
      %p125 = pneg %p124
    $region22: #{tpu_custom_call.1} parent=5 // pred_check_branch
      %127 = sbr.rel (%p125) target = $region24
    $region23: #{tpu_custom_call.1} parent=5 // pred_region
      // Predicated region
      $region25: #{tpu_custom_call.1} parent=23 // pred_check
        %p128 = pneg %p29
      $region26: #{tpu_custom_call.1} parent=23 // pred_check_branch
        %130 = sbr.rel (%p128) target = $region28
      $region27: #{tpu_custom_call.1} parent=23 // pred_region
        %p131 = scmp.lt.s32.totalorder %s9, 1
        %s132 = scalar_select %p131, %s9, 1
        %s133 = smul.addr %s132, 32
        %s134 = smul.addr %s133, 8
        %s135 = scalar_lea.vmem %s0, %s134
      $region28: #{tpu_custom_call.1} parent=23 // pred_fallthru
        _
    $region24: #{tpu_custom_call.1} parent=5 // pred_fallthru
      _
    %p136 = scmp.le.s32.totalorder 1, %s9
    %p137 = scmp.lt.s32.totalorder %s9, 3
    %p138 = pnand %p136, %p137
    %p139 = pneg %p138
    // Predicated region
    $region29: #{tpu_custom_call.1} parent=5 // pred_check
      _
    $region30: #{tpu_custom_call.1} parent=5 // pred_check_branch
      %141 = sbr.rel (%p138) target = $region32
    $region31: #{tpu_custom_call.1} parent=5 // pred_region
      %s142 = ssub.s32 %s9, 1
      %p143 = scmp.lt.s32.totalorder %s14, 1
      %s144 = scalar_select %p143, %s14, 1
      %s145 = smul.addr %s144, 32
      %s146 = smul.addr %s145, 8
      %s147 = scalar_lea.vmem %s0, %s146
      %p148 = pneg %p35
      %p149 = pneg %p32
      %p150 = pneg %p56
      %p151 = pneg %p53
      %p152 = pneg %p77
      %p153 = pneg %p74
      %p154 = pneg %p103
      %p155 = pneg %p100
      %p156 = scmp.lt.s32.totalorder %s14, 1
      %s157 = scalar_select %p156, %s14, 1
      %s158 = smul.addr %s157, 32
      %s159 = smul.addr %s158, 8
      %s160 = scalar_lea.vmem %s3, %s159
      %p161 = scmp.lt.s32.totalorder %s14, 1
      %s162 = scalar_select %p161, %s14, 1
      %s163 = smul.addr %s162, 32
      %s164 = smul.addr %s163, 8
      %s165 = scalar_lea.vmem %s0, %s164
      %p166 = scmp.lt.s32.totalorder %s14, 1
      %s167 = scalar_select %p166, %s14, 1
      %s168 = smul.addr %s167, 32
      %s169 = smul.addr %s168, 8
      %s170 = scalar_lea.vmem %s3, %s169
      %v171 = vld [vmem:[%s165] sm:$0xff]
      %v172 = vld [vmem:[%s165 + $0x8] sm:$0xff]
      %v173 = vld [vmem:[%s165 + $0x10] sm:$0xff]
      %v174 = vld [vmem:[%s165 + $0x18] sm:$0xff]
      %v175 = vld [vmem:[%s165 + $0x20] sm:$0xff]
      %v176 = vld [vmem:[%s165 + $0x28] sm:$0xff]
      %v177 = vld [vmem:[%s165 + $0x30] sm:$0xff]
      %v178 = vld [vmem:[%s165 + $0x38] sm:$0xff]
      %v179 = vld [vmem:[%s165 + $0x40] sm:$0xff]
      %v180 = vld [vmem:[%s165 + $0x48] sm:$0xff]
      %v181 = vld [vmem:[%s165 + $0x50] sm:$0xff]
      %v182 = vld [vmem:[%s165 + $0x58] sm:$0xff]
      %v183 = vld [vmem:[%s165 + $0x60] sm:$0xff]
      %v184 = vld [vmem:[%s165 + $0x68] sm:$0xff]
      %v185 = vld [vmem:[%s165 + $0x70] sm:$0xff]
      %v186 = vld [vmem:[%s165 + $0x78] sm:$0xff]
      %v187 = vld [vmem:[%s165 + $0x80] sm:$0xff]
      %v188 = vld [vmem:[%s165 + $0x88] sm:$0xff]
      %v189 = vld [vmem:[%s165 + $0x90] sm:$0xff]
      %v190 = vld [vmem:[%s165 + $0x98] sm:$0xff]
      %v191 = vld [vmem:[%s165 + $0xa0] sm:$0xff]
      %v192 = vld [vmem:[%s165 + $0xa8] sm:$0xff]
      %v193 = vld [vmem:[%s165 + $0xb0] sm:$0xff]
      %v194 = vld [vmem:[%s165 + $0xb8] sm:$0xff]
      %v195 = vld [vmem:[%s165 + $0xc0] sm:$0xff]
      %v196 = vld [vmem:[%s165 + $0xc8] sm:$0xff]
      %v197 = vld [vmem:[%s165 + $0xd0] sm:$0xff]
      %v198 = vld [vmem:[%s165 + $0xd8] sm:$0xff]
      %v199 = vld [vmem:[%s165 + $0xe0] sm:$0xff]
      %v200 = vld [vmem:[%s165 + $0xe8] sm:$0xff]
      %v201 = vld [vmem:[%s165 + $0xf0] sm:$0xff]
      %v202 = vld [vmem:[%s165 + $0xf8] sm:$0xff]
      %v219 = vrot.slane %v173, 1
      %v220 = vrot.slane %v171, 1
      %v221 = vrot.slane %v175, 1
      %v222 = vrot.slane %v177, 1
      %v223 = vrot.slane %v179, 1
      %v224 = vrot.slane %v181, 1
      %v225 = vrot.slane %v183, 1
      %v226 = vrot.slane %v185, 1
      %v227 = vrot.slane %v187, 1
      %v228 = vrot.slane %v189, 1
      %v229 = vrot.slane %v191, 1
      %v230 = vrot.slane %v193, 1
      %v231 = vrot.slane %v195, 1
      %v232 = vrot.slane %v197, 1
      %v233 = vrot.slane %v199, 1
      %v234 = vrot.slane %v201, 1
      %vm267 = vcmask 1040384
      %v268 = vrot.slane %v173, 7
      %v269 = vrot.slane %v174, 7
      %v270 = vsel %vm267, %v268, %v269
      %v271 = vrot.slane %v171, 7
      %v272 = vrot.slane %v172, 7
      %v273 = vsel %vm267, %v271, %v272
      %v274 = vrot.slane %v175, 7
      %v275 = vrot.slane %v176, 7
      %v276 = vsel %vm267, %v274, %v275
      %v277 = vrot.slane %v177, 7
      %v278 = vrot.slane %v178, 7
      %v279 = vsel %vm267, %v277, %v278
      %v280 = vrot.slane %v179, 7
      %v281 = vrot.slane %v180, 7
      %v282 = vsel %vm267, %v280, %v281
      %v283 = vrot.slane %v181, 7
      %v284 = vrot.slane %v182, 7
      %v285 = vsel %vm267, %v283, %v284
      %v286 = vrot.slane %v183, 7
      %v287 = vrot.slane %v184, 7
      %v288 = vsel %vm267, %v286, %v287
      %v289 = vrot.slane %v185, 7
      %v290 = vrot.slane %v186, 7
      %v291 = vsel %vm267, %v289, %v290
      %v292 = vrot.slane %v187, 7
      %v293 = vrot.slane %v188, 7
      %v294 = vsel %vm267, %v292, %v293
      %v295 = vrot.slane %v189, 7
      %v296 = vrot.slane %v190, 7
      %v297 = vsel %vm267, %v295, %v296
      %v298 = vrot.slane %v191, 7
      %v299 = vrot.slane %v192, 7
      %v300 = vsel %vm267, %v298, %v299
      %v301 = vrot.slane %v193, 7
      %v302 = vrot.slane %v194, 7
      %v303 = vsel %vm267, %v301, %v302
      %v304 = vrot.slane %v195, 7
      %v305 = vrot.slane %v196, 7
      %v306 = vsel %vm267, %v304, %v305
      %v307 = vrot.slane %v197, 7
      %v308 = vrot.slane %v198, 7
      %v309 = vsel %vm267, %v307, %v308
      %v310 = vrot.slane %v199, 7
      %v311 = vrot.slane %v200, 7
      %v312 = vsel %vm267, %v310, %v311
      %v313 = vrot.slane %v201, 7
      %v314 = vrot.slane %v202, 7
      %v315 = vsel %vm267, %v313, %v314
      %v348 = vrot.slane %v174, 5
      %v349 = vrot.slane %v172, 5
      %v350 = vrot.slane %v176, 5
      %v351 = vrot.slane %v178, 5
      %v352 = vrot.slane %v180, 5
      %v353 = vrot.slane %v182, 5
      %v354 = vrot.slane %v184, 5
      %v355 = vrot.slane %v186, 5
      %v356 = vrot.slane %v188, 5
      %v357 = vrot.slane %v190, 5
      %v358 = vrot.slane %v192, 5
      %v359 = vrot.slane %v194, 5
      %v360 = vrot.slane %v196, 5
      %v361 = vrot.slane %v198, 5
      %v362 = vrot.slane %v200, 5
      %v363 = vrot.slane %v202, 5
      %v380 = vsel %vm267, %v219, %v268
      %v381 = vsel %vm267, %v220, %v271
      %v382 = vsel %vm267, %v221, %v274
      %v383 = vsel %vm267, %v222, %v277
      %v384 = vsel %vm267, %v223, %v280
      %v385 = vsel %vm267, %v224, %v283
      %v386 = vsel %vm267, %v225, %v286
      %v387 = vsel %vm267, %v226, %v289
      %v388 = vsel %vm267, %v227, %v292
      %v389 = vsel %vm267, %v228, %v295
      %v390 = vsel %vm267, %v229, %v298
      %v391 = vsel %vm267, %v230, %v301
      %v392 = vsel %vm267, %v231, %v304
      %v393 = vsel %vm267, %v232, %v307
      %v394 = vsel %vm267, %v233, %v310
      %v395 = vsel %vm267, %v234, %v313
      %v396 = vsel %vm267, %v269, %v348
      %v397 = vsel %vm267, %v272, %v349
      %v398 = vsel %vm267, %v275, %v350
      %v399 = vsel %vm267, %v278, %v351
      %v400 = vsel %vm267, %v281, %v352
      %v401 = vsel %vm267, %v284, %v353
      %v402 = vsel %vm267, %v287, %v354
      %v403 = vsel %vm267, %v290, %v355
      %v404 = vsel %vm267, %v293, %v356
      %v405 = vsel %vm267, %v296, %v357
      %v406 = vsel %vm267, %v299, %v358
      %v407 = vsel %vm267, %v302, %v359
      %v408 = vsel %vm267, %v305, %v360
      %v409 = vsel %vm267, %v308, %v361
      %v410 = vsel %vm267, %v311, %v362
      %v411 = vsel %vm267, %v314, %v363
      %v412 = vld [vmem:[%s1] sm:$0xf]
      %vm443 = vcmask 1046528
      %v444 = vrot.slane %v380, 1
      %v445 = vrot.slane %v270, 1
      %v446 = vsel %vm443, %v444, %v445
      %v447 = vrot.slane %v396, 1
      %v448 = vsel %vm443, %v445, %v447
      %v449 = vrot.slane %v381, 1
      %v450 = vrot.slane %v273, 1
      %v451 = vsel %vm443, %v449, %v450
      %v452 = vrot.slane %v397, 1
      %v453 = vsel %vm443, %v450, %v452
      %v454 = vrot.slane %v382, 1
      %v455 = vrot.slane %v276, 1
      %v456 = vsel %vm443, %v454, %v455
      %v457 = vrot.slane %v398, 1
      %v458 = vsel %vm443, %v455, %v457
      %v459 = vrot.slane %v383, 1
      %v460 = vrot.slane %v279, 1
      %v461 = vsel %vm443, %v459, %v460
      %v462 = vrot.slane %v399, 1
      %v463 = vsel %vm443, %v460, %v462
      %v464 = vrot.slane %v384, 1
      %v465 = vrot.slane %v282, 1
      %v466 = vsel %vm443, %v464, %v465
      %v467 = vrot.slane %v400, 1
      %v468 = vsel %vm443, %v465, %v467
      %v469 = vrot.slane %v385, 1
      %v470 = vrot.slane %v285, 1
      %v471 = vsel %vm443, %v469, %v470
      %v472 = vrot.slane %v401, 1
      %v473 = vsel %vm443, %v470, %v472
      %v474 = vrot.slane %v386, 1
      %v475 = vrot.slane %v288, 1
      %v476 = vsel %vm443, %v474, %v475
      %v477 = vrot.slane %v402, 1
      %v478 = vsel %vm443, %v475, %v477
      %v479 = vrot.slane %v387, 1
      %v480 = vrot.slane %v291, 1
      %v481 = vsel %vm443, %v479, %v480
      %v482 = vrot.slane %v403, 1
      %v483 = vsel %vm443, %v480, %v482
      %v484 = vrot.slane %v388, 1
      %v485 = vrot.slane %v294, 1
      %v486 = vsel %vm443, %v484, %v485
      %v487 = vrot.slane %v404, 1
      %v488 = vsel %vm443, %v485, %v487
      %v489 = vrot.slane %v389, 1
      %v490 = vrot.slane %v297, 1
      %v491 = vsel %vm443, %v489, %v490
      %v492 = vrot.slane %v405, 1
      %v493 = vsel %vm443, %v490, %v492
      %v494 = vrot.slane %v390, 1
      %v495 = vrot.slane %v300, 1
      %v496 = vsel %vm443, %v494, %v495
      %v497 = vrot.slane %v406, 1
      %v498 = vsel %vm443, %v495, %v497
      %v499 = vrot.slane %v391, 1
      %v500 = vrot.slane %v303, 1
      %v501 = vsel %vm443, %v499, %v500
      %v502 = vrot.slane %v407, 1
      %v503 = vsel %vm443, %v500, %v502
      %v504 = vrot.slane %v392, 1
      %v505 = vrot.slane %v306, 1
      %v506 = vsel %vm443, %v504, %v505
      %v507 = vrot.slane %v408, 1
      %v508 = vsel %vm443, %v505, %v507
      %v509 = vrot.slane %v393, 1
      %v510 = vrot.slane %v309, 1
      %v511 = vsel %vm443, %v509, %v510
      %v512 = vrot.slane %v409, 1
      %v513 = vsel %vm443, %v510, %v512
      %v514 = vrot.slane %v394, 1
      %v515 = vrot.slane %v312, 1
      %v516 = vsel %vm443, %v514, %v515
      %v517 = vrot.slane %v410, 1
      %v518 = vsel %vm443, %v515, %v517
      %s519 = scalar_lea.vmem %s1, 4
      %v520 = vld [vmem:[%s519] sm:$0xf]
      %vm521 = vcmask 31744
      %v522 = vsel %vm521, %v446, 0
      %v524 = vsel %vm521, %v448, 0
      %v526 = vsel %vm521, %v451, 0
      %v528 = vsel %vm521, %v453, 0
      %v530 = vsel %vm521, %v456, 0
      %v532 = vsel %vm521, %v458, 0
      %v534 = vsel %vm521, %v461, 0
      %v536 = vsel %vm521, %v463, 0
      %v538 = vsel %vm521, %v466, 0
      %v540 = vsel %vm521, %v468, 0
      %v542 = vsel %vm521, %v471, 0
      %v544 = vsel %vm521, %v473, 0
      %v546 = vsel %vm521, %v476, 0
      %v548 = vsel %vm521, %v478, 0
      %v550 = vsel %vm521, %v481, 0
      %v552 = vsel %vm521, %v483, 0
      %v554 = vsel %vm521, %v486, 0
      %v556 = vsel %vm521, %v488, 0
      %v558 = vsel %vm521, %v491, 0
      %v560 = vsel %vm521, %v493, 0
      %v562 = vsel %vm521, %v496, 0
      %v564 = vsel %vm521, %v498, 0
      %v566 = vsel %vm521, %v501, 0
      %v568 = vsel %vm521, %v503, 0
      %v570 = vsel %vm521, %v506, 0
      %v572 = vsel %vm521, %v508, 0
      %v574 = vsel %vm521, %v511, 0
      %v576 = vsel %vm521, %v513, 0
      %v578 = vsel %vm521, %v516, 0
      %v580 = vsel %vm521, %v518, 0
      %vm582 = vcmask 1043456
      %v584 = vsel %vm582, %v520, 0
      %586 = vmatprep.subr.mxu0 0.0
      %587 = vmatpush1.msra.mxu0 0.0
      %588 = vmatprep.subr.mxu0 0.0
      %589 = vmatpush1.msra.mxu0 0.0
      %590 = vmatprep.subr.mxu0 0.0
      %591 = vmatpush1.msra.mxu0 0.0
      %592 = vmatprep.subr.mxu0 0.0
      %593 = vmatpush1.msra.mxu0 0.0
      %594 = vmatprep.subr.mxu0 0.0
      %595 = vmatpush1.msra.mxu0 0.0
      %596 = vmatprep.subr.mxu0 0.0
      %597 = vmatpush1.msra.mxu0 0.0
      %598 = vmatprep.subr.mxu0 0.0
      %599 = vmatpush1.msra.mxu0 0.0
      %600 = vmatprep.subr.mxu0 0.0
      %601 = vmatpush1.msra.mxu0 0.0
      %602 = vmatprep.subr.mxu0 0.0
      %603 = vmatpush1.msra.mxu0 0.0
      %604 = vmatprep.subr.mxu0 0.0
      %605 = vmatpush1.msra.mxu0 0.0
      %606 = vmatprep.subr.mxu0 0.0
      %607 = vmatpush1.msra.mxu0 0.0
      %608 = vmatprep.subr.mxu0 0.0
      %609 = vmatpush1.msra.mxu0 0.0
      %610 = vmatprep.subr.mxu0 0.0
      %611 = vmatpush1.msra.mxu0 0.0
      %612 = vmatprep.subr.mxu0 0.0
      %613 = vmatpush1.msra.mxu0 0.0
      %614 = vmatprep.subr.mxu0 0.0
      %615 = vmatpush1.msra.mxu0 0.0
      %616 = vmatprep.subr.mxu0 0.0
      %617 = vmatpush1.msra.mxu0 %v584
      %618 = vmatprep.subr.mxu0 0.0
      %619 = vmatpush2.msra.mxu0 0.0
      %620 = vmatprep.subr.mxu0 0.0
      %621 = vmatpush2.msra.mxu0 0.0
      %622 = vmatprep.subr.mxu0 0.0
      %623 = vmatpush2.msra.mxu0 0.0
      %624 = vmatprep.subr.mxu0 0.0
      %625 = vmatpush2.msra.mxu0 0.0
      %626 = vmatprep.subr.mxu0 0.0
      %627 = vmatpush2.msra.mxu0 0.0
      %628 = vmatprep.subr.mxu0 0.0
      %629 = vmatpush2.msra.mxu0 0.0
      %630 = vmatprep.subr.mxu0 0.0
      %631 = vmatpush2.msra.mxu0 0.0
      %632 = vmatprep.subr.mxu0 0.0
      %633 = vmatpush2.msra.mxu0 0.0
      %634 = vmatprep.subr.mxu0 0.0
      %635 = vmatpush2.msra.mxu0 0.0
      %636 = vmatprep.subr.mxu0 0.0
      %637 = vmatpush2.msra.mxu0 0.0
      %638 = vmatprep.subr.mxu0 0.0
      %639 = vmatpush2.msra.mxu0 0.0
      %640 = vmatprep.subr.mxu0 0.0
      %641 = vmatpush2.msra.mxu0 0.0
      %642 = vmatprep.subr.mxu0 0.0
      %643 = vmatpush2.msra.mxu0 0.0
      %644 = vmatprep.subr.mxu0 0.0
      %645 = vmatpush2.msra.mxu0 0.0
      %646 = vmatprep.subr.mxu0 0.0
      %647 = vmatpush2.msra.mxu0 0.0
      %648 = vmatprep.subr.mxu0 0.0
      %649 = vmatpush2.msra.mxu0 0.0
      %650 = vmatprep.mubr.f32.mxu0 0.0
      %651 = vmatmul.mubr.f32.gmra.mxu0 %v522
      %v652 = vpop.f32.mrf.mxu0
      %v653 = vadd.f32 0.0, %v652
      %v654 = vpop.f32.mrf.mxu0
      %655 = vmatprep.mubr.f32.mxu0 0.0
      %656 = vmatmul.mubr.f32.gmra.mxu0 %v524
      %v657 = vpop.f32.mrf.mxu0
      %v658 = vadd.f32 0.0, %v657
      %v659 = vpop.f32.mrf.mxu0
      %660 = vmatprep.mubr.f32.mxu0 0.0
      %661 = vmatmul.mubr.f32.gmra.mxu0 %v526
      %v662 = vpop.f32.mrf.mxu0
      %v663 = vadd.f32 0.0, %v662
      %v664 = vpop.f32.mrf.mxu0
      %665 = vmatprep.mubr.f32.mxu0 0.0
      %666 = vmatmul.mubr.f32.gmra.mxu0 %v528
      %v667 = vpop.f32.mrf.mxu0
      %v668 = vadd.f32 0.0, %v667
      %v669 = vpop.f32.mrf.mxu0
      %670 = vmatprep.mubr.f32.mxu0 0.0
      %671 = vmatmul.mubr.f32.gmra.mxu0 %v522
      %v672 = vpop.f32.mrf.mxu0
      %v673 = vadd.f32 0.0, %v672
      %v674 = vpop.f32.mrf.mxu0
      %675 = vmatprep.mubr.f32.mxu0 0.0
      %676 = vmatmul.mubr.f32.gmra.mxu0 %v524
      %v677 = vpop.f32.mrf.mxu0
      %v678 = vadd.f32 0.0, %v677
      %v679 = vpop.f32.mrf.mxu0
      %680 = vmatprep.mubr.f32.mxu0 0.0
      %681 = vmatmul.mubr.f32.gmra.mxu0 %v530
      %v682 = vpop.f32.mrf.mxu0
      %v683 = vadd.f32 0.0, %v682
      %v684 = vpop.f32.mrf.mxu0
      %685 = vmatprep.mubr.f32.mxu0 0.0
      %686 = vmatmul.mubr.f32.gmra.mxu0 %v532
      %v687 = vpop.f32.mrf.mxu0
      %v688 = vadd.f32 0.0, %v687
      %v689 = vpop.f32.mrf.mxu0
      %690 = vmatprep.mubr.f32.mxu0 0.0
      %691 = vmatmul.mubr.f32.gmra.mxu0 %v534
      %v692 = vpop.f32.mrf.mxu0
      %v693 = vadd.f32 0.0, %v692
      %v694 = vpop.f32.mrf.mxu0
      %695 = vmatprep.mubr.f32.mxu0 0.0
      %696 = vmatmul.mubr.f32.gmra.mxu0 %v536
      %v697 = vpop.f32.mrf.mxu0
      %v698 = vadd.f32 0.0, %v697
      %v699 = vpop.f32.mrf.mxu0
      %700 = vmatprep.mubr.f32.mxu0 0.0
      %701 = vmatmul.mubr.f32.gmra.mxu0 %v538
      %v702 = vpop.f32.mrf.mxu0
      %v703 = vadd.f32 0.0, %v702
      %v704 = vpop.f32.mrf.mxu0
      %705 = vmatprep.mubr.f32.mxu0 0.0
      %706 = vmatmul.mubr.f32.gmra.mxu0 %v540
      %v707 = vpop.f32.mrf.mxu0
      %v708 = vadd.f32 0.0, %v707
      %v709 = vpop.f32.mrf.mxu0
      %710 = vmatprep.mubr.f32.mxu0 0.0
      %711 = vmatmul.mubr.f32.gmra.mxu0 %v542
      %v712 = vpop.f32.mrf.mxu0
      %v713 = vadd.f32 0.0, %v712
      %v714 = vpop.f32.mrf.mxu0
      %715 = vmatprep.mubr.f32.mxu0 0.0
      %716 = vmatmul.mubr.f32.gmra.mxu0 %v544
      %v717 = vpop.f32.mrf.mxu0
      %v718 = vadd.f32 0.0, %v717
      %v719 = vpop.f32.mrf.mxu0
      %720 = vmatprep.mubr.f32.mxu0 0.0
      %721 = vmatmul.mubr.f32.gmra.mxu0 %v546
      %v722 = vpop.f32.mrf.mxu0
      %v723 = vadd.f32 0.0, %v722
      %v724 = vpop.f32.mrf.mxu0
      %725 = vmatprep.mubr.f32.mxu0 0.0
      %726 = vmatmul.mubr.f32.gmra.mxu0 %v548
      %v727 = vpop.f32.mrf.mxu0
      %v728 = vadd.f32 0.0, %v727
      %v729 = vpop.f32.mrf.mxu0
      %730 = vmatprep.mubr.f32.mxu0 0.0
      %731 = vmatmul.mubr.f32.gmra.mxu0 %v550
      %v732 = vpop.f32.mrf.mxu0
      %v733 = vadd.f32 0.0, %v732
      %v734 = vpop.f32.mrf.mxu0
      %735 = vmatprep.mubr.f32.mxu0 0.0
      %736 = vmatmul.mubr.f32.gmra.mxu0 %v552
      %v737 = vpop.f32.mrf.mxu0
      %v738 = vadd.f32 0.0, %v737
      %v739 = vpop.f32.mrf.mxu0
      %740 = vmatprep.mubr.f32.mxu0 0.0
      %741 = vmatmul.mubr.f32.gmra.mxu0 %v554
      %v742 = vpop.f32.mrf.mxu0
      %v743 = vadd.f32 0.0, %v742
      %v744 = vpop.f32.mrf.mxu0
      %745 = vmatprep.mubr.f32.mxu0 0.0
      %746 = vmatmul.mubr.f32.gmra.mxu0 %v556
      %v747 = vpop.f32.mrf.mxu0
      %v748 = vadd.f32 0.0, %v747
      %v749 = vpop.f32.mrf.mxu0
      %750 = vmatprep.mubr.f32.mxu0 0.0
      %751 = vmatmul.mubr.f32.gmra.mxu0 %v558
      %v752 = vpop.f32.mrf.mxu0
      %v753 = vadd.f32 0.0, %v752
      %v754 = vpop.f32.mrf.mxu0
      %755 = vmatprep.mubr.f32.mxu0 0.0
      %756 = vmatmul.mubr.f32.gmra.mxu0 %v560
      %v757 = vpop.f32.mrf.mxu0
      %v758 = vadd.f32 0.0, %v757
      %v759 = vpop.f32.mrf.mxu0
      %760 = vmatprep.mubr.f32.mxu0 0.0
      %761 = vmatmul.mubr.f32.gmra.mxu0 %v562
      %v762 = vpop.f32.mrf.mxu0
      %v763 = vadd.f32 0.0, %v762
      %v764 = vpop.f32.mrf.mxu0
      %765 = vmatprep.mubr.f32.mxu0 0.0
      %766 = vmatmul.mubr.f32.gmra.mxu0 %v564
      %v767 = vpop.f32.mrf.mxu0
      %v768 = vadd.f32 0.0, %v767
      %v769 = vpop.f32.mrf.mxu0
      %770 = vmatprep.mubr.f32.mxu0 0.0
      %771 = vmatmul.mubr.f32.gmra.mxu0 %v566
      %v772 = vpop.f32.mrf.mxu0
      %v773 = vadd.f32 0.0, %v772
      %v774 = vpop.f32.mrf.mxu0
      %775 = vmatprep.mubr.f32.mxu0 0.0
      %776 = vmatmul.mubr.f32.gmra.mxu0 %v568
      %v777 = vpop.f32.mrf.mxu0
      %v778 = vadd.f32 0.0, %v777
      %v779 = vpop.f32.mrf.mxu0
      %780 = vmatprep.mubr.f32.mxu0 0.0
      %781 = vmatmul.mubr.f32.gmra.mxu0 %v570
      %v782 = vpop.f32.mrf.mxu0
      %v783 = vadd.f32 0.0, %v782
      %v784 = vpop.f32.mrf.mxu0
      %785 = vmatprep.mubr.f32.mxu0 0.0
      %786 = vmatmul.mubr.f32.gmra.mxu0 %v572
      %v787 = vpop.f32.mrf.mxu0
      %v788 = vadd.f32 0.0, %v787
      %v789 = vpop.f32.mrf.mxu0
      %790 = vmatprep.mubr.f32.mxu0 0.0
      %791 = vmatmul.mubr.f32.gmra.mxu0 %v574
      %v792 = vpop.f32.mrf.mxu0
      %v793 = vadd.f32 0.0, %v792
      %v794 = vpop.f32.mrf.mxu0
      %795 = vmatprep.mubr.f32.mxu0 0.0
      %796 = vmatmul.mubr.f32.gmra.mxu0 %v576
      %v797 = vpop.f32.mrf.mxu0
      %v798 = vadd.f32 0.0, %v797
      %v799 = vpop.f32.mrf.mxu0
      %800 = vmatprep.mubr.f32.mxu0 0.0
      %801 = vmatmul.mubr.f32.gmra.mxu0 %v578
      %v802 = vpop.f32.mrf.mxu0
      %v803 = vadd.f32 0.0, %v802
      %v804 = vpop.f32.mrf.mxu0
      %805 = vmatprep.mubr.f32.mxu0 0.0
      %806 = vmatmul.mubr.f32.gmra.mxu0 %v580
      %v807 = vpop.f32.mrf.mxu0
      %v808 = vadd.f32 0.0, %v807
      %v809 = vpop.f32.mrf.mxu0
      %810 = vdwg.mxu0
      %v811 = vsel %vm521, %v380, 0
      %v813 = vsel %vm521, %v270, 0
      %v815 = vsel %vm521, %v381, 0
      %v817 = vsel %vm521, %v273, 0
      %v819 = vsel %vm521, %v382, 0
      %v821 = vsel %vm521, %v276, 0
      %v823 = vsel %vm521, %v383, 0
      %v825 = vsel %vm521, %v279, 0
      %v827 = vsel %vm521, %v384, 0
      %v829 = vsel %vm521, %v282, 0
      %v831 = vsel %vm521, %v385, 0
      %v833 = vsel %vm521, %v285, 0
      %v835 = vsel %vm521, %v386, 0
      %v837 = vsel %vm521, %v288, 0
      %v839 = vsel %vm521, %v387, 0
      %v841 = vsel %vm521, %v291, 0
      %v843 = vsel %vm521, %v388, 0
      %v845 = vsel %vm521, %v294, 0
      %v847 = vsel %vm521, %v389, 0
      %v849 = vsel %vm521, %v297, 0
      %v851 = vsel %vm521, %v390, 0
      %v853 = vsel %vm521, %v300, 0
      %v855 = vsel %vm521, %v391, 0
      %v857 = vsel %vm521, %v303, 0
      %v859 = vsel %vm521, %v392, 0
      %v861 = vsel %vm521, %v306, 0
      %v863 = vsel %vm521, %v393, 0
      %v865 = vsel %vm521, %v309, 0
      %v867 = vsel %vm521, %v394, 0
      %v869 = vsel %vm521, %v312, 0
      %v872 = vsel %vm582, %v412, 0
      %874 = vmatprep.subr.mxu0 0.0
      %875 = vmatpush1.msra.mxu0 0.0
      %876 = vmatprep.subr.mxu0 0.0
      %877 = vmatpush1.msra.mxu0 0.0
      %878 = vmatprep.subr.mxu0 0.0
      %879 = vmatpush1.msra.mxu0 0.0
      %880 = vmatprep.subr.mxu0 0.0
      %881 = vmatpush1.msra.mxu0 0.0
      %882 = vmatprep.subr.mxu0 0.0
      %883 = vmatpush1.msra.mxu0 0.0
      %884 = vmatprep.subr.mxu0 0.0
      %885 = vmatpush1.msra.mxu0 0.0
      %886 = vmatprep.subr.mxu0 0.0
      %887 = vmatpush1.msra.mxu0 0.0
      %888 = vmatprep.subr.mxu0 0.0
      %889 = vmatpush1.msra.mxu0 0.0
      %890 = vmatprep.subr.mxu0 0.0
      %891 = vmatpush1.msra.mxu0 0.0
      %892 = vmatprep.subr.mxu0 0.0
      %893 = vmatpush1.msra.mxu0 0.0
      %894 = vmatprep.subr.mxu0 0.0
      %895 = vmatpush1.msra.mxu0 0.0
      %896 = vmatprep.subr.mxu0 0.0
      %897 = vmatpush1.msra.mxu0 0.0
      %898 = vmatprep.subr.mxu0 0.0
      %899 = vmatpush1.msra.mxu0 0.0
      %900 = vmatprep.subr.mxu0 0.0
      %901 = vmatpush1.msra.mxu0 0.0
      %902 = vmatprep.subr.mxu0 0.0
      %903 = vmatpush1.msra.mxu0 0.0
      %904 = vmatprep.subr.mxu0 0.0
      %905 = vmatpush1.msra.mxu0 %v872
      %906 = vmatprep.subr.mxu0 0.0
      %907 = vmatpush2.msra.mxu0 0.0
      %908 = vmatprep.subr.mxu0 0.0
      %909 = vmatpush2.msra.mxu0 0.0
      %910 = vmatprep.subr.mxu0 0.0
      %911 = vmatpush2.msra.mxu0 0.0
      %912 = vmatprep.subr.mxu0 0.0
      %913 = vmatpush2.msra.mxu0 0.0
      %914 = vmatprep.subr.mxu0 0.0
      %915 = vmatpush2.msra.mxu0 0.0
      %916 = vmatprep.subr.mxu0 0.0
      %917 = vmatpush2.msra.mxu0 0.0
      %918 = vmatprep.subr.mxu0 0.0
      %919 = vmatpush2.msra.mxu0 0.0
      %920 = vmatprep.subr.mxu0 0.0
      %921 = vmatpush2.msra.mxu0 0.0
      %922 = vmatprep.subr.mxu0 0.0
      %923 = vmatpush2.msra.mxu0 0.0
      %924 = vmatprep.subr.mxu0 0.0
      %925 = vmatpush2.msra.mxu0 0.0
      %926 = vmatprep.subr.mxu0 0.0
      %927 = vmatpush2.msra.mxu0 0.0
      %928 = vmatprep.subr.mxu0 0.0
      %929 = vmatpush2.msra.mxu0 0.0
      %930 = vmatprep.subr.mxu0 0.0
      %931 = vmatpush2.msra.mxu0 0.0
      %932 = vmatprep.subr.mxu0 0.0
      %933 = vmatpush2.msra.mxu0 0.0
      %934 = vmatprep.subr.mxu0 0.0
      %935 = vmatpush2.msra.mxu0 0.0
      %936 = vmatprep.subr.mxu0 0.0
      %937 = vmatpush2.msra.mxu0 0.0
      %938 = vmatprep.mubr.f32.mxu0 0.0
      %939 = vmatmul.mubr.f32.gmra.mxu0 %v811
      %v940 = vpop.f32.mrf.mxu0
      %v941 = vadd.f32 %v653, %v940
      %v942 = vpop.f32.mrf.mxu0
      %943 = vmatprep.mubr.f32.mxu0 0.0
      %944 = vmatmul.mubr.f32.gmra.mxu0 %v813
      %v945 = vpop.f32.mrf.mxu0
      %v946 = vadd.f32 %v658, %v945
      %v947 = vpop.f32.mrf.mxu0
      %948 = vmatprep.mubr.f32.mxu0 0.0
      %949 = vmatmul.mubr.f32.gmra.mxu0 %v815
      %v950 = vpop.f32.mrf.mxu0
      %v951 = vadd.f32 %v663, %v950
      %v952 = vpop.f32.mrf.mxu0
      %953 = vmatprep.mubr.f32.mxu0 0.0
      %954 = vmatmul.mubr.f32.gmra.mxu0 %v817
      %v955 = vpop.f32.mrf.mxu0
      %v956 = vadd.f32 %v668, %v955
      %v957 = vpop.f32.mrf.mxu0
      %958 = vmatprep.mubr.f32.mxu0 0.0
      %959 = vmatmul.mubr.f32.gmra.mxu0 %v811
      %v960 = vpop.f32.mrf.mxu0
      %v961 = vadd.f32 %v673, %v960
      %v962 = vpop.f32.mrf.mxu0
      %963 = vmatprep.mubr.f32.mxu0 0.0
      %964 = vmatmul.mubr.f32.gmra.mxu0 %v813
      %v965 = vpop.f32.mrf.mxu0
      %v966 = vadd.f32 %v678, %v965
      %v967 = vpop.f32.mrf.mxu0
      %968 = vmatprep.mubr.f32.mxu0 0.0
      %969 = vmatmul.mubr.f32.gmra.mxu0 %v819
      %v970 = vpop.f32.mrf.mxu0
      %v971 = vadd.f32 %v683, %v970
      %v972 = vpop.f32.mrf.mxu0
      %973 = vmatprep.mubr.f32.mxu0 0.0
      %974 = vmatmul.mubr.f32.gmra.mxu0 %v821
      %v975 = vpop.f32.mrf.mxu0
      %v976 = vadd.f32 %v688, %v975
      %v977 = vpop.f32.mrf.mxu0
      %978 = vmatprep.mubr.f32.mxu0 0.0
      %979 = vmatmul.mubr.f32.gmra.mxu0 %v823
      %v980 = vpop.f32.mrf.mxu0
      %v981 = vadd.f32 %v693, %v980
      %v982 = vpop.f32.mrf.mxu0
      %983 = vmatprep.mubr.f32.mxu0 0.0
      %984 = vmatmul.mubr.f32.gmra.mxu0 %v825
      %v985 = vpop.f32.mrf.mxu0
      %v986 = vadd.f32 %v698, %v985
      %v987 = vpop.f32.mrf.mxu0
      %988 = vmatprep.mubr.f32.mxu0 0.0
      %989 = vmatmul.mubr.f32.gmra.mxu0 %v827
      %v990 = vpop.f32.mrf.mxu0
      %v991 = vadd.f32 %v703, %v990
      %v992 = vpop.f32.mrf.mxu0
      %993 = vmatprep.mubr.f32.mxu0 0.0
      %994 = vmatmul.mubr.f32.gmra.mxu0 %v829
      %v995 = vpop.f32.mrf.mxu0
      %v996 = vadd.f32 %v708, %v995
      %v997 = vpop.f32.mrf.mxu0
      %998 = vmatprep.mubr.f32.mxu0 0.0
      %999 = vmatmul.mubr.f32.gmra.mxu0 %v831
      %v1000 = vpop.f32.mrf.mxu0
      %v1001 = vadd.f32 %v713, %v1000
      %v1002 = vpop.f32.mrf.mxu0
      %1003 = vmatprep.mubr.f32.mxu0 0.0
      %1004 = vmatmul.mubr.f32.gmra.mxu0 %v833
      %v1005 = vpop.f32.mrf.mxu0
      %v1006 = vadd.f32 %v718, %v1005
      %v1007 = vpop.f32.mrf.mxu0
      %1008 = vmatprep.mubr.f32.mxu0 0.0
      %1009 = vmatmul.mubr.f32.gmra.mxu0 %v835
      %v1010 = vpop.f32.mrf.mxu0
      %v1011 = vadd.f32 %v723, %v1010
      %v1012 = vpop.f32.mrf.mxu0
      %1013 = vmatprep.mubr.f32.mxu0 0.0
      %1014 = vmatmul.mubr.f32.gmra.mxu0 %v837
      %v1015 = vpop.f32.mrf.mxu0
      %v1016 = vadd.f32 %v728, %v1015
      %v1017 = vpop.f32.mrf.mxu0
      %1018 = vmatprep.mubr.f32.mxu0 0.0
      %1019 = vmatmul.mubr.f32.gmra.mxu0 %v839
      %v1020 = vpop.f32.mrf.mxu0
      %v1021 = vadd.f32 %v733, %v1020
      %v1022 = vpop.f32.mrf.mxu0
      %1023 = vmatprep.mubr.f32.mxu0 0.0
      %1024 = vmatmul.mubr.f32.gmra.mxu0 %v841
      %v1025 = vpop.f32.mrf.mxu0
      %v1026 = vadd.f32 %v738, %v1025
      %v1027 = vpop.f32.mrf.mxu0
      %1028 = vmatprep.mubr.f32.mxu0 0.0
      %1029 = vmatmul.mubr.f32.gmra.mxu0 %v843
      %v1030 = vpop.f32.mrf.mxu0
      %v1031 = vadd.f32 %v743, %v1030
      %v1032 = vpop.f32.mrf.mxu0
      %1033 = vmatprep.mubr.f32.mxu0 0.0
      %1034 = vmatmul.mubr.f32.gmra.mxu0 %v845
      %v1035 = vpop.f32.mrf.mxu0
      %v1036 = vadd.f32 %v748, %v1035
      %v1037 = vpop.f32.mrf.mxu0
      %1038 = vmatprep.mubr.f32.mxu0 0.0
      %1039 = vmatmul.mubr.f32.gmra.mxu0 %v847
      %v1040 = vpop.f32.mrf.mxu0
      %v1041 = vadd.f32 %v753, %v1040
      %v1042 = vpop.f32.mrf.mxu0
      %1043 = vmatprep.mubr.f32.mxu0 0.0
      %1044 = vmatmul.mubr.f32.gmra.mxu0 %v849
      %v1045 = vpop.f32.mrf.mxu0
      %v1046 = vadd.f32 %v758, %v1045
      %v1047 = vpop.f32.mrf.mxu0
      %1048 = vmatprep.mubr.f32.mxu0 0.0
      %1049 = vmatmul.mubr.f32.gmra.mxu0 %v851
      %v1050 = vpop.f32.mrf.mxu0
      %v1051 = vadd.f32 %v763, %v1050
      %v1052 = vpop.f32.mrf.mxu0
      %1053 = vmatprep.mubr.f32.mxu0 0.0
      %1054 = vmatmul.mubr.f32.gmra.mxu0 %v853
      %v1055 = vpop.f32.mrf.mxu0
      %v1056 = vadd.f32 %v768, %v1055
      %v1057 = vpop.f32.mrf.mxu0
      %1058 = vmatprep.mubr.f32.mxu0 0.0
      %1059 = vmatmul.mubr.f32.gmra.mxu0 %v855
      %v1060 = vpop.f32.mrf.mxu0
      %v1061 = vadd.f32 %v773, %v1060
      %v1062 = vpop.f32.mrf.mxu0
      %1063 = vmatprep.mubr.f32.mxu0 0.0
      %1064 = vmatmul.mubr.f32.gmra.mxu0 %v857
      %v1065 = vpop.f32.mrf.mxu0
      %v1066 = vadd.f32 %v778, %v1065
      %v1067 = vpop.f32.mrf.mxu0
      %1068 = vmatprep.mubr.f32.mxu0 0.0
      %1069 = vmatmul.mubr.f32.gmra.mxu0 %v859
      %v1070 = vpop.f32.mrf.mxu0
      %v1071 = vadd.f32 %v783, %v1070
      %v1072 = vpop.f32.mrf.mxu0
      %1073 = vmatprep.mubr.f32.mxu0 0.0
      %1074 = vmatmul.mubr.f32.gmra.mxu0 %v861
      %v1075 = vpop.f32.mrf.mxu0
      %v1076 = vadd.f32 %v788, %v1075
      %v1077 = vpop.f32.mrf.mxu0
      %1078 = vmatprep.mubr.f32.mxu0 0.0
      %1079 = vmatmul.mubr.f32.gmra.mxu0 %v863
      %v1080 = vpop.f32.mrf.mxu0
      %v1081 = vadd.f32 %v793, %v1080
      %v1082 = vpop.f32.mrf.mxu0
      %1083 = vmatprep.mubr.f32.mxu0 0.0
      %1084 = vmatmul.mubr.f32.gmra.mxu0 %v865
      %v1085 = vpop.f32.mrf.mxu0
      %v1086 = vadd.f32 %v798, %v1085
      %v1087 = vpop.f32.mrf.mxu0
      %1088 = vmatprep.mubr.f32.mxu0 0.0
      %1089 = vmatmul.mubr.f32.gmra.mxu0 %v867
      %v1090 = vpop.f32.mrf.mxu0
      %v1091 = vadd.f32 %v803, %v1090
      %v1092 = vpop.f32.mrf.mxu0
      %1093 = vmatprep.mubr.f32.mxu0 0.0
      %1094 = vmatmul.mubr.f32.gmra.mxu0 %v869
      %v1095 = vpop.f32.mrf.mxu0
      %v1096 = vadd.f32 %v808, %v1095
      %v1097 = vpop.f32.mrf.mxu0
      %1098 = vdwg.mxu0
      %vm1099 = vcmask 1045504
      %v1100 = vrot.slane %v380, 2
      %v1101 = vrot.slane %v270, 2
      %v1102 = vsel %vm1099, %v1100, %v1101
      %v1103 = vrot.slane %v396, 2
      %v1104 = vsel %vm1099, %v1101, %v1103
      %v1105 = vrot.slane %v381, 2
      %v1106 = vrot.slane %v273, 2
      %v1107 = vsel %vm1099, %v1105, %v1106
      %v1108 = vrot.slane %v397, 2
      %v1109 = vsel %vm1099, %v1106, %v1108
      %v1110 = vrot.slane %v382, 2
      %v1111 = vrot.slane %v276, 2
      %v1112 = vsel %vm1099, %v1110, %v1111
      %v1113 = vrot.slane %v398, 2
      %v1114 = vsel %vm1099, %v1111, %v1113
      %v1115 = vrot.slane %v383, 2
      %v1116 = vrot.slane %v279, 2
      %v1117 = vsel %vm1099, %v1115, %v1116
      %v1118 = vrot.slane %v399, 2
      %v1119 = vsel %vm1099, %v1116, %v1118
      %v1120 = vrot.slane %v384, 2
      %v1121 = vrot.slane %v282, 2
      %v1122 = vsel %vm1099, %v1120, %v1121
      %v1123 = vrot.slane %v400, 2
      %v1124 = vsel %vm1099, %v1121, %v1123
      %v1125 = vrot.slane %v385, 2
      %v1126 = vrot.slane %v285, 2
      %v1127 = vsel %vm1099, %v1125, %v1126
      %v1128 = vrot.slane %v401, 2
      %v1129 = vsel %vm1099, %v1126, %v1128
      %v1130 = vrot.slane %v386, 2
      %v1131 = vrot.slane %v288, 2
      %v1132 = vsel %vm1099, %v1130, %v1131
      %v1133 = vrot.slane %v402, 2
      %v1134 = vsel %vm1099, %v1131, %v1133
      %v1135 = vrot.slane %v387, 2
      %v1136 = vrot.slane %v291, 2
      %v1137 = vsel %vm1099, %v1135, %v1136
      %v1138 = vrot.slane %v403, 2
      %v1139 = vsel %vm1099, %v1136, %v1138
      %v1140 = vrot.slane %v388, 2
      %v1141 = vrot.slane %v294, 2
      %v1142 = vsel %vm1099, %v1140, %v1141
      %v1143 = vrot.slane %v404, 2
      %v1144 = vsel %vm1099, %v1141, %v1143
      %v1145 = vrot.slane %v389, 2
      %v1146 = vrot.slane %v297, 2
      %v1147 = vsel %vm1099, %v1145, %v1146
      %v1148 = vrot.slane %v405, 2
      %v1149 = vsel %vm1099, %v1146, %v1148
      %v1150 = vrot.slane %v390, 2
      %v1151 = vrot.slane %v300, 2
      %v1152 = vsel %vm1099, %v1150, %v1151
      %v1153 = vrot.slane %v406, 2
      %v1154 = vsel %vm1099, %v1151, %v1153
      %v1155 = vrot.slane %v391, 2
      %v1156 = vrot.slane %v303, 2
      %v1157 = vsel %vm1099, %v1155, %v1156
      %v1158 = vrot.slane %v407, 2
      %v1159 = vsel %vm1099, %v1156, %v1158
      %v1160 = vrot.slane %v392, 2
      %v1161 = vrot.slane %v306, 2
      %v1162 = vsel %vm1099, %v1160, %v1161
      %v1163 = vrot.slane %v408, 2
      %v1164 = vsel %vm1099, %v1161, %v1163
      %v1165 = vrot.slane %v393, 2
      %v1166 = vrot.slane %v309, 2
      %v1167 = vsel %vm1099, %v1165, %v1166
      %v1168 = vrot.slane %v409, 2
      %v1169 = vsel %vm1099, %v1166, %v1168
      %v1170 = vrot.slane %v394, 2
      %v1171 = vrot.slane %v312, 2
      %v1172 = vsel %vm1099, %v1170, %v1171
      %v1173 = vrot.slane %v410, 2
      %v1174 = vsel %vm1099, %v1171, %v1173
      %s1175 = scalar_lea.vmem %s1, 8
      %v1176 = vld [vmem:[%s1175] sm:$0xf]
      %v1177 = vsel %vm521, %v1102, 0
      %v1179 = vsel %vm521, %v1104, 0
      %v1181 = vsel %vm521, %v1107, 0
      %v1183 = vsel %vm521, %v1109, 0
      %v1185 = vsel %vm521, %v1112, 0
      %v1187 = vsel %vm521, %v1114, 0
      %v1189 = vsel %vm521, %v1117, 0
      %v1191 = vsel %vm521, %v1119, 0
      %v1193 = vsel %vm521, %v1122, 0
      %v1195 = vsel %vm521, %v1124, 0
      %v1197 = vsel %vm521, %v1127, 0
      %v1199 = vsel %vm521, %v1129, 0
      %v1201 = vsel %vm521, %v1132, 0
      %v1203 = vsel %vm521, %v1134, 0
      %v1205 = vsel %vm521, %v1137, 0
      %v1207 = vsel %vm521, %v1139, 0
      %v1209 = vsel %vm521, %v1142, 0
      %v1211 = vsel %vm521, %v1144, 0
      %v1213 = vsel %vm521, %v1147, 0
      %v1215 = vsel %vm521, %v1149, 0
      %v1217 = vsel %vm521, %v1152, 0
      %v1219 = vsel %vm521, %v1154, 0
      %v1221 = vsel %vm521, %v1157, 0
      %v1223 = vsel %vm521, %v1159, 0
      %v1225 = vsel %vm521, %v1162, 0
      %v1227 = vsel %vm521, %v1164, 0
      %v1229 = vsel %vm521, %v1167, 0
      %v1231 = vsel %vm521, %v1169, 0
      %v1233 = vsel %vm521, %v1172, 0
      %v1235 = vsel %vm521, %v1174, 0
      %v1238 = vsel %vm582, %v1176, 0
      %1240 = vmatprep.subr.mxu0 0.0
      %1241 = vmatpush1.msra.mxu0 0.0
      %1242 = vmatprep.subr.mxu0 0.0
      %1243 = vmatpush1.msra.mxu0 0.0
      %1244 = vmatprep.subr.mxu0 0.0
      %1245 = vmatpush1.msra.mxu0 0.0
      %1246 = vmatprep.subr.mxu0 0.0
      %1247 = vmatpush1.msra.mxu0 0.0
      %1248 = vmatprep.subr.mxu0 0.0
      %1249 = vmatpush1.msra.mxu0 0.0
      %1250 = vmatprep.subr.mxu0 0.0
      %1251 = vmatpush1.msra.mxu0 0.0
      %1252 = vmatprep.subr.mxu0 0.0
      %1253 = vmatpush1.msra.mxu0 0.0
      %1254 = vmatprep.subr.mxu0 0.0
      %1255 = vmatpush1.msra.mxu0 0.0
      %1256 = vmatprep.subr.mxu0 0.0
      %1257 = vmatpush1.msra.mxu0 0.0
      %1258 = vmatprep.subr.mxu0 0.0
      %1259 = vmatpush1.msra.mxu0 0.0
      %1260 = vmatprep.subr.mxu0 0.0
      %1261 = vmatpush1.msra.mxu0 0.0
      %1262 = vmatprep.subr.mxu0 0.0
      %1263 = vmatpush1.msra.mxu0 0.0
      %1264 = vmatprep.subr.mxu0 0.0
      %1265 = vmatpush1.msra.mxu0 0.0
      %1266 = vmatprep.subr.mxu0 0.0
      %1267 = vmatpush1.msra.mxu0 0.0
      %1268 = vmatprep.subr.mxu0 0.0
      %1269 = vmatpush1.msra.mxu0 0.0
      %1270 = vmatprep.subr.mxu0 0.0
      %1271 = vmatpush1.msra.mxu0 %v1238
      %1272 = vmatprep.subr.mxu0 0.0
      %1273 = vmatpush2.msra.mxu0 0.0
      %1274 = vmatprep.subr.mxu0 0.0
      %1275 = vmatpush2.msra.mxu0 0.0
      %1276 = vmatprep.subr.mxu0 0.0
      %1277 = vmatpush2.msra.mxu0 0.0
      %1278 = vmatprep.subr.mxu0 0.0
      %1279 = vmatpush2.msra.mxu0 0.0
      %1280 = vmatprep.subr.mxu0 0.0
      %1281 = vmatpush2.msra.mxu0 0.0
      %1282 = vmatprep.subr.mxu0 0.0
      %1283 = vmatpush2.msra.mxu0 0.0
      %1284 = vmatprep.subr.mxu0 0.0
      %1285 = vmatpush2.msra.mxu0 0.0
      %1286 = vmatprep.subr.mxu0 0.0
      %1287 = vmatpush2.msra.mxu0 0.0
      %1288 = vmatprep.subr.mxu0 0.0
      %1289 = vmatpush2.msra.mxu0 0.0
      %1290 = vmatprep.subr.mxu0 0.0
      %1291 = vmatpush2.msra.mxu0 0.0
      %1292 = vmatprep.subr.mxu0 0.0
      %1293 = vmatpush2.msra.mxu0 0.0
      %1294 = vmatprep.subr.mxu0 0.0
      %1295 = vmatpush2.msra.mxu0 0.0
      %1296 = vmatprep.subr.mxu0 0.0
      %1297 = vmatpush2.msra.mxu0 0.0
      %1298 = vmatprep.subr.mxu0 0.0
      %1299 = vmatpush2.msra.mxu0 0.0
      %1300 = vmatprep.subr.mxu0 0.0
      %1301 = vmatpush2.msra.mxu0 0.0
      %1302 = vmatprep.subr.mxu0 0.0
      %1303 = vmatpush2.msra.mxu0 0.0
      %1304 = vmatprep.mubr.f32.mxu0 0.0
      %1305 = vmatmul.mubr.f32.gmra.mxu0 %v1177
      %v1306 = vpop.f32.mrf.mxu0
      %v1307 = vadd.f32 0.0, %v1306
      %v1308 = vpop.f32.mrf.mxu0
      %1309 = vmatprep.mubr.f32.mxu0 0.0
      %1310 = vmatmul.mubr.f32.gmra.mxu0 %v1179
      %v1311 = vpop.f32.mrf.mxu0
      %v1312 = vadd.f32 0.0, %v1311
      %v1313 = vpop.f32.mrf.mxu0
      %1314 = vmatprep.mubr.f32.mxu0 0.0
      %1315 = vmatmul.mubr.f32.gmra.mxu0 %v1181
      %v1316 = vpop.f32.mrf.mxu0
      %v1317 = vadd.f32 0.0, %v1316
      %v1318 = vpop.f32.mrf.mxu0
      %1319 = vmatprep.mubr.f32.mxu0 0.0
      %1320 = vmatmul.mubr.f32.gmra.mxu0 %v1183
      %v1321 = vpop.f32.mrf.mxu0
      %v1322 = vadd.f32 0.0, %v1321
      %v1323 = vpop.f32.mrf.mxu0
      %1324 = vmatprep.mubr.f32.mxu0 0.0
      %1325 = vmatmul.mubr.f32.gmra.mxu0 %v1177
      %v1326 = vpop.f32.mrf.mxu0
      %v1327 = vadd.f32 0.0, %v1326
      %v1328 = vpop.f32.mrf.mxu0
      %1329 = vmatprep.mubr.f32.mxu0 0.0
      %1330 = vmatmul.mubr.f32.gmra.mxu0 %v1179
      %v1331 = vpop.f32.mrf.mxu0
      %v1332 = vadd.f32 0.0, %v1331
      %v1333 = vpop.f32.mrf.mxu0
      %1334 = vmatprep.mubr.f32.mxu0 0.0
      %1335 = vmatmul.mubr.f32.gmra.mxu0 %v1185
      %v1336 = vpop.f32.mrf.mxu0
      %v1337 = vadd.f32 0.0, %v1336
      %v1338 = vpop.f32.mrf.mxu0
      %1339 = vmatprep.mubr.f32.mxu0 0.0
      %1340 = vmatmul.mubr.f32.gmra.mxu0 %v1187
      %v1341 = vpop.f32.mrf.mxu0
      %v1342 = vadd.f32 0.0, %v1341
      %v1343 = vpop.f32.mrf.mxu0
      %1344 = vmatprep.mubr.f32.mxu0 0.0
      %1345 = vmatmul.mubr.f32.gmra.mxu0 %v1189
      %v1346 = vpop.f32.mrf.mxu0
      %v1347 = vadd.f32 0.0, %v1346
      %v1348 = vpop.f32.mrf.mxu0
      %1349 = vmatprep.mubr.f32.mxu0 0.0
      %1350 = vmatmul.mubr.f32.gmra.mxu0 %v1191
      %v1351 = vpop.f32.mrf.mxu0
      %v1352 = vadd.f32 0.0, %v1351
      %v1353 = vpop.f32.mrf.mxu0
      %1354 = vmatprep.mubr.f32.mxu0 0.0
      %1355 = vmatmul.mubr.f32.gmra.mxu0 %v1193
      %v1356 = vpop.f32.mrf.mxu0
      %v1357 = vadd.f32 0.0, %v1356
      %v1358 = vpop.f32.mrf.mxu0
      %1359 = vmatprep.mubr.f32.mxu0 0.0
      %1360 = vmatmul.mubr.f32.gmra.mxu0 %v1195
      %v1361 = vpop.f32.mrf.mxu0
      %v1362 = vadd.f32 0.0, %v1361
      %v1363 = vpop.f32.mrf.mxu0
      %1364 = vmatprep.mubr.f32.mxu0 0.0
      %1365 = vmatmul.mubr.f32.gmra.mxu0 %v1197
      %v1366 = vpop.f32.mrf.mxu0
      %v1367 = vadd.f32 0.0, %v1366
      %v1368 = vpop.f32.mrf.mxu0
      %1369 = vmatprep.mubr.f32.mxu0 0.0
      %1370 = vmatmul.mubr.f32.gmra.mxu0 %v1199
      %v1371 = vpop.f32.mrf.mxu0
      %v1372 = vadd.f32 0.0, %v1371
      %v1373 = vpop.f32.mrf.mxu0
      %1374 = vmatprep.mubr.f32.mxu0 0.0
      %1375 = vmatmul.mubr.f32.gmra.mxu0 %v1201
      %v1376 = vpop.f32.mrf.mxu0
      %v1377 = vadd.f32 0.0, %v1376
      %v1378 = vpop.f32.mrf.mxu0
      %1379 = vmatprep.mubr.f32.mxu0 0.0
      %1380 = vmatmul.mubr.f32.gmra.mxu0 %v1203
      %v1381 = vpop.f32.mrf.mxu0
      %v1382 = vadd.f32 0.0, %v1381
      %v1383 = vpop.f32.mrf.mxu0
      %1384 = vmatprep.mubr.f32.mxu0 0.0
      %1385 = vmatmul.mubr.f32.gmra.mxu0 %v1205
      %v1386 = vpop.f32.mrf.mxu0
      %v1387 = vadd.f32 0.0, %v1386
      %v1388 = vpop.f32.mrf.mxu0
      %1389 = vmatprep.mubr.f32.mxu0 0.0
      %1390 = vmatmul.mubr.f32.gmra.mxu0 %v1207
      %v1391 = vpop.f32.mrf.mxu0
      %v1392 = vadd.f32 0.0, %v1391
      %v1393 = vpop.f32.mrf.mxu0
      %1394 = vmatprep.mubr.f32.mxu0 0.0
      %1395 = vmatmul.mubr.f32.gmra.mxu0 %v1209
      %v1396 = vpop.f32.mrf.mxu0
      %v1397 = vadd.f32 0.0, %v1396
      %v1398 = vpop.f32.mrf.mxu0
      %1399 = vmatprep.mubr.f32.mxu0 0.0
      %1400 = vmatmul.mubr.f32.gmra.mxu0 %v1211
      %v1401 = vpop.f32.mrf.mxu0
      %v1402 = vadd.f32 0.0, %v1401
      %v1403 = vpop.f32.mrf.mxu0
      %1404 = vmatprep.mubr.f32.mxu0 0.0
      %1405 = vmatmul.mubr.f32.gmra.mxu0 %v1213
      %v1406 = vpop.f32.mrf.mxu0
      %v1407 = vadd.f32 0.0, %v1406
      %v1408 = vpop.f32.mrf.mxu0
      %1409 = vmatprep.mubr.f32.mxu0 0.0
      %1410 = vmatmul.mubr.f32.gmra.mxu0 %v1215
      %v1411 = vpop.f32.mrf.mxu0
      %v1412 = vadd.f32 0.0, %v1411
      %v1413 = vpop.f32.mrf.mxu0
      %1414 = vmatprep.mubr.f32.mxu0 0.0
      %1415 = vmatmul.mubr.f32.gmra.mxu0 %v1217
      %v1416 = vpop.f32.mrf.mxu0
      %v1417 = vadd.f32 0.0, %v1416
      %v1418 = vpop.f32.mrf.mxu0
      %1419 = vmatprep.mubr.f32.mxu0 0.0
      %1420 = vmatmul.mubr.f32.gmra.mxu0 %v1219
      %v1421 = vpop.f32.mrf.mxu0
      %v1422 = vadd.f32 0.0, %v1421
      %v1423 = vpop.f32.mrf.mxu0
      %1424 = vmatprep.mubr.f32.mxu0 0.0
      %1425 = vmatmul.mubr.f32.gmra.mxu0 %v1221
      %v1426 = vpop.f32.mrf.mxu0
      %v1427 = vadd.f32 0.0, %v1426
      %v1428 = vpop.f32.mrf.mxu0
      %1429 = vmatprep.mubr.f32.mxu0 0.0
      %1430 = vmatmul.mubr.f32.gmra.mxu0 %v1223
      %v1431 = vpop.f32.mrf.mxu0
      %v1432 = vadd.f32 0.0, %v1431
      %v1433 = vpop.f32.mrf.mxu0
      %1434 = vmatprep.mubr.f32.mxu0 0.0
      %1435 = vmatmul.mubr.f32.gmra.mxu0 %v1225
      %v1436 = vpop.f32.mrf.mxu0
      %v1437 = vadd.f32 0.0, %v1436
      %v1438 = vpop.f32.mrf.mxu0
      %1439 = vmatprep.mubr.f32.mxu0 0.0
      %1440 = vmatmul.mubr.f32.gmra.mxu0 %v1227
      %v1441 = vpop.f32.mrf.mxu0
      %v1442 = vadd.f32 0.0, %v1441
      %v1443 = vpop.f32.mrf.mxu0
      %1444 = vmatprep.mubr.f32.mxu0 0.0
      %1445 = vmatmul.mubr.f32.gmra.mxu0 %v1229
      %v1446 = vpop.f32.mrf.mxu0
      %v1447 = vadd.f32 0.0, %v1446
      %v1448 = vpop.f32.mrf.mxu0
      %1449 = vmatprep.mubr.f32.mxu0 0.0
      %1450 = vmatmul.mubr.f32.gmra.mxu0 %v1231
      %v1451 = vpop.f32.mrf.mxu0
      %v1452 = vadd.f32 0.0, %v1451
      %v1453 = vpop.f32.mrf.mxu0
      %1454 = vmatprep.mubr.f32.mxu0 0.0
      %1455 = vmatmul.mubr.f32.gmra.mxu0 %v1233
      %v1456 = vpop.f32.mrf.mxu0
      %v1457 = vadd.f32 0.0, %v1456
      %v1458 = vpop.f32.mrf.mxu0
      %1459 = vmatprep.mubr.f32.mxu0 0.0
      %1460 = vmatmul.mubr.f32.gmra.mxu0 %v1235
      %v1461 = vpop.f32.mrf.mxu0
      %v1462 = vadd.f32 0.0, %v1461
      %v1463 = vpop.f32.mrf.mxu0
      %1464 = vdwg.mxu0
      %v1465 = vadd.f32 %v941, %v1307
      %v1466 = vadd.f32 %v946, %v1312
      %v1467 = vadd.f32 %v951, %v1317
      %v1468 = vadd.f32 %v956, %v1322
      %v1469 = vadd.f32 %v961, %v1327
      %v1470 = vadd.f32 %v966, %v1332
      %v1471 = vadd.f32 %v971, %v1337
      %v1472 = vadd.f32 %v976, %v1342
      %v1473 = vadd.f32 %v981, %v1347
      %v1474 = vadd.f32 %v986, %v1352
      %v1475 = vadd.f32 %v991, %v1357
      %v1476 = vadd.f32 %v996, %v1362
      %v1477 = vadd.f32 %v1001, %v1367
      %v1478 = vadd.f32 %v1006, %v1372
      %v1479 = vadd.f32 %v1011, %v1377
      %v1480 = vadd.f32 %v1016, %v1382
      %v1481 = vadd.f32 %v1021, %v1387
      %v1482 = vadd.f32 %v1026, %v1392
      %v1483 = vadd.f32 %v1031, %v1397
      %v1484 = vadd.f32 %v1036, %v1402
      %v1485 = vadd.f32 %v1041, %v1407
      %v1486 = vadd.f32 %v1046, %v1412
      %v1487 = vadd.f32 %v1051, %v1417
      %v1488 = vadd.f32 %v1056, %v1422
      %v1489 = vadd.f32 %v1061, %v1427
      %v1490 = vadd.f32 %v1066, %v1432
      %v1491 = vadd.f32 %v1071, %v1437
      %v1492 = vadd.f32 %v1076, %v1442
      %v1493 = vadd.f32 %v1081, %v1447
      %v1494 = vadd.f32 %v1086, %v1452
      %v1495 = vadd.f32 %v1091, %v1457
      %v1496 = vadd.f32 %v1096, %v1462
      %s1497 = scalar_lea.vmem %s1, 12
      %v1498 = vld [vmem:[%s1497] sm:$0xf]
      %v1500 = vsel %vm521, %v395, 0
      %v1502 = vsel %vm521, %v315, 0
      %v1505 = vsel %vm582, %v1498, 0
      %1507 = vmatprep.subr.mxu0 0.0
      %1508 = vmatpush1.msra.mxu0 0.0
      %1509 = vmatprep.subr.mxu0 0.0
      %1510 = vmatpush1.msra.mxu0 0.0
      %1511 = vmatprep.subr.mxu0 0.0
      %1512 = vmatpush1.msra.mxu0 0.0
      %1513 = vmatprep.subr.mxu0 0.0
      %1514 = vmatpush1.msra.mxu0 0.0
      %1515 = vmatprep.subr.mxu0 0.0
      %1516 = vmatpush1.msra.mxu0 0.0
      %1517 = vmatprep.subr.mxu0 0.0
      %1518 = vmatpush1.msra.mxu0 0.0
      %1519 = vmatprep.subr.mxu0 0.0
      %1520 = vmatpush1.msra.mxu0 0.0
      %1521 = vmatprep.subr.mxu0 0.0
      %1522 = vmatpush1.msra.mxu0 0.0
      %1523 = vmatprep.subr.mxu0 0.0
      %1524 = vmatpush1.msra.mxu0 0.0
      %1525 = vmatprep.subr.mxu0 0.0
      %1526 = vmatpush1.msra.mxu0 0.0
      %1527 = vmatprep.subr.mxu0 0.0
      %1528 = vmatpush1.msra.mxu0 0.0
      %1529 = vmatprep.subr.mxu0 0.0
      %1530 = vmatpush1.msra.mxu0 0.0
      %1531 = vmatprep.subr.mxu0 0.0
      %1532 = vmatpush1.msra.mxu0 0.0
      %1533 = vmatprep.subr.mxu0 0.0
      %1534 = vmatpush1.msra.mxu0 0.0
      %1535 = vmatprep.subr.mxu0 0.0
      %1536 = vmatpush1.msra.mxu0 0.0
      %1537 = vmatprep.subr.mxu0 0.0
      %1538 = vmatpush1.msra.mxu0 %v1505
      %1539 = vmatprep.subr.mxu0 0.0
      %1540 = vmatpush2.msra.mxu0 0.0
      %1541 = vmatprep.subr.mxu0 0.0
      %1542 = vmatpush2.msra.mxu0 0.0
      %1543 = vmatprep.subr.mxu0 0.0
      %1544 = vmatpush2.msra.mxu0 0.0
      %1545 = vmatprep.subr.mxu0 0.0
      %1546 = vmatpush2.msra.mxu0 0.0
      %1547 = vmatprep.subr.mxu0 0.0
      %1548 = vmatpush2.msra.mxu0 0.0
      %1549 = vmatprep.subr.mxu0 0.0
      %1550 = vmatpush2.msra.mxu0 0.0
      %1551 = vmatprep.subr.mxu0 0.0
      %1552 = vmatpush2.msra.mxu0 0.0
      %1553 = vmatprep.subr.mxu0 0.0
      %1554 = vmatpush2.msra.mxu0 0.0
      %1555 = vmatprep.subr.mxu0 0.0
      %1556 = vmatpush2.msra.mxu0 0.0
      %1557 = vmatprep.subr.mxu0 0.0
      %1558 = vmatpush2.msra.mxu0 0.0
      %1559 = vmatprep.subr.mxu0 0.0
      %1560 = vmatpush2.msra.mxu0 0.0
      %1561 = vmatprep.subr.mxu0 0.0
      %1562 = vmatpush2.msra.mxu0 0.0
      %1563 = vmatprep.subr.mxu0 0.0
      %1564 = vmatpush2.msra.mxu0 0.0
      %1565 = vmatprep.subr.mxu0 0.0
      %1566 = vmatpush2.msra.mxu0 0.0
      %1567 = vmatprep.subr.mxu0 0.0
      %1568 = vmatpush2.msra.mxu0 0.0
      %1569 = vmatprep.subr.mxu0 0.0
      %1570 = vmatpush2.msra.mxu0 0.0
      %1571 = vmatprep.mubr.f32.mxu0 0.0
      %1572 = vmatmul.mubr.f32.gmra.mxu0 %v815
      %v1573 = vpop.f32.mrf.mxu0
      %v1574 = vadd.f32 0.0, %v1573
      %v1575 = vpop.f32.mrf.mxu0
      %1576 = vmatprep.mubr.f32.mxu0 0.0
      %1577 = vmatmul.mubr.f32.gmra.mxu0 %v817
      %v1578 = vpop.f32.mrf.mxu0
      %v1579 = vadd.f32 0.0, %v1578
      %v1580 = vpop.f32.mrf.mxu0
      %1581 = vmatprep.mubr.f32.mxu0 0.0
      %1582 = vmatmul.mubr.f32.gmra.mxu0 %v811
      %v1583 = vpop.f32.mrf.mxu0
      %v1584 = vadd.f32 0.0, %v1583
      %v1585 = vpop.f32.mrf.mxu0
      %1586 = vmatprep.mubr.f32.mxu0 0.0
      %1587 = vmatmul.mubr.f32.gmra.mxu0 %v813
      %v1588 = vpop.f32.mrf.mxu0
      %v1589 = vadd.f32 0.0, %v1588
      %v1590 = vpop.f32.mrf.mxu0
      %1591 = vmatprep.mubr.f32.mxu0 0.0
      %1592 = vmatmul.mubr.f32.gmra.mxu0 %v819
      %v1593 = vpop.f32.mrf.mxu0
      %v1594 = vadd.f32 0.0, %v1593
      %v1595 = vpop.f32.mrf.mxu0
      %1596 = vmatprep.mubr.f32.mxu0 0.0
      %1597 = vmatmul.mubr.f32.gmra.mxu0 %v821
      %v1598 = vpop.f32.mrf.mxu0
      %v1599 = vadd.f32 0.0, %v1598
      %v1600 = vpop.f32.mrf.mxu0
      %1601 = vmatprep.mubr.f32.mxu0 0.0
      %1602 = vmatmul.mubr.f32.gmra.mxu0 %v823
      %v1603 = vpop.f32.mrf.mxu0
      %v1604 = vadd.f32 0.0, %v1603
      %v1605 = vpop.f32.mrf.mxu0
      %1606 = vmatprep.mubr.f32.mxu0 0.0
      %1607 = vmatmul.mubr.f32.gmra.mxu0 %v825
      %v1608 = vpop.f32.mrf.mxu0
      %v1609 = vadd.f32 0.0, %v1608
      %v1610 = vpop.f32.mrf.mxu0
      %1611 = vmatprep.mubr.f32.mxu0 0.0
      %1612 = vmatmul.mubr.f32.gmra.mxu0 %v827
      %v1613 = vpop.f32.mrf.mxu0
      %v1614 = vadd.f32 0.0, %v1613
      %v1615 = vpop.f32.mrf.mxu0
      %1616 = vmatprep.mubr.f32.mxu0 0.0
      %1617 = vmatmul.mubr.f32.gmra.mxu0 %v829
      %v1618 = vpop.f32.mrf.mxu0
      %v1619 = vadd.f32 0.0, %v1618
      %v1620 = vpop.f32.mrf.mxu0
      %1621 = vmatprep.mubr.f32.mxu0 0.0
      %1622 = vmatmul.mubr.f32.gmra.mxu0 %v831
      %v1623 = vpop.f32.mrf.mxu0
      %v1624 = vadd.f32 0.0, %v1623
      %v1625 = vpop.f32.mrf.mxu0
      %1626 = vmatprep.mubr.f32.mxu0 0.0
      %1627 = vmatmul.mubr.f32.gmra.mxu0 %v833
      %v1628 = vpop.f32.mrf.mxu0
      %v1629 = vadd.f32 0.0, %v1628
      %v1630 = vpop.f32.mrf.mxu0
      %1631 = vmatprep.mubr.f32.mxu0 0.0
      %1632 = vmatmul.mubr.f32.gmra.mxu0 %v835
      %v1633 = vpop.f32.mrf.mxu0
      %v1634 = vadd.f32 0.0, %v1633
      %v1635 = vpop.f32.mrf.mxu0
      %1636 = vmatprep.mubr.f32.mxu0 0.0
      %1637 = vmatmul.mubr.f32.gmra.mxu0 %v837
      %v1638 = vpop.f32.mrf.mxu0
      %v1639 = vadd.f32 0.0, %v1638
      %v1640 = vpop.f32.mrf.mxu0
      %1641 = vmatprep.mubr.f32.mxu0 0.0
      %1642 = vmatmul.mubr.f32.gmra.mxu0 %v839
      %v1643 = vpop.f32.mrf.mxu0
      %v1644 = vadd.f32 0.0, %v1643
      %v1645 = vpop.f32.mrf.mxu0
      %1646 = vmatprep.mubr.f32.mxu0 0.0
      %1647 = vmatmul.mubr.f32.gmra.mxu0 %v841
      %v1648 = vpop.f32.mrf.mxu0
      %v1649 = vadd.f32 0.0, %v1648
      %v1650 = vpop.f32.mrf.mxu0
      %1651 = vmatprep.mubr.f32.mxu0 0.0
      %1652 = vmatmul.mubr.f32.gmra.mxu0 %v843
      %v1653 = vpop.f32.mrf.mxu0
      %v1654 = vadd.f32 0.0, %v1653
      %v1655 = vpop.f32.mrf.mxu0
      %1656 = vmatprep.mubr.f32.mxu0 0.0
      %1657 = vmatmul.mubr.f32.gmra.mxu0 %v845
      %v1658 = vpop.f32.mrf.mxu0
      %v1659 = vadd.f32 0.0, %v1658
      %v1660 = vpop.f32.mrf.mxu0
      %1661 = vmatprep.mubr.f32.mxu0 0.0
      %1662 = vmatmul.mubr.f32.gmra.mxu0 %v847
      %v1663 = vpop.f32.mrf.mxu0
      %v1664 = vadd.f32 0.0, %v1663
      %v1665 = vpop.f32.mrf.mxu0
      %1666 = vmatprep.mubr.f32.mxu0 0.0
      %1667 = vmatmul.mubr.f32.gmra.mxu0 %v849
      %v1668 = vpop.f32.mrf.mxu0
      %v1669 = vadd.f32 0.0, %v1668
      %v1670 = vpop.f32.mrf.mxu0
      %1671 = vmatprep.mubr.f32.mxu0 0.0
      %1672 = vmatmul.mubr.f32.gmra.mxu0 %v851
      %v1673 = vpop.f32.mrf.mxu0
      %v1674 = vadd.f32 0.0, %v1673
      %v1675 = vpop.f32.mrf.mxu0
      %1676 = vmatprep.mubr.f32.mxu0 0.0
      %1677 = vmatmul.mubr.f32.gmra.mxu0 %v853
      %v1678 = vpop.f32.mrf.mxu0
      %v1679 = vadd.f32 0.0, %v1678
      %v1680 = vpop.f32.mrf.mxu0
      %1681 = vmatprep.mubr.f32.mxu0 0.0
      %1682 = vmatmul.mubr.f32.gmra.mxu0 %v855
      %v1683 = vpop.f32.mrf.mxu0
      %v1684 = vadd.f32 0.0, %v1683
      %v1685 = vpop.f32.mrf.mxu0
      %1686 = vmatprep.mubr.f32.mxu0 0.0
      %1687 = vmatmul.mubr.f32.gmra.mxu0 %v857
      %v1688 = vpop.f32.mrf.mxu0
      %v1689 = vadd.f32 0.0, %v1688
      %v1690 = vpop.f32.mrf.mxu0
      %1691 = vmatprep.mubr.f32.mxu0 0.0
      %1692 = vmatmul.mubr.f32.gmra.mxu0 %v859
      %v1693 = vpop.f32.mrf.mxu0
      %v1694 = vadd.f32 0.0, %v1693
      %v1695 = vpop.f32.mrf.mxu0
      %1696 = vmatprep.mubr.f32.mxu0 0.0
      %1697 = vmatmul.mubr.f32.gmra.mxu0 %v861
      %v1698 = vpop.f32.mrf.mxu0
      %v1699 = vadd.f32 0.0, %v1698
      %v1700 = vpop.f32.mrf.mxu0
      %1701 = vmatprep.mubr.f32.mxu0 0.0
      %1702 = vmatmul.mubr.f32.gmra.mxu0 %v863
      %v1703 = vpop.f32.mrf.mxu0
      %v1704 = vadd.f32 0.0, %v1703
      %v1705 = vpop.f32.mrf.mxu0
      %1706 = vmatprep.mubr.f32.mxu0 0.0
      %1707 = vmatmul.mubr.f32.gmra.mxu0 %v865
      %v1708 = vpop.f32.mrf.mxu0
      %v1709 = vadd.f32 0.0, %v1708
      %v1710 = vpop.f32.mrf.mxu0
      %1711 = vmatprep.mubr.f32.mxu0 0.0
      %1712 = vmatmul.mubr.f32.gmra.mxu0 %v867
      %v1713 = vpop.f32.mrf.mxu0
      %v1714 = vadd.f32 0.0, %v1713
      %v1715 = vpop.f32.mrf.mxu0
      %1716 = vmatprep.mubr.f32.mxu0 0.0
      %1717 = vmatmul.mubr.f32.gmra.mxu0 %v869
      %v1718 = vpop.f32.mrf.mxu0
      %v1719 = vadd.f32 0.0, %v1718
      %v1720 = vpop.f32.mrf.mxu0
      %1721 = vmatprep.mubr.f32.mxu0 0.0
      %1722 = vmatmul.mubr.f32.gmra.mxu0 %v1500
      %v1723 = vpop.f32.mrf.mxu0
      %v1724 = vadd.f32 0.0, %v1723
      %v1725 = vpop.f32.mrf.mxu0
      %1726 = vmatprep.mubr.f32.mxu0 0.0
      %1727 = vmatmul.mubr.f32.gmra.mxu0 %v1502
      %v1728 = vpop.f32.mrf.mxu0
      %v1729 = vadd.f32 0.0, %v1728
      %v1730 = vpop.f32.mrf.mxu0
      %1731 = vdwg.mxu0
      %v1732 = vadd.f32 %v1465, %v1574
      %v1733 = vadd.f32 %v1466, %v1579
      %v1734 = vadd.f32 %v1467, %v1584
      %v1735 = vadd.f32 %v1468, %v1589
      %v1736 = vadd.f32 %v1469, %v1594
      %v1737 = vadd.f32 %v1470, %v1599
      %v1738 = vadd.f32 %v1471, %v1604
      %v1739 = vadd.f32 %v1472, %v1609
      %v1740 = vadd.f32 %v1473, %v1614
      %v1741 = vadd.f32 %v1474, %v1619
      %v1742 = vadd.f32 %v1475, %v1624
      %v1743 = vadd.f32 %v1476, %v1629
      %v1744 = vadd.f32 %v1477, %v1634
      %v1745 = vadd.f32 %v1478, %v1639
      %v1746 = vadd.f32 %v1479, %v1644
      %v1747 = vadd.f32 %v1480, %v1649
      %v1748 = vadd.f32 %v1481, %v1654
      %v1749 = vadd.f32 %v1482, %v1659
      %v1750 = vadd.f32 %v1483, %v1664
      %v1751 = vadd.f32 %v1484, %v1669
      %v1752 = vadd.f32 %v1485, %v1674
      %v1753 = vadd.f32 %v1486, %v1679
      %v1754 = vadd.f32 %v1487, %v1684
      %v1755 = vadd.f32 %v1488, %v1689
      %v1756 = vadd.f32 %v1489, %v1694
      %v1757 = vadd.f32 %v1490, %v1699
      %v1758 = vadd.f32 %v1491, %v1704
      %v1759 = vadd.f32 %v1492, %v1709
      %v1760 = vadd.f32 %v1493, %v1714
      %v1761 = vadd.f32 %v1494, %v1719
      %v1762 = vadd.f32 %v1495, %v1724
      %v1763 = vadd.f32 %v1496, %v1729
      %v1765 = vrot.slane %v395, 1
      %v1766 = vrot.slane %v315, 1
      %v1767 = vsel %vm443, %v1765, %v1766
      %v1768 = vrot.slane %v411, 1
      %v1769 = vsel %vm443, %v1766, %v1768
      %s1770 = scalar_lea.vmem %s1, 16
      %v1771 = vld [vmem:[%s1770] sm:$0xf]
      %v1772 = vsel %vm521, %v1767, 0
      %v1774 = vsel %vm521, %v1769, 0
      %v1777 = vsel %vm582, %v1771, 0
      %1779 = vmatprep.subr.mxu0 0.0
      %1780 = vmatpush1.msra.mxu0 0.0
      %1781 = vmatprep.subr.mxu0 0.0
      %1782 = vmatpush1.msra.mxu0 0.0
      %1783 = vmatprep.subr.mxu0 0.0
      %1784 = vmatpush1.msra.mxu0 0.0
      %1785 = vmatprep.subr.mxu0 0.0
      %1786 = vmatpush1.msra.mxu0 0.0
      %1787 = vmatprep.subr.mxu0 0.0
      %1788 = vmatpush1.msra.mxu0 0.0
      %1789 = vmatprep.subr.mxu0 0.0
      %1790 = vmatpush1.msra.mxu0 0.0
      %1791 = vmatprep.subr.mxu0 0.0
      %1792 = vmatpush1.msra.mxu0 0.0
      %1793 = vmatprep.subr.mxu0 0.0
      %1794 = vmatpush1.msra.mxu0 0.0
      %1795 = vmatprep.subr.mxu0 0.0
      %1796 = vmatpush1.msra.mxu0 0.0
      %1797 = vmatprep.subr.mxu0 0.0
      %1798 = vmatpush1.msra.mxu0 0.0
      %1799 = vmatprep.subr.mxu0 0.0
      %1800 = vmatpush1.msra.mxu0 0.0
      %1801 = vmatprep.subr.mxu0 0.0
      %1802 = vmatpush1.msra.mxu0 0.0
      %1803 = vmatprep.subr.mxu0 0.0
      %1804 = vmatpush1.msra.mxu0 0.0
      %1805 = vmatprep.subr.mxu0 0.0
      %1806 = vmatpush1.msra.mxu0 0.0
      %1807 = vmatprep.subr.mxu0 0.0
      %1808 = vmatpush1.msra.mxu0 0.0
      %1809 = vmatprep.subr.mxu0 0.0
      %1810 = vmatpush1.msra.mxu0 %v1777
      %1811 = vmatprep.subr.mxu0 0.0
      %1812 = vmatpush2.msra.mxu0 0.0
      %1813 = vmatprep.subr.mxu0 0.0
      %1814 = vmatpush2.msra.mxu0 0.0
      %1815 = vmatprep.subr.mxu0 0.0
      %1816 = vmatpush2.msra.mxu0 0.0
      %1817 = vmatprep.subr.mxu0 0.0
      %1818 = vmatpush2.msra.mxu0 0.0
      %1819 = vmatprep.subr.mxu0 0.0
      %1820 = vmatpush2.msra.mxu0 0.0
      %1821 = vmatprep.subr.mxu0 0.0
      %1822 = vmatpush2.msra.mxu0 0.0
      %1823 = vmatprep.subr.mxu0 0.0
      %1824 = vmatpush2.msra.mxu0 0.0
      %1825 = vmatprep.subr.mxu0 0.0
      %1826 = vmatpush2.msra.mxu0 0.0
      %1827 = vmatprep.subr.mxu0 0.0
      %1828 = vmatpush2.msra.mxu0 0.0
      %1829 = vmatprep.subr.mxu0 0.0
      %1830 = vmatpush2.msra.mxu0 0.0
      %1831 = vmatprep.subr.mxu0 0.0
      %1832 = vmatpush2.msra.mxu0 0.0
      %1833 = vmatprep.subr.mxu0 0.0
      %1834 = vmatpush2.msra.mxu0 0.0
      %1835 = vmatprep.subr.mxu0 0.0
      %1836 = vmatpush2.msra.mxu0 0.0
      %1837 = vmatprep.subr.mxu0 0.0
      %1838 = vmatpush2.msra.mxu0 0.0
      %1839 = vmatprep.subr.mxu0 0.0
      %1840 = vmatpush2.msra.mxu0 0.0
      %1841 = vmatprep.subr.mxu0 0.0
      %1842 = vmatpush2.msra.mxu0 0.0
      %1843 = vmatprep.mubr.f32.mxu0 0.0
      %1844 = vmatmul.mubr.f32.gmra.mxu0 %v526
      %v1845 = vpop.f32.mrf.mxu0
      %v1846 = vadd.f32 0.0, %v1845
      %v1847 = vpop.f32.mrf.mxu0
      %1848 = vmatprep.mubr.f32.mxu0 0.0
      %1849 = vmatmul.mubr.f32.gmra.mxu0 %v528
      %v1850 = vpop.f32.mrf.mxu0
      %v1851 = vadd.f32 0.0, %v1850
      %v1852 = vpop.f32.mrf.mxu0
      %1853 = vmatprep.mubr.f32.mxu0 0.0
      %1854 = vmatmul.mubr.f32.gmra.mxu0 %v522
      %v1855 = vpop.f32.mrf.mxu0
      %v1856 = vadd.f32 0.0, %v1855
      %v1857 = vpop.f32.mrf.mxu0
      %1858 = vmatprep.mubr.f32.mxu0 0.0
      %1859 = vmatmul.mubr.f32.gmra.mxu0 %v524
      %v1860 = vpop.f32.mrf.mxu0
      %v1861 = vadd.f32 0.0, %v1860
      %v1862 = vpop.f32.mrf.mxu0
      %1863 = vmatprep.mubr.f32.mxu0 0.0
      %1864 = vmatmul.mubr.f32.gmra.mxu0 %v530
      %v1865 = vpop.f32.mrf.mxu0
      %v1866 = vadd.f32 0.0, %v1865
      %v1867 = vpop.f32.mrf.mxu0
      %1868 = vmatprep.mubr.f32.mxu0 0.0
      %1869 = vmatmul.mubr.f32.gmra.mxu0 %v532
      %v1870 = vpop.f32.mrf.mxu0
      %v1871 = vadd.f32 0.0, %v1870
      %v1872 = vpop.f32.mrf.mxu0
      %1873 = vmatprep.mubr.f32.mxu0 0.0
      %1874 = vmatmul.mubr.f32.gmra.mxu0 %v534
      %v1875 = vpop.f32.mrf.mxu0
      %v1876 = vadd.f32 0.0, %v1875
      %v1877 = vpop.f32.mrf.mxu0
      %1878 = vmatprep.mubr.f32.mxu0 0.0
      %1879 = vmatmul.mubr.f32.gmra.mxu0 %v536
      %v1880 = vpop.f32.mrf.mxu0
      %v1881 = vadd.f32 0.0, %v1880
      %v1882 = vpop.f32.mrf.mxu0
      %1883 = vmatprep.mubr.f32.mxu0 0.0
      %1884 = vmatmul.mubr.f32.gmra.mxu0 %v538
      %v1885 = vpop.f32.mrf.mxu0
      %v1886 = vadd.f32 0.0, %v1885
      %v1887 = vpop.f32.mrf.mxu0
      %1888 = vmatprep.mubr.f32.mxu0 0.0
      %1889 = vmatmul.mubr.f32.gmra.mxu0 %v540
      %v1890 = vpop.f32.mrf.mxu0
      %v1891 = vadd.f32 0.0, %v1890
      %v1892 = vpop.f32.mrf.mxu0
      %1893 = vmatprep.mubr.f32.mxu0 0.0
      %1894 = vmatmul.mubr.f32.gmra.mxu0 %v542
      %v1895 = vpop.f32.mrf.mxu0
      %v1896 = vadd.f32 0.0, %v1895
      %v1897 = vpop.f32.mrf.mxu0
      %1898 = vmatprep.mubr.f32.mxu0 0.0
      %1899 = vmatmul.mubr.f32.gmra.mxu0 %v544
      %v1900 = vpop.f32.mrf.mxu0
      %v1901 = vadd.f32 0.0, %v1900
      %v1902 = vpop.f32.mrf.mxu0
      %1903 = vmatprep.mubr.f32.mxu0 0.0
      %1904 = vmatmul.mubr.f32.gmra.mxu0 %v546
      %v1905 = vpop.f32.mrf.mxu0
      %v1906 = vadd.f32 0.0, %v1905
      %v1907 = vpop.f32.mrf.mxu0
      %1908 = vmatprep.mubr.f32.mxu0 0.0
      %1909 = vmatmul.mubr.f32.gmra.mxu0 %v548
      %v1910 = vpop.f32.mrf.mxu0
      %v1911 = vadd.f32 0.0, %v1910
      %v1912 = vpop.f32.mrf.mxu0
      %1913 = vmatprep.mubr.f32.mxu0 0.0
      %1914 = vmatmul.mubr.f32.gmra.mxu0 %v550
      %v1915 = vpop.f32.mrf.mxu0
      %v1916 = vadd.f32 0.0, %v1915
      %v1917 = vpop.f32.mrf.mxu0
      %1918 = vmatprep.mubr.f32.mxu0 0.0
      %1919 = vmatmul.mubr.f32.gmra.mxu0 %v552
      %v1920 = vpop.f32.mrf.mxu0
      %v1921 = vadd.f32 0.0, %v1920
      %v1922 = vpop.f32.mrf.mxu0
      %1923 = vmatprep.mubr.f32.mxu0 0.0
      %1924 = vmatmul.mubr.f32.gmra.mxu0 %v554
      %v1925 = vpop.f32.mrf.mxu0
      %v1926 = vadd.f32 0.0, %v1925
      %v1927 = vpop.f32.mrf.mxu0
      %1928 = vmatprep.mubr.f32.mxu0 0.0
      %1929 = vmatmul.mubr.f32.gmra.mxu0 %v556
      %v1930 = vpop.f32.mrf.mxu0
      %v1931 = vadd.f32 0.0, %v1930
      %v1932 = vpop.f32.mrf.mxu0
      %1933 = vmatprep.mubr.f32.mxu0 0.0
      %1934 = vmatmul.mubr.f32.gmra.mxu0 %v558
      %v1935 = vpop.f32.mrf.mxu0
      %v1936 = vadd.f32 0.0, %v1935
      %v1937 = vpop.f32.mrf.mxu0
      %1938 = vmatprep.mubr.f32.mxu0 0.0
      %1939 = vmatmul.mubr.f32.gmra.mxu0 %v560
      %v1940 = vpop.f32.mrf.mxu0
      %v1941 = vadd.f32 0.0, %v1940
      %v1942 = vpop.f32.mrf.mxu0
      %1943 = vmatprep.mubr.f32.mxu0 0.0
      %1944 = vmatmul.mubr.f32.gmra.mxu0 %v562
      %v1945 = vpop.f32.mrf.mxu0
      %v1946 = vadd.f32 0.0, %v1945
      %v1947 = vpop.f32.mrf.mxu0
      %1948 = vmatprep.mubr.f32.mxu0 0.0
      %1949 = vmatmul.mubr.f32.gmra.mxu0 %v564
      %v1950 = vpop.f32.mrf.mxu0
      %v1951 = vadd.f32 0.0, %v1950
      %v1952 = vpop.f32.mrf.mxu0
      %1953 = vmatprep.mubr.f32.mxu0 0.0
      %1954 = vmatmul.mubr.f32.gmra.mxu0 %v566
      %v1955 = vpop.f32.mrf.mxu0
      %v1956 = vadd.f32 0.0, %v1955
      %v1957 = vpop.f32.mrf.mxu0
      %1958 = vmatprep.mubr.f32.mxu0 0.0
      %1959 = vmatmul.mubr.f32.gmra.mxu0 %v568
      %v1960 = vpop.f32.mrf.mxu0
      %v1961 = vadd.f32 0.0, %v1960
      %v1962 = vpop.f32.mrf.mxu0
      %1963 = vmatprep.mubr.f32.mxu0 0.0
      %1964 = vmatmul.mubr.f32.gmra.mxu0 %v570
      %v1965 = vpop.f32.mrf.mxu0
      %v1966 = vadd.f32 0.0, %v1965
      %v1967 = vpop.f32.mrf.mxu0
      %1968 = vmatprep.mubr.f32.mxu0 0.0
      %1969 = vmatmul.mubr.f32.gmra.mxu0 %v572
      %v1970 = vpop.f32.mrf.mxu0
      %v1971 = vadd.f32 0.0, %v1970
      %v1972 = vpop.f32.mrf.mxu0
      %1973 = vmatprep.mubr.f32.mxu0 0.0
      %1974 = vmatmul.mubr.f32.gmra.mxu0 %v574
      %v1975 = vpop.f32.mrf.mxu0
      %v1976 = vadd.f32 0.0, %v1975
      %v1977 = vpop.f32.mrf.mxu0
      %1978 = vmatprep.mubr.f32.mxu0 0.0
      %1979 = vmatmul.mubr.f32.gmra.mxu0 %v576
      %v1980 = vpop.f32.mrf.mxu0
      %v1981 = vadd.f32 0.0, %v1980
      %v1982 = vpop.f32.mrf.mxu0
      %1983 = vmatprep.mubr.f32.mxu0 0.0
      %1984 = vmatmul.mubr.f32.gmra.mxu0 %v578
      %v1985 = vpop.f32.mrf.mxu0
      %v1986 = vadd.f32 0.0, %v1985
      %v1987 = vpop.f32.mrf.mxu0
      %1988 = vmatprep.mubr.f32.mxu0 0.0
      %1989 = vmatmul.mubr.f32.gmra.mxu0 %v580
      %v1990 = vpop.f32.mrf.mxu0
      %v1991 = vadd.f32 0.0, %v1990
      %v1992 = vpop.f32.mrf.mxu0
      %1993 = vmatprep.mubr.f32.mxu0 0.0
      %1994 = vmatmul.mubr.f32.gmra.mxu0 %v1772
      %v1995 = vpop.f32.mrf.mxu0
      %v1996 = vadd.f32 0.0, %v1995
      %v1997 = vpop.f32.mrf.mxu0
      %1998 = vmatprep.mubr.f32.mxu0 0.0
      %1999 = vmatmul.mubr.f32.gmra.mxu0 %v1774
      %v2000 = vpop.f32.mrf.mxu0
      %v2001 = vadd.f32 0.0, %v2000
      %v2002 = vpop.f32.mrf.mxu0
      %2003 = vdwg.mxu0
      %v2004 = vadd.f32 %v1732, %v1846
      %v2005 = vadd.f32 %v1733, %v1851
      %v2006 = vadd.f32 %v1734, %v1856
      %v2007 = vadd.f32 %v1735, %v1861
      %v2008 = vadd.f32 %v1736, %v1866
      %v2009 = vadd.f32 %v1737, %v1871
      %v2010 = vadd.f32 %v1738, %v1876
      %v2011 = vadd.f32 %v1739, %v1881
      %v2012 = vadd.f32 %v1740, %v1886
      %v2013 = vadd.f32 %v1741, %v1891
      %v2014 = vadd.f32 %v1742, %v1896
      %v2015 = vadd.f32 %v1743, %v1901
      %v2016 = vadd.f32 %v1744, %v1906
      %v2017 = vadd.f32 %v1745, %v1911
      %v2018 = vadd.f32 %v1746, %v1916
      %v2019 = vadd.f32 %v1747, %v1921
      %v2020 = vadd.f32 %v1748, %v1926
      %v2021 = vadd.f32 %v1749, %v1931
      %v2022 = vadd.f32 %v1750, %v1936
      %v2023 = vadd.f32 %v1751, %v1941
      %v2024 = vadd.f32 %v1752, %v1946
      %v2025 = vadd.f32 %v1753, %v1951
      %v2026 = vadd.f32 %v1754, %v1956
      %v2027 = vadd.f32 %v1755, %v1961
      %v2028 = vadd.f32 %v1756, %v1966
      %v2029 = vadd.f32 %v1757, %v1971
      %v2030 = vadd.f32 %v1758, %v1976
      %v2031 = vadd.f32 %v1759, %v1981
      %v2032 = vadd.f32 %v1760, %v1986
      %v2033 = vadd.f32 %v1761, %v1991
      %v2034 = vadd.f32 %v1762, %v1996
      %v2035 = vadd.f32 %v1763, %v2001
      %v2036 = vrot.slane %v395, 2
      %v2037 = vrot.slane %v315, 2
      %v2038 = vsel %vm1099, %v2036, %v2037
      %v2039 = vrot.slane %v411, 2
      %v2040 = vsel %vm1099, %v2037, %v2039
      %s2041 = scalar_lea.vmem %s1, 20
      %v2042 = vld [vmem:[%s2041] sm:$0xf]
      %v2043 = vsel %vm521, %v2038, 0
      %v2045 = vsel %vm521, %v2040, 0
      %v2048 = vsel %vm582, %v2042, 0
      %2050 = vmatprep.subr.mxu0 0.0
      %2051 = vmatpush1.msra.mxu0 0.0
      %2052 = vmatprep.subr.mxu0 0.0
      %2053 = vmatpush1.msra.mxu0 0.0
      %2054 = vmatprep.subr.mxu0 0.0
      %2055 = vmatpush1.msra.mxu0 0.0
      %2056 = vmatprep.subr.mxu0 0.0
      %2057 = vmatpush1.msra.mxu0 0.0
      %2058 = vmatprep.subr.mxu0 0.0
      %2059 = vmatpush1.msra.mxu0 0.0
      %2060 = vmatprep.subr.mxu0 0.0
      %2061 = vmatpush1.msra.mxu0 0.0
      %2062 = vmatprep.subr.mxu0 0.0
      %2063 = vmatpush1.msra.mxu0 0.0
      %2064 = vmatprep.subr.mxu0 0.0
      %2065 = vmatpush1.msra.mxu0 0.0
      %2066 = vmatprep.subr.mxu0 0.0
      %2067 = vmatpush1.msra.mxu0 0.0
      %2068 = vmatprep.subr.mxu0 0.0
      %2069 = vmatpush1.msra.mxu0 0.0
      %2070 = vmatprep.subr.mxu0 0.0
      %2071 = vmatpush1.msra.mxu0 0.0
      %2072 = vmatprep.subr.mxu0 0.0
      %2073 = vmatpush1.msra.mxu0 0.0
      %2074 = vmatprep.subr.mxu0 0.0
      %2075 = vmatpush1.msra.mxu0 0.0
      %2076 = vmatprep.subr.mxu0 0.0
      %2077 = vmatpush1.msra.mxu0 0.0
      %2078 = vmatprep.subr.mxu0 0.0
      %2079 = vmatpush1.msra.mxu0 0.0
      %2080 = vmatprep.subr.mxu0 0.0
      %2081 = vmatpush1.msra.mxu0 %v2048
      %2082 = vmatprep.subr.mxu0 0.0
      %2083 = vmatpush2.msra.mxu0 0.0
      %2084 = vmatprep.subr.mxu0 0.0
      %2085 = vmatpush2.msra.mxu0 0.0
      %2086 = vmatprep.subr.mxu0 0.0
      %2087 = vmatpush2.msra.mxu0 0.0
      %2088 = vmatprep.subr.mxu0 0.0
      %2089 = vmatpush2.msra.mxu0 0.0
      %2090 = vmatprep.subr.mxu0 0.0
      %2091 = vmatpush2.msra.mxu0 0.0
      %2092 = vmatprep.subr.mxu0 0.0
      %2093 = vmatpush2.msra.mxu0 0.0
      %2094 = vmatprep.subr.mxu0 0.0
      %2095 = vmatpush2.msra.mxu0 0.0
      %2096 = vmatprep.subr.mxu0 0.0
      %2097 = vmatpush2.msra.mxu0 0.0
      %2098 = vmatprep.subr.mxu0 0.0
      %2099 = vmatpush2.msra.mxu0 0.0
      %2100 = vmatprep.subr.mxu0 0.0
      %2101 = vmatpush2.msra.mxu0 0.0
      %2102 = vmatprep.subr.mxu0 0.0
      %2103 = vmatpush2.msra.mxu0 0.0
      %2104 = vmatprep.subr.mxu0 0.0
      %2105 = vmatpush2.msra.mxu0 0.0
      %2106 = vmatprep.subr.mxu0 0.0
      %2107 = vmatpush2.msra.mxu0 0.0
      %2108 = vmatprep.subr.mxu0 0.0
      %2109 = vmatpush2.msra.mxu0 0.0
      %2110 = vmatprep.subr.mxu0 0.0
      %2111 = vmatpush2.msra.mxu0 0.0
      %2112 = vmatprep.subr.mxu0 0.0
      %2113 = vmatpush2.msra.mxu0 0.0
      %2114 = vmatprep.mubr.f32.mxu0 0.0
      %2115 = vmatmul.mubr.f32.gmra.mxu0 %v1181
      %v2116 = vpop.f32.mrf.mxu0
      %v2117 = vadd.f32 0.0, %v2116
      %v2118 = vpop.f32.mrf.mxu0
      %2119 = vmatprep.mubr.f32.mxu0 0.0
      %2120 = vmatmul.mubr.f32.gmra.mxu0 %v1183
      %v2121 = vpop.f32.mrf.mxu0
      %v2122 = vadd.f32 0.0, %v2121
      %v2123 = vpop.f32.mrf.mxu0
      %2124 = vmatprep.mubr.f32.mxu0 0.0
      %2125 = vmatmul.mubr.f32.gmra.mxu0 %v1177
      %v2126 = vpop.f32.mrf.mxu0
      %v2127 = vadd.f32 0.0, %v2126
      %v2128 = vpop.f32.mrf.mxu0
      %2129 = vmatprep.mubr.f32.mxu0 0.0
      %2130 = vmatmul.mubr.f32.gmra.mxu0 %v1179
      %v2131 = vpop.f32.mrf.mxu0
      %v2132 = vadd.f32 0.0, %v2131
      %v2133 = vpop.f32.mrf.mxu0
      %2134 = vmatprep.mubr.f32.mxu0 0.0
      %2135 = vmatmul.mubr.f32.gmra.mxu0 %v1185
      %v2136 = vpop.f32.mrf.mxu0
      %v2137 = vadd.f32 0.0, %v2136
      %v2138 = vpop.f32.mrf.mxu0
      %2139 = vmatprep.mubr.f32.mxu0 0.0
      %2140 = vmatmul.mubr.f32.gmra.mxu0 %v1187
      %v2141 = vpop.f32.mrf.mxu0
      %v2142 = vadd.f32 0.0, %v2141
      %v2143 = vpop.f32.mrf.mxu0
      %2144 = vmatprep.mubr.f32.mxu0 0.0
      %2145 = vmatmul.mubr.f32.gmra.mxu0 %v1189
      %v2146 = vpop.f32.mrf.mxu0
      %v2147 = vadd.f32 0.0, %v2146
      %v2148 = vpop.f32.mrf.mxu0
      %2149 = vmatprep.mubr.f32.mxu0 0.0
      %2150 = vmatmul.mubr.f32.gmra.mxu0 %v1191
      %v2151 = vpop.f32.mrf.mxu0
      %v2152 = vadd.f32 0.0, %v2151
      %v2153 = vpop.f32.mrf.mxu0
      %2154 = vmatprep.mubr.f32.mxu0 0.0
      %2155 = vmatmul.mubr.f32.gmra.mxu0 %v1193
      %v2156 = vpop.f32.mrf.mxu0
      %v2157 = vadd.f32 0.0, %v2156
      %v2158 = vpop.f32.mrf.mxu0
      %2159 = vmatprep.mubr.f32.mxu0 0.0
      %2160 = vmatmul.mubr.f32.gmra.mxu0 %v1195
      %v2161 = vpop.f32.mrf.mxu0
      %v2162 = vadd.f32 0.0, %v2161
      %v2163 = vpop.f32.mrf.mxu0
      %2164 = vmatprep.mubr.f32.mxu0 0.0
      %2165 = vmatmul.mubr.f32.gmra.mxu0 %v1197
      %v2166 = vpop.f32.mrf.mxu0
      %v2167 = vadd.f32 0.0, %v2166
      %v2168 = vpop.f32.mrf.mxu0
      %2169 = vmatprep.mubr.f32.mxu0 0.0
      %2170 = vmatmul.mubr.f32.gmra.mxu0 %v1199
      %v2171 = vpop.f32.mrf.mxu0
      %v2172 = vadd.f32 0.0, %v2171
      %v2173 = vpop.f32.mrf.mxu0
      %2174 = vmatprep.mubr.f32.mxu0 0.0
      %2175 = vmatmul.mubr.f32.gmra.mxu0 %v1201
      %v2176 = vpop.f32.mrf.mxu0
      %v2177 = vadd.f32 0.0, %v2176
      %v2178 = vpop.f32.mrf.mxu0
      %2179 = vmatprep.mubr.f32.mxu0 0.0
      %2180 = vmatmul.mubr.f32.gmra.mxu0 %v1203
      %v2181 = vpop.f32.mrf.mxu0
      %v2182 = vadd.f32 0.0, %v2181
      %v2183 = vpop.f32.mrf.mxu0
      %2184 = vmatprep.mubr.f32.mxu0 0.0
      %2185 = vmatmul.mubr.f32.gmra.mxu0 %v1205
      %v2186 = vpop.f32.mrf.mxu0
      %v2187 = vadd.f32 0.0, %v2186
      %v2188 = vpop.f32.mrf.mxu0
      %2189 = vmatprep.mubr.f32.mxu0 0.0
      %2190 = vmatmul.mubr.f32.gmra.mxu0 %v1207
      %v2191 = vpop.f32.mrf.mxu0
      %v2192 = vadd.f32 0.0, %v2191
      %v2193 = vpop.f32.mrf.mxu0
      %2194 = vmatprep.mubr.f32.mxu0 0.0
      %2195 = vmatmul.mubr.f32.gmra.mxu0 %v1209
      %v2196 = vpop.f32.mrf.mxu0
      %v2197 = vadd.f32 0.0, %v2196
      %v2198 = vpop.f32.mrf.mxu0
      %2199 = vmatprep.mubr.f32.mxu0 0.0
      %2200 = vmatmul.mubr.f32.gmra.mxu0 %v1211
      %v2201 = vpop.f32.mrf.mxu0
      %v2202 = vadd.f32 0.0, %v2201
      %v2203 = vpop.f32.mrf.mxu0
      %2204 = vmatprep.mubr.f32.mxu0 0.0
      %2205 = vmatmul.mubr.f32.gmra.mxu0 %v1213
      %v2206 = vpop.f32.mrf.mxu0
      %v2207 = vadd.f32 0.0, %v2206
      %v2208 = vpop.f32.mrf.mxu0
      %2209 = vmatprep.mubr.f32.mxu0 0.0
      %2210 = vmatmul.mubr.f32.gmra.mxu0 %v1215
      %v2211 = vpop.f32.mrf.mxu0
      %v2212 = vadd.f32 0.0, %v2211
      %v2213 = vpop.f32.mrf.mxu0
      %2214 = vmatprep.mubr.f32.mxu0 0.0
      %2215 = vmatmul.mubr.f32.gmra.mxu0 %v1217
      %v2216 = vpop.f32.mrf.mxu0
      %v2217 = vadd.f32 0.0, %v2216
      %v2218 = vpop.f32.mrf.mxu0
      %2219 = vmatprep.mubr.f32.mxu0 0.0
      %2220 = vmatmul.mubr.f32.gmra.mxu0 %v1219
      %v2221 = vpop.f32.mrf.mxu0
      %v2222 = vadd.f32 0.0, %v2221
      %v2223 = vpop.f32.mrf.mxu0
      %2224 = vmatprep.mubr.f32.mxu0 0.0
      %2225 = vmatmul.mubr.f32.gmra.mxu0 %v1221
      %v2226 = vpop.f32.mrf.mxu0
      %v2227 = vadd.f32 0.0, %v2226
      %v2228 = vpop.f32.mrf.mxu0
      %2229 = vmatprep.mubr.f32.mxu0 0.0
      %2230 = vmatmul.mubr.f32.gmra.mxu0 %v1223
      %v2231 = vpop.f32.mrf.mxu0
      %v2232 = vadd.f32 0.0, %v2231
      %v2233 = vpop.f32.mrf.mxu0
      %2234 = vmatprep.mubr.f32.mxu0 0.0
      %2235 = vmatmul.mubr.f32.gmra.mxu0 %v1225
      %v2236 = vpop.f32.mrf.mxu0
      %v2237 = vadd.f32 0.0, %v2236
      %v2238 = vpop.f32.mrf.mxu0
      %2239 = vmatprep.mubr.f32.mxu0 0.0
      %2240 = vmatmul.mubr.f32.gmra.mxu0 %v1227
      %v2241 = vpop.f32.mrf.mxu0
      %v2242 = vadd.f32 0.0, %v2241
      %v2243 = vpop.f32.mrf.mxu0
      %2244 = vmatprep.mubr.f32.mxu0 0.0
      %2245 = vmatmul.mubr.f32.gmra.mxu0 %v1229
      %v2246 = vpop.f32.mrf.mxu0
      %v2247 = vadd.f32 0.0, %v2246
      %v2248 = vpop.f32.mrf.mxu0
      %2249 = vmatprep.mubr.f32.mxu0 0.0
      %2250 = vmatmul.mubr.f32.gmra.mxu0 %v1231
      %v2251 = vpop.f32.mrf.mxu0
      %v2252 = vadd.f32 0.0, %v2251
      %v2253 = vpop.f32.mrf.mxu0
      %2254 = vmatprep.mubr.f32.mxu0 0.0
      %2255 = vmatmul.mubr.f32.gmra.mxu0 %v1233
      %v2256 = vpop.f32.mrf.mxu0
      %v2257 = vadd.f32 0.0, %v2256
      %v2258 = vpop.f32.mrf.mxu0
      %2259 = vmatprep.mubr.f32.mxu0 0.0
      %2260 = vmatmul.mubr.f32.gmra.mxu0 %v1235
      %v2261 = vpop.f32.mrf.mxu0
      %v2262 = vadd.f32 0.0, %v2261
      %v2263 = vpop.f32.mrf.mxu0
      %2264 = vmatprep.mubr.f32.mxu0 0.0
      %2265 = vmatmul.mubr.f32.gmra.mxu0 %v2043
      %v2266 = vpop.f32.mrf.mxu0
      %v2267 = vadd.f32 0.0, %v2266
      %v2268 = vpop.f32.mrf.mxu0
      %2269 = vmatprep.mubr.f32.mxu0 0.0
      %2270 = vmatmul.mubr.f32.gmra.mxu0 %v2045
      %v2271 = vpop.f32.mrf.mxu0
      %v2272 = vadd.f32 0.0, %v2271
      %v2273 = vpop.f32.mrf.mxu0
      %2274 = vdwg.mxu0
      %v2275 = vadd.f32 %v2004, %v2117
      %v2276 = vadd.f32 %v2005, %v2122
      %v2277 = vadd.f32 %v2006, %v2127
      %v2278 = vadd.f32 %v2007, %v2132
      %v2279 = vadd.f32 %v2008, %v2137
      %v2280 = vadd.f32 %v2009, %v2142
      %v2281 = vadd.f32 %v2010, %v2147
      %v2282 = vadd.f32 %v2011, %v2152
      %v2283 = vadd.f32 %v2012, %v2157
      %v2284 = vadd.f32 %v2013, %v2162
      %v2285 = vadd.f32 %v2014, %v2167
      %v2286 = vadd.f32 %v2015, %v2172
      %v2287 = vadd.f32 %v2016, %v2177
      %v2288 = vadd.f32 %v2017, %v2182
      %v2289 = vadd.f32 %v2018, %v2187
      %v2290 = vadd.f32 %v2019, %v2192
      %v2291 = vadd.f32 %v2020, %v2197
      %v2292 = vadd.f32 %v2021, %v2202
      %v2293 = vadd.f32 %v2022, %v2207
      %v2294 = vadd.f32 %v2023, %v2212
      %v2295 = vadd.f32 %v2024, %v2217
      %v2296 = vadd.f32 %v2025, %v2222
      %v2297 = vadd.f32 %v2026, %v2227
      %v2298 = vadd.f32 %v2027, %v2232
      %v2299 = vadd.f32 %v2028, %v2237
      %v2300 = vadd.f32 %v2029, %v2242
      %v2301 = vadd.f32 %v2030, %v2247
      %v2302 = vadd.f32 %v2031, %v2252
      %v2303 = vadd.f32 %v2032, %v2257
      %v2304 = vadd.f32 %v2033, %v2262
      %v2305 = vadd.f32 %v2034, %v2267
      %v2306 = vadd.f32 %v2035, %v2272
      %s2307 = scalar_lea.vmem %s1, 24
      %v2308 = vld [vmem:[%s2307] sm:$0xf]
      %v2310 = vsel %vm582, %v2308, 0
      %2312 = vmatprep.subr.mxu0 0.0
      %2313 = vmatpush1.msra.mxu0 0.0
      %2314 = vmatprep.subr.mxu0 0.0
      %2315 = vmatpush1.msra.mxu0 0.0
      %2316 = vmatprep.subr.mxu0 0.0
      %2317 = vmatpush1.msra.mxu0 0.0
      %2318 = vmatprep.subr.mxu0 0.0
      %2319 = vmatpush1.msra.mxu0 0.0
      %2320 = vmatprep.subr.mxu0 0.0
      %2321 = vmatpush1.msra.mxu0 0.0
      %2322 = vmatprep.subr.mxu0 0.0
      %2323 = vmatpush1.msra.mxu0 0.0
      %2324 = vmatprep.subr.mxu0 0.0
      %2325 = vmatpush1.msra.mxu0 0.0
      %2326 = vmatprep.subr.mxu0 0.0
      %2327 = vmatpush1.msra.mxu0 0.0
      %2328 = vmatprep.subr.mxu0 0.0
      %2329 = vmatpush1.msra.mxu0 0.0
      %2330 = vmatprep.subr.mxu0 0.0
      %2331 = vmatpush1.msra.mxu0 0.0
      %2332 = vmatprep.subr.mxu0 0.0
      %2333 = vmatpush1.msra.mxu0 0.0
      %2334 = vmatprep.subr.mxu0 0.0
      %2335 = vmatpush1.msra.mxu0 0.0
      %2336 = vmatprep.subr.mxu0 0.0
      %2337 = vmatpush1.msra.mxu0 0.0
      %2338 = vmatprep.subr.mxu0 0.0
      %2339 = vmatpush1.msra.mxu0 0.0
      %2340 = vmatprep.subr.mxu0 0.0
      %2341 = vmatpush1.msra.mxu0 0.0
      %2342 = vmatprep.subr.mxu0 0.0
      %2343 = vmatpush1.msra.mxu0 %v2310
      %2344 = vmatprep.subr.mxu0 0.0
      %2345 = vmatpush2.msra.mxu0 0.0
      %2346 = vmatprep.subr.mxu0 0.0
      %2347 = vmatpush2.msra.mxu0 0.0
      %2348 = vmatprep.subr.mxu0 0.0
      %2349 = vmatpush2.msra.mxu0 0.0
      %2350 = vmatprep.subr.mxu0 0.0
      %2351 = vmatpush2.msra.mxu0 0.0
      %2352 = vmatprep.subr.mxu0 0.0
      %2353 = vmatpush2.msra.mxu0 0.0
      %2354 = vmatprep.subr.mxu0 0.0
      %2355 = vmatpush2.msra.mxu0 0.0
      %2356 = vmatprep.subr.mxu0 0.0
      %2357 = vmatpush2.msra.mxu0 0.0
      %2358 = vmatprep.subr.mxu0 0.0
      %2359 = vmatpush2.msra.mxu0 0.0
      %2360 = vmatprep.subr.mxu0 0.0
      %2361 = vmatpush2.msra.mxu0 0.0
      %2362 = vmatprep.subr.mxu0 0.0
      %2363 = vmatpush2.msra.mxu0 0.0
      %2364 = vmatprep.subr.mxu0 0.0
      %2365 = vmatpush2.msra.mxu0 0.0
      %2366 = vmatprep.subr.mxu0 0.0
      %2367 = vmatpush2.msra.mxu0 0.0
      %2368 = vmatprep.subr.mxu0 0.0
      %2369 = vmatpush2.msra.mxu0 0.0
      %2370 = vmatprep.subr.mxu0 0.0
      %2371 = vmatpush2.msra.mxu0 0.0
      %2372 = vmatprep.subr.mxu0 0.0
      %2373 = vmatpush2.msra.mxu0 0.0
      %2374 = vmatprep.subr.mxu0 0.0
      %2375 = vmatpush2.msra.mxu0 0.0
      %2376 = vmatprep.mubr.f32.mxu0 0.0
      %2377 = vmatmul.mubr.f32.gmra.mxu0 %v811
      %v2378 = vpop.f32.mrf.mxu0
      %v2379 = vadd.f32 0.0, %v2378
      %v2380 = vpop.f32.mrf.mxu0
      %2381 = vmatprep.mubr.f32.mxu0 0.0
      %2382 = vmatmul.mubr.f32.gmra.mxu0 %v813
      %v2383 = vpop.f32.mrf.mxu0
      %v2384 = vadd.f32 0.0, %v2383
      %v2385 = vpop.f32.mrf.mxu0
      %2386 = vmatprep.mubr.f32.mxu0 0.0
      %2387 = vmatmul.mubr.f32.gmra.mxu0 %v819
      %v2388 = vpop.f32.mrf.mxu0
      %v2389 = vadd.f32 0.0, %v2388
      %v2390 = vpop.f32.mrf.mxu0
      %2391 = vmatprep.mubr.f32.mxu0 0.0
      %2392 = vmatmul.mubr.f32.gmra.mxu0 %v821
      %v2393 = vpop.f32.mrf.mxu0
      %v2394 = vadd.f32 0.0, %v2393
      %v2395 = vpop.f32.mrf.mxu0
      %2396 = vmatprep.mubr.f32.mxu0 0.0
      %2397 = vmatmul.mubr.f32.gmra.mxu0 %v823
      %v2398 = vpop.f32.mrf.mxu0
      %v2399 = vadd.f32 0.0, %v2398
      %v2400 = vpop.f32.mrf.mxu0
      %2401 = vmatprep.mubr.f32.mxu0 0.0
      %2402 = vmatmul.mubr.f32.gmra.mxu0 %v825
      %v2403 = vpop.f32.mrf.mxu0
      %v2404 = vadd.f32 0.0, %v2403
      %v2405 = vpop.f32.mrf.mxu0
      %2406 = vmatprep.mubr.f32.mxu0 0.0
      %2407 = vmatmul.mubr.f32.gmra.mxu0 %v827
      %v2408 = vpop.f32.mrf.mxu0
      %v2409 = vadd.f32 0.0, %v2408
      %v2410 = vpop.f32.mrf.mxu0
      %2411 = vmatprep.mubr.f32.mxu0 0.0
      %2412 = vmatmul.mubr.f32.gmra.mxu0 %v829
      %v2413 = vpop.f32.mrf.mxu0
      %v2414 = vadd.f32 0.0, %v2413
      %v2415 = vpop.f32.mrf.mxu0
      %2416 = vmatprep.mubr.f32.mxu0 0.0
      %2417 = vmatmul.mubr.f32.gmra.mxu0 %v831
      %v2418 = vpop.f32.mrf.mxu0
      %v2419 = vadd.f32 0.0, %v2418
      %v2420 = vpop.f32.mrf.mxu0
      %2421 = vmatprep.mubr.f32.mxu0 0.0
      %2422 = vmatmul.mubr.f32.gmra.mxu0 %v833
      %v2423 = vpop.f32.mrf.mxu0
      %v2424 = vadd.f32 0.0, %v2423
      %v2425 = vpop.f32.mrf.mxu0
      %2426 = vmatprep.mubr.f32.mxu0 0.0
      %2427 = vmatmul.mubr.f32.gmra.mxu0 %v835
      %v2428 = vpop.f32.mrf.mxu0
      %v2429 = vadd.f32 0.0, %v2428
      %v2430 = vpop.f32.mrf.mxu0
      %2431 = vmatprep.mubr.f32.mxu0 0.0
      %2432 = vmatmul.mubr.f32.gmra.mxu0 %v837
      %v2433 = vpop.f32.mrf.mxu0
      %v2434 = vadd.f32 0.0, %v2433
      %v2435 = vpop.f32.mrf.mxu0
      %2436 = vmatprep.mubr.f32.mxu0 0.0
      %2437 = vmatmul.mubr.f32.gmra.mxu0 %v839
      %v2438 = vpop.f32.mrf.mxu0
      %v2439 = vadd.f32 0.0, %v2438
      %v2440 = vpop.f32.mrf.mxu0
      %2441 = vmatprep.mubr.f32.mxu0 0.0
      %2442 = vmatmul.mubr.f32.gmra.mxu0 %v841
      %v2443 = vpop.f32.mrf.mxu0
      %v2444 = vadd.f32 0.0, %v2443
      %v2445 = vpop.f32.mrf.mxu0
      %2446 = vmatprep.mubr.f32.mxu0 0.0
      %2447 = vmatmul.mubr.f32.gmra.mxu0 %v843
      %v2448 = vpop.f32.mrf.mxu0
      %v2449 = vadd.f32 0.0, %v2448
      %v2450 = vpop.f32.mrf.mxu0
      %2451 = vmatprep.mubr.f32.mxu0 0.0
      %2452 = vmatmul.mubr.f32.gmra.mxu0 %v845
      %v2453 = vpop.f32.mrf.mxu0
      %v2454 = vadd.f32 0.0, %v2453
      %v2455 = vpop.f32.mrf.mxu0
      %2456 = vmatprep.mubr.f32.mxu0 0.0
      %2457 = vmatmul.mubr.f32.gmra.mxu0 %v847
      %v2458 = vpop.f32.mrf.mxu0
      %v2459 = vadd.f32 0.0, %v2458
      %v2460 = vpop.f32.mrf.mxu0
      %2461 = vmatprep.mubr.f32.mxu0 0.0
      %2462 = vmatmul.mubr.f32.gmra.mxu0 %v849
      %v2463 = vpop.f32.mrf.mxu0
      %v2464 = vadd.f32 0.0, %v2463
      %v2465 = vpop.f32.mrf.mxu0
      %2466 = vmatprep.mubr.f32.mxu0 0.0
      %2467 = vmatmul.mubr.f32.gmra.mxu0 %v851
      %v2468 = vpop.f32.mrf.mxu0
      %v2469 = vadd.f32 0.0, %v2468
      %v2470 = vpop.f32.mrf.mxu0
      %2471 = vmatprep.mubr.f32.mxu0 0.0
      %2472 = vmatmul.mubr.f32.gmra.mxu0 %v853
      %v2473 = vpop.f32.mrf.mxu0
      %v2474 = vadd.f32 0.0, %v2473
      %v2475 = vpop.f32.mrf.mxu0
      %2476 = vmatprep.mubr.f32.mxu0 0.0
      %2477 = vmatmul.mubr.f32.gmra.mxu0 %v855
      %v2478 = vpop.f32.mrf.mxu0
      %v2479 = vadd.f32 0.0, %v2478
      %v2480 = vpop.f32.mrf.mxu0
      %2481 = vmatprep.mubr.f32.mxu0 0.0
      %2482 = vmatmul.mubr.f32.gmra.mxu0 %v857
      %v2483 = vpop.f32.mrf.mxu0
      %v2484 = vadd.f32 0.0, %v2483
      %v2485 = vpop.f32.mrf.mxu0
      %2486 = vmatprep.mubr.f32.mxu0 0.0
      %2487 = vmatmul.mubr.f32.gmra.mxu0 %v859
      %v2488 = vpop.f32.mrf.mxu0
      %v2489 = vadd.f32 0.0, %v2488
      %v2490 = vpop.f32.mrf.mxu0
      %2491 = vmatprep.mubr.f32.mxu0 0.0
      %2492 = vmatmul.mubr.f32.gmra.mxu0 %v861
      %v2493 = vpop.f32.mrf.mxu0
      %v2494 = vadd.f32 0.0, %v2493
      %v2495 = vpop.f32.mrf.mxu0
      %2496 = vmatprep.mubr.f32.mxu0 0.0
      %2497 = vmatmul.mubr.f32.gmra.mxu0 %v863
      %v2498 = vpop.f32.mrf.mxu0
      %v2499 = vadd.f32 0.0, %v2498
      %v2500 = vpop.f32.mrf.mxu0
      %2501 = vmatprep.mubr.f32.mxu0 0.0
      %2502 = vmatmul.mubr.f32.gmra.mxu0 %v865
      %v2503 = vpop.f32.mrf.mxu0
      %v2504 = vadd.f32 0.0, %v2503
      %v2505 = vpop.f32.mrf.mxu0
      %2506 = vmatprep.mubr.f32.mxu0 0.0
      %2507 = vmatmul.mubr.f32.gmra.mxu0 %v867
      %v2508 = vpop.f32.mrf.mxu0
      %v2509 = vadd.f32 0.0, %v2508
      %v2510 = vpop.f32.mrf.mxu0
      %2511 = vmatprep.mubr.f32.mxu0 0.0
      %2512 = vmatmul.mubr.f32.gmra.mxu0 %v869
      %v2513 = vpop.f32.mrf.mxu0
      %v2514 = vadd.f32 0.0, %v2513
      %v2515 = vpop.f32.mrf.mxu0
      %2516 = vmatprep.mubr.f32.mxu0 0.0
      %2517 = vmatmul.mubr.f32.gmra.mxu0 %v1500
      %v2518 = vpop.f32.mrf.mxu0
      %v2519 = vadd.f32 0.0, %v2518
      %v2520 = vpop.f32.mrf.mxu0
      %2521 = vmatprep.mubr.f32.mxu0 0.0
      %2522 = vmatmul.mubr.f32.gmra.mxu0 %v1502
      %v2523 = vpop.f32.mrf.mxu0
      %v2524 = vadd.f32 0.0, %v2523
      %v2525 = vpop.f32.mrf.mxu0
      %2526 = vmatprep.mubr.f32.mxu0 0.0
      %2527 = vmatmul.mubr.f32.gmra.mxu0 %v867
      %v2528 = vpop.f32.mrf.mxu0
      %v2529 = vadd.f32 0.0, %v2528
      %v2530 = vpop.f32.mrf.mxu0
      %2531 = vmatprep.mubr.f32.mxu0 0.0
      %2532 = vmatmul.mubr.f32.gmra.mxu0 %v869
      %v2533 = vpop.f32.mrf.mxu0
      %v2534 = vadd.f32 0.0, %v2533
      %v2535 = vpop.f32.mrf.mxu0
      %2536 = vdwg.mxu0
      %v2537 = vadd.f32 %v2275, %v2379
      %v2538 = vadd.f32 %v2276, %v2384
      %v2539 = vadd.f32 %v2277, %v2389
      %v2540 = vadd.f32 %v2278, %v2394
      %v2541 = vadd.f32 %v2279, %v2399
      %v2542 = vadd.f32 %v2280, %v2404
      %v2543 = vadd.f32 %v2281, %v2409
      %v2544 = vadd.f32 %v2282, %v2414
      %v2545 = vadd.f32 %v2283, %v2419
      %v2546 = vadd.f32 %v2284, %v2424
      %v2547 = vadd.f32 %v2285, %v2429
      %v2548 = vadd.f32 %v2286, %v2434
      %v2549 = vadd.f32 %v2287, %v2439
      %v2550 = vadd.f32 %v2288, %v2444
      %v2551 = vadd.f32 %v2289, %v2449
      %v2552 = vadd.f32 %v2290, %v2454
      %v2553 = vadd.f32 %v2291, %v2459
      %v2554 = vadd.f32 %v2292, %v2464
      %v2555 = vadd.f32 %v2293, %v2469
      %v2556 = vadd.f32 %v2294, %v2474
      %v2557 = vadd.f32 %v2295, %v2479
      %v2558 = vadd.f32 %v2296, %v2484
      %v2559 = vadd.f32 %v2297, %v2489
      %v2560 = vadd.f32 %v2298, %v2494
      %v2561 = vadd.f32 %v2299, %v2499
      %v2562 = vadd.f32 %v2300, %v2504
      %v2563 = vadd.f32 %v2301, %v2509
      %v2564 = vadd.f32 %v2302, %v2514
      %v2565 = vadd.f32 %v2303, %v2519
      %v2566 = vadd.f32 %v2304, %v2524
      %v2567 = vadd.f32 %v2305, %v2529
      %v2568 = vadd.f32 %v2306, %v2534
      %s2569 = scalar_lea.vmem %s1, 28
      %v2570 = vld [vmem:[%s2569] sm:$0xf]
      %v2572 = vsel %vm582, %v2570, 0
      %2574 = vmatprep.subr.mxu0 0.0
      %2575 = vmatpush1.msra.mxu0 0.0
      %2576 = vmatprep.subr.mxu0 0.0
      %2577 = vmatpush1.msra.mxu0 0.0
      %2578 = vmatprep.subr.mxu0 0.0
      %2579 = vmatpush1.msra.mxu0 0.0
      %2580 = vmatprep.subr.mxu0 0.0
      %2581 = vmatpush1.msra.mxu0 0.0
      %2582 = vmatprep.subr.mxu0 0.0
      %2583 = vmatpush1.msra.mxu0 0.0
      %2584 = vmatprep.subr.mxu0 0.0
      %2585 = vmatpush1.msra.mxu0 0.0
      %2586 = vmatprep.subr.mxu0 0.0
      %2587 = vmatpush1.msra.mxu0 0.0
      %2588 = vmatprep.subr.mxu0 0.0
      %2589 = vmatpush1.msra.mxu0 0.0
      %2590 = vmatprep.subr.mxu0 0.0
      %2591 = vmatpush1.msra.mxu0 0.0
      %2592 = vmatprep.subr.mxu0 0.0
      %2593 = vmatpush1.msra.mxu0 0.0
      %2594 = vmatprep.subr.mxu0 0.0
      %2595 = vmatpush1.msra.mxu0 0.0
      %2596 = vmatprep.subr.mxu0 0.0
      %2597 = vmatpush1.msra.mxu0 0.0
      %2598 = vmatprep.subr.mxu0 0.0
      %2599 = vmatpush1.msra.mxu0 0.0
      %2600 = vmatprep.subr.mxu0 0.0
      %2601 = vmatpush1.msra.mxu0 0.0
      %2602 = vmatprep.subr.mxu0 0.0
      %2603 = vmatpush1.msra.mxu0 0.0
      %2604 = vmatprep.subr.mxu0 0.0
      %2605 = vmatpush1.msra.mxu0 %v2572
      %2606 = vmatprep.subr.mxu0 0.0
      %2607 = vmatpush2.msra.mxu0 0.0
      %2608 = vmatprep.subr.mxu0 0.0
      %2609 = vmatpush2.msra.mxu0 0.0
      %2610 = vmatprep.subr.mxu0 0.0
      %2611 = vmatpush2.msra.mxu0 0.0
      %2612 = vmatprep.subr.mxu0 0.0
      %2613 = vmatpush2.msra.mxu0 0.0
      %2614 = vmatprep.subr.mxu0 0.0
      %2615 = vmatpush2.msra.mxu0 0.0
      %2616 = vmatprep.subr.mxu0 0.0
      %2617 = vmatpush2.msra.mxu0 0.0
      %2618 = vmatprep.subr.mxu0 0.0
      %2619 = vmatpush2.msra.mxu0 0.0
      %2620 = vmatprep.subr.mxu0 0.0
      %2621 = vmatpush2.msra.mxu0 0.0
      %2622 = vmatprep.subr.mxu0 0.0
      %2623 = vmatpush2.msra.mxu0 0.0
      %2624 = vmatprep.subr.mxu0 0.0
      %2625 = vmatpush2.msra.mxu0 0.0
      %2626 = vmatprep.subr.mxu0 0.0
      %2627 = vmatpush2.msra.mxu0 0.0
      %2628 = vmatprep.subr.mxu0 0.0
      %2629 = vmatpush2.msra.mxu0 0.0
      %2630 = vmatprep.subr.mxu0 0.0
      %2631 = vmatpush2.msra.mxu0 0.0
      %2632 = vmatprep.subr.mxu0 0.0
      %2633 = vmatpush2.msra.mxu0 0.0
      %2634 = vmatprep.subr.mxu0 0.0
      %2635 = vmatpush2.msra.mxu0 0.0
      %2636 = vmatprep.subr.mxu0 0.0
      %2637 = vmatpush2.msra.mxu0 0.0
      %2638 = vmatprep.mubr.f32.mxu0 0.0
      %2639 = vmatmul.mubr.f32.gmra.mxu0 %v522
      %v2640 = vpop.f32.mrf.mxu0
      %v2641 = vadd.f32 0.0, %v2640
      %v2642 = vpop.f32.mrf.mxu0
      %2643 = vmatprep.mubr.f32.mxu0 0.0
      %2644 = vmatmul.mubr.f32.gmra.mxu0 %v524
      %v2645 = vpop.f32.mrf.mxu0
      %v2646 = vadd.f32 0.0, %v2645
      %v2647 = vpop.f32.mrf.mxu0
      %2648 = vmatprep.mubr.f32.mxu0 0.0
      %2649 = vmatmul.mubr.f32.gmra.mxu0 %v530
      %v2650 = vpop.f32.mrf.mxu0
      %v2651 = vadd.f32 0.0, %v2650
      %v2652 = vpop.f32.mrf.mxu0
      %2653 = vmatprep.mubr.f32.mxu0 0.0
      %2654 = vmatmul.mubr.f32.gmra.mxu0 %v532
      %v2655 = vpop.f32.mrf.mxu0
      %v2656 = vadd.f32 0.0, %v2655
      %v2657 = vpop.f32.mrf.mxu0
      %2658 = vmatprep.mubr.f32.mxu0 0.0
      %2659 = vmatmul.mubr.f32.gmra.mxu0 %v534
      %v2660 = vpop.f32.mrf.mxu0
      %v2661 = vadd.f32 0.0, %v2660
      %v2662 = vpop.f32.mrf.mxu0
      %2663 = vmatprep.mubr.f32.mxu0 0.0
      %2664 = vmatmul.mubr.f32.gmra.mxu0 %v536
      %v2665 = vpop.f32.mrf.mxu0
      %v2666 = vadd.f32 0.0, %v2665
      %v2667 = vpop.f32.mrf.mxu0
      %2668 = vmatprep.mubr.f32.mxu0 0.0
      %2669 = vmatmul.mubr.f32.gmra.mxu0 %v538
      %v2670 = vpop.f32.mrf.mxu0
      %v2671 = vadd.f32 0.0, %v2670
      %v2672 = vpop.f32.mrf.mxu0
      %2673 = vmatprep.mubr.f32.mxu0 0.0
      %2674 = vmatmul.mubr.f32.gmra.mxu0 %v540
      %v2675 = vpop.f32.mrf.mxu0
      %v2676 = vadd.f32 0.0, %v2675
      %v2677 = vpop.f32.mrf.mxu0
      %2678 = vmatprep.mubr.f32.mxu0 0.0
      %2679 = vmatmul.mubr.f32.gmra.mxu0 %v542
      %v2680 = vpop.f32.mrf.mxu0
      %v2681 = vadd.f32 0.0, %v2680
      %v2682 = vpop.f32.mrf.mxu0
      %2683 = vmatprep.mubr.f32.mxu0 0.0
      %2684 = vmatmul.mubr.f32.gmra.mxu0 %v544
      %v2685 = vpop.f32.mrf.mxu0
      %v2686 = vadd.f32 0.0, %v2685
      %v2687 = vpop.f32.mrf.mxu0
      %2688 = vmatprep.mubr.f32.mxu0 0.0
      %2689 = vmatmul.mubr.f32.gmra.mxu0 %v546
      %v2690 = vpop.f32.mrf.mxu0
      %v2691 = vadd.f32 0.0, %v2690
      %v2692 = vpop.f32.mrf.mxu0
      %2693 = vmatprep.mubr.f32.mxu0 0.0
      %2694 = vmatmul.mubr.f32.gmra.mxu0 %v548
      %v2695 = vpop.f32.mrf.mxu0
      %v2696 = vadd.f32 0.0, %v2695
      %v2697 = vpop.f32.mrf.mxu0
      %2698 = vmatprep.mubr.f32.mxu0 0.0
      %2699 = vmatmul.mubr.f32.gmra.mxu0 %v550
      %v2700 = vpop.f32.mrf.mxu0
      %v2701 = vadd.f32 0.0, %v2700
      %v2702 = vpop.f32.mrf.mxu0
      %2703 = vmatprep.mubr.f32.mxu0 0.0
      %2704 = vmatmul.mubr.f32.gmra.mxu0 %v552
      %v2705 = vpop.f32.mrf.mxu0
      %v2706 = vadd.f32 0.0, %v2705
      %v2707 = vpop.f32.mrf.mxu0
      %2708 = vmatprep.mubr.f32.mxu0 0.0
      %2709 = vmatmul.mubr.f32.gmra.mxu0 %v554
      %v2710 = vpop.f32.mrf.mxu0
      %v2711 = vadd.f32 0.0, %v2710
      %v2712 = vpop.f32.mrf.mxu0
      %2713 = vmatprep.mubr.f32.mxu0 0.0
      %2714 = vmatmul.mubr.f32.gmra.mxu0 %v556
      %v2715 = vpop.f32.mrf.mxu0
      %v2716 = vadd.f32 0.0, %v2715
      %v2717 = vpop.f32.mrf.mxu0
      %2718 = vmatprep.mubr.f32.mxu0 0.0
      %2719 = vmatmul.mubr.f32.gmra.mxu0 %v558
      %v2720 = vpop.f32.mrf.mxu0
      %v2721 = vadd.f32 0.0, %v2720
      %v2722 = vpop.f32.mrf.mxu0
      %2723 = vmatprep.mubr.f32.mxu0 0.0
      %2724 = vmatmul.mubr.f32.gmra.mxu0 %v560
      %v2725 = vpop.f32.mrf.mxu0
      %v2726 = vadd.f32 0.0, %v2725
      %v2727 = vpop.f32.mrf.mxu0
      %2728 = vmatprep.mubr.f32.mxu0 0.0
      %2729 = vmatmul.mubr.f32.gmra.mxu0 %v562
      %v2730 = vpop.f32.mrf.mxu0
      %v2731 = vadd.f32 0.0, %v2730
      %v2732 = vpop.f32.mrf.mxu0
      %2733 = vmatprep.mubr.f32.mxu0 0.0
      %2734 = vmatmul.mubr.f32.gmra.mxu0 %v564
      %v2735 = vpop.f32.mrf.mxu0
      %v2736 = vadd.f32 0.0, %v2735
      %v2737 = vpop.f32.mrf.mxu0
      %2738 = vmatprep.mubr.f32.mxu0 0.0
      %2739 = vmatmul.mubr.f32.gmra.mxu0 %v566
      %v2740 = vpop.f32.mrf.mxu0
      %v2741 = vadd.f32 0.0, %v2740
      %v2742 = vpop.f32.mrf.mxu0
      %2743 = vmatprep.mubr.f32.mxu0 0.0
      %2744 = vmatmul.mubr.f32.gmra.mxu0 %v568
      %v2745 = vpop.f32.mrf.mxu0
      %v2746 = vadd.f32 0.0, %v2745
      %v2747 = vpop.f32.mrf.mxu0
      %2748 = vmatprep.mubr.f32.mxu0 0.0
      %2749 = vmatmul.mubr.f32.gmra.mxu0 %v570
      %v2750 = vpop.f32.mrf.mxu0
      %v2751 = vadd.f32 0.0, %v2750
      %v2752 = vpop.f32.mrf.mxu0
      %2753 = vmatprep.mubr.f32.mxu0 0.0
      %2754 = vmatmul.mubr.f32.gmra.mxu0 %v572
      %v2755 = vpop.f32.mrf.mxu0
      %v2756 = vadd.f32 0.0, %v2755
      %v2757 = vpop.f32.mrf.mxu0
      %2758 = vmatprep.mubr.f32.mxu0 0.0
      %2759 = vmatmul.mubr.f32.gmra.mxu0 %v574
      %v2760 = vpop.f32.mrf.mxu0
      %v2761 = vadd.f32 0.0, %v2760
      %v2762 = vpop.f32.mrf.mxu0
      %2763 = vmatprep.mubr.f32.mxu0 0.0
      %2764 = vmatmul.mubr.f32.gmra.mxu0 %v576
      %v2765 = vpop.f32.mrf.mxu0
      %v2766 = vadd.f32 0.0, %v2765
      %v2767 = vpop.f32.mrf.mxu0
      %2768 = vmatprep.mubr.f32.mxu0 0.0
      %2769 = vmatmul.mubr.f32.gmra.mxu0 %v578
      %v2770 = vpop.f32.mrf.mxu0
      %v2771 = vadd.f32 0.0, %v2770
      %v2772 = vpop.f32.mrf.mxu0
      %2773 = vmatprep.mubr.f32.mxu0 0.0
      %2774 = vmatmul.mubr.f32.gmra.mxu0 %v580
      %v2775 = vpop.f32.mrf.mxu0
      %v2776 = vadd.f32 0.0, %v2775
      %v2777 = vpop.f32.mrf.mxu0
      %2778 = vmatprep.mubr.f32.mxu0 0.0
      %2779 = vmatmul.mubr.f32.gmra.mxu0 %v1772
      %v2780 = vpop.f32.mrf.mxu0
      %v2781 = vadd.f32 0.0, %v2780
      %v2782 = vpop.f32.mrf.mxu0
      %2783 = vmatprep.mubr.f32.mxu0 0.0
      %2784 = vmatmul.mubr.f32.gmra.mxu0 %v1774
      %v2785 = vpop.f32.mrf.mxu0
      %v2786 = vadd.f32 0.0, %v2785
      %v2787 = vpop.f32.mrf.mxu0
      %2788 = vmatprep.mubr.f32.mxu0 0.0
      %2789 = vmatmul.mubr.f32.gmra.mxu0 %v578
      %v2790 = vpop.f32.mrf.mxu0
      %v2791 = vadd.f32 0.0, %v2790
      %v2792 = vpop.f32.mrf.mxu0
      %2793 = vmatprep.mubr.f32.mxu0 0.0
      %2794 = vmatmul.mubr.f32.gmra.mxu0 %v580
      %v2795 = vpop.f32.mrf.mxu0
      %v2796 = vadd.f32 0.0, %v2795
      %v2797 = vpop.f32.mrf.mxu0
      %2798 = vdwg.mxu0
      %v2799 = vadd.f32 %v2537, %v2641
      %v2800 = vadd.f32 %v2538, %v2646
      %v2801 = vadd.f32 %v2539, %v2651
      %v2802 = vadd.f32 %v2540, %v2656
      %v2803 = vadd.f32 %v2541, %v2661
      %v2804 = vadd.f32 %v2542, %v2666
      %v2805 = vadd.f32 %v2543, %v2671
      %v2806 = vadd.f32 %v2544, %v2676
      %v2807 = vadd.f32 %v2545, %v2681
      %v2808 = vadd.f32 %v2546, %v2686
      %v2809 = vadd.f32 %v2547, %v2691
      %v2810 = vadd.f32 %v2548, %v2696
      %v2811 = vadd.f32 %v2549, %v2701
      %v2812 = vadd.f32 %v2550, %v2706
      %v2813 = vadd.f32 %v2551, %v2711
      %v2814 = vadd.f32 %v2552, %v2716
      %v2815 = vadd.f32 %v2553, %v2721
      %v2816 = vadd.f32 %v2554, %v2726
      %v2817 = vadd.f32 %v2555, %v2731
      %v2818 = vadd.f32 %v2556, %v2736
      %v2819 = vadd.f32 %v2557, %v2741
      %v2820 = vadd.f32 %v2558, %v2746
      %v2821 = vadd.f32 %v2559, %v2751
      %v2822 = vadd.f32 %v2560, %v2756
      %v2823 = vadd.f32 %v2561, %v2761
      %v2824 = vadd.f32 %v2562, %v2766
      %v2825 = vadd.f32 %v2563, %v2771
      %v2826 = vadd.f32 %v2564, %v2776
      %v2827 = vadd.f32 %v2565, %v2781
      %v2828 = vadd.f32 %v2566, %v2786
      %v2829 = vadd.f32 %v2567, %v2791
      %v2830 = vadd.f32 %v2568, %v2796
      %s2831 = scalar_lea.vmem %s1, 32
      %v2832 = vld [vmem:[%s2831] sm:$0xf]
      %v2834 = vsel %vm582, %v2832, 0
      %2836 = vmatprep.subr.mxu0 0.0
      %2837 = vmatpush1.msra.mxu0 0.0
      %2838 = vmatprep.subr.mxu0 0.0
      %2839 = vmatpush1.msra.mxu0 0.0
      %2840 = vmatprep.subr.mxu0 0.0
      %2841 = vmatpush1.msra.mxu0 0.0
      %2842 = vmatprep.subr.mxu0 0.0
      %2843 = vmatpush1.msra.mxu0 0.0
      %2844 = vmatprep.subr.mxu0 0.0
      %2845 = vmatpush1.msra.mxu0 0.0
      %2846 = vmatprep.subr.mxu0 0.0
      %2847 = vmatpush1.msra.mxu0 0.0
      %2848 = vmatprep.subr.mxu0 0.0
      %2849 = vmatpush1.msra.mxu0 0.0
      %2850 = vmatprep.subr.mxu0 0.0
      %2851 = vmatpush1.msra.mxu0 0.0
      %2852 = vmatprep.subr.mxu0 0.0
      %2853 = vmatpush1.msra.mxu0 0.0
      %2854 = vmatprep.subr.mxu0 0.0
      %2855 = vmatpush1.msra.mxu0 0.0
      %2856 = vmatprep.subr.mxu0 0.0
      %2857 = vmatpush1.msra.mxu0 0.0
      %2858 = vmatprep.subr.mxu0 0.0
      %2859 = vmatpush1.msra.mxu0 0.0
      %2860 = vmatprep.subr.mxu0 0.0
      %2861 = vmatpush1.msra.mxu0 0.0
      %2862 = vmatprep.subr.mxu0 0.0
      %2863 = vmatpush1.msra.mxu0 0.0
      %2864 = vmatprep.subr.mxu0 0.0
      %2865 = vmatpush1.msra.mxu0 0.0
      %2866 = vmatprep.subr.mxu0 0.0
      %2867 = vmatpush1.msra.mxu0 %v2834
      %2868 = vmatprep.subr.mxu0 0.0
      %2869 = vmatpush2.msra.mxu0 0.0
      %2870 = vmatprep.subr.mxu0 0.0
      %2871 = vmatpush2.msra.mxu0 0.0
      %2872 = vmatprep.subr.mxu0 0.0
      %2873 = vmatpush2.msra.mxu0 0.0
      %2874 = vmatprep.subr.mxu0 0.0
      %2875 = vmatpush2.msra.mxu0 0.0
      %2876 = vmatprep.subr.mxu0 0.0
      %2877 = vmatpush2.msra.mxu0 0.0
      %2878 = vmatprep.subr.mxu0 0.0
      %2879 = vmatpush2.msra.mxu0 0.0
      %2880 = vmatprep.subr.mxu0 0.0
      %2881 = vmatpush2.msra.mxu0 0.0
      %2882 = vmatprep.subr.mxu0 0.0
      %2883 = vmatpush2.msra.mxu0 0.0
      %2884 = vmatprep.subr.mxu0 0.0
      %2885 = vmatpush2.msra.mxu0 0.0
      %2886 = vmatprep.subr.mxu0 0.0
      %2887 = vmatpush2.msra.mxu0 0.0
      %2888 = vmatprep.subr.mxu0 0.0
      %2889 = vmatpush2.msra.mxu0 0.0
      %2890 = vmatprep.subr.mxu0 0.0
      %2891 = vmatpush2.msra.mxu0 0.0
      %2892 = vmatprep.subr.mxu0 0.0
      %2893 = vmatpush2.msra.mxu0 0.0
      %2894 = vmatprep.subr.mxu0 0.0
      %2895 = vmatpush2.msra.mxu0 0.0
      %2896 = vmatprep.subr.mxu0 0.0
      %2897 = vmatpush2.msra.mxu0 0.0
      %2898 = vmatprep.subr.mxu0 0.0
      %2899 = vmatpush2.msra.mxu0 0.0
      %2900 = vmatprep.mubr.f32.mxu0 0.0
      %2901 = vmatmul.mubr.f32.gmra.mxu0 %v1177
      %v2902 = vpop.f32.mrf.mxu0
      %v2903 = vadd.f32 0.0, %v2902
      %v2904 = vpop.f32.mrf.mxu0
      %2905 = vmatprep.mubr.f32.mxu0 0.0
      %2906 = vmatmul.mubr.f32.gmra.mxu0 %v1179
      %v2907 = vpop.f32.mrf.mxu0
      %v2908 = vadd.f32 0.0, %v2907
      %v2909 = vpop.f32.mrf.mxu0
      %2910 = vmatprep.mubr.f32.mxu0 0.0
      %2911 = vmatmul.mubr.f32.gmra.mxu0 %v1185
      %v2912 = vpop.f32.mrf.mxu0
      %v2913 = vadd.f32 0.0, %v2912
      %v2914 = vpop.f32.mrf.mxu0
      %2915 = vmatprep.mubr.f32.mxu0 0.0
      %2916 = vmatmul.mubr.f32.gmra.mxu0 %v1187
      %v2917 = vpop.f32.mrf.mxu0
      %v2918 = vadd.f32 0.0, %v2917
      %v2919 = vpop.f32.mrf.mxu0
      %2920 = vmatprep.mubr.f32.mxu0 0.0
      %2921 = vmatmul.mubr.f32.gmra.mxu0 %v1189
      %v2922 = vpop.f32.mrf.mxu0
      %v2923 = vadd.f32 0.0, %v2922
      %v2924 = vpop.f32.mrf.mxu0
      %2925 = vmatprep.mubr.f32.mxu0 0.0
      %2926 = vmatmul.mubr.f32.gmra.mxu0 %v1191
      %v2927 = vpop.f32.mrf.mxu0
      %v2928 = vadd.f32 0.0, %v2927
      %v2929 = vpop.f32.mrf.mxu0
      %2930 = vmatprep.mubr.f32.mxu0 0.0
      %2931 = vmatmul.mubr.f32.gmra.mxu0 %v1193
      %v2932 = vpop.f32.mrf.mxu0
      %v2933 = vadd.f32 0.0, %v2932
      %v2934 = vpop.f32.mrf.mxu0
      %2935 = vmatprep.mubr.f32.mxu0 0.0
      %2936 = vmatmul.mubr.f32.gmra.mxu0 %v1195
      %v2937 = vpop.f32.mrf.mxu0
      %v2938 = vadd.f32 0.0, %v2937
      %v2939 = vpop.f32.mrf.mxu0
      %2940 = vmatprep.mubr.f32.mxu0 0.0
      %2941 = vmatmul.mubr.f32.gmra.mxu0 %v1197
      %v2942 = vpop.f32.mrf.mxu0
      %v2943 = vadd.f32 0.0, %v2942
      %v2944 = vpop.f32.mrf.mxu0
      %2945 = vmatprep.mubr.f32.mxu0 0.0
      %2946 = vmatmul.mubr.f32.gmra.mxu0 %v1199
      %v2947 = vpop.f32.mrf.mxu0
      %v2948 = vadd.f32 0.0, %v2947
      %v2949 = vpop.f32.mrf.mxu0
      %2950 = vmatprep.mubr.f32.mxu0 0.0
      %2951 = vmatmul.mubr.f32.gmra.mxu0 %v1201
      %v2952 = vpop.f32.mrf.mxu0
      %v2953 = vadd.f32 0.0, %v2952
      %v2954 = vpop.f32.mrf.mxu0
      %2955 = vmatprep.mubr.f32.mxu0 0.0
      %2956 = vmatmul.mubr.f32.gmra.mxu0 %v1203
      %v2957 = vpop.f32.mrf.mxu0
      %v2958 = vadd.f32 0.0, %v2957
      %v2959 = vpop.f32.mrf.mxu0
      %2960 = vmatprep.mubr.f32.mxu0 0.0
      %2961 = vmatmul.mubr.f32.gmra.mxu0 %v1205
      %v2962 = vpop.f32.mrf.mxu0
      %v2963 = vadd.f32 0.0, %v2962
      %v2964 = vpop.f32.mrf.mxu0
      %2965 = vmatprep.mubr.f32.mxu0 0.0
      %2966 = vmatmul.mubr.f32.gmra.mxu0 %v1207
      %v2967 = vpop.f32.mrf.mxu0
      %v2968 = vadd.f32 0.0, %v2967
      %v2969 = vpop.f32.mrf.mxu0
      %2970 = vmatprep.mubr.f32.mxu0 0.0
      %2971 = vmatmul.mubr.f32.gmra.mxu0 %v1209
      %v2972 = vpop.f32.mrf.mxu0
      %v2973 = vadd.f32 0.0, %v2972
      %v2974 = vpop.f32.mrf.mxu0
      %2975 = vmatprep.mubr.f32.mxu0 0.0
      %2976 = vmatmul.mubr.f32.gmra.mxu0 %v1211
      %v2977 = vpop.f32.mrf.mxu0
      %v2978 = vadd.f32 0.0, %v2977
      %v2979 = vpop.f32.mrf.mxu0
      %2980 = vmatprep.mubr.f32.mxu0 0.0
      %2981 = vmatmul.mubr.f32.gmra.mxu0 %v1213
      %v2982 = vpop.f32.mrf.mxu0
      %v2983 = vadd.f32 0.0, %v2982
      %v2984 = vpop.f32.mrf.mxu0
      %2985 = vmatprep.mubr.f32.mxu0 0.0
      %2986 = vmatmul.mubr.f32.gmra.mxu0 %v1215
      %v2987 = vpop.f32.mrf.mxu0
      %v2988 = vadd.f32 0.0, %v2987
      %v2989 = vpop.f32.mrf.mxu0
      %2990 = vmatprep.mubr.f32.mxu0 0.0
      %2991 = vmatmul.mubr.f32.gmra.mxu0 %v1217
      %v2992 = vpop.f32.mrf.mxu0
      %v2993 = vadd.f32 0.0, %v2992
      %v2994 = vpop.f32.mrf.mxu0
      %2995 = vmatprep.mubr.f32.mxu0 0.0
      %2996 = vmatmul.mubr.f32.gmra.mxu0 %v1219
      %v2997 = vpop.f32.mrf.mxu0
      %v2998 = vadd.f32 0.0, %v2997
      %v2999 = vpop.f32.mrf.mxu0
      %3000 = vmatprep.mubr.f32.mxu0 0.0
      %3001 = vmatmul.mubr.f32.gmra.mxu0 %v1221
      %v3002 = vpop.f32.mrf.mxu0
      %v3003 = vadd.f32 0.0, %v3002
      %v3004 = vpop.f32.mrf.mxu0
      %3005 = vmatprep.mubr.f32.mxu0 0.0
      %3006 = vmatmul.mubr.f32.gmra.mxu0 %v1223
      %v3007 = vpop.f32.mrf.mxu0
      %v3008 = vadd.f32 0.0, %v3007
      %v3009 = vpop.f32.mrf.mxu0
      %3010 = vmatprep.mubr.f32.mxu0 0.0
      %3011 = vmatmul.mubr.f32.gmra.mxu0 %v1225
      %v3012 = vpop.f32.mrf.mxu0
      %v3013 = vadd.f32 0.0, %v3012
      %v3014 = vpop.f32.mrf.mxu0
      %3015 = vmatprep.mubr.f32.mxu0 0.0
      %3016 = vmatmul.mubr.f32.gmra.mxu0 %v1227
      %v3017 = vpop.f32.mrf.mxu0
      %v3018 = vadd.f32 0.0, %v3017
      %v3019 = vpop.f32.mrf.mxu0
      %3020 = vmatprep.mubr.f32.mxu0 0.0
      %3021 = vmatmul.mubr.f32.gmra.mxu0 %v1229
      %v3022 = vpop.f32.mrf.mxu0
      %v3023 = vadd.f32 0.0, %v3022
      %v3024 = vpop.f32.mrf.mxu0
      %3025 = vmatprep.mubr.f32.mxu0 0.0
      %3026 = vmatmul.mubr.f32.gmra.mxu0 %v1231
      %v3027 = vpop.f32.mrf.mxu0
      %v3028 = vadd.f32 0.0, %v3027
      %v3029 = vpop.f32.mrf.mxu0
      %3030 = vmatprep.mubr.f32.mxu0 0.0
      %3031 = vmatmul.mubr.f32.gmra.mxu0 %v1233
      %v3032 = vpop.f32.mrf.mxu0
      %v3033 = vadd.f32 0.0, %v3032
      %v3034 = vpop.f32.mrf.mxu0
      %3035 = vmatprep.mubr.f32.mxu0 0.0
      %3036 = vmatmul.mubr.f32.gmra.mxu0 %v1235
      %v3037 = vpop.f32.mrf.mxu0
      %v3038 = vadd.f32 0.0, %v3037
      %v3039 = vpop.f32.mrf.mxu0
      %3040 = vmatprep.mubr.f32.mxu0 0.0
      %3041 = vmatmul.mubr.f32.gmra.mxu0 %v2043
      %v3042 = vpop.f32.mrf.mxu0
      %v3043 = vadd.f32 0.0, %v3042
      %v3044 = vpop.f32.mrf.mxu0
      %3045 = vmatprep.mubr.f32.mxu0 0.0
      %3046 = vmatmul.mubr.f32.gmra.mxu0 %v2045
      %v3047 = vpop.f32.mrf.mxu0
      %v3048 = vadd.f32 0.0, %v3047
      %v3049 = vpop.f32.mrf.mxu0
      %3050 = vmatprep.mubr.f32.mxu0 0.0
      %3051 = vmatmul.mubr.f32.gmra.mxu0 %v1233
      %v3052 = vpop.f32.mrf.mxu0
      %v3053 = vadd.f32 0.0, %v3052
      %v3054 = vpop.f32.mrf.mxu0
      %3055 = vmatprep.mubr.f32.mxu0 0.0
      %3056 = vmatmul.mubr.f32.gmra.mxu0 %v1235
      %v3057 = vpop.f32.mrf.mxu0
      %v3058 = vadd.f32 0.0, %v3057
      %v3059 = vpop.f32.mrf.mxu0
      %3060 = vdwg.mxu0
      %v3061 = vadd.f32 %v2799, %v2903
      %v3062 = vadd.f32 %v2800, %v2908
      %v3063 = vadd.f32 %v2801, %v2913
      %v3064 = vadd.f32 %v2802, %v2918
      %v3065 = vadd.f32 %v2803, %v2923
      %v3066 = vadd.f32 %v2804, %v2928
      %v3067 = vadd.f32 %v2805, %v2933
      %v3068 = vadd.f32 %v2806, %v2938
      %v3069 = vadd.f32 %v2807, %v2943
      %v3070 = vadd.f32 %v2808, %v2948
      %v3071 = vadd.f32 %v2809, %v2953
      %v3072 = vadd.f32 %v2810, %v2958
      %v3073 = vadd.f32 %v2811, %v2963
      %v3074 = vadd.f32 %v2812, %v2968
      %v3075 = vadd.f32 %v2813, %v2973
      %v3076 = vadd.f32 %v2814, %v2978
      %v3077 = vadd.f32 %v2815, %v2983
      %v3078 = vadd.f32 %v2816, %v2988
      %v3079 = vadd.f32 %v2817, %v2993
      %v3080 = vadd.f32 %v2818, %v2998
      %v3081 = vadd.f32 %v2819, %v3003
      %v3082 = vadd.f32 %v2820, %v3008
      %v3083 = vadd.f32 %v2821, %v3013
      %v3084 = vadd.f32 %v2822, %v3018
      %v3085 = vadd.f32 %v2823, %v3023
      %v3086 = vadd.f32 %v2824, %v3028
      %v3087 = vadd.f32 %v2825, %v3033
      %v3088 = vadd.f32 %v2826, %v3038
      %v3089 = vadd.f32 %v2827, %v3043
      %v3090 = vadd.f32 %v2828, %v3048
      %v3091 = vadd.f32 %v2829, %v3053
      %v3092 = vadd.f32 %v2830, %v3058
      %v3093 = vsel %vm521, %v3061, 0.0
      %v3094 = vsel %vm521, %v3062, 0.0
      %v3095 = vadd.f32 %v3093, %v3094
      %v3096 = vsel %vm521, %v3063, 0.0
      %v3097 = vadd.f32 %v3095, %v3096
      %v3098 = vsel %vm521, %v3064, 0.0
      %v3099 = vadd.f32 %v3097, %v3098
      %v3100 = vsel %vm521, %v3065, 0.0
      %v3101 = vadd.f32 %v3099, %v3100
      %v3102 = vsel %vm521, %v3066, 0.0
      %v3103 = vadd.f32 %v3101, %v3102
      %v3104 = vsel %vm521, %v3067, 0.0
      %v3105 = vadd.f32 %v3103, %v3104
      %v3106 = vsel %vm521, %v3068, 0.0
      %v3107 = vadd.f32 %v3105, %v3106
      %v3108 = vsel %vm521, %v3069, 0.0
      %v3109 = vadd.f32 %v3107, %v3108
      %v3110 = vsel %vm521, %v3070, 0.0
      %v3111 = vadd.f32 %v3109, %v3110
      %v3112 = vsel %vm521, %v3071, 0.0
      %v3113 = vadd.f32 %v3111, %v3112
      %v3114 = vsel %vm521, %v3072, 0.0
      %v3115 = vadd.f32 %v3113, %v3114
      %v3116 = vsel %vm521, %v3073, 0.0
      %v3117 = vadd.f32 %v3115, %v3116
      %v3118 = vsel %vm521, %v3074, 0.0
      %v3119 = vadd.f32 %v3117, %v3118
      %v3120 = vsel %vm521, %v3075, 0.0
      %v3121 = vadd.f32 %v3119, %v3120
      %v3122 = vsel %vm521, %v3076, 0.0
      %v3123 = vadd.f32 %v3121, %v3122
      %v3124 = vsel %vm521, %v3077, 0.0
      %v3125 = vadd.f32 %v3123, %v3124
      %v3126 = vsel %vm521, %v3078, 0.0
      %v3127 = vadd.f32 %v3125, %v3126
      %v3128 = vsel %vm521, %v3079, 0.0
      %v3129 = vadd.f32 %v3127, %v3128
      %v3130 = vsel %vm521, %v3080, 0.0
      %v3131 = vadd.f32 %v3129, %v3130
      %v3132 = vsel %vm521, %v3081, 0.0
      %v3133 = vadd.f32 %v3131, %v3132
      %v3134 = vsel %vm521, %v3082, 0.0
      %v3135 = vadd.f32 %v3133, %v3134
      %v3136 = vsel %vm521, %v3083, 0.0
      %v3137 = vadd.f32 %v3135, %v3136
      %v3138 = vsel %vm521, %v3084, 0.0
      %v3139 = vadd.f32 %v3137, %v3138
      %v3140 = vsel %vm521, %v3085, 0.0
      %v3141 = vadd.f32 %v3139, %v3140
      %v3142 = vsel %vm521, %v3086, 0.0
      %v3143 = vadd.f32 %v3141, %v3142
      %v3144 = vsel %vm521, %v3087, 0.0
      %v3145 = vadd.f32 %v3143, %v3144
      %v3146 = vsel %vm521, %v3088, 0.0
      %v3147 = vadd.f32 %v3145, %v3146
      %v3148 = vsel %vm521, %v3089, 0.0
      %v3149 = vadd.f32 %v3147, %v3148
      %v3150 = vsel %vm521, %v3090, 0.0
      %v3151 = vadd.f32 %v3149, %v3150
      %v3152 = vsel %vm521, %v3091, 0.0
      %v3153 = vadd.f32 %v3151, %v3152
      %v3154 = vsel %vm521, %v3092, 0.0
      %v3155 = vadd.f32 %v3153, %v3154
      %v3156 = vrot.slane %v3155, 4
      %v3157 = vadd.f32 %v3155, %v3156
      %v3158 = vrot.slane %v3157, 2
      %v3159 = vadd.f32 %v3157, %v3158
      %v3160 = vrot.slane %v3159, 1
      %v3161 = vadd.f32 %v3159, %v3160
      %v3162 = vmul.f32 %v3161, 0.00390625
      %v3163 = vsub.f32 %v3061, %v3162
      %v3164 = vsub.f32 %v3062, %v3162
      %v3165 = vsub.f32 %v3063, %v3162
      %v3166 = vsub.f32 %v3064, %v3162
      %v3167 = vsub.f32 %v3065, %v3162
      %v3168 = vsub.f32 %v3066, %v3162
      %v3169 = vsub.f32 %v3067, %v3162
      %v3170 = vsub.f32 %v3068, %v3162
      %v3171 = vsub.f32 %v3069, %v3162
      %v3172 = vsub.f32 %v3070, %v3162
      %v3173 = vsub.f32 %v3071, %v3162
      %v3174 = vsub.f32 %v3072, %v3162
      %v3175 = vsub.f32 %v3073, %v3162
      %v3176 = vsub.f32 %v3074, %v3162
      %v3177 = vsub.f32 %v3075, %v3162
      %v3178 = vsub.f32 %v3076, %v3162
      %v3179 = vsub.f32 %v3077, %v3162
      %v3180 = vsub.f32 %v3078, %v3162
      %v3181 = vsub.f32 %v3079, %v3162
      %v3182 = vsub.f32 %v3080, %v3162
      %v3183 = vsub.f32 %v3081, %v3162
      %v3184 = vsub.f32 %v3082, %v3162
      %v3185 = vsub.f32 %v3083, %v3162
      %v3186 = vsub.f32 %v3084, %v3162
      %v3187 = vsub.f32 %v3085, %v3162
      %v3188 = vsub.f32 %v3086, %v3162
      %v3189 = vsub.f32 %v3087, %v3162
      %v3190 = vsub.f32 %v3088, %v3162
      %v3191 = vsub.f32 %v3089, %v3162
      %v3192 = vsub.f32 %v3090, %v3162
      %v3193 = vsub.f32 %v3091, %v3162
      %v3194 = vsub.f32 %v3092, %v3162
      %v3195 = vmul.f32 %v3163, %v3163
      %v3196 = vmul.f32 %v3164, %v3164
      %v3197 = vmul.f32 %v3165, %v3165
      %v3198 = vmul.f32 %v3166, %v3166
      %v3199 = vmul.f32 %v3167, %v3167
      %v3200 = vmul.f32 %v3168, %v3168
      %v3201 = vmul.f32 %v3169, %v3169
      %v3202 = vmul.f32 %v3170, %v3170
      %v3203 = vmul.f32 %v3171, %v3171
      %v3204 = vmul.f32 %v3172, %v3172
      %v3205 = vmul.f32 %v3173, %v3173
      %v3206 = vmul.f32 %v3174, %v3174
      %v3207 = vmul.f32 %v3175, %v3175
      %v3208 = vmul.f32 %v3176, %v3176
      %v3209 = vmul.f32 %v3177, %v3177
      %v3210 = vmul.f32 %v3178, %v3178
      %v3211 = vmul.f32 %v3179, %v3179
      %v3212 = vmul.f32 %v3180, %v3180
      %v3213 = vmul.f32 %v3181, %v3181
      %v3214 = vmul.f32 %v3182, %v3182
      %v3215 = vmul.f32 %v3183, %v3183
      %v3216 = vmul.f32 %v3184, %v3184
      %v3217 = vmul.f32 %v3185, %v3185
      %v3218 = vmul.f32 %v3186, %v3186
      %v3219 = vmul.f32 %v3187, %v3187
      %v3220 = vmul.f32 %v3188, %v3188
      %v3221 = vmul.f32 %v3189, %v3189
      %v3222 = vmul.f32 %v3190, %v3190
      %v3223 = vmul.f32 %v3191, %v3191
      %v3224 = vmul.f32 %v3192, %v3192
      %v3225 = vmul.f32 %v3193, %v3193
      %v3226 = vmul.f32 %v3194, %v3194
      %v3227 = vsel %vm521, %v3195, 0.0
      %v3228 = vsel %vm521, %v3196, 0.0
      %v3229 = vadd.f32 %v3227, %v3228
      %v3230 = vsel %vm521, %v3197, 0.0
      %v3231 = vadd.f32 %v3229, %v3230
      %v3232 = vsel %vm521, %v3198, 0.0
      %v3233 = vadd.f32 %v3231, %v3232
      %v3234 = vsel %vm521, %v3199, 0.0
      %v3235 = vadd.f32 %v3233, %v3234
      %v3236 = vsel %vm521, %v3200, 0.0
      %v3237 = vadd.f32 %v3235, %v3236
      %v3238 = vsel %vm521, %v3201, 0.0
      %v3239 = vadd.f32 %v3237, %v3238
      %v3240 = vsel %vm521, %v3202, 0.0
      %v3241 = vadd.f32 %v3239, %v3240
      %v3242 = vsel %vm521, %v3203, 0.0
      %v3243 = vadd.f32 %v3241, %v3242
      %v3244 = vsel %vm521, %v3204, 0.0
      %v3245 = vadd.f32 %v3243, %v3244
      %v3246 = vsel %vm521, %v3205, 0.0
      %v3247 = vadd.f32 %v3245, %v3246
      %v3248 = vsel %vm521, %v3206, 0.0
      %v3249 = vadd.f32 %v3247, %v3248
      %v3250 = vsel %vm521, %v3207, 0.0
      %v3251 = vadd.f32 %v3249, %v3250
      %v3252 = vsel %vm521, %v3208, 0.0
      %v3253 = vadd.f32 %v3251, %v3252
      %v3254 = vsel %vm521, %v3209, 0.0
      %v3255 = vadd.f32 %v3253, %v3254
      %v3256 = vsel %vm521, %v3210, 0.0
      %v3257 = vadd.f32 %v3255, %v3256
      %v3258 = vsel %vm521, %v3211, 0.0
      %v3259 = vadd.f32 %v3257, %v3258
      %v3260 = vsel %vm521, %v3212, 0.0
      %v3261 = vadd.f32 %v3259, %v3260
      %v3262 = vsel %vm521, %v3213, 0.0
      %v3263 = vadd.f32 %v3261, %v3262
      %v3264 = vsel %vm521, %v3214, 0.0
      %v3265 = vadd.f32 %v3263, %v3264
      %v3266 = vsel %vm521, %v3215, 0.0
      %v3267 = vadd.f32 %v3265, %v3266
      %v3268 = vsel %vm521, %v3216, 0.0
      %v3269 = vadd.f32 %v3267, %v3268
      %v3270 = vsel %vm521, %v3217, 0.0
      %v3271 = vadd.f32 %v3269, %v3270
      %v3272 = vsel %vm521, %v3218, 0.0
      %v3273 = vadd.f32 %v3271, %v3272
      %v3274 = vsel %vm521, %v3219, 0.0
      %v3275 = vadd.f32 %v3273, %v3274
      %v3276 = vsel %vm521, %v3220, 0.0
      %v3277 = vadd.f32 %v3275, %v3276
      %v3278 = vsel %vm521, %v3221, 0.0
      %v3279 = vadd.f32 %v3277, %v3278
      %v3280 = vsel %vm521, %v3222, 0.0
      %v3281 = vadd.f32 %v3279, %v3280
      %v3282 = vsel %vm521, %v3223, 0.0
      %v3283 = vadd.f32 %v3281, %v3282
      %v3284 = vsel %vm521, %v3224, 0.0
      %v3285 = vadd.f32 %v3283, %v3284
      %v3286 = vsel %vm521, %v3225, 0.0
      %v3287 = vadd.f32 %v3285, %v3286
      %v3288 = vsel %vm521, %v3226, 0.0
      %v3289 = vadd.f32 %v3287, %v3288
      %v3290 = vrot.slane %v3289, 4
      %v3291 = vadd.f32 %v3289, %v3290
      %v3292 = vrot.slane %v3291, 2
      %v3293 = vadd.f32 %v3291, %v3292
      %v3294 = vrot.slane %v3293, 1
      %v3295 = vadd.f32 %v3293, %v3294
      %v3296 = vmul.f32 %v3295, 0.00390625
      %v3297 = vadd.f32 %v3296, 1e-05
      %v3298 = vrsqrt.pop %v3297
      %v3299 = vmul.f32 %v3163, %v3298
      %v3300 = vmul.f32 %v3164, %v3298
      %v3301 = vmul.f32 %v3165, %v3298
      %v3302 = vmul.f32 %v3166, %v3298
      %v3303 = vmul.f32 %v3167, %v3298
      %v3304 = vmul.f32 %v3168, %v3298
      %v3305 = vmul.f32 %v3169, %v3298
      %v3306 = vmul.f32 %v3170, %v3298
      %v3307 = vmul.f32 %v3171, %v3298
      %v3308 = vmul.f32 %v3172, %v3298
      %v3309 = vmul.f32 %v3173, %v3298
      %v3310 = vmul.f32 %v3174, %v3298
      %v3311 = vmul.f32 %v3175, %v3298
      %v3312 = vmul.f32 %v3176, %v3298
      %v3313 = vmul.f32 %v3177, %v3298
      %v3314 = vmul.f32 %v3178, %v3298
      %v3315 = vmul.f32 %v3179, %v3298
      %v3316 = vmul.f32 %v3180, %v3298
      %v3317 = vmul.f32 %v3181, %v3298
      %v3318 = vmul.f32 %v3182, %v3298
      %v3319 = vmul.f32 %v3183, %v3298
      %v3320 = vmul.f32 %v3184, %v3298
      %v3321 = vmul.f32 %v3185, %v3298
      %v3322 = vmul.f32 %v3186, %v3298
      %v3323 = vmul.f32 %v3187, %v3298
      %v3324 = vmul.f32 %v3188, %v3298
      %v3325 = vmul.f32 %v3189, %v3298
      %v3326 = vmul.f32 %v3190, %v3298
      %v3327 = vmul.f32 %v3191, %v3298
      %v3328 = vmul.f32 %v3192, %v3298
      %v3329 = vmul.f32 %v3193, %v3298
      %v3330 = vmul.f32 %v3194, %v3298
      %v3331 = vmax.f32 %v3299, 0.0
      %v3332 = vmax.f32 %v3300, 0.0
      %v3333 = vmax.f32 %v3301, 0.0
      %v3334 = vmax.f32 %v3302, 0.0
      %v3335 = vmax.f32 %v3303, 0.0
      %v3336 = vmax.f32 %v3304, 0.0
      %v3337 = vmax.f32 %v3305, 0.0
      %v3338 = vmax.f32 %v3306, 0.0
      %v3339 = vmax.f32 %v3307, 0.0
      %v3340 = vmax.f32 %v3308, 0.0
      %v3341 = vmax.f32 %v3309, 0.0
      %v3342 = vmax.f32 %v3310, 0.0
      %v3343 = vmax.f32 %v3311, 0.0
      %v3344 = vmax.f32 %v3312, 0.0
      %v3345 = vmax.f32 %v3313, 0.0
      %v3346 = vmax.f32 %v3314, 0.0
      %v3347 = vmax.f32 %v3315, 0.0
      %v3348 = vmax.f32 %v3316, 0.0
      %v3349 = vmax.f32 %v3317, 0.0
      %v3350 = vmax.f32 %v3318, 0.0
      %v3351 = vmax.f32 %v3319, 0.0
      %v3352 = vmax.f32 %v3320, 0.0
      %v3353 = vmax.f32 %v3321, 0.0
      %v3354 = vmax.f32 %v3322, 0.0
      %v3355 = vmax.f32 %v3323, 0.0
      %v3356 = vmax.f32 %v3324, 0.0
      %v3357 = vmax.f32 %v3325, 0.0
      %v3358 = vmax.f32 %v3326, 0.0
      %v3359 = vmax.f32 %v3327, 0.0
      %v3360 = vmax.f32 %v3328, 0.0
      %v3361 = vmax.f32 %v3329, 0.0
      %v3362 = vmax.f32 %v3330, 0.0
      %v3379 = vrot.slane %v3333, 1
      %v3380 = vrot.slane %v3331, 1
      %v3381 = vrot.slane %v3335, 1
      %v3382 = vrot.slane %v3337, 1
      %v3383 = vrot.slane %v3339, 1
      %v3384 = vrot.slane %v3341, 1
      %v3385 = vrot.slane %v3343, 1
      %v3386 = vrot.slane %v3345, 1
      %v3387 = vrot.slane %v3347, 1
      %v3388 = vrot.slane %v3349, 1
      %v3389 = vrot.slane %v3351, 1
      %v3390 = vrot.slane %v3353, 1
      %v3391 = vrot.slane %v3355, 1
      %v3392 = vrot.slane %v3357, 1
      %v3393 = vrot.slane %v3359, 1
      %v3394 = vrot.slane %v3361, 1
      %v3427 = vrot.slane %v3333, 7
      %v3428 = vrot.slane %v3334, 7
      %v3429 = vsel %vm267, %v3427, %v3428
      %v3430 = vrot.slane %v3331, 7
      %v3431 = vrot.slane %v3332, 7
      %v3432 = vsel %vm267, %v3430, %v3431
      %v3433 = vrot.slane %v3335, 7
      %v3434 = vrot.slane %v3336, 7
      %v3435 = vsel %vm267, %v3433, %v3434
      %v3436 = vrot.slane %v3337, 7
      %v3437 = vrot.slane %v3338, 7
      %v3438 = vsel %vm267, %v3436, %v3437
      %v3439 = vrot.slane %v3339, 7
      %v3440 = vrot.slane %v3340, 7
      %v3441 = vsel %vm267, %v3439, %v3440
      %v3442 = vrot.slane %v3341, 7
      %v3443 = vrot.slane %v3342, 7
      %v3444 = vsel %vm267, %v3442, %v3443
      %v3445 = vrot.slane %v3343, 7
      %v3446 = vrot.slane %v3344, 7
      %v3447 = vsel %vm267, %v3445, %v3446
      %v3448 = vrot.slane %v3345, 7
      %v3449 = vrot.slane %v3346, 7
      %v3450 = vsel %vm267, %v3448, %v3449
      %v3451 = vrot.slane %v3347, 7
      %v3452 = vrot.slane %v3348, 7
      %v3453 = vsel %vm267, %v3451, %v3452
      %v3454 = vrot.slane %v3349, 7
      %v3455 = vrot.slane %v3350, 7
      %v3456 = vsel %vm267, %v3454, %v3455
      %v3457 = vrot.slane %v3351, 7
      %v3458 = vrot.slane %v3352, 7
      %v3459 = vsel %vm267, %v3457, %v3458
      %v3460 = vrot.slane %v3353, 7
      %v3461 = vrot.slane %v3354, 7
      %v3462 = vsel %vm267, %v3460, %v3461
      %v3463 = vrot.slane %v3355, 7
      %v3464 = vrot.slane %v3356, 7
      %v3465 = vsel %vm267, %v3463, %v3464
      %v3466 = vrot.slane %v3357, 7
      %v3467 = vrot.slane %v3358, 7
      %v3468 = vsel %vm267, %v3466, %v3467
      %v3469 = vrot.slane %v3359, 7
      %v3470 = vrot.slane %v3360, 7
      %v3471 = vsel %vm267, %v3469, %v3470
      %v3472 = vrot.slane %v3361, 7
      %v3473 = vrot.slane %v3362, 7
      %v3474 = vsel %vm267, %v3472, %v3473
      %v3507 = vrot.slane %v3334, 5
      %v3508 = vrot.slane %v3332, 5
      %v3509 = vrot.slane %v3336, 5
      %v3510 = vrot.slane %v3338, 5
      %v3511 = vrot.slane %v3340, 5
      %v3512 = vrot.slane %v3342, 5
      %v3513 = vrot.slane %v3344, 5
      %v3514 = vrot.slane %v3346, 5
      %v3515 = vrot.slane %v3348, 5
      %v3516 = vrot.slane %v3350, 5
      %v3517 = vrot.slane %v3352, 5
      %v3518 = vrot.slane %v3354, 5
      %v3519 = vrot.slane %v3356, 5
      %v3520 = vrot.slane %v3358, 5
      %v3521 = vrot.slane %v3360, 5
      %v3522 = vrot.slane %v3362, 5
      %v3539 = vsel %vm267, %v3379, %v3427
      %v3540 = vsel %vm267, %v3380, %v3430
      %v3541 = vsel %vm267, %v3381, %v3433
      %v3542 = vsel %vm267, %v3382, %v3436
      %v3543 = vsel %vm267, %v3383, %v3439
      %v3544 = vsel %vm267, %v3384, %v3442
      %v3545 = vsel %vm267, %v3385, %v3445
      %v3546 = vsel %vm267, %v3386, %v3448
      %v3547 = vsel %vm267, %v3387, %v3451
      %v3548 = vsel %vm267, %v3388, %v3454
      %v3549 = vsel %vm267, %v3389, %v3457
      %v3550 = vsel %vm267, %v3390, %v3460
      %v3551 = vsel %vm267, %v3391, %v3463
      %v3552 = vsel %vm267, %v3392, %v3466
      %v3553 = vsel %vm267, %v3393, %v3469
      %v3554 = vsel %vm267, %v3394, %v3472
      %v3555 = vsel %vm267, %v3428, %v3507
      %v3556 = vsel %vm267, %v3431, %v3508
      %v3557 = vsel %vm267, %v3434, %v3509
      %v3558 = vsel %vm267, %v3437, %v3510
      %v3559 = vsel %vm267, %v3440, %v3511
      %v3560 = vsel %vm267, %v3443, %v3512
      %v3561 = vsel %vm267, %v3446, %v3513
      %v3562 = vsel %vm267, %v3449, %v3514
      %v3563 = vsel %vm267, %v3452, %v3515
      %v3564 = vsel %vm267, %v3455, %v3516
      %v3565 = vsel %vm267, %v3458, %v3517
      %v3566 = vsel %vm267, %v3461, %v3518
      %v3567 = vsel %vm267, %v3464, %v3519
      %v3568 = vsel %vm267, %v3467, %v3520
      %v3569 = vsel %vm267, %v3470, %v3521
      %v3570 = vsel %vm267, %v3473, %v3522
      %v3571 = vld [vmem:[%s2] sm:$0xf]
      %v3602 = vrot.slane %v3539, 1
      %v3603 = vrot.slane %v3429, 1
      %v3604 = vsel %vm443, %v3602, %v3603
      %v3605 = vrot.slane %v3555, 1
      %v3606 = vsel %vm443, %v3603, %v3605
      %v3607 = vrot.slane %v3540, 1
      %v3608 = vrot.slane %v3432, 1
      %v3609 = vsel %vm443, %v3607, %v3608
      %v3610 = vrot.slane %v3556, 1
      %v3611 = vsel %vm443, %v3608, %v3610
      %v3612 = vrot.slane %v3541, 1
      %v3613 = vrot.slane %v3435, 1
      %v3614 = vsel %vm443, %v3612, %v3613
      %v3615 = vrot.slane %v3557, 1
      %v3616 = vsel %vm443, %v3613, %v3615
      %v3617 = vrot.slane %v3542, 1
      %v3618 = vrot.slane %v3438, 1
      %v3619 = vsel %vm443, %v3617, %v3618
      %v3620 = vrot.slane %v3558, 1
      %v3621 = vsel %vm443, %v3618, %v3620
      %v3622 = vrot.slane %v3543, 1
      %v3623 = vrot.slane %v3441, 1
      %v3624 = vsel %vm443, %v3622, %v3623
      %v3625 = vrot.slane %v3559, 1
      %v3626 = vsel %vm443, %v3623, %v3625
      %v3627 = vrot.slane %v3544, 1
      %v3628 = vrot.slane %v3444, 1
      %v3629 = vsel %vm443, %v3627, %v3628
      %v3630 = vrot.slane %v3560, 1
      %v3631 = vsel %vm443, %v3628, %v3630
      %v3632 = vrot.slane %v3545, 1
      %v3633 = vrot.slane %v3447, 1
      %v3634 = vsel %vm443, %v3632, %v3633
      %v3635 = vrot.slane %v3561, 1
      %v3636 = vsel %vm443, %v3633, %v3635
      %v3637 = vrot.slane %v3546, 1
      %v3638 = vrot.slane %v3450, 1
      %v3639 = vsel %vm443, %v3637, %v3638
      %v3640 = vrot.slane %v3562, 1
      %v3641 = vsel %vm443, %v3638, %v3640
      %v3642 = vrot.slane %v3547, 1
      %v3643 = vrot.slane %v3453, 1
      %v3644 = vsel %vm443, %v3642, %v3643
      %v3645 = vrot.slane %v3563, 1
      %v3646 = vsel %vm443, %v3643, %v3645
      %v3647 = vrot.slane %v3548, 1
      %v3648 = vrot.slane %v3456, 1
      %v3649 = vsel %vm443, %v3647, %v3648
      %v3650 = vrot.slane %v3564, 1
      %v3651 = vsel %vm443, %v3648, %v3650
      %v3652 = vrot.slane %v3549, 1
      %v3653 = vrot.slane %v3459, 1
      %v3654 = vsel %vm443, %v3652, %v3653
      %v3655 = vrot.slane %v3565, 1
      %v3656 = vsel %vm443, %v3653, %v3655
      %v3657 = vrot.slane %v3550, 1
      %v3658 = vrot.slane %v3462, 1
      %v3659 = vsel %vm443, %v3657, %v3658
      %v3660 = vrot.slane %v3566, 1
      %v3661 = vsel %vm443, %v3658, %v3660
      %v3662 = vrot.slane %v3551, 1
      %v3663 = vrot.slane %v3465, 1
      %v3664 = vsel %vm443, %v3662, %v3663
      %v3665 = vrot.slane %v3567, 1
      %v3666 = vsel %vm443, %v3663, %v3665
      %v3667 = vrot.slane %v3552, 1
      %v3668 = vrot.slane %v3468, 1
      %v3669 = vsel %vm443, %v3667, %v3668
      %v3670 = vrot.slane %v3568, 1
      %v3671 = vsel %vm443, %v3668, %v3670
      %v3672 = vrot.slane %v3553, 1
      %v3673 = vrot.slane %v3471, 1
      %v3674 = vsel %vm443, %v3672, %v3673
      %v3675 = vrot.slane %v3569, 1
      %v3676 = vsel %vm443, %v3673, %v3675
      %s3677 = scalar_lea.vmem %s2, 4
      %v3678 = vld [vmem:[%s3677] sm:$0xf]
      %v3679 = vsel %vm521, %v3604, 0
      %v3681 = vsel %vm521, %v3606, 0
      %v3683 = vsel %vm521, %v3609, 0
      %v3685 = vsel %vm521, %v3611, 0
      %v3687 = vsel %vm521, %v3614, 0
      %v3689 = vsel %vm521, %v3616, 0
      %v3691 = vsel %vm521, %v3619, 0
      %v3693 = vsel %vm521, %v3621, 0
      %v3695 = vsel %vm521, %v3624, 0
      %v3697 = vsel %vm521, %v3626, 0
      %v3699 = vsel %vm521, %v3629, 0
      %v3701 = vsel %vm521, %v3631, 0
      %v3703 = vsel %vm521, %v3634, 0
      %v3705 = vsel %vm521, %v3636, 0
      %v3707 = vsel %vm521, %v3639, 0
      %v3709 = vsel %vm521, %v3641, 0
      %v3711 = vsel %vm521, %v3644, 0
      %v3713 = vsel %vm521, %v3646, 0
      %v3715 = vsel %vm521, %v3649, 0
      %v3717 = vsel %vm521, %v3651, 0
      %v3719 = vsel %vm521, %v3654, 0
      %v3721 = vsel %vm521, %v3656, 0
      %v3723 = vsel %vm521, %v3659, 0
      %v3725 = vsel %vm521, %v3661, 0
      %v3727 = vsel %vm521, %v3664, 0
      %v3729 = vsel %vm521, %v3666, 0
      %v3731 = vsel %vm521, %v3669, 0
      %v3733 = vsel %vm521, %v3671, 0
      %v3735 = vsel %vm521, %v3674, 0
      %v3737 = vsel %vm521, %v3676, 0
      %v3740 = vsel %vm582, %v3678, 0
      %3742 = vmatprep.subr.mxu0 0.0
      %3743 = vmatpush1.msra.mxu0 0.0
      %3744 = vmatprep.subr.mxu0 0.0
      %3745 = vmatpush1.msra.mxu0 0.0
      %3746 = vmatprep.subr.mxu0 0.0
      %3747 = vmatpush1.msra.mxu0 0.0
      %3748 = vmatprep.subr.mxu0 0.0
      %3749 = vmatpush1.msra.mxu0 0.0
      %3750 = vmatprep.subr.mxu0 0.0
      %3751 = vmatpush1.msra.mxu0 0.0
      %3752 = vmatprep.subr.mxu0 0.0
      %3753 = vmatpush1.msra.mxu0 0.0
      %3754 = vmatprep.subr.mxu0 0.0
      %3755 = vmatpush1.msra.mxu0 0.0
      %3756 = vmatprep.subr.mxu0 0.0
      %3757 = vmatpush1.msra.mxu0 0.0
      %3758 = vmatprep.subr.mxu0 0.0
      %3759 = vmatpush1.msra.mxu0 0.0
      %3760 = vmatprep.subr.mxu0 0.0
      %3761 = vmatpush1.msra.mxu0 0.0
      %3762 = vmatprep.subr.mxu0 0.0
      %3763 = vmatpush1.msra.mxu0 0.0
      %3764 = vmatprep.subr.mxu0 0.0
      %3765 = vmatpush1.msra.mxu0 0.0
      %3766 = vmatprep.subr.mxu0 0.0
      %3767 = vmatpush1.msra.mxu0 0.0
      %3768 = vmatprep.subr.mxu0 0.0
      %3769 = vmatpush1.msra.mxu0 0.0
      %3770 = vmatprep.subr.mxu0 0.0
      %3771 = vmatpush1.msra.mxu0 0.0
      %3772 = vmatprep.subr.mxu0 0.0
      %3773 = vmatpush1.msra.mxu0 %v3740
      %3774 = vmatprep.subr.mxu0 0.0
      %3775 = vmatpush2.msra.mxu0 0.0
      %3776 = vmatprep.subr.mxu0 0.0
      %3777 = vmatpush2.msra.mxu0 0.0
      %3778 = vmatprep.subr.mxu0 0.0
      %3779 = vmatpush2.msra.mxu0 0.0
      %3780 = vmatprep.subr.mxu0 0.0
      %3781 = vmatpush2.msra.mxu0 0.0
      %3782 = vmatprep.subr.mxu0 0.0
      %3783 = vmatpush2.msra.mxu0 0.0
      %3784 = vmatprep.subr.mxu0 0.0
      %3785 = vmatpush2.msra.mxu0 0.0
      %3786 = vmatprep.subr.mxu0 0.0
      %3787 = vmatpush2.msra.mxu0 0.0
      %3788 = vmatprep.subr.mxu0 0.0
      %3789 = vmatpush2.msra.mxu0 0.0
      %3790 = vmatprep.subr.mxu0 0.0
      %3791 = vmatpush2.msra.mxu0 0.0
      %3792 = vmatprep.subr.mxu0 0.0
      %3793 = vmatpush2.msra.mxu0 0.0
      %3794 = vmatprep.subr.mxu0 0.0
      %3795 = vmatpush2.msra.mxu0 0.0
      %3796 = vmatprep.subr.mxu0 0.0
      %3797 = vmatpush2.msra.mxu0 0.0
      %3798 = vmatprep.subr.mxu0 0.0
      %3799 = vmatpush2.msra.mxu0 0.0
      %3800 = vmatprep.subr.mxu0 0.0
      %3801 = vmatpush2.msra.mxu0 0.0
      %3802 = vmatprep.subr.mxu0 0.0
      %3803 = vmatpush2.msra.mxu0 0.0
      %3804 = vmatprep.subr.mxu0 0.0
      %3805 = vmatpush2.msra.mxu0 0.0
      %3806 = vmatprep.mubr.f32.mxu0 0.0
      %3807 = vmatmul.mubr.f32.gmra.mxu0 %v3679
      %v3808 = vpop.f32.mrf.mxu0
      %v3809 = vadd.f32 0.0, %v3808
      %v3810 = vpop.f32.mrf.mxu0
      %3811 = vmatprep.mubr.f32.mxu0 0.0
      %3812 = vmatmul.mubr.f32.gmra.mxu0 %v3681
      %v3813 = vpop.f32.mrf.mxu0
      %v3814 = vadd.f32 0.0, %v3813
      %v3815 = vpop.f32.mrf.mxu0
      %3816 = vmatprep.mubr.f32.mxu0 0.0
      %3817 = vmatmul.mubr.f32.gmra.mxu0 %v3683
      %v3818 = vpop.f32.mrf.mxu0
      %v3819 = vadd.f32 0.0, %v3818
      %v3820 = vpop.f32.mrf.mxu0
      %3821 = vmatprep.mubr.f32.mxu0 0.0
      %3822 = vmatmul.mubr.f32.gmra.mxu0 %v3685
      %v3823 = vpop.f32.mrf.mxu0
      %v3824 = vadd.f32 0.0, %v3823
      %v3825 = vpop.f32.mrf.mxu0
      %3826 = vmatprep.mubr.f32.mxu0 0.0
      %3827 = vmatmul.mubr.f32.gmra.mxu0 %v3679
      %v3828 = vpop.f32.mrf.mxu0
      %v3829 = vadd.f32 0.0, %v3828
      %v3830 = vpop.f32.mrf.mxu0
      %3831 = vmatprep.mubr.f32.mxu0 0.0
      %3832 = vmatmul.mubr.f32.gmra.mxu0 %v3681
      %v3833 = vpop.f32.mrf.mxu0
      %v3834 = vadd.f32 0.0, %v3833
      %v3835 = vpop.f32.mrf.mxu0
      %3836 = vmatprep.mubr.f32.mxu0 0.0
      %3837 = vmatmul.mubr.f32.gmra.mxu0 %v3687
      %v3838 = vpop.f32.mrf.mxu0
      %v3839 = vadd.f32 0.0, %v3838
      %v3840 = vpop.f32.mrf.mxu0
      %3841 = vmatprep.mubr.f32.mxu0 0.0
      %3842 = vmatmul.mubr.f32.gmra.mxu0 %v3689
      %v3843 = vpop.f32.mrf.mxu0
      %v3844 = vadd.f32 0.0, %v3843
      %v3845 = vpop.f32.mrf.mxu0
      %3846 = vmatprep.mubr.f32.mxu0 0.0
      %3847 = vmatmul.mubr.f32.gmra.mxu0 %v3691
      %v3848 = vpop.f32.mrf.mxu0
      %v3849 = vadd.f32 0.0, %v3848
      %v3850 = vpop.f32.mrf.mxu0
      %3851 = vmatprep.mubr.f32.mxu0 0.0
      %3852 = vmatmul.mubr.f32.gmra.mxu0 %v3693
      %v3853 = vpop.f32.mrf.mxu0
      %v3854 = vadd.f32 0.0, %v3853
      %v3855 = vpop.f32.mrf.mxu0
      %3856 = vmatprep.mubr.f32.mxu0 0.0
      %3857 = vmatmul.mubr.f32.gmra.mxu0 %v3695
      %v3858 = vpop.f32.mrf.mxu0
      %v3859 = vadd.f32 0.0, %v3858
      %v3860 = vpop.f32.mrf.mxu0
      %3861 = vmatprep.mubr.f32.mxu0 0.0
      %3862 = vmatmul.mubr.f32.gmra.mxu0 %v3697
      %v3863 = vpop.f32.mrf.mxu0
      %v3864 = vadd.f32 0.0, %v3863
      %v3865 = vpop.f32.mrf.mxu0
      %3866 = vmatprep.mubr.f32.mxu0 0.0
      %3867 = vmatmul.mubr.f32.gmra.mxu0 %v3699
      %v3868 = vpop.f32.mrf.mxu0
      %v3869 = vadd.f32 0.0, %v3868
      %v3870 = vpop.f32.mrf.mxu0
      %3871 = vmatprep.mubr.f32.mxu0 0.0
      %3872 = vmatmul.mubr.f32.gmra.mxu0 %v3701
      %v3873 = vpop.f32.mrf.mxu0
      %v3874 = vadd.f32 0.0, %v3873
      %v3875 = vpop.f32.mrf.mxu0
      %3876 = vmatprep.mubr.f32.mxu0 0.0
      %3877 = vmatmul.mubr.f32.gmra.mxu0 %v3703
      %v3878 = vpop.f32.mrf.mxu0
      %v3879 = vadd.f32 0.0, %v3878
      %v3880 = vpop.f32.mrf.mxu0
      %3881 = vmatprep.mubr.f32.mxu0 0.0
      %3882 = vmatmul.mubr.f32.gmra.mxu0 %v3705
      %v3883 = vpop.f32.mrf.mxu0
      %v3884 = vadd.f32 0.0, %v3883
      %v3885 = vpop.f32.mrf.mxu0
      %3886 = vmatprep.mubr.f32.mxu0 0.0
      %3887 = vmatmul.mubr.f32.gmra.mxu0 %v3707
      %v3888 = vpop.f32.mrf.mxu0
      %v3889 = vadd.f32 0.0, %v3888
      %v3890 = vpop.f32.mrf.mxu0
      %3891 = vmatprep.mubr.f32.mxu0 0.0
      %3892 = vmatmul.mubr.f32.gmra.mxu0 %v3709
      %v3893 = vpop.f32.mrf.mxu0
      %v3894 = vadd.f32 0.0, %v3893
      %v3895 = vpop.f32.mrf.mxu0
      %3896 = vmatprep.mubr.f32.mxu0 0.0
      %3897 = vmatmul.mubr.f32.gmra.mxu0 %v3711
      %v3898 = vpop.f32.mrf.mxu0
      %v3899 = vadd.f32 0.0, %v3898
      %v3900 = vpop.f32.mrf.mxu0
      %3901 = vmatprep.mubr.f32.mxu0 0.0
      %3902 = vmatmul.mubr.f32.gmra.mxu0 %v3713
      %v3903 = vpop.f32.mrf.mxu0
      %v3904 = vadd.f32 0.0, %v3903
      %v3905 = vpop.f32.mrf.mxu0
      %3906 = vmatprep.mubr.f32.mxu0 0.0
      %3907 = vmatmul.mubr.f32.gmra.mxu0 %v3715
      %v3908 = vpop.f32.mrf.mxu0
      %v3909 = vadd.f32 0.0, %v3908
      %v3910 = vpop.f32.mrf.mxu0
      %3911 = vmatprep.mubr.f32.mxu0 0.0
      %3912 = vmatmul.mubr.f32.gmra.mxu0 %v3717
      %v3913 = vpop.f32.mrf.mxu0
      %v3914 = vadd.f32 0.0, %v3913
      %v3915 = vpop.f32.mrf.mxu0
      %3916 = vmatprep.mubr.f32.mxu0 0.0
      %3917 = vmatmul.mubr.f32.gmra.mxu0 %v3719
      %v3918 = vpop.f32.mrf.mxu0
      %v3919 = vadd.f32 0.0, %v3918
      %v3920 = vpop.f32.mrf.mxu0
      %3921 = vmatprep.mubr.f32.mxu0 0.0
      %3922 = vmatmul.mubr.f32.gmra.mxu0 %v3721
      %v3923 = vpop.f32.mrf.mxu0
      %v3924 = vadd.f32 0.0, %v3923
      %v3925 = vpop.f32.mrf.mxu0
      %3926 = vmatprep.mubr.f32.mxu0 0.0
      %3927 = vmatmul.mubr.f32.gmra.mxu0 %v3723
      %v3928 = vpop.f32.mrf.mxu0
      %v3929 = vadd.f32 0.0, %v3928
      %v3930 = vpop.f32.mrf.mxu0
      %3931 = vmatprep.mubr.f32.mxu0 0.0
      %3932 = vmatmul.mubr.f32.gmra.mxu0 %v3725
      %v3933 = vpop.f32.mrf.mxu0
      %v3934 = vadd.f32 0.0, %v3933
      %v3935 = vpop.f32.mrf.mxu0
      %3936 = vmatprep.mubr.f32.mxu0 0.0
      %3937 = vmatmul.mubr.f32.gmra.mxu0 %v3727
      %v3938 = vpop.f32.mrf.mxu0
      %v3939 = vadd.f32 0.0, %v3938
      %v3940 = vpop.f32.mrf.mxu0
      %3941 = vmatprep.mubr.f32.mxu0 0.0
      %3942 = vmatmul.mubr.f32.gmra.mxu0 %v3729
      %v3943 = vpop.f32.mrf.mxu0
      %v3944 = vadd.f32 0.0, %v3943
      %v3945 = vpop.f32.mrf.mxu0
      %3946 = vmatprep.mubr.f32.mxu0 0.0
      %3947 = vmatmul.mubr.f32.gmra.mxu0 %v3731
      %v3948 = vpop.f32.mrf.mxu0
      %v3949 = vadd.f32 0.0, %v3948
      %v3950 = vpop.f32.mrf.mxu0
      %3951 = vmatprep.mubr.f32.mxu0 0.0
      %3952 = vmatmul.mubr.f32.gmra.mxu0 %v3733
      %v3953 = vpop.f32.mrf.mxu0
      %v3954 = vadd.f32 0.0, %v3953
      %v3955 = vpop.f32.mrf.mxu0
      %3956 = vmatprep.mubr.f32.mxu0 0.0
      %3957 = vmatmul.mubr.f32.gmra.mxu0 %v3735
      %v3958 = vpop.f32.mrf.mxu0
      %v3959 = vadd.f32 0.0, %v3958
      %v3960 = vpop.f32.mrf.mxu0
      %3961 = vmatprep.mubr.f32.mxu0 0.0
      %3962 = vmatmul.mubr.f32.gmra.mxu0 %v3737
      %v3963 = vpop.f32.mrf.mxu0
      %v3964 = vadd.f32 0.0, %v3963
      %v3965 = vpop.f32.mrf.mxu0
      %3966 = vdwg.mxu0
      %v3967 = vsel %vm521, %v3539, 0
      %v3969 = vsel %vm521, %v3429, 0
      %v3971 = vsel %vm521, %v3540, 0
      %v3973 = vsel %vm521, %v3432, 0
      %v3975 = vsel %vm521, %v3541, 0
      %v3977 = vsel %vm521, %v3435, 0
      %v3979 = vsel %vm521, %v3542, 0
      %v3981 = vsel %vm521, %v3438, 0
      %v3983 = vsel %vm521, %v3543, 0
      %v3985 = vsel %vm521, %v3441, 0
      %v3987 = vsel %vm521, %v3544, 0
      %v3989 = vsel %vm521, %v3444, 0
      %v3991 = vsel %vm521, %v3545, 0
      %v3993 = vsel %vm521, %v3447, 0
      %v3995 = vsel %vm521, %v3546, 0
      %v3997 = vsel %vm521, %v3450, 0
      %v3999 = vsel %vm521, %v3547, 0
      %v4001 = vsel %vm521, %v3453, 0
      %v4003 = vsel %vm521, %v3548, 0
      %v4005 = vsel %vm521, %v3456, 0
      %v4007 = vsel %vm521, %v3549, 0
      %v4009 = vsel %vm521, %v3459, 0
      %v4011 = vsel %vm521, %v3550, 0
      %v4013 = vsel %vm521, %v3462, 0
      %v4015 = vsel %vm521, %v3551, 0
      %v4017 = vsel %vm521, %v3465, 0
      %v4019 = vsel %vm521, %v3552, 0
      %v4021 = vsel %vm521, %v3468, 0
      %v4023 = vsel %vm521, %v3553, 0
      %v4025 = vsel %vm521, %v3471, 0
      %v4028 = vsel %vm582, %v3571, 0
      %4030 = vmatprep.subr.mxu0 0.0
      %4031 = vmatpush1.msra.mxu0 0.0
      %4032 = vmatprep.subr.mxu0 0.0
      %4033 = vmatpush1.msra.mxu0 0.0
      %4034 = vmatprep.subr.mxu0 0.0
      %4035 = vmatpush1.msra.mxu0 0.0
      %4036 = vmatprep.subr.mxu0 0.0
      %4037 = vmatpush1.msra.mxu0 0.0
      %4038 = vmatprep.subr.mxu0 0.0
      %4039 = vmatpush1.msra.mxu0 0.0
      %4040 = vmatprep.subr.mxu0 0.0
      %4041 = vmatpush1.msra.mxu0 0.0
      %4042 = vmatprep.subr.mxu0 0.0
      %4043 = vmatpush1.msra.mxu0 0.0
      %4044 = vmatprep.subr.mxu0 0.0
      %4045 = vmatpush1.msra.mxu0 0.0
      %4046 = vmatprep.subr.mxu0 0.0
      %4047 = vmatpush1.msra.mxu0 0.0
      %4048 = vmatprep.subr.mxu0 0.0
      %4049 = vmatpush1.msra.mxu0 0.0
      %4050 = vmatprep.subr.mxu0 0.0
      %4051 = vmatpush1.msra.mxu0 0.0
      %4052 = vmatprep.subr.mxu0 0.0
      %4053 = vmatpush1.msra.mxu0 0.0
      %4054 = vmatprep.subr.mxu0 0.0
      %4055 = vmatpush1.msra.mxu0 0.0
      %4056 = vmatprep.subr.mxu0 0.0
      %4057 = vmatpush1.msra.mxu0 0.0
      %4058 = vmatprep.subr.mxu0 0.0
      %4059 = vmatpush1.msra.mxu0 0.0
      %4060 = vmatprep.subr.mxu0 0.0
      %4061 = vmatpush1.msra.mxu0 %v4028
      %4062 = vmatprep.subr.mxu0 0.0
      %4063 = vmatpush2.msra.mxu0 0.0
      %4064 = vmatprep.subr.mxu0 0.0
      %4065 = vmatpush2.msra.mxu0 0.0
      %4066 = vmatprep.subr.mxu0 0.0
      %4067 = vmatpush2.msra.mxu0 0.0
      %4068 = vmatprep.subr.mxu0 0.0
      %4069 = vmatpush2.msra.mxu0 0.0
      %4070 = vmatprep.subr.mxu0 0.0
      %4071 = vmatpush2.msra.mxu0 0.0
      %4072 = vmatprep.subr.mxu0 0.0
      %4073 = vmatpush2.msra.mxu0 0.0
      %4074 = vmatprep.subr.mxu0 0.0
      %4075 = vmatpush2.msra.mxu0 0.0
      %4076 = vmatprep.subr.mxu0 0.0
      %4077 = vmatpush2.msra.mxu0 0.0
      %4078 = vmatprep.subr.mxu0 0.0
      %4079 = vmatpush2.msra.mxu0 0.0
      %4080 = vmatprep.subr.mxu0 0.0
      %4081 = vmatpush2.msra.mxu0 0.0
      %4082 = vmatprep.subr.mxu0 0.0
      %4083 = vmatpush2.msra.mxu0 0.0
      %4084 = vmatprep.subr.mxu0 0.0
      %4085 = vmatpush2.msra.mxu0 0.0
      %4086 = vmatprep.subr.mxu0 0.0
      %4087 = vmatpush2.msra.mxu0 0.0
      %4088 = vmatprep.subr.mxu0 0.0
      %4089 = vmatpush2.msra.mxu0 0.0
      %4090 = vmatprep.subr.mxu0 0.0
      %4091 = vmatpush2.msra.mxu0 0.0
      %4092 = vmatprep.subr.mxu0 0.0
      %4093 = vmatpush2.msra.mxu0 0.0
      %4094 = vmatprep.mubr.f32.mxu0 0.0
      %4095 = vmatmul.mubr.f32.gmra.mxu0 %v3967
      %v4096 = vpop.f32.mrf.mxu0
      %v4097 = vadd.f32 %v3809, %v4096
      %v4098 = vpop.f32.mrf.mxu0
      %4099 = vmatprep.mubr.f32.mxu0 0.0
      %4100 = vmatmul.mubr.f32.gmra.mxu0 %v3969
      %v4101 = vpop.f32.mrf.mxu0
      %v4102 = vadd.f32 %v3814, %v4101
      %v4103 = vpop.f32.mrf.mxu0
      %4104 = vmatprep.mubr.f32.mxu0 0.0
      %4105 = vmatmul.mubr.f32.gmra.mxu0 %v3971
      %v4106 = vpop.f32.mrf.mxu0
      %v4107 = vadd.f32 %v3819, %v4106
      %v4108 = vpop.f32.mrf.mxu0
      %4109 = vmatprep.mubr.f32.mxu0 0.0
      %4110 = vmatmul.mubr.f32.gmra.mxu0 %v3973
      %v4111 = vpop.f32.mrf.mxu0
      %v4112 = vadd.f32 %v3824, %v4111
      %v4113 = vpop.f32.mrf.mxu0
      %4114 = vmatprep.mubr.f32.mxu0 0.0
      %4115 = vmatmul.mubr.f32.gmra.mxu0 %v3967
      %v4116 = vpop.f32.mrf.mxu0
      %v4117 = vadd.f32 %v3829, %v4116
      %v4118 = vpop.f32.mrf.mxu0
      %4119 = vmatprep.mubr.f32.mxu0 0.0
      %4120 = vmatmul.mubr.f32.gmra.mxu0 %v3969
      %v4121 = vpop.f32.mrf.mxu0
      %v4122 = vadd.f32 %v3834, %v4121
      %v4123 = vpop.f32.mrf.mxu0
      %4124 = vmatprep.mubr.f32.mxu0 0.0
      %4125 = vmatmul.mubr.f32.gmra.mxu0 %v3975
      %v4126 = vpop.f32.mrf.mxu0
      %v4127 = vadd.f32 %v3839, %v4126
      %v4128 = vpop.f32.mrf.mxu0
      %4129 = vmatprep.mubr.f32.mxu0 0.0
      %4130 = vmatmul.mubr.f32.gmra.mxu0 %v3977
      %v4131 = vpop.f32.mrf.mxu0
      %v4132 = vadd.f32 %v3844, %v4131
      %v4133 = vpop.f32.mrf.mxu0
      %4134 = vmatprep.mubr.f32.mxu0 0.0
      %4135 = vmatmul.mubr.f32.gmra.mxu0 %v3979
      %v4136 = vpop.f32.mrf.mxu0
      %v4137 = vadd.f32 %v3849, %v4136
      %v4138 = vpop.f32.mrf.mxu0
      %4139 = vmatprep.mubr.f32.mxu0 0.0
      %4140 = vmatmul.mubr.f32.gmra.mxu0 %v3981
      %v4141 = vpop.f32.mrf.mxu0
      %v4142 = vadd.f32 %v3854, %v4141
      %v4143 = vpop.f32.mrf.mxu0
      %4144 = vmatprep.mubr.f32.mxu0 0.0
      %4145 = vmatmul.mubr.f32.gmra.mxu0 %v3983
      %v4146 = vpop.f32.mrf.mxu0
      %v4147 = vadd.f32 %v3859, %v4146
      %v4148 = vpop.f32.mrf.mxu0
      %4149 = vmatprep.mubr.f32.mxu0 0.0
      %4150 = vmatmul.mubr.f32.gmra.mxu0 %v3985
      %v4151 = vpop.f32.mrf.mxu0
      %v4152 = vadd.f32 %v3864, %v4151
      %v4153 = vpop.f32.mrf.mxu0
      %4154 = vmatprep.mubr.f32.mxu0 0.0
      %4155 = vmatmul.mubr.f32.gmra.mxu0 %v3987
      %v4156 = vpop.f32.mrf.mxu0
      %v4157 = vadd.f32 %v3869, %v4156
      %v4158 = vpop.f32.mrf.mxu0
      %4159 = vmatprep.mubr.f32.mxu0 0.0
      %4160 = vmatmul.mubr.f32.gmra.mxu0 %v3989
      %v4161 = vpop.f32.mrf.mxu0
      %v4162 = vadd.f32 %v3874, %v4161
      %v4163 = vpop.f32.mrf.mxu0
      %4164 = vmatprep.mubr.f32.mxu0 0.0
      %4165 = vmatmul.mubr.f32.gmra.mxu0 %v3991
      %v4166 = vpop.f32.mrf.mxu0
      %v4167 = vadd.f32 %v3879, %v4166
      %v4168 = vpop.f32.mrf.mxu0
      %4169 = vmatprep.mubr.f32.mxu0 0.0
      %4170 = vmatmul.mubr.f32.gmra.mxu0 %v3993
      %v4171 = vpop.f32.mrf.mxu0
      %v4172 = vadd.f32 %v3884, %v4171
      %v4173 = vpop.f32.mrf.mxu0
      %4174 = vmatprep.mubr.f32.mxu0 0.0
      %4175 = vmatmul.mubr.f32.gmra.mxu0 %v3995
      %v4176 = vpop.f32.mrf.mxu0
      %v4177 = vadd.f32 %v3889, %v4176
      %v4178 = vpop.f32.mrf.mxu0
      %4179 = vmatprep.mubr.f32.mxu0 0.0
      %4180 = vmatmul.mubr.f32.gmra.mxu0 %v3997
      %v4181 = vpop.f32.mrf.mxu0
      %v4182 = vadd.f32 %v3894, %v4181
      %v4183 = vpop.f32.mrf.mxu0
      %4184 = vmatprep.mubr.f32.mxu0 0.0
      %4185 = vmatmul.mubr.f32.gmra.mxu0 %v3999
      %v4186 = vpop.f32.mrf.mxu0
      %v4187 = vadd.f32 %v3899, %v4186
      %v4188 = vpop.f32.mrf.mxu0
      %4189 = vmatprep.mubr.f32.mxu0 0.0
      %4190 = vmatmul.mubr.f32.gmra.mxu0 %v4001
      %v4191 = vpop.f32.mrf.mxu0
      %v4192 = vadd.f32 %v3904, %v4191
      %v4193 = vpop.f32.mrf.mxu0
      %4194 = vmatprep.mubr.f32.mxu0 0.0
      %4195 = vmatmul.mubr.f32.gmra.mxu0 %v4003
      %v4196 = vpop.f32.mrf.mxu0
      %v4197 = vadd.f32 %v3909, %v4196
      %v4198 = vpop.f32.mrf.mxu0
      %4199 = vmatprep.mubr.f32.mxu0 0.0
      %4200 = vmatmul.mubr.f32.gmra.mxu0 %v4005
      %v4201 = vpop.f32.mrf.mxu0
      %v4202 = vadd.f32 %v3914, %v4201
      %v4203 = vpop.f32.mrf.mxu0
      %4204 = vmatprep.mubr.f32.mxu0 0.0
      %4205 = vmatmul.mubr.f32.gmra.mxu0 %v4007
      %v4206 = vpop.f32.mrf.mxu0
      %v4207 = vadd.f32 %v3919, %v4206
      %v4208 = vpop.f32.mrf.mxu0
      %4209 = vmatprep.mubr.f32.mxu0 0.0
      %4210 = vmatmul.mubr.f32.gmra.mxu0 %v4009
      %v4211 = vpop.f32.mrf.mxu0
      %v4212 = vadd.f32 %v3924, %v4211
      %v4213 = vpop.f32.mrf.mxu0
      %4214 = vmatprep.mubr.f32.mxu0 0.0
      %4215 = vmatmul.mubr.f32.gmra.mxu0 %v4011
      %v4216 = vpop.f32.mrf.mxu0
      %v4217 = vadd.f32 %v3929, %v4216
      %v4218 = vpop.f32.mrf.mxu0
      %4219 = vmatprep.mubr.f32.mxu0 0.0
      %4220 = vmatmul.mubr.f32.gmra.mxu0 %v4013
      %v4221 = vpop.f32.mrf.mxu0
      %v4222 = vadd.f32 %v3934, %v4221
      %v4223 = vpop.f32.mrf.mxu0
      %4224 = vmatprep.mubr.f32.mxu0 0.0
      %4225 = vmatmul.mubr.f32.gmra.mxu0 %v4015
      %v4226 = vpop.f32.mrf.mxu0
      %v4227 = vadd.f32 %v3939, %v4226
      %v4228 = vpop.f32.mrf.mxu0
      %4229 = vmatprep.mubr.f32.mxu0 0.0
      %4230 = vmatmul.mubr.f32.gmra.mxu0 %v4017
      %v4231 = vpop.f32.mrf.mxu0
      %v4232 = vadd.f32 %v3944, %v4231
      %v4233 = vpop.f32.mrf.mxu0
      %4234 = vmatprep.mubr.f32.mxu0 0.0
      %4235 = vmatmul.mubr.f32.gmra.mxu0 %v4019
      %v4236 = vpop.f32.mrf.mxu0
      %v4237 = vadd.f32 %v3949, %v4236
      %v4238 = vpop.f32.mrf.mxu0
      %4239 = vmatprep.mubr.f32.mxu0 0.0
      %4240 = vmatmul.mubr.f32.gmra.mxu0 %v4021
      %v4241 = vpop.f32.mrf.mxu0
      %v4242 = vadd.f32 %v3954, %v4241
      %v4243 = vpop.f32.mrf.mxu0
      %4244 = vmatprep.mubr.f32.mxu0 0.0
      %4245 = vmatmul.mubr.f32.gmra.mxu0 %v4023
      %v4246 = vpop.f32.mrf.mxu0
      %v4247 = vadd.f32 %v3959, %v4246
      %v4248 = vpop.f32.mrf.mxu0
      %4249 = vmatprep.mubr.f32.mxu0 0.0
      %4250 = vmatmul.mubr.f32.gmra.mxu0 %v4025
      %v4251 = vpop.f32.mrf.mxu0
      %v4252 = vadd.f32 %v3964, %v4251
      %v4253 = vpop.f32.mrf.mxu0
      %4254 = vdwg.mxu0
      %v4255 = vrot.slane %v3539, 2
      %v4256 = vrot.slane %v3429, 2
      %v4257 = vsel %vm1099, %v4255, %v4256
      %v4258 = vrot.slane %v3555, 2
      %v4259 = vsel %vm1099, %v4256, %v4258
      %v4260 = vrot.slane %v3540, 2
      %v4261 = vrot.slane %v3432, 2
      %v4262 = vsel %vm1099, %v4260, %v4261
      %v4263 = vrot.slane %v3556, 2
      %v4264 = vsel %vm1099, %v4261, %v4263
      %v4265 = vrot.slane %v3541, 2
      %v4266 = vrot.slane %v3435, 2
      %v4267 = vsel %vm1099, %v4265, %v4266
      %v4268 = vrot.slane %v3557, 2
      %v4269 = vsel %vm1099, %v4266, %v4268
      %v4270 = vrot.slane %v3542, 2
      %v4271 = vrot.slane %v3438, 2
      %v4272 = vsel %vm1099, %v4270, %v4271
      %v4273 = vrot.slane %v3558, 2
      %v4274 = vsel %vm1099, %v4271, %v4273
      %v4275 = vrot.slane %v3543, 2
      %v4276 = vrot.slane %v3441, 2
      %v4277 = vsel %vm1099, %v4275, %v4276
      %v4278 = vrot.slane %v3559, 2
      %v4279 = vsel %vm1099, %v4276, %v4278
      %v4280 = vrot.slane %v3544, 2
      %v4281 = vrot.slane %v3444, 2
      %v4282 = vsel %vm1099, %v4280, %v4281
      %v4283 = vrot.slane %v3560, 2
      %v4284 = vsel %vm1099, %v4281, %v4283
      %v4285 = vrot.slane %v3545, 2
      %v4286 = vrot.slane %v3447, 2
      %v4287 = vsel %vm1099, %v4285, %v4286
      %v4288 = vrot.slane %v3561, 2
      %v4289 = vsel %vm1099, %v4286, %v4288
      %v4290 = vrot.slane %v3546, 2
      %v4291 = vrot.slane %v3450, 2
      %v4292 = vsel %vm1099, %v4290, %v4291
      %v4293 = vrot.slane %v3562, 2
      %v4294 = vsel %vm1099, %v4291, %v4293
      %v4295 = vrot.slane %v3547, 2
      %v4296 = vrot.slane %v3453, 2
      %v4297 = vsel %vm1099, %v4295, %v4296
      %v4298 = vrot.slane %v3563, 2
      %v4299 = vsel %vm1099, %v4296, %v4298
      %v4300 = vrot.slane %v3548, 2
      %v4301 = vrot.slane %v3456, 2
      %v4302 = vsel %vm1099, %v4300, %v4301
      %v4303 = vrot.slane %v3564, 2
      %v4304 = vsel %vm1099, %v4301, %v4303
      %v4305 = vrot.slane %v3549, 2
      %v4306 = vrot.slane %v3459, 2
      %v4307 = vsel %vm1099, %v4305, %v4306
      %v4308 = vrot.slane %v3565, 2
      %v4309 = vsel %vm1099, %v4306, %v4308
      %v4310 = vrot.slane %v3550, 2
      %v4311 = vrot.slane %v3462, 2
      %v4312 = vsel %vm1099, %v4310, %v4311
      %v4313 = vrot.slane %v3566, 2
      %v4314 = vsel %vm1099, %v4311, %v4313
      %v4315 = vrot.slane %v3551, 2
      %v4316 = vrot.slane %v3465, 2
      %v4317 = vsel %vm1099, %v4315, %v4316
      %v4318 = vrot.slane %v3567, 2
      %v4319 = vsel %vm1099, %v4316, %v4318
      %v4320 = vrot.slane %v3552, 2
      %v4321 = vrot.slane %v3468, 2
      %v4322 = vsel %vm1099, %v4320, %v4321
      %v4323 = vrot.slane %v3568, 2
      %v4324 = vsel %vm1099, %v4321, %v4323
      %v4325 = vrot.slane %v3553, 2
      %v4326 = vrot.slane %v3471, 2
      %v4327 = vsel %vm1099, %v4325, %v4326
      %v4328 = vrot.slane %v3569, 2
      %v4329 = vsel %vm1099, %v4326, %v4328
      %s4330 = scalar_lea.vmem %s2, 8
      %v4331 = vld [vmem:[%s4330] sm:$0xf]
      %v4332 = vsel %vm521, %v4257, 0
      %v4334 = vsel %vm521, %v4259, 0
      %v4336 = vsel %vm521, %v4262, 0
      %v4338 = vsel %vm521, %v4264, 0
      %v4340 = vsel %vm521, %v4267, 0
      %v4342 = vsel %vm521, %v4269, 0
      %v4344 = vsel %vm521, %v4272, 0
      %v4346 = vsel %vm521, %v4274, 0
      %v4348 = vsel %vm521, %v4277, 0
      %v4350 = vsel %vm521, %v4279, 0
      %v4352 = vsel %vm521, %v4282, 0
      %v4354 = vsel %vm521, %v4284, 0
      %v4356 = vsel %vm521, %v4287, 0
      %v4358 = vsel %vm521, %v4289, 0
      %v4360 = vsel %vm521, %v4292, 0
      %v4362 = vsel %vm521, %v4294, 0
      %v4364 = vsel %vm521, %v4297, 0
      %v4366 = vsel %vm521, %v4299, 0
      %v4368 = vsel %vm521, %v4302, 0
      %v4370 = vsel %vm521, %v4304, 0
      %v4372 = vsel %vm521, %v4307, 0
      %v4374 = vsel %vm521, %v4309, 0
      %v4376 = vsel %vm521, %v4312, 0
      %v4378 = vsel %vm521, %v4314, 0
      %v4380 = vsel %vm521, %v4317, 0
      %v4382 = vsel %vm521, %v4319, 0
      %v4384 = vsel %vm521, %v4322, 0
      %v4386 = vsel %vm521, %v4324, 0
      %v4388 = vsel %vm521, %v4327, 0
      %v4390 = vsel %vm521, %v4329, 0
      %v4393 = vsel %vm582, %v4331, 0
      %4395 = vmatprep.subr.mxu0 0.0
      %4396 = vmatpush1.msra.mxu0 0.0
      %4397 = vmatprep.subr.mxu0 0.0
      %4398 = vmatpush1.msra.mxu0 0.0
      %4399 = vmatprep.subr.mxu0 0.0
      %4400 = vmatpush1.msra.mxu0 0.0
      %4401 = vmatprep.subr.mxu0 0.0
      %4402 = vmatpush1.msra.mxu0 0.0
      %4403 = vmatprep.subr.mxu0 0.0
      %4404 = vmatpush1.msra.mxu0 0.0
      %4405 = vmatprep.subr.mxu0 0.0
      %4406 = vmatpush1.msra.mxu0 0.0
      %4407 = vmatprep.subr.mxu0 0.0
      %4408 = vmatpush1.msra.mxu0 0.0
      %4409 = vmatprep.subr.mxu0 0.0
      %4410 = vmatpush1.msra.mxu0 0.0
      %4411 = vmatprep.subr.mxu0 0.0
      %4412 = vmatpush1.msra.mxu0 0.0
      %4413 = vmatprep.subr.mxu0 0.0
      %4414 = vmatpush1.msra.mxu0 0.0
      %4415 = vmatprep.subr.mxu0 0.0
      %4416 = vmatpush1.msra.mxu0 0.0
      %4417 = vmatprep.subr.mxu0 0.0
      %4418 = vmatpush1.msra.mxu0 0.0
      %4419 = vmatprep.subr.mxu0 0.0
      %4420 = vmatpush1.msra.mxu0 0.0
      %4421 = vmatprep.subr.mxu0 0.0
      %4422 = vmatpush1.msra.mxu0 0.0
      %4423 = vmatprep.subr.mxu0 0.0
      %4424 = vmatpush1.msra.mxu0 0.0
      %4425 = vmatprep.subr.mxu0 0.0
      %4426 = vmatpush1.msra.mxu0 %v4393
      %4427 = vmatprep.subr.mxu0 0.0
      %4428 = vmatpush2.msra.mxu0 0.0
      %4429 = vmatprep.subr.mxu0 0.0
      %4430 = vmatpush2.msra.mxu0 0.0
      %4431 = vmatprep.subr.mxu0 0.0
      %4432 = vmatpush2.msra.mxu0 0.0
      %4433 = vmatprep.subr.mxu0 0.0
      %4434 = vmatpush2.msra.mxu0 0.0
      %4435 = vmatprep.subr.mxu0 0.0
      %4436 = vmatpush2.msra.mxu0 0.0
      %4437 = vmatprep.subr.mxu0 0.0
      %4438 = vmatpush2.msra.mxu0 0.0
      %4439 = vmatprep.subr.mxu0 0.0
      %4440 = vmatpush2.msra.mxu0 0.0
      %4441 = vmatprep.subr.mxu0 0.0
      %4442 = vmatpush2.msra.mxu0 0.0
      %4443 = vmatprep.subr.mxu0 0.0
      %4444 = vmatpush2.msra.mxu0 0.0
      %4445 = vmatprep.subr.mxu0 0.0
      %4446 = vmatpush2.msra.mxu0 0.0
      %4447 = vmatprep.subr.mxu0 0.0
      %4448 = vmatpush2.msra.mxu0 0.0
      %4449 = vmatprep.subr.mxu0 0.0
      %4450 = vmatpush2.msra.mxu0 0.0
      %4451 = vmatprep.subr.mxu0 0.0
      %4452 = vmatpush2.msra.mxu0 0.0
      %4453 = vmatprep.subr.mxu0 0.0
      %4454 = vmatpush2.msra.mxu0 0.0
      %4455 = vmatprep.subr.mxu0 0.0
      %4456 = vmatpush2.msra.mxu0 0.0
      %4457 = vmatprep.subr.mxu0 0.0
      %4458 = vmatpush2.msra.mxu0 0.0
      %4459 = vmatprep.mubr.f32.mxu0 0.0
      %4460 = vmatmul.mubr.f32.gmra.mxu0 %v4332
      %v4461 = vpop.f32.mrf.mxu0
      %v4462 = vadd.f32 0.0, %v4461
      %v4463 = vpop.f32.mrf.mxu0
      %4464 = vmatprep.mubr.f32.mxu0 0.0
      %4465 = vmatmul.mubr.f32.gmra.mxu0 %v4334
      %v4466 = vpop.f32.mrf.mxu0
      %v4467 = vadd.f32 0.0, %v4466
      %v4468 = vpop.f32.mrf.mxu0
      %4469 = vmatprep.mubr.f32.mxu0 0.0
      %4470 = vmatmul.mubr.f32.gmra.mxu0 %v4336
      %v4471 = vpop.f32.mrf.mxu0
      %v4472 = vadd.f32 0.0, %v4471
      %v4473 = vpop.f32.mrf.mxu0
      %4474 = vmatprep.mubr.f32.mxu0 0.0
      %4475 = vmatmul.mubr.f32.gmra.mxu0 %v4338
      %v4476 = vpop.f32.mrf.mxu0
      %v4477 = vadd.f32 0.0, %v4476
      %v4478 = vpop.f32.mrf.mxu0
      %4479 = vmatprep.mubr.f32.mxu0 0.0
      %4480 = vmatmul.mubr.f32.gmra.mxu0 %v4332
      %v4481 = vpop.f32.mrf.mxu0
      %v4482 = vadd.f32 0.0, %v4481
      %v4483 = vpop.f32.mrf.mxu0
      %4484 = vmatprep.mubr.f32.mxu0 0.0
      %4485 = vmatmul.mubr.f32.gmra.mxu0 %v4334
      %v4486 = vpop.f32.mrf.mxu0
      %v4487 = vadd.f32 0.0, %v4486
      %v4488 = vpop.f32.mrf.mxu0
      %4489 = vmatprep.mubr.f32.mxu0 0.0
      %4490 = vmatmul.mubr.f32.gmra.mxu0 %v4340
      %v4491 = vpop.f32.mrf.mxu0
      %v4492 = vadd.f32 0.0, %v4491
      %v4493 = vpop.f32.mrf.mxu0
      %4494 = vmatprep.mubr.f32.mxu0 0.0
      %4495 = vmatmul.mubr.f32.gmra.mxu0 %v4342
      %v4496 = vpop.f32.mrf.mxu0
      %v4497 = vadd.f32 0.0, %v4496
      %v4498 = vpop.f32.mrf.mxu0
      %4499 = vmatprep.mubr.f32.mxu0 0.0
      %4500 = vmatmul.mubr.f32.gmra.mxu0 %v4344
      %v4501 = vpop.f32.mrf.mxu0
      %v4502 = vadd.f32 0.0, %v4501
      %v4503 = vpop.f32.mrf.mxu0
      %4504 = vmatprep.mubr.f32.mxu0 0.0
      %4505 = vmatmul.mubr.f32.gmra.mxu0 %v4346
      %v4506 = vpop.f32.mrf.mxu0
      %v4507 = vadd.f32 0.0, %v4506
      %v4508 = vpop.f32.mrf.mxu0
      %4509 = vmatprep.mubr.f32.mxu0 0.0
      %4510 = vmatmul.mubr.f32.gmra.mxu0 %v4348
      %v4511 = vpop.f32.mrf.mxu0
      %v4512 = vadd.f32 0.0, %v4511
      %v4513 = vpop.f32.mrf.mxu0
      %4514 = vmatprep.mubr.f32.mxu0 0.0
      %4515 = vmatmul.mubr.f32.gmra.mxu0 %v4350
      %v4516 = vpop.f32.mrf.mxu0
      %v4517 = vadd.f32 0.0, %v4516
      %v4518 = vpop.f32.mrf.mxu0
      %4519 = vmatprep.mubr.f32.mxu0 0.0
      %4520 = vmatmul.mubr.f32.gmra.mxu0 %v4352
      %v4521 = vpop.f32.mrf.mxu0
      %v4522 = vadd.f32 0.0, %v4521
      %v4523 = vpop.f32.mrf.mxu0
      %4524 = vmatprep.mubr.f32.mxu0 0.0
      %4525 = vmatmul.mubr.f32.gmra.mxu0 %v4354
      %v4526 = vpop.f32.mrf.mxu0
      %v4527 = vadd.f32 0.0, %v4526
      %v4528 = vpop.f32.mrf.mxu0
      %4529 = vmatprep.mubr.f32.mxu0 0.0
      %4530 = vmatmul.mubr.f32.gmra.mxu0 %v4356
      %v4531 = vpop.f32.mrf.mxu0
      %v4532 = vadd.f32 0.0, %v4531
      %v4533 = vpop.f32.mrf.mxu0
      %4534 = vmatprep.mubr.f32.mxu0 0.0
      %4535 = vmatmul.mubr.f32.gmra.mxu0 %v4358
      %v4536 = vpop.f32.mrf.mxu0
      %v4537 = vadd.f32 0.0, %v4536
      %v4538 = vpop.f32.mrf.mxu0
      %4539 = vmatprep.mubr.f32.mxu0 0.0
      %4540 = vmatmul.mubr.f32.gmra.mxu0 %v4360
      %v4541 = vpop.f32.mrf.mxu0
      %v4542 = vadd.f32 0.0, %v4541
      %v4543 = vpop.f32.mrf.mxu0
      %4544 = vmatprep.mubr.f32.mxu0 0.0
      %4545 = vmatmul.mubr.f32.gmra.mxu0 %v4362
      %v4546 = vpop.f32.mrf.mxu0
      %v4547 = vadd.f32 0.0, %v4546
      %v4548 = vpop.f32.mrf.mxu0
      %4549 = vmatprep.mubr.f32.mxu0 0.0
      %4550 = vmatmul.mubr.f32.gmra.mxu0 %v4364
      %v4551 = vpop.f32.mrf.mxu0
      %v4552 = vadd.f32 0.0, %v4551
      %v4553 = vpop.f32.mrf.mxu0
      %4554 = vmatprep.mubr.f32.mxu0 0.0
      %4555 = vmatmul.mubr.f32.gmra.mxu0 %v4366
      %v4556 = vpop.f32.mrf.mxu0
      %v4557 = vadd.f32 0.0, %v4556
      %v4558 = vpop.f32.mrf.mxu0
      %4559 = vmatprep.mubr.f32.mxu0 0.0
      %4560 = vmatmul.mubr.f32.gmra.mxu0 %v4368
      %v4561 = vpop.f32.mrf.mxu0
      %v4562 = vadd.f32 0.0, %v4561
      %v4563 = vpop.f32.mrf.mxu0
      %4564 = vmatprep.mubr.f32.mxu0 0.0
      %4565 = vmatmul.mubr.f32.gmra.mxu0 %v4370
      %v4566 = vpop.f32.mrf.mxu0
      %v4567 = vadd.f32 0.0, %v4566
      %v4568 = vpop.f32.mrf.mxu0
      %4569 = vmatprep.mubr.f32.mxu0 0.0
      %4570 = vmatmul.mubr.f32.gmra.mxu0 %v4372
      %v4571 = vpop.f32.mrf.mxu0
      %v4572 = vadd.f32 0.0, %v4571
      %v4573 = vpop.f32.mrf.mxu0
      %4574 = vmatprep.mubr.f32.mxu0 0.0
      %4575 = vmatmul.mubr.f32.gmra.mxu0 %v4374
      %v4576 = vpop.f32.mrf.mxu0
      %v4577 = vadd.f32 0.0, %v4576
      %v4578 = vpop.f32.mrf.mxu0
      %4579 = vmatprep.mubr.f32.mxu0 0.0
      %4580 = vmatmul.mubr.f32.gmra.mxu0 %v4376
      %v4581 = vpop.f32.mrf.mxu0
      %v4582 = vadd.f32 0.0, %v4581
      %v4583 = vpop.f32.mrf.mxu0
      %4584 = vmatprep.mubr.f32.mxu0 0.0
      %4585 = vmatmul.mubr.f32.gmra.mxu0 %v4378
      %v4586 = vpop.f32.mrf.mxu0
      %v4587 = vadd.f32 0.0, %v4586
      %v4588 = vpop.f32.mrf.mxu0
      %4589 = vmatprep.mubr.f32.mxu0 0.0
      %4590 = vmatmul.mubr.f32.gmra.mxu0 %v4380
      %v4591 = vpop.f32.mrf.mxu0
      %v4592 = vadd.f32 0.0, %v4591
      %v4593 = vpop.f32.mrf.mxu0
      %4594 = vmatprep.mubr.f32.mxu0 0.0
      %4595 = vmatmul.mubr.f32.gmra.mxu0 %v4382
      %v4596 = vpop.f32.mrf.mxu0
      %v4597 = vadd.f32 0.0, %v4596
      %v4598 = vpop.f32.mrf.mxu0
      %4599 = vmatprep.mubr.f32.mxu0 0.0
      %4600 = vmatmul.mubr.f32.gmra.mxu0 %v4384
      %v4601 = vpop.f32.mrf.mxu0
      %v4602 = vadd.f32 0.0, %v4601
      %v4603 = vpop.f32.mrf.mxu0
      %4604 = vmatprep.mubr.f32.mxu0 0.0
      %4605 = vmatmul.mubr.f32.gmra.mxu0 %v4386
      %v4606 = vpop.f32.mrf.mxu0
      %v4607 = vadd.f32 0.0, %v4606
      %v4608 = vpop.f32.mrf.mxu0
      %4609 = vmatprep.mubr.f32.mxu0 0.0
      %4610 = vmatmul.mubr.f32.gmra.mxu0 %v4388
      %v4611 = vpop.f32.mrf.mxu0
      %v4612 = vadd.f32 0.0, %v4611
      %v4613 = vpop.f32.mrf.mxu0
      %4614 = vmatprep.mubr.f32.mxu0 0.0
      %4615 = vmatmul.mubr.f32.gmra.mxu0 %v4390
      %v4616 = vpop.f32.mrf.mxu0
      %v4617 = vadd.f32 0.0, %v4616
      %v4618 = vpop.f32.mrf.mxu0
      %4619 = vdwg.mxu0
      %v4620 = vadd.f32 %v4097, %v4462
      %v4621 = vadd.f32 %v4102, %v4467
      %v4622 = vadd.f32 %v4107, %v4472
      %v4623 = vadd.f32 %v4112, %v4477
      %v4624 = vadd.f32 %v4117, %v4482
      %v4625 = vadd.f32 %v4122, %v4487
      %v4626 = vadd.f32 %v4127, %v4492
      %v4627 = vadd.f32 %v4132, %v4497
      %v4628 = vadd.f32 %v4137, %v4502
      %v4629 = vadd.f32 %v4142, %v4507
      %v4630 = vadd.f32 %v4147, %v4512
      %v4631 = vadd.f32 %v4152, %v4517
      %v4632 = vadd.f32 %v4157, %v4522
      %v4633 = vadd.f32 %v4162, %v4527
      %v4634 = vadd.f32 %v4167, %v4532
      %v4635 = vadd.f32 %v4172, %v4537
      %v4636 = vadd.f32 %v4177, %v4542
      %v4637 = vadd.f32 %v4182, %v4547
      %v4638 = vadd.f32 %v4187, %v4552
      %v4639 = vadd.f32 %v4192, %v4557
      %v4640 = vadd.f32 %v4197, %v4562
      %v4641 = vadd.f32 %v4202, %v4567
      %v4642 = vadd.f32 %v4207, %v4572
      %v4643 = vadd.f32 %v4212, %v4577
      %v4644 = vadd.f32 %v4217, %v4582
      %v4645 = vadd.f32 %v4222, %v4587
      %v4646 = vadd.f32 %v4227, %v4592
      %v4647 = vadd.f32 %v4232, %v4597
      %v4648 = vadd.f32 %v4237, %v4602
      %v4649 = vadd.f32 %v4242, %v4607
      %v4650 = vadd.f32 %v4247, %v4612
      %v4651 = vadd.f32 %v4252, %v4617
      %s4652 = scalar_lea.vmem %s2, 12
      %v4653 = vld [vmem:[%s4652] sm:$0xf]
      %v4655 = vsel %vm521, %v3554, 0
      %v4657 = vsel %vm521, %v3474, 0
      %v4660 = vsel %vm582, %v4653, 0
      %4662 = vmatprep.subr.mxu0 0.0
      %4663 = vmatpush1.msra.mxu0 0.0
      %4664 = vmatprep.subr.mxu0 0.0
      %4665 = vmatpush1.msra.mxu0 0.0
      %4666 = vmatprep.subr.mxu0 0.0
      %4667 = vmatpush1.msra.mxu0 0.0
      %4668 = vmatprep.subr.mxu0 0.0
      %4669 = vmatpush1.msra.mxu0 0.0
      %4670 = vmatprep.subr.mxu0 0.0
      %4671 = vmatpush1.msra.mxu0 0.0
      %4672 = vmatprep.subr.mxu0 0.0
      %4673 = vmatpush1.msra.mxu0 0.0
      %4674 = vmatprep.subr.mxu0 0.0
      %4675 = vmatpush1.msra.mxu0 0.0
      %4676 = vmatprep.subr.mxu0 0.0
      %4677 = vmatpush1.msra.mxu0 0.0
      %4678 = vmatprep.subr.mxu0 0.0
      %4679 = vmatpush1.msra.mxu0 0.0
      %4680 = vmatprep.subr.mxu0 0.0
      %4681 = vmatpush1.msra.mxu0 0.0
      %4682 = vmatprep.subr.mxu0 0.0
      %4683 = vmatpush1.msra.mxu0 0.0
      %4684 = vmatprep.subr.mxu0 0.0
      %4685 = vmatpush1.msra.mxu0 0.0
      %4686 = vmatprep.subr.mxu0 0.0
      %4687 = vmatpush1.msra.mxu0 0.0
      %4688 = vmatprep.subr.mxu0 0.0
      %4689 = vmatpush1.msra.mxu0 0.0
      %4690 = vmatprep.subr.mxu0 0.0
      %4691 = vmatpush1.msra.mxu0 0.0
      %4692 = vmatprep.subr.mxu0 0.0
      %4693 = vmatpush1.msra.mxu0 %v4660
      %4694 = vmatprep.subr.mxu0 0.0
      %4695 = vmatpush2.msra.mxu0 0.0
      %4696 = vmatprep.subr.mxu0 0.0
      %4697 = vmatpush2.msra.mxu0 0.0
      %4698 = vmatprep.subr.mxu0 0.0
      %4699 = vmatpush2.msra.mxu0 0.0
      %4700 = vmatprep.subr.mxu0 0.0
      %4701 = vmatpush2.msra.mxu0 0.0
      %4702 = vmatprep.subr.mxu0 0.0
      %4703 = vmatpush2.msra.mxu0 0.0
      %4704 = vmatprep.subr.mxu0 0.0
      %4705 = vmatpush2.msra.mxu0 0.0
      %4706 = vmatprep.subr.mxu0 0.0
      %4707 = vmatpush2.msra.mxu0 0.0
      %4708 = vmatprep.subr.mxu0 0.0
      %4709 = vmatpush2.msra.mxu0 0.0
      %4710 = vmatprep.subr.mxu0 0.0
      %4711 = vmatpush2.msra.mxu0 0.0
      %4712 = vmatprep.subr.mxu0 0.0
      %4713 = vmatpush2.msra.mxu0 0.0
      %4714 = vmatprep.subr.mxu0 0.0
      %4715 = vmatpush2.msra.mxu0 0.0
      %4716 = vmatprep.subr.mxu0 0.0
      %4717 = vmatpush2.msra.mxu0 0.0
      %4718 = vmatprep.subr.mxu0 0.0
      %4719 = vmatpush2.msra.mxu0 0.0
      %4720 = vmatprep.subr.mxu0 0.0
      %4721 = vmatpush2.msra.mxu0 0.0
      %4722 = vmatprep.subr.mxu0 0.0
      %4723 = vmatpush2.msra.mxu0 0.0
      %4724 = vmatprep.subr.mxu0 0.0
      %4725 = vmatpush2.msra.mxu0 0.0
      %4726 = vmatprep.mubr.f32.mxu0 0.0
      %4727 = vmatmul.mubr.f32.gmra.mxu0 %v3971
      %v4728 = vpop.f32.mrf.mxu0
      %v4729 = vadd.f32 0.0, %v4728
      %v4730 = vpop.f32.mrf.mxu0
      %4731 = vmatprep.mubr.f32.mxu0 0.0
      %4732 = vmatmul.mubr.f32.gmra.mxu0 %v3973
      %v4733 = vpop.f32.mrf.mxu0
      %v4734 = vadd.f32 0.0, %v4733
      %v4735 = vpop.f32.mrf.mxu0
      %4736 = vmatprep.mubr.f32.mxu0 0.0
      %4737 = vmatmul.mubr.f32.gmra.mxu0 %v3967
      %v4738 = vpop.f32.mrf.mxu0
      %v4739 = vadd.f32 0.0, %v4738
      %v4740 = vpop.f32.mrf.mxu0
      %4741 = vmatprep.mubr.f32.mxu0 0.0
      %4742 = vmatmul.mubr.f32.gmra.mxu0 %v3969
      %v4743 = vpop.f32.mrf.mxu0
      %v4744 = vadd.f32 0.0, %v4743
      %v4745 = vpop.f32.mrf.mxu0
      %4746 = vmatprep.mubr.f32.mxu0 0.0
      %4747 = vmatmul.mubr.f32.gmra.mxu0 %v3975
      %v4748 = vpop.f32.mrf.mxu0
      %v4749 = vadd.f32 0.0, %v4748
      %v4750 = vpop.f32.mrf.mxu0
      %4751 = vmatprep.mubr.f32.mxu0 0.0
      %4752 = vmatmul.mubr.f32.gmra.mxu0 %v3977
      %v4753 = vpop.f32.mrf.mxu0
      %v4754 = vadd.f32 0.0, %v4753
      %v4755 = vpop.f32.mrf.mxu0
      %4756 = vmatprep.mubr.f32.mxu0 0.0
      %4757 = vmatmul.mubr.f32.gmra.mxu0 %v3979
      %v4758 = vpop.f32.mrf.mxu0
      %v4759 = vadd.f32 0.0, %v4758
      %v4760 = vpop.f32.mrf.mxu0
      %4761 = vmatprep.mubr.f32.mxu0 0.0
      %4762 = vmatmul.mubr.f32.gmra.mxu0 %v3981
      %v4763 = vpop.f32.mrf.mxu0
      %v4764 = vadd.f32 0.0, %v4763
      %v4765 = vpop.f32.mrf.mxu0
      %4766 = vmatprep.mubr.f32.mxu0 0.0
      %4767 = vmatmul.mubr.f32.gmra.mxu0 %v3983
      %v4768 = vpop.f32.mrf.mxu0
      %v4769 = vadd.f32 0.0, %v4768
      %v4770 = vpop.f32.mrf.mxu0
      %4771 = vmatprep.mubr.f32.mxu0 0.0
      %4772 = vmatmul.mubr.f32.gmra.mxu0 %v3985
      %v4773 = vpop.f32.mrf.mxu0
      %v4774 = vadd.f32 0.0, %v4773
      %v4775 = vpop.f32.mrf.mxu0
      %4776 = vmatprep.mubr.f32.mxu0 0.0
      %4777 = vmatmul.mubr.f32.gmra.mxu0 %v3987
      %v4778 = vpop.f32.mrf.mxu0
      %v4779 = vadd.f32 0.0, %v4778
      %v4780 = vpop.f32.mrf.mxu0
      %4781 = vmatprep.mubr.f32.mxu0 0.0
      %4782 = vmatmul.mubr.f32.gmra.mxu0 %v3989
      %v4783 = vpop.f32.mrf.mxu0
      %v4784 = vadd.f32 0.0, %v4783
      %v4785 = vpop.f32.mrf.mxu0
      %4786 = vmatprep.mubr.f32.mxu0 0.0
      %4787 = vmatmul.mubr.f32.gmra.mxu0 %v3991
      %v4788 = vpop.f32.mrf.mxu0
      %v4789 = vadd.f32 0.0, %v4788
      %v4790 = vpop.f32.mrf.mxu0
      %4791 = vmatprep.mubr.f32.mxu0 0.0
      %4792 = vmatmul.mubr.f32.gmra.mxu0 %v3993
      %v4793 = vpop.f32.mrf.mxu0
      %v4794 = vadd.f32 0.0, %v4793
      %v4795 = vpop.f32.mrf.mxu0
      %4796 = vmatprep.mubr.f32.mxu0 0.0
      %4797 = vmatmul.mubr.f32.gmra.mxu0 %v3995
      %v4798 = vpop.f32.mrf.mxu0
      %v4799 = vadd.f32 0.0, %v4798
      %v4800 = vpop.f32.mrf.mxu0
      %4801 = vmatprep.mubr.f32.mxu0 0.0
      %4802 = vmatmul.mubr.f32.gmra.mxu0 %v3997
      %v4803 = vpop.f32.mrf.mxu0
      %v4804 = vadd.f32 0.0, %v4803
      %v4805 = vpop.f32.mrf.mxu0
      %4806 = vmatprep.mubr.f32.mxu0 0.0
      %4807 = vmatmul.mubr.f32.gmra.mxu0 %v3999
      %v4808 = vpop.f32.mrf.mxu0
      %v4809 = vadd.f32 0.0, %v4808
      %v4810 = vpop.f32.mrf.mxu0
      %4811 = vmatprep.mubr.f32.mxu0 0.0
      %4812 = vmatmul.mubr.f32.gmra.mxu0 %v4001
      %v4813 = vpop.f32.mrf.mxu0
      %v4814 = vadd.f32 0.0, %v4813
      %v4815 = vpop.f32.mrf.mxu0
      %4816 = vmatprep.mubr.f32.mxu0 0.0
      %4817 = vmatmul.mubr.f32.gmra.mxu0 %v4003
      %v4818 = vpop.f32.mrf.mxu0
      %v4819 = vadd.f32 0.0, %v4818
      %v4820 = vpop.f32.mrf.mxu0
      %4821 = vmatprep.mubr.f32.mxu0 0.0
      %4822 = vmatmul.mubr.f32.gmra.mxu0 %v4005
      %v4823 = vpop.f32.mrf.mxu0
      %v4824 = vadd.f32 0.0, %v4823
      %v4825 = vpop.f32.mrf.mxu0
      %4826 = vmatprep.mubr.f32.mxu0 0.0
      %4827 = vmatmul.mubr.f32.gmra.mxu0 %v4007
      %v4828 = vpop.f32.mrf.mxu0
      %v4829 = vadd.f32 0.0, %v4828
      %v4830 = vpop.f32.mrf.mxu0
      %4831 = vmatprep.mubr.f32.mxu0 0.0
      %4832 = vmatmul.mubr.f32.gmra.mxu0 %v4009
      %v4833 = vpop.f32.mrf.mxu0
      %v4834 = vadd.f32 0.0, %v4833
      %v4835 = vpop.f32.mrf.mxu0
      %4836 = vmatprep.mubr.f32.mxu0 0.0
      %4837 = vmatmul.mubr.f32.gmra.mxu0 %v4011
      %v4838 = vpop.f32.mrf.mxu0
      %v4839 = vadd.f32 0.0, %v4838
      %v4840 = vpop.f32.mrf.mxu0
      %4841 = vmatprep.mubr.f32.mxu0 0.0
      %4842 = vmatmul.mubr.f32.gmra.mxu0 %v4013
      %v4843 = vpop.f32.mrf.mxu0
      %v4844 = vadd.f32 0.0, %v4843
      %v4845 = vpop.f32.mrf.mxu0
      %4846 = vmatprep.mubr.f32.mxu0 0.0
      %4847 = vmatmul.mubr.f32.gmra.mxu0 %v4015
      %v4848 = vpop.f32.mrf.mxu0
      %v4849 = vadd.f32 0.0, %v4848
      %v4850 = vpop.f32.mrf.mxu0
      %4851 = vmatprep.mubr.f32.mxu0 0.0
      %4852 = vmatmul.mubr.f32.gmra.mxu0 %v4017
      %v4853 = vpop.f32.mrf.mxu0
      %v4854 = vadd.f32 0.0, %v4853
      %v4855 = vpop.f32.mrf.mxu0
      %4856 = vmatprep.mubr.f32.mxu0 0.0
      %4857 = vmatmul.mubr.f32.gmra.mxu0 %v4019
      %v4858 = vpop.f32.mrf.mxu0
      %v4859 = vadd.f32 0.0, %v4858
      %v4860 = vpop.f32.mrf.mxu0
      %4861 = vmatprep.mubr.f32.mxu0 0.0
      %4862 = vmatmul.mubr.f32.gmra.mxu0 %v4021
      %v4863 = vpop.f32.mrf.mxu0
      %v4864 = vadd.f32 0.0, %v4863
      %v4865 = vpop.f32.mrf.mxu0
      %4866 = vmatprep.mubr.f32.mxu0 0.0
      %4867 = vmatmul.mubr.f32.gmra.mxu0 %v4023
      %v4868 = vpop.f32.mrf.mxu0
      %v4869 = vadd.f32 0.0, %v4868
      %v4870 = vpop.f32.mrf.mxu0
      %4871 = vmatprep.mubr.f32.mxu0 0.0
      %4872 = vmatmul.mubr.f32.gmra.mxu0 %v4025
      %v4873 = vpop.f32.mrf.mxu0
      %v4874 = vadd.f32 0.0, %v4873
      %v4875 = vpop.f32.mrf.mxu0
      %4876 = vmatprep.mubr.f32.mxu0 0.0
      %4877 = vmatmul.mubr.f32.gmra.mxu0 %v4655
      %v4878 = vpop.f32.mrf.mxu0
      %v4879 = vadd.f32 0.0, %v4878
      %v4880 = vpop.f32.mrf.mxu0
      %4881 = vmatprep.mubr.f32.mxu0 0.0
      %4882 = vmatmul.mubr.f32.gmra.mxu0 %v4657
      %v4883 = vpop.f32.mrf.mxu0
      %v4884 = vadd.f32 0.0, %v4883
      %v4885 = vpop.f32.mrf.mxu0
      %4886 = vdwg.mxu0
      %v4887 = vadd.f32 %v4620, %v4729
      %v4888 = vadd.f32 %v4621, %v4734
      %v4889 = vadd.f32 %v4622, %v4739
      %v4890 = vadd.f32 %v4623, %v4744
      %v4891 = vadd.f32 %v4624, %v4749
      %v4892 = vadd.f32 %v4625, %v4754
      %v4893 = vadd.f32 %v4626, %v4759
      %v4894 = vadd.f32 %v4627, %v4764
      %v4895 = vadd.f32 %v4628, %v4769
      %v4896 = vadd.f32 %v4629, %v4774
      %v4897 = vadd.f32 %v4630, %v4779
      %v4898 = vadd.f32 %v4631, %v4784
      %v4899 = vadd.f32 %v4632, %v4789
      %v4900 = vadd.f32 %v4633, %v4794
      %v4901 = vadd.f32 %v4634, %v4799
      %v4902 = vadd.f32 %v4635, %v4804
      %v4903 = vadd.f32 %v4636, %v4809
      %v4904 = vadd.f32 %v4637, %v4814
      %v4905 = vadd.f32 %v4638, %v4819
      %v4906 = vadd.f32 %v4639, %v4824
      %v4907 = vadd.f32 %v4640, %v4829
      %v4908 = vadd.f32 %v4641, %v4834
      %v4909 = vadd.f32 %v4642, %v4839
      %v4910 = vadd.f32 %v4643, %v4844
      %v4911 = vadd.f32 %v4644, %v4849
      %v4912 = vadd.f32 %v4645, %v4854
      %v4913 = vadd.f32 %v4646, %v4859
      %v4914 = vadd.f32 %v4647, %v4864
      %v4915 = vadd.f32 %v4648, %v4869
      %v4916 = vadd.f32 %v4649, %v4874
      %v4917 = vadd.f32 %v4650, %v4879
      %v4918 = vadd.f32 %v4651, %v4884
      %v4920 = vrot.slane %v3554, 1
      %v4921 = vrot.slane %v3474, 1
      %v4922 = vsel %vm443, %v4920, %v4921
      %v4923 = vrot.slane %v3570, 1
      %v4924 = vsel %vm443, %v4921, %v4923
      %s4925 = scalar_lea.vmem %s2, 16
      %v4926 = vld [vmem:[%s4925] sm:$0xf]
      %v4927 = vsel %vm521, %v4922, 0
      %v4929 = vsel %vm521, %v4924, 0
      %v4932 = vsel %vm582, %v4926, 0
      %4934 = vmatprep.subr.mxu0 0.0
      %4935 = vmatpush1.msra.mxu0 0.0
      %4936 = vmatprep.subr.mxu0 0.0
      %4937 = vmatpush1.msra.mxu0 0.0
      %4938 = vmatprep.subr.mxu0 0.0
      %4939 = vmatpush1.msra.mxu0 0.0
      %4940 = vmatprep.subr.mxu0 0.0
      %4941 = vmatpush1.msra.mxu0 0.0
      %4942 = vmatprep.subr.mxu0 0.0
      %4943 = vmatpush1.msra.mxu0 0.0
      %4944 = vmatprep.subr.mxu0 0.0
      %4945 = vmatpush1.msra.mxu0 0.0
      %4946 = vmatprep.subr.mxu0 0.0
      %4947 = vmatpush1.msra.mxu0 0.0
      %4948 = vmatprep.subr.mxu0 0.0
      %4949 = vmatpush1.msra.mxu0 0.0
      %4950 = vmatprep.subr.mxu0 0.0
      %4951 = vmatpush1.msra.mxu0 0.0
      %4952 = vmatprep.subr.mxu0 0.0
      %4953 = vmatpush1.msra.mxu0 0.0
      %4954 = vmatprep.subr.mxu0 0.0
      %4955 = vmatpush1.msra.mxu0 0.0
      %4956 = vmatprep.subr.mxu0 0.0
      %4957 = vmatpush1.msra.mxu0 0.0
      %4958 = vmatprep.subr.mxu0 0.0
      %4959 = vmatpush1.msra.mxu0 0.0
      %4960 = vmatprep.subr.mxu0 0.0
      %4961 = vmatpush1.msra.mxu0 0.0
      %4962 = vmatprep.subr.mxu0 0.0
      %4963 = vmatpush1.msra.mxu0 0.0
      %4964 = vmatprep.subr.mxu0 0.0
      %4965 = vmatpush1.msra.mxu0 %v4932
      %4966 = vmatprep.subr.mxu0 0.0
      %4967 = vmatpush2.msra.mxu0 0.0
      %4968 = vmatprep.subr.mxu0 0.0
      %4969 = vmatpush2.msra.mxu0 0.0
      %4970 = vmatprep.subr.mxu0 0.0
      %4971 = vmatpush2.msra.mxu0 0.0
      %4972 = vmatprep.subr.mxu0 0.0
      %4973 = vmatpush2.msra.mxu0 0.0
      %4974 = vmatprep.subr.mxu0 0.0
      %4975 = vmatpush2.msra.mxu0 0.0
      %4976 = vmatprep.subr.mxu0 0.0
      %4977 = vmatpush2.msra.mxu0 0.0
      %4978 = vmatprep.subr.mxu0 0.0
      %4979 = vmatpush2.msra.mxu0 0.0
      %4980 = vmatprep.subr.mxu0 0.0
      %4981 = vmatpush2.msra.mxu0 0.0
      %4982 = vmatprep.subr.mxu0 0.0
      %4983 = vmatpush2.msra.mxu0 0.0
      %4984 = vmatprep.subr.mxu0 0.0
      %4985 = vmatpush2.msra.mxu0 0.0
      %4986 = vmatprep.subr.mxu0 0.0
      %4987 = vmatpush2.msra.mxu0 0.0
      %4988 = vmatprep.subr.mxu0 0.0
      %4989 = vmatpush2.msra.mxu0 0.0
      %4990 = vmatprep.subr.mxu0 0.0
      %4991 = vmatpush2.msra.mxu0 0.0
      %4992 = vmatprep.subr.mxu0 0.0
      %4993 = vmatpush2.msra.mxu0 0.0
      %4994 = vmatprep.subr.mxu0 0.0
      %4995 = vmatpush2.msra.mxu0 0.0
      %4996 = vmatprep.subr.mxu0 0.0
      %4997 = vmatpush2.msra.mxu0 0.0
      %4998 = vmatprep.mubr.f32.mxu0 0.0
      %4999 = vmatmul.mubr.f32.gmra.mxu0 %v3683
      %v5000 = vpop.f32.mrf.mxu0
      %v5001 = vadd.f32 0.0, %v5000
      %v5002 = vpop.f32.mrf.mxu0
      %5003 = vmatprep.mubr.f32.mxu0 0.0
      %5004 = vmatmul.mubr.f32.gmra.mxu0 %v3685
      %v5005 = vpop.f32.mrf.mxu0
      %v5006 = vadd.f32 0.0, %v5005
      %v5007 = vpop.f32.mrf.mxu0
      %5008 = vmatprep.mubr.f32.mxu0 0.0
      %5009 = vmatmul.mubr.f32.gmra.mxu0 %v3679
      %v5010 = vpop.f32.mrf.mxu0
      %v5011 = vadd.f32 0.0, %v5010
      %v5012 = vpop.f32.mrf.mxu0
      %5013 = vmatprep.mubr.f32.mxu0 0.0
      %5014 = vmatmul.mubr.f32.gmra.mxu0 %v3681
      %v5015 = vpop.f32.mrf.mxu0
      %v5016 = vadd.f32 0.0, %v5015
      %v5017 = vpop.f32.mrf.mxu0
      %5018 = vmatprep.mubr.f32.mxu0 0.0
      %5019 = vmatmul.mubr.f32.gmra.mxu0 %v3687
      %v5020 = vpop.f32.mrf.mxu0
      %v5021 = vadd.f32 0.0, %v5020
      %v5022 = vpop.f32.mrf.mxu0
      %5023 = vmatprep.mubr.f32.mxu0 0.0
      %5024 = vmatmul.mubr.f32.gmra.mxu0 %v3689
      %v5025 = vpop.f32.mrf.mxu0
      %v5026 = vadd.f32 0.0, %v5025
      %v5027 = vpop.f32.mrf.mxu0
      %5028 = vmatprep.mubr.f32.mxu0 0.0
      %5029 = vmatmul.mubr.f32.gmra.mxu0 %v3691
      %v5030 = vpop.f32.mrf.mxu0
      %v5031 = vadd.f32 0.0, %v5030
      %v5032 = vpop.f32.mrf.mxu0
      %5033 = vmatprep.mubr.f32.mxu0 0.0
      %5034 = vmatmul.mubr.f32.gmra.mxu0 %v3693
      %v5035 = vpop.f32.mrf.mxu0
      %v5036 = vadd.f32 0.0, %v5035
      %v5037 = vpop.f32.mrf.mxu0
      %5038 = vmatprep.mubr.f32.mxu0 0.0
      %5039 = vmatmul.mubr.f32.gmra.mxu0 %v3695
      %v5040 = vpop.f32.mrf.mxu0
      %v5041 = vadd.f32 0.0, %v5040
      %v5042 = vpop.f32.mrf.mxu0
      %5043 = vmatprep.mubr.f32.mxu0 0.0
      %5044 = vmatmul.mubr.f32.gmra.mxu0 %v3697
      %v5045 = vpop.f32.mrf.mxu0
      %v5046 = vadd.f32 0.0, %v5045
      %v5047 = vpop.f32.mrf.mxu0
      %5048 = vmatprep.mubr.f32.mxu0 0.0
      %5049 = vmatmul.mubr.f32.gmra.mxu0 %v3699
      %v5050 = vpop.f32.mrf.mxu0
      %v5051 = vadd.f32 0.0, %v5050
      %v5052 = vpop.f32.mrf.mxu0
      %5053 = vmatprep.mubr.f32.mxu0 0.0
      %5054 = vmatmul.mubr.f32.gmra.mxu0 %v3701
      %v5055 = vpop.f32.mrf.mxu0
      %v5056 = vadd.f32 0.0, %v5055
      %v5057 = vpop.f32.mrf.mxu0
      %5058 = vmatprep.mubr.f32.mxu0 0.0
      %5059 = vmatmul.mubr.f32.gmra.mxu0 %v3703
      %v5060 = vpop.f32.mrf.mxu0
      %v5061 = vadd.f32 0.0, %v5060
      %v5062 = vpop.f32.mrf.mxu0
      %5063 = vmatprep.mubr.f32.mxu0 0.0
      %5064 = vmatmul.mubr.f32.gmra.mxu0 %v3705
      %v5065 = vpop.f32.mrf.mxu0
      %v5066 = vadd.f32 0.0, %v5065
      %v5067 = vpop.f32.mrf.mxu0
      %5068 = vmatprep.mubr.f32.mxu0 0.0
      %5069 = vmatmul.mubr.f32.gmra.mxu0 %v3707
      %v5070 = vpop.f32.mrf.mxu0
      %v5071 = vadd.f32 0.0, %v5070
      %v5072 = vpop.f32.mrf.mxu0
      %5073 = vmatprep.mubr.f32.mxu0 0.0
      %5074 = vmatmul.mubr.f32.gmra.mxu0 %v3709
      %v5075 = vpop.f32.mrf.mxu0
      %v5076 = vadd.f32 0.0, %v5075
      %v5077 = vpop.f32.mrf.mxu0
      %5078 = vmatprep.mubr.f32.mxu0 0.0
      %5079 = vmatmul.mubr.f32.gmra.mxu0 %v3711
      %v5080 = vpop.f32.mrf.mxu0
      %v5081 = vadd.f32 0.0, %v5080
      %v5082 = vpop.f32.mrf.mxu0
      %5083 = vmatprep.mubr.f32.mxu0 0.0
      %5084 = vmatmul.mubr.f32.gmra.mxu0 %v3713
      %v5085 = vpop.f32.mrf.mxu0
      %v5086 = vadd.f32 0.0, %v5085
      %v5087 = vpop.f32.mrf.mxu0
      %5088 = vmatprep.mubr.f32.mxu0 0.0
      %5089 = vmatmul.mubr.f32.gmra.mxu0 %v3715
      %v5090 = vpop.f32.mrf.mxu0
      %v5091 = vadd.f32 0.0, %v5090
      %v5092 = vpop.f32.mrf.mxu0
      %5093 = vmatprep.mubr.f32.mxu0 0.0
      %5094 = vmatmul.mubr.f32.gmra.mxu0 %v3717
      %v5095 = vpop.f32.mrf.mxu0
      %v5096 = vadd.f32 0.0, %v5095
      %v5097 = vpop.f32.mrf.mxu0
      %5098 = vmatprep.mubr.f32.mxu0 0.0
      %5099 = vmatmul.mubr.f32.gmra.mxu0 %v3719
      %v5100 = vpop.f32.mrf.mxu0
      %v5101 = vadd.f32 0.0, %v5100
      %v5102 = vpop.f32.mrf.mxu0
      %5103 = vmatprep.mubr.f32.mxu0 0.0
      %5104 = vmatmul.mubr.f32.gmra.mxu0 %v3721
      %v5105 = vpop.f32.mrf.mxu0
      %v5106 = vadd.f32 0.0, %v5105
      %v5107 = vpop.f32.mrf.mxu0
      %5108 = vmatprep.mubr.f32.mxu0 0.0
      %5109 = vmatmul.mubr.f32.gmra.mxu0 %v3723
      %v5110 = vpop.f32.mrf.mxu0
      %v5111 = vadd.f32 0.0, %v5110
      %v5112 = vpop.f32.mrf.mxu0
      %5113 = vmatprep.mubr.f32.mxu0 0.0
      %5114 = vmatmul.mubr.f32.gmra.mxu0 %v3725
      %v5115 = vpop.f32.mrf.mxu0
      %v5116 = vadd.f32 0.0, %v5115
      %v5117 = vpop.f32.mrf.mxu0
      %5118 = vmatprep.mubr.f32.mxu0 0.0
      %5119 = vmatmul.mubr.f32.gmra.mxu0 %v3727
      %v5120 = vpop.f32.mrf.mxu0
      %v5121 = vadd.f32 0.0, %v5120
      %v5122 = vpop.f32.mrf.mxu0
      %5123 = vmatprep.mubr.f32.mxu0 0.0
      %5124 = vmatmul.mubr.f32.gmra.mxu0 %v3729
      %v5125 = vpop.f32.mrf.mxu0
      %v5126 = vadd.f32 0.0, %v5125
      %v5127 = vpop.f32.mrf.mxu0
      %5128 = vmatprep.mubr.f32.mxu0 0.0
      %5129 = vmatmul.mubr.f32.gmra.mxu0 %v3731
      %v5130 = vpop.f32.mrf.mxu0
      %v5131 = vadd.f32 0.0, %v5130
      %v5132 = vpop.f32.mrf.mxu0
      %5133 = vmatprep.mubr.f32.mxu0 0.0
      %5134 = vmatmul.mubr.f32.gmra.mxu0 %v3733
      %v5135 = vpop.f32.mrf.mxu0
      %v5136 = vadd.f32 0.0, %v5135
      %v5137 = vpop.f32.mrf.mxu0
      %5138 = vmatprep.mubr.f32.mxu0 0.0
      %5139 = vmatmul.mubr.f32.gmra.mxu0 %v3735
      %v5140 = vpop.f32.mrf.mxu0
      %v5141 = vadd.f32 0.0, %v5140
      %v5142 = vpop.f32.mrf.mxu0
      %5143 = vmatprep.mubr.f32.mxu0 0.0
      %5144 = vmatmul.mubr.f32.gmra.mxu0 %v3737
      %v5145 = vpop.f32.mrf.mxu0
      %v5146 = vadd.f32 0.0, %v5145
      %v5147 = vpop.f32.mrf.mxu0
      %5148 = vmatprep.mubr.f32.mxu0 0.0
      %5149 = vmatmul.mubr.f32.gmra.mxu0 %v4927
      %v5150 = vpop.f32.mrf.mxu0
      %v5151 = vadd.f32 0.0, %v5150
      %v5152 = vpop.f32.mrf.mxu0
      %5153 = vmatprep.mubr.f32.mxu0 0.0
      %5154 = vmatmul.mubr.f32.gmra.mxu0 %v4929
      %v5155 = vpop.f32.mrf.mxu0
      %v5156 = vadd.f32 0.0, %v5155
      %v5157 = vpop.f32.mrf.mxu0
      %5158 = vdwg.mxu0
      %v5159 = vadd.f32 %v4887, %v5001
      %v5160 = vadd.f32 %v4888, %v5006
      %v5161 = vadd.f32 %v4889, %v5011
      %v5162 = vadd.f32 %v4890, %v5016
      %v5163 = vadd.f32 %v4891, %v5021
      %v5164 = vadd.f32 %v4892, %v5026
      %v5165 = vadd.f32 %v4893, %v5031
      %v5166 = vadd.f32 %v4894, %v5036
      %v5167 = vadd.f32 %v4895, %v5041
      %v5168 = vadd.f32 %v4896, %v5046
      %v5169 = vadd.f32 %v4897, %v5051
      %v5170 = vadd.f32 %v4898, %v5056
      %v5171 = vadd.f32 %v4899, %v5061
      %v5172 = vadd.f32 %v4900, %v5066
      %v5173 = vadd.f32 %v4901, %v5071
      %v5174 = vadd.f32 %v4902, %v5076
      %v5175 = vadd.f32 %v4903, %v5081
      %v5176 = vadd.f32 %v4904, %v5086
      %v5177 = vadd.f32 %v4905, %v5091
      %v5178 = vadd.f32 %v4906, %v5096
      %v5179 = vadd.f32 %v4907, %v5101
      %v5180 = vadd.f32 %v4908, %v5106
      %v5181 = vadd.f32 %v4909, %v5111
      %v5182 = vadd.f32 %v4910, %v5116
      %v5183 = vadd.f32 %v4911, %v5121
      %v5184 = vadd.f32 %v4912, %v5126
      %v5185 = vadd.f32 %v4913, %v5131
      %v5186 = vadd.f32 %v4914, %v5136
      %v5187 = vadd.f32 %v4915, %v5141
      %v5188 = vadd.f32 %v4916, %v5146
      %v5189 = vadd.f32 %v4917, %v5151
      %v5190 = vadd.f32 %v4918, %v5156
      %v5191 = vrot.slane %v3554, 2
      %v5192 = vrot.slane %v3474, 2
      %v5193 = vsel %vm1099, %v5191, %v5192
      %v5194 = vrot.slane %v3570, 2
      %v5195 = vsel %vm1099, %v5192, %v5194
      %s5196 = scalar_lea.vmem %s2, 20
      %v5197 = vld [vmem:[%s5196] sm:$0xf]
      %v5198 = vsel %vm521, %v5193, 0
      %v5200 = vsel %vm521, %v5195, 0
      %v5203 = vsel %vm582, %v5197, 0
      %5205 = vmatprep.subr.mxu0 0.0
      %5206 = vmatpush1.msra.mxu0 0.0
      %5207 = vmatprep.subr.mxu0 0.0
      %5208 = vmatpush1.msra.mxu0 0.0
      %5209 = vmatprep.subr.mxu0 0.0
      %5210 = vmatpush1.msra.mxu0 0.0
      %5211 = vmatprep.subr.mxu0 0.0
      %5212 = vmatpush1.msra.mxu0 0.0
      %5213 = vmatprep.subr.mxu0 0.0
      %5214 = vmatpush1.msra.mxu0 0.0
      %5215 = vmatprep.subr.mxu0 0.0
      %5216 = vmatpush1.msra.mxu0 0.0
      %5217 = vmatprep.subr.mxu0 0.0
      %5218 = vmatpush1.msra.mxu0 0.0
      %5219 = vmatprep.subr.mxu0 0.0
      %5220 = vmatpush1.msra.mxu0 0.0
      %5221 = vmatprep.subr.mxu0 0.0
      %5222 = vmatpush1.msra.mxu0 0.0
      %5223 = vmatprep.subr.mxu0 0.0
      %5224 = vmatpush1.msra.mxu0 0.0
      %5225 = vmatprep.subr.mxu0 0.0
      %5226 = vmatpush1.msra.mxu0 0.0
      %5227 = vmatprep.subr.mxu0 0.0
      %5228 = vmatpush1.msra.mxu0 0.0
      %5229 = vmatprep.subr.mxu0 0.0
      %5230 = vmatpush1.msra.mxu0 0.0
      %5231 = vmatprep.subr.mxu0 0.0
      %5232 = vmatpush1.msra.mxu0 0.0
      %5233 = vmatprep.subr.mxu0 0.0
      %5234 = vmatpush1.msra.mxu0 0.0
      %5235 = vmatprep.subr.mxu0 0.0
      %5236 = vmatpush1.msra.mxu0 %v5203
      %5237 = vmatprep.subr.mxu0 0.0
      %5238 = vmatpush2.msra.mxu0 0.0
      %5239 = vmatprep.subr.mxu0 0.0
      %5240 = vmatpush2.msra.mxu0 0.0
      %5241 = vmatprep.subr.mxu0 0.0
      %5242 = vmatpush2.msra.mxu0 0.0
      %5243 = vmatprep.subr.mxu0 0.0
      %5244 = vmatpush2.msra.mxu0 0.0
      %5245 = vmatprep.subr.mxu0 0.0
      %5246 = vmatpush2.msra.mxu0 0.0
      %5247 = vmatprep.subr.mxu0 0.0
      %5248 = vmatpush2.msra.mxu0 0.0
      %5249 = vmatprep.subr.mxu0 0.0
      %5250 = vmatpush2.msra.mxu0 0.0
      %5251 = vmatprep.subr.mxu0 0.0
      %5252 = vmatpush2.msra.mxu0 0.0
      %5253 = vmatprep.subr.mxu0 0.0
      %5254 = vmatpush2.msra.mxu0 0.0
      %5255 = vmatprep.subr.mxu0 0.0
      %5256 = vmatpush2.msra.mxu0 0.0
      %5257 = vmatprep.subr.mxu0 0.0
      %5258 = vmatpush2.msra.mxu0 0.0
      %5259 = vmatprep.subr.mxu0 0.0
      %5260 = vmatpush2.msra.mxu0 0.0
      %5261 = vmatprep.subr.mxu0 0.0
      %5262 = vmatpush2.msra.mxu0 0.0
      %5263 = vmatprep.subr.mxu0 0.0
      %5264 = vmatpush2.msra.mxu0 0.0
      %5265 = vmatprep.subr.mxu0 0.0
      %5266 = vmatpush2.msra.mxu0 0.0
      %5267 = vmatprep.subr.mxu0 0.0
      %5268 = vmatpush2.msra.mxu0 0.0
      %5269 = vmatprep.mubr.f32.mxu0 0.0
      %5270 = vmatmul.mubr.f32.gmra.mxu0 %v4336
      %v5271 = vpop.f32.mrf.mxu0
      %v5272 = vadd.f32 0.0, %v5271
      %v5273 = vpop.f32.mrf.mxu0
      %5274 = vmatprep.mubr.f32.mxu0 0.0
      %5275 = vmatmul.mubr.f32.gmra.mxu0 %v4338
      %v5276 = vpop.f32.mrf.mxu0
      %v5277 = vadd.f32 0.0, %v5276
      %v5278 = vpop.f32.mrf.mxu0
      %5279 = vmatprep.mubr.f32.mxu0 0.0
      %5280 = vmatmul.mubr.f32.gmra.mxu0 %v4332
      %v5281 = vpop.f32.mrf.mxu0
      %v5282 = vadd.f32 0.0, %v5281
      %v5283 = vpop.f32.mrf.mxu0
      %5284 = vmatprep.mubr.f32.mxu0 0.0
      %5285 = vmatmul.mubr.f32.gmra.mxu0 %v4334
      %v5286 = vpop.f32.mrf.mxu0
      %v5287 = vadd.f32 0.0, %v5286
      %v5288 = vpop.f32.mrf.mxu0
      %5289 = vmatprep.mubr.f32.mxu0 0.0
      %5290 = vmatmul.mubr.f32.gmra.mxu0 %v4340
      %v5291 = vpop.f32.mrf.mxu0
      %v5292 = vadd.f32 0.0, %v5291
      %v5293 = vpop.f32.mrf.mxu0
      %5294 = vmatprep.mubr.f32.mxu0 0.0
      %5295 = vmatmul.mubr.f32.gmra.mxu0 %v4342
      %v5296 = vpop.f32.mrf.mxu0
      %v5297 = vadd.f32 0.0, %v5296
      %v5298 = vpop.f32.mrf.mxu0
      %5299 = vmatprep.mubr.f32.mxu0 0.0
      %5300 = vmatmul.mubr.f32.gmra.mxu0 %v4344
      %v5301 = vpop.f32.mrf.mxu0
      %v5302 = vadd.f32 0.0, %v5301
      %v5303 = vpop.f32.mrf.mxu0
      %5304 = vmatprep.mubr.f32.mxu0 0.0
      %5305 = vmatmul.mubr.f32.gmra.mxu0 %v4346
      %v5306 = vpop.f32.mrf.mxu0
      %v5307 = vadd.f32 0.0, %v5306
      %v5308 = vpop.f32.mrf.mxu0
      %5309 = vmatprep.mubr.f32.mxu0 0.0
      %5310 = vmatmul.mubr.f32.gmra.mxu0 %v4348
      %v5311 = vpop.f32.mrf.mxu0
      %v5312 = vadd.f32 0.0, %v5311
      %v5313 = vpop.f32.mrf.mxu0
      %5314 = vmatprep.mubr.f32.mxu0 0.0
      %5315 = vmatmul.mubr.f32.gmra.mxu0 %v4350
      %v5316 = vpop.f32.mrf.mxu0
      %v5317 = vadd.f32 0.0, %v5316
      %v5318 = vpop.f32.mrf.mxu0
      %5319 = vmatprep.mubr.f32.mxu0 0.0
      %5320 = vmatmul.mubr.f32.gmra.mxu0 %v4352
      %v5321 = vpop.f32.mrf.mxu0
      %v5322 = vadd.f32 0.0, %v5321
      %v5323 = vpop.f32.mrf.mxu0
      %5324 = vmatprep.mubr.f32.mxu0 0.0
      %5325 = vmatmul.mubr.f32.gmra.mxu0 %v4354
      %v5326 = vpop.f32.mrf.mxu0
      %v5327 = vadd.f32 0.0, %v5326
      %v5328 = vpop.f32.mrf.mxu0
      %5329 = vmatprep.mubr.f32.mxu0 0.0
      %5330 = vmatmul.mubr.f32.gmra.mxu0 %v4356
      %v5331 = vpop.f32.mrf.mxu0
      %v5332 = vadd.f32 0.0, %v5331
      %v5333 = vpop.f32.mrf.mxu0
      %5334 = vmatprep.mubr.f32.mxu0 0.0
      %5335 = vmatmul.mubr.f32.gmra.mxu0 %v4358
      %v5336 = vpop.f32.mrf.mxu0
      %v5337 = vadd.f32 0.0, %v5336
      %v5338 = vpop.f32.mrf.mxu0
      %5339 = vmatprep.mubr.f32.mxu0 0.0
      %5340 = vmatmul.mubr.f32.gmra.mxu0 %v4360
      %v5341 = vpop.f32.mrf.mxu0
      %v5342 = vadd.f32 0.0, %v5341
      %v5343 = vpop.f32.mrf.mxu0
      %5344 = vmatprep.mubr.f32.mxu0 0.0
      %5345 = vmatmul.mubr.f32.gmra.mxu0 %v4362
      %v5346 = vpop.f32.mrf.mxu0
      %v5347 = vadd.f32 0.0, %v5346
      %v5348 = vpop.f32.mrf.mxu0
      %5349 = vmatprep.mubr.f32.mxu0 0.0
      %5350 = vmatmul.mubr.f32.gmra.mxu0 %v4364
      %v5351 = vpop.f32.mrf.mxu0
      %v5352 = vadd.f32 0.0, %v5351
      %v5353 = vpop.f32.mrf.mxu0
      %5354 = vmatprep.mubr.f32.mxu0 0.0
      %5355 = vmatmul.mubr.f32.gmra.mxu0 %v4366
      %v5356 = vpop.f32.mrf.mxu0
      %v5357 = vadd.f32 0.0, %v5356
      %v5358 = vpop.f32.mrf.mxu0
      %5359 = vmatprep.mubr.f32.mxu0 0.0
      %5360 = vmatmul.mubr.f32.gmra.mxu0 %v4368
      %v5361 = vpop.f32.mrf.mxu0
      %v5362 = vadd.f32 0.0, %v5361
      %v5363 = vpop.f32.mrf.mxu0
      %5364 = vmatprep.mubr.f32.mxu0 0.0
      %5365 = vmatmul.mubr.f32.gmra.mxu0 %v4370
      %v5366 = vpop.f32.mrf.mxu0
      %v5367 = vadd.f32 0.0, %v5366
      %v5368 = vpop.f32.mrf.mxu0
      %5369 = vmatprep.mubr.f32.mxu0 0.0
      %5370 = vmatmul.mubr.f32.gmra.mxu0 %v4372
      %v5371 = vpop.f32.mrf.mxu0
      %v5372 = vadd.f32 0.0, %v5371
      %v5373 = vpop.f32.mrf.mxu0
      %5374 = vmatprep.mubr.f32.mxu0 0.0
      %5375 = vmatmul.mubr.f32.gmra.mxu0 %v4374
      %v5376 = vpop.f32.mrf.mxu0
      %v5377 = vadd.f32 0.0, %v5376
      %v5378 = vpop.f32.mrf.mxu0
      %5379 = vmatprep.mubr.f32.mxu0 0.0
      %5380 = vmatmul.mubr.f32.gmra.mxu0 %v4376
      %v5381 = vpop.f32.mrf.mxu0
      %v5382 = vadd.f32 0.0, %v5381
      %v5383 = vpop.f32.mrf.mxu0
      %5384 = vmatprep.mubr.f32.mxu0 0.0
      %5385 = vmatmul.mubr.f32.gmra.mxu0 %v4378
      %v5386 = vpop.f32.mrf.mxu0
      %v5387 = vadd.f32 0.0, %v5386
      %v5388 = vpop.f32.mrf.mxu0
      %5389 = vmatprep.mubr.f32.mxu0 0.0
      %5390 = vmatmul.mubr.f32.gmra.mxu0 %v4380
      %v5391 = vpop.f32.mrf.mxu0
      %v5392 = vadd.f32 0.0, %v5391
      %v5393 = vpop.f32.mrf.mxu0
      %5394 = vmatprep.mubr.f32.mxu0 0.0
      %5395 = vmatmul.mubr.f32.gmra.mxu0 %v4382
      %v5396 = vpop.f32.mrf.mxu0
      %v5397 = vadd.f32 0.0, %v5396
      %v5398 = vpop.f32.mrf.mxu0
      %5399 = vmatprep.mubr.f32.mxu0 0.0
      %5400 = vmatmul.mubr.f32.gmra.mxu0 %v4384
      %v5401 = vpop.f32.mrf.mxu0
      %v5402 = vadd.f32 0.0, %v5401
      %v5403 = vpop.f32.mrf.mxu0
      %5404 = vmatprep.mubr.f32.mxu0 0.0
      %5405 = vmatmul.mubr.f32.gmra.mxu0 %v4386
      %v5406 = vpop.f32.mrf.mxu0
      %v5407 = vadd.f32 0.0, %v5406
      %v5408 = vpop.f32.mrf.mxu0
      %5409 = vmatprep.mubr.f32.mxu0 0.0
      %5410 = vmatmul.mubr.f32.gmra.mxu0 %v4388
      %v5411 = vpop.f32.mrf.mxu0
      %v5412 = vadd.f32 0.0, %v5411
      %v5413 = vpop.f32.mrf.mxu0
      %5414 = vmatprep.mubr.f32.mxu0 0.0
      %5415 = vmatmul.mubr.f32.gmra.mxu0 %v4390
      %v5416 = vpop.f32.mrf.mxu0
      %v5417 = vadd.f32 0.0, %v5416
      %v5418 = vpop.f32.mrf.mxu0
      %5419 = vmatprep.mubr.f32.mxu0 0.0
      %5420 = vmatmul.mubr.f32.gmra.mxu0 %v5198
      %v5421 = vpop.f32.mrf.mxu0
      %v5422 = vadd.f32 0.0, %v5421
      %v5423 = vpop.f32.mrf.mxu0
      %5424 = vmatprep.mubr.f32.mxu0 0.0
      %5425 = vmatmul.mubr.f32.gmra.mxu0 %v5200
      %v5426 = vpop.f32.mrf.mxu0
      %v5427 = vadd.f32 0.0, %v5426
      %v5428 = vpop.f32.mrf.mxu0
      %5429 = vdwg.mxu0
      %v5430 = vadd.f32 %v5159, %v5272
      %v5431 = vadd.f32 %v5160, %v5277
      %v5432 = vadd.f32 %v5161, %v5282
      %v5433 = vadd.f32 %v5162, %v5287
      %v5434 = vadd.f32 %v5163, %v5292
      %v5435 = vadd.f32 %v5164, %v5297
      %v5436 = vadd.f32 %v5165, %v5302
      %v5437 = vadd.f32 %v5166, %v5307
      %v5438 = vadd.f32 %v5167, %v5312
      %v5439 = vadd.f32 %v5168, %v5317
      %v5440 = vadd.f32 %v5169, %v5322
      %v5441 = vadd.f32 %v5170, %v5327
      %v5442 = vadd.f32 %v5171, %v5332
      %v5443 = vadd.f32 %v5172, %v5337
      %v5444 = vadd.f32 %v5173, %v5342
      %v5445 = vadd.f32 %v5174, %v5347
      %v5446 = vadd.f32 %v5175, %v5352
      %v5447 = vadd.f32 %v5176, %v5357
      %v5448 = vadd.f32 %v5177, %v5362
      %v5449 = vadd.f32 %v5178, %v5367
      %v5450 = vadd.f32 %v5179, %v5372
      %v5451 = vadd.f32 %v5180, %v5377
      %v5452 = vadd.f32 %v5181, %v5382
      %v5453 = vadd.f32 %v5182, %v5387
      %v5454 = vadd.f32 %v5183, %v5392
      %v5455 = vadd.f32 %v5184, %v5397
      %v5456 = vadd.f32 %v5185, %v5402
      %v5457 = vadd.f32 %v5186, %v5407
      %v5458 = vadd.f32 %v5187, %v5412
      %v5459 = vadd.f32 %v5188, %v5417
      %v5460 = vadd.f32 %v5189, %v5422
      %v5461 = vadd.f32 %v5190, %v5427
      %s5462 = scalar_lea.vmem %s2, 24
      %v5463 = vld [vmem:[%s5462] sm:$0xf]
      %v5465 = vsel %vm582, %v5463, 0
      %5467 = vmatprep.subr.mxu0 0.0
      %5468 = vmatpush1.msra.mxu0 0.0
      %5469 = vmatprep.subr.mxu0 0.0
      %5470 = vmatpush1.msra.mxu0 0.0
      %5471 = vmatprep.subr.mxu0 0.0
      %5472 = vmatpush1.msra.mxu0 0.0
      %5473 = vmatprep.subr.mxu0 0.0
      %5474 = vmatpush1.msra.mxu0 0.0
      %5475 = vmatprep.subr.mxu0 0.0
      %5476 = vmatpush1.msra.mxu0 0.0
      %5477 = vmatprep.subr.mxu0 0.0
      %5478 = vmatpush1.msra.mxu0 0.0
      %5479 = vmatprep.subr.mxu0 0.0
      %5480 = vmatpush1.msra.mxu0 0.0
      %5481 = vmatprep.subr.mxu0 0.0
      %5482 = vmatpush1.msra.mxu0 0.0
      %5483 = vmatprep.subr.mxu0 0.0
      %5484 = vmatpush1.msra.mxu0 0.0
      %5485 = vmatprep.subr.mxu0 0.0
      %5486 = vmatpush1.msra.mxu0 0.0
      %5487 = vmatprep.subr.mxu0 0.0
      %5488 = vmatpush1.msra.mxu0 0.0
      %5489 = vmatprep.subr.mxu0 0.0
      %5490 = vmatpush1.msra.mxu0 0.0
      %5491 = vmatprep.subr.mxu0 0.0
      %5492 = vmatpush1.msra.mxu0 0.0
      %5493 = vmatprep.subr.mxu0 0.0
      %5494 = vmatpush1.msra.mxu0 0.0
      %5495 = vmatprep.subr.mxu0 0.0
      %5496 = vmatpush1.msra.mxu0 0.0
      %5497 = vmatprep.subr.mxu0 0.0
      %5498 = vmatpush1.msra.mxu0 %v5465
      %5499 = vmatprep.subr.mxu0 0.0
      %5500 = vmatpush2.msra.mxu0 0.0
      %5501 = vmatprep.subr.mxu0 0.0
      %5502 = vmatpush2.msra.mxu0 0.0
      %5503 = vmatprep.subr.mxu0 0.0
      %5504 = vmatpush2.msra.mxu0 0.0
      %5505 = vmatprep.subr.mxu0 0.0
      %5506 = vmatpush2.msra.mxu0 0.0
      %5507 = vmatprep.subr.mxu0 0.0
      %5508 = vmatpush2.msra.mxu0 0.0
      %5509 = vmatprep.subr.mxu0 0.0
      %5510 = vmatpush2.msra.mxu0 0.0
      %5511 = vmatprep.subr.mxu0 0.0
      %5512 = vmatpush2.msra.mxu0 0.0
      %5513 = vmatprep.subr.mxu0 0.0
      %5514 = vmatpush2.msra.mxu0 0.0
      %5515 = vmatprep.subr.mxu0 0.0
      %5516 = vmatpush2.msra.mxu0 0.0
      %5517 = vmatprep.subr.mxu0 0.0
      %5518 = vmatpush2.msra.mxu0 0.0
      %5519 = vmatprep.subr.mxu0 0.0
      %5520 = vmatpush2.msra.mxu0 0.0
      %5521 = vmatprep.subr.mxu0 0.0
      %5522 = vmatpush2.msra.mxu0 0.0
      %5523 = vmatprep.subr.mxu0 0.0
      %5524 = vmatpush2.msra.mxu0 0.0
      %5525 = vmatprep.subr.mxu0 0.0
      %5526 = vmatpush2.msra.mxu0 0.0
      %5527 = vmatprep.subr.mxu0 0.0
      %5528 = vmatpush2.msra.mxu0 0.0
      %5529 = vmatprep.subr.mxu0 0.0
      %5530 = vmatpush2.msra.mxu0 0.0
      %5531 = vmatprep.mubr.f32.mxu0 0.0
      %5532 = vmatmul.mubr.f32.gmra.mxu0 %v3967
      %v5533 = vpop.f32.mrf.mxu0
      %v5534 = vadd.f32 0.0, %v5533
      %v5535 = vpop.f32.mrf.mxu0
      %5536 = vmatprep.mubr.f32.mxu0 0.0
      %5537 = vmatmul.mubr.f32.gmra.mxu0 %v3969
      %v5538 = vpop.f32.mrf.mxu0
      %v5539 = vadd.f32 0.0, %v5538
      %v5540 = vpop.f32.mrf.mxu0
      %5541 = vmatprep.mubr.f32.mxu0 0.0
      %5542 = vmatmul.mubr.f32.gmra.mxu0 %v3975
      %v5543 = vpop.f32.mrf.mxu0
      %v5544 = vadd.f32 0.0, %v5543
      %v5545 = vpop.f32.mrf.mxu0
      %5546 = vmatprep.mubr.f32.mxu0 0.0
      %5547 = vmatmul.mubr.f32.gmra.mxu0 %v3977
      %v5548 = vpop.f32.mrf.mxu0
      %v5549 = vadd.f32 0.0, %v5548
      %v5550 = vpop.f32.mrf.mxu0
      %5551 = vmatprep.mubr.f32.mxu0 0.0
      %5552 = vmatmul.mubr.f32.gmra.mxu0 %v3979
      %v5553 = vpop.f32.mrf.mxu0
      %v5554 = vadd.f32 0.0, %v5553
      %v5555 = vpop.f32.mrf.mxu0
      %5556 = vmatprep.mubr.f32.mxu0 0.0
      %5557 = vmatmul.mubr.f32.gmra.mxu0 %v3981
      %v5558 = vpop.f32.mrf.mxu0
      %v5559 = vadd.f32 0.0, %v5558
      %v5560 = vpop.f32.mrf.mxu0
      %5561 = vmatprep.mubr.f32.mxu0 0.0
      %5562 = vmatmul.mubr.f32.gmra.mxu0 %v3983
      %v5563 = vpop.f32.mrf.mxu0
      %v5564 = vadd.f32 0.0, %v5563
      %v5565 = vpop.f32.mrf.mxu0
      %5566 = vmatprep.mubr.f32.mxu0 0.0
      %5567 = vmatmul.mubr.f32.gmra.mxu0 %v3985
      %v5568 = vpop.f32.mrf.mxu0
      %v5569 = vadd.f32 0.0, %v5568
      %v5570 = vpop.f32.mrf.mxu0
      %5571 = vmatprep.mubr.f32.mxu0 0.0
      %5572 = vmatmul.mubr.f32.gmra.mxu0 %v3987
      %v5573 = vpop.f32.mrf.mxu0
      %v5574 = vadd.f32 0.0, %v5573
      %v5575 = vpop.f32.mrf.mxu0
      %5576 = vmatprep.mubr.f32.mxu0 0.0
      %5577 = vmatmul.mubr.f32.gmra.mxu0 %v3989
      %v5578 = vpop.f32.mrf.mxu0
      %v5579 = vadd.f32 0.0, %v5578
      %v5580 = vpop.f32.mrf.mxu0
      %5581 = vmatprep.mubr.f32.mxu0 0.0
      %5582 = vmatmul.mubr.f32.gmra.mxu0 %v3991
      %v5583 = vpop.f32.mrf.mxu0
      %v5584 = vadd.f32 0.0, %v5583
      %v5585 = vpop.f32.mrf.mxu0
      %5586 = vmatprep.mubr.f32.mxu0 0.0
      %5587 = vmatmul.mubr.f32.gmra.mxu0 %v3993
      %v5588 = vpop.f32.mrf.mxu0
      %v5589 = vadd.f32 0.0, %v5588
      %v5590 = vpop.f32.mrf.mxu0
      %5591 = vmatprep.mubr.f32.mxu0 0.0
      %5592 = vmatmul.mubr.f32.gmra.mxu0 %v3995
      %v5593 = vpop.f32.mrf.mxu0
      %v5594 = vadd.f32 0.0, %v5593
      %v5595 = vpop.f32.mrf.mxu0
      %5596 = vmatprep.mubr.f32.mxu0 0.0
      %5597 = vmatmul.mubr.f32.gmra.mxu0 %v3997
      %v5598 = vpop.f32.mrf.mxu0
      %v5599 = vadd.f32 0.0, %v5598
      %v5600 = vpop.f32.mrf.mxu0
      %5601 = vmatprep.mubr.f32.mxu0 0.0
      %5602 = vmatmul.mubr.f32.gmra.mxu0 %v3999
      %v5603 = vpop.f32.mrf.mxu0
      %v5604 = vadd.f32 0.0, %v5603
      %v5605 = vpop.f32.mrf.mxu0
      %5606 = vmatprep.mubr.f32.mxu0 0.0
      %5607 = vmatmul.mubr.f32.gmra.mxu0 %v4001
      %v5608 = vpop.f32.mrf.mxu0
      %v5609 = vadd.f32 0.0, %v5608
      %v5610 = vpop.f32.mrf.mxu0
      %5611 = vmatprep.mubr.f32.mxu0 0.0
      %5612 = vmatmul.mubr.f32.gmra.mxu0 %v4003
      %v5613 = vpop.f32.mrf.mxu0
      %v5614 = vadd.f32 0.0, %v5613
      %v5615 = vpop.f32.mrf.mxu0
      %5616 = vmatprep.mubr.f32.mxu0 0.0
      %5617 = vmatmul.mubr.f32.gmra.mxu0 %v4005
      %v5618 = vpop.f32.mrf.mxu0
      %v5619 = vadd.f32 0.0, %v5618
      %v5620 = vpop.f32.mrf.mxu0
      %5621 = vmatprep.mubr.f32.mxu0 0.0
      %5622 = vmatmul.mubr.f32.gmra.mxu0 %v4007
      %v5623 = vpop.f32.mrf.mxu0
      %v5624 = vadd.f32 0.0, %v5623
      %v5625 = vpop.f32.mrf.mxu0
      %5626 = vmatprep.mubr.f32.mxu0 0.0
      %5627 = vmatmul.mubr.f32.gmra.mxu0 %v4009
      %v5628 = vpop.f32.mrf.mxu0
      %v5629 = vadd.f32 0.0, %v5628
      %v5630 = vpop.f32.mrf.mxu0
      %5631 = vmatprep.mubr.f32.mxu0 0.0
      %5632 = vmatmul.mubr.f32.gmra.mxu0 %v4011
      %v5633 = vpop.f32.mrf.mxu0
      %v5634 = vadd.f32 0.0, %v5633
      %v5635 = vpop.f32.mrf.mxu0
      %5636 = vmatprep.mubr.f32.mxu0 0.0
      %5637 = vmatmul.mubr.f32.gmra.mxu0 %v4013
      %v5638 = vpop.f32.mrf.mxu0
      %v5639 = vadd.f32 0.0, %v5638
      %v5640 = vpop.f32.mrf.mxu0
      %5641 = vmatprep.mubr.f32.mxu0 0.0
      %5642 = vmatmul.mubr.f32.gmra.mxu0 %v4015
      %v5643 = vpop.f32.mrf.mxu0
      %v5644 = vadd.f32 0.0, %v5643
      %v5645 = vpop.f32.mrf.mxu0
      %5646 = vmatprep.mubr.f32.mxu0 0.0
      %5647 = vmatmul.mubr.f32.gmra.mxu0 %v4017
      %v5648 = vpop.f32.mrf.mxu0
      %v5649 = vadd.f32 0.0, %v5648
      %v5650 = vpop.f32.mrf.mxu0
      %5651 = vmatprep.mubr.f32.mxu0 0.0
      %5652 = vmatmul.mubr.f32.gmra.mxu0 %v4019
      %v5653 = vpop.f32.mrf.mxu0
      %v5654 = vadd.f32 0.0, %v5653
      %v5655 = vpop.f32.mrf.mxu0
      %5656 = vmatprep.mubr.f32.mxu0 0.0
      %5657 = vmatmul.mubr.f32.gmra.mxu0 %v4021
      %v5658 = vpop.f32.mrf.mxu0
      %v5659 = vadd.f32 0.0, %v5658
      %v5660 = vpop.f32.mrf.mxu0
      %5661 = vmatprep.mubr.f32.mxu0 0.0
      %5662 = vmatmul.mubr.f32.gmra.mxu0 %v4023
      %v5663 = vpop.f32.mrf.mxu0
      %v5664 = vadd.f32 0.0, %v5663
      %v5665 = vpop.f32.mrf.mxu0
      %5666 = vmatprep.mubr.f32.mxu0 0.0
      %5667 = vmatmul.mubr.f32.gmra.mxu0 %v4025
      %v5668 = vpop.f32.mrf.mxu0
      %v5669 = vadd.f32 0.0, %v5668
      %v5670 = vpop.f32.mrf.mxu0
      %5671 = vmatprep.mubr.f32.mxu0 0.0
      %5672 = vmatmul.mubr.f32.gmra.mxu0 %v4655
      %v5673 = vpop.f32.mrf.mxu0
      %v5674 = vadd.f32 0.0, %v5673
      %v5675 = vpop.f32.mrf.mxu0
      %5676 = vmatprep.mubr.f32.mxu0 0.0
      %5677 = vmatmul.mubr.f32.gmra.mxu0 %v4657
      %v5678 = vpop.f32.mrf.mxu0
      %v5679 = vadd.f32 0.0, %v5678
      %v5680 = vpop.f32.mrf.mxu0
      %5681 = vmatprep.mubr.f32.mxu0 0.0
      %5682 = vmatmul.mubr.f32.gmra.mxu0 %v4023
      %v5683 = vpop.f32.mrf.mxu0
      %v5684 = vadd.f32 0.0, %v5683
      %v5685 = vpop.f32.mrf.mxu0
      %5686 = vmatprep.mubr.f32.mxu0 0.0
      %5687 = vmatmul.mubr.f32.gmra.mxu0 %v4025
      %v5688 = vpop.f32.mrf.mxu0
      %v5689 = vadd.f32 0.0, %v5688
      %v5690 = vpop.f32.mrf.mxu0
      %5691 = vdwg.mxu0
      %v5692 = vadd.f32 %v5430, %v5534
      %v5693 = vadd.f32 %v5431, %v5539
      %v5694 = vadd.f32 %v5432, %v5544
      %v5695 = vadd.f32 %v5433, %v5549
      %v5696 = vadd.f32 %v5434, %v5554
      %v5697 = vadd.f32 %v5435, %v5559
      %v5698 = vadd.f32 %v5436, %v5564
      %v5699 = vadd.f32 %v5437, %v5569
      %v5700 = vadd.f32 %v5438, %v5574
      %v5701 = vadd.f32 %v5439, %v5579
      %v5702 = vadd.f32 %v5440, %v5584
      %v5703 = vadd.f32 %v5441, %v5589
      %v5704 = vadd.f32 %v5442, %v5594
      %v5705 = vadd.f32 %v5443, %v5599
      %v5706 = vadd.f32 %v5444, %v5604
      %v5707 = vadd.f32 %v5445, %v5609
      %v5708 = vadd.f32 %v5446, %v5614
      %v5709 = vadd.f32 %v5447, %v5619
      %v5710 = vadd.f32 %v5448, %v5624
      %v5711 = vadd.f32 %v5449, %v5629
      %v5712 = vadd.f32 %v5450, %v5634
      %v5713 = vadd.f32 %v5451, %v5639
      %v5714 = vadd.f32 %v5452, %v5644
      %v5715 = vadd.f32 %v5453, %v5649
      %v5716 = vadd.f32 %v5454, %v5654
      %v5717 = vadd.f32 %v5455, %v5659
      %v5718 = vadd.f32 %v5456, %v5664
      %v5719 = vadd.f32 %v5457, %v5669
      %v5720 = vadd.f32 %v5458, %v5674
      %v5721 = vadd.f32 %v5459, %v5679
      %v5722 = vadd.f32 %v5460, %v5684
      %v5723 = vadd.f32 %v5461, %v5689
      %s5724 = scalar_lea.vmem %s2, 28
      %v5725 = vld [vmem:[%s5724] sm:$0xf]
      %v5727 = vsel %vm582, %v5725, 0
      %5729 = vmatprep.subr.mxu0 0.0
      %5730 = vmatpush1.msra.mxu0 0.0
      %5731 = vmatprep.subr.mxu0 0.0
      %5732 = vmatpush1.msra.mxu0 0.0
      %5733 = vmatprep.subr.mxu0 0.0
      %5734 = vmatpush1.msra.mxu0 0.0
      %5735 = vmatprep.subr.mxu0 0.0
      %5736 = vmatpush1.msra.mxu0 0.0
      %5737 = vmatprep.subr.mxu0 0.0
      %5738 = vmatpush1.msra.mxu0 0.0
      %5739 = vmatprep.subr.mxu0 0.0
      %5740 = vmatpush1.msra.mxu0 0.0
      %5741 = vmatprep.subr.mxu0 0.0
      %5742 = vmatpush1.msra.mxu0 0.0
      %5743 = vmatprep.subr.mxu0 0.0
      %5744 = vmatpush1.msra.mxu0 0.0
      %5745 = vmatprep.subr.mxu0 0.0
      %5746 = vmatpush1.msra.mxu0 0.0
      %5747 = vmatprep.subr.mxu0 0.0
      %5748 = vmatpush1.msra.mxu0 0.0
      %5749 = vmatprep.subr.mxu0 0.0
      %5750 = vmatpush1.msra.mxu0 0.0
      %5751 = vmatprep.subr.mxu0 0.0
      %5752 = vmatpush1.msra.mxu0 0.0
      %5753 = vmatprep.subr.mxu0 0.0
      %5754 = vmatpush1.msra.mxu0 0.0
      %5755 = vmatprep.subr.mxu0 0.0
      %5756 = vmatpush1.msra.mxu0 0.0
      %5757 = vmatprep.subr.mxu0 0.0
      %5758 = vmatpush1.msra.mxu0 0.0
      %5759 = vmatprep.subr.mxu0 0.0
      %5760 = vmatpush1.msra.mxu0 %v5727
      %5761 = vmatprep.subr.mxu0 0.0
      %5762 = vmatpush2.msra.mxu0 0.0
      %5763 = vmatprep.subr.mxu0 0.0
      %5764 = vmatpush2.msra.mxu0 0.0
      %5765 = vmatprep.subr.mxu0 0.0
      %5766 = vmatpush2.msra.mxu0 0.0
      %5767 = vmatprep.subr.mxu0 0.0
      %5768 = vmatpush2.msra.mxu0 0.0
      %5769 = vmatprep.subr.mxu0 0.0
      %5770 = vmatpush2.msra.mxu0 0.0
      %5771 = vmatprep.subr.mxu0 0.0
      %5772 = vmatpush2.msra.mxu0 0.0
      %5773 = vmatprep.subr.mxu0 0.0
      %5774 = vmatpush2.msra.mxu0 0.0
      %5775 = vmatprep.subr.mxu0 0.0
      %5776 = vmatpush2.msra.mxu0 0.0
      %5777 = vmatprep.subr.mxu0 0.0
      %5778 = vmatpush2.msra.mxu0 0.0
      %5779 = vmatprep.subr.mxu0 0.0
      %5780 = vmatpush2.msra.mxu0 0.0
      %5781 = vmatprep.subr.mxu0 0.0
      %5782 = vmatpush2.msra.mxu0 0.0
      %5783 = vmatprep.subr.mxu0 0.0
      %5784 = vmatpush2.msra.mxu0 0.0
      %5785 = vmatprep.subr.mxu0 0.0
      %5786 = vmatpush2.msra.mxu0 0.0
      %5787 = vmatprep.subr.mxu0 0.0
      %5788 = vmatpush2.msra.mxu0 0.0
      %5789 = vmatprep.subr.mxu0 0.0
      %5790 = vmatpush2.msra.mxu0 0.0
      %5791 = vmatprep.subr.mxu0 0.0
      %5792 = vmatpush2.msra.mxu0 0.0
      %5793 = vmatprep.mubr.f32.mxu0 0.0
      %5794 = vmatmul.mubr.f32.gmra.mxu0 %v3679
      %v5795 = vpop.f32.mrf.mxu0
      %v5796 = vadd.f32 0.0, %v5795
      %v5797 = vpop.f32.mrf.mxu0
      %5798 = vmatprep.mubr.f32.mxu0 0.0
      %5799 = vmatmul.mubr.f32.gmra.mxu0 %v3681
      %v5800 = vpop.f32.mrf.mxu0
      %v5801 = vadd.f32 0.0, %v5800
      %v5802 = vpop.f32.mrf.mxu0
      %5803 = vmatprep.mubr.f32.mxu0 0.0
      %5804 = vmatmul.mubr.f32.gmra.mxu0 %v3687
      %v5805 = vpop.f32.mrf.mxu0
      %v5806 = vadd.f32 0.0, %v5805
      %v5807 = vpop.f32.mrf.mxu0
      %5808 = vmatprep.mubr.f32.mxu0 0.0
      %5809 = vmatmul.mubr.f32.gmra.mxu0 %v3689
      %v5810 = vpop.f32.mrf.mxu0
      %v5811 = vadd.f32 0.0, %v5810
      %v5812 = vpop.f32.mrf.mxu0
      %5813 = vmatprep.mubr.f32.mxu0 0.0
      %5814 = vmatmul.mubr.f32.gmra.mxu0 %v3691
      %v5815 = vpop.f32.mrf.mxu0
      %v5816 = vadd.f32 0.0, %v5815
      %v5817 = vpop.f32.mrf.mxu0
      %5818 = vmatprep.mubr.f32.mxu0 0.0
      %5819 = vmatmul.mubr.f32.gmra.mxu0 %v3693
      %v5820 = vpop.f32.mrf.mxu0
      %v5821 = vadd.f32 0.0, %v5820
      %v5822 = vpop.f32.mrf.mxu0
      %5823 = vmatprep.mubr.f32.mxu0 0.0
      %5824 = vmatmul.mubr.f32.gmra.mxu0 %v3695
      %v5825 = vpop.f32.mrf.mxu0
      %v5826 = vadd.f32 0.0, %v5825
      %v5827 = vpop.f32.mrf.mxu0
      %5828 = vmatprep.mubr.f32.mxu0 0.0
      %5829 = vmatmul.mubr.f32.gmra.mxu0 %v3697
      %v5830 = vpop.f32.mrf.mxu0
      %v5831 = vadd.f32 0.0, %v5830
      %v5832 = vpop.f32.mrf.mxu0
      %5833 = vmatprep.mubr.f32.mxu0 0.0
      %5834 = vmatmul.mubr.f32.gmra.mxu0 %v3699
      %v5835 = vpop.f32.mrf.mxu0
      %v5836 = vadd.f32 0.0, %v5835
      %v5837 = vpop.f32.mrf.mxu0
      %5838 = vmatprep.mubr.f32.mxu0 0.0
      %5839 = vmatmul.mubr.f32.gmra.mxu0 %v3701
      %v5840 = vpop.f32.mrf.mxu0
      %v5841 = vadd.f32 0.0, %v5840
      %v5842 = vpop.f32.mrf.mxu0
      %5843 = vmatprep.mubr.f32.mxu0 0.0
      %5844 = vmatmul.mubr.f32.gmra.mxu0 %v3703
      %v5845 = vpop.f32.mrf.mxu0
      %v5846 = vadd.f32 0.0, %v5845
      %v5847 = vpop.f32.mrf.mxu0
      %5848 = vmatprep.mubr.f32.mxu0 0.0
      %5849 = vmatmul.mubr.f32.gmra.mxu0 %v3705
      %v5850 = vpop.f32.mrf.mxu0
      %v5851 = vadd.f32 0.0, %v5850
      %v5852 = vpop.f32.mrf.mxu0
      %5853 = vmatprep.mubr.f32.mxu0 0.0
      %5854 = vmatmul.mubr.f32.gmra.mxu0 %v3707
      %v5855 = vpop.f32.mrf.mxu0
      %v5856 = vadd.f32 0.0, %v5855
      %v5857 = vpop.f32.mrf.mxu0
      %5858 = vmatprep.mubr.f32.mxu0 0.0
      %5859 = vmatmul.mubr.f32.gmra.mxu0 %v3709
      %v5860 = vpop.f32.mrf.mxu0
      %v5861 = vadd.f32 0.0, %v5860
      %v5862 = vpop.f32.mrf.mxu0
      %5863 = vmatprep.mubr.f32.mxu0 0.0
      %5864 = vmatmul.mubr.f32.gmra.mxu0 %v3711
      %v5865 = vpop.f32.mrf.mxu0
      %v5866 = vadd.f32 0.0, %v5865
      %v5867 = vpop.f32.mrf.mxu0
      %5868 = vmatprep.mubr.f32.mxu0 0.0
      %5869 = vmatmul.mubr.f32.gmra.mxu0 %v3713
      %v5870 = vpop.f32.mrf.mxu0
      %v5871 = vadd.f32 0.0, %v5870
      %v5872 = vpop.f32.mrf.mxu0
      %5873 = vmatprep.mubr.f32.mxu0 0.0
      %5874 = vmatmul.mubr.f32.gmra.mxu0 %v3715
      %v5875 = vpop.f32.mrf.mxu0
      %v5876 = vadd.f32 0.0, %v5875
      %v5877 = vpop.f32.mrf.mxu0
      %5878 = vmatprep.mubr.f32.mxu0 0.0
      %5879 = vmatmul.mubr.f32.gmra.mxu0 %v3717
      %v5880 = vpop.f32.mrf.mxu0
      %v5881 = vadd.f32 0.0, %v5880
      %v5882 = vpop.f32.mrf.mxu0
      %5883 = vmatprep.mubr.f32.mxu0 0.0
      %5884 = vmatmul.mubr.f32.gmra.mxu0 %v3719
      %v5885 = vpop.f32.mrf.mxu0
      %v5886 = vadd.f32 0.0, %v5885
      %v5887 = vpop.f32.mrf.mxu0
      %5888 = vmatprep.mubr.f32.mxu0 0.0
      %5889 = vmatmul.mubr.f32.gmra.mxu0 %v3721
      %v5890 = vpop.f32.mrf.mxu0
      %v5891 = vadd.f32 0.0, %v5890
      %v5892 = vpop.f32.mrf.mxu0
      %5893 = vmatprep.mubr.f32.mxu0 0.0
      %5894 = vmatmul.mubr.f32.gmra.mxu0 %v3723
      %v5895 = vpop.f32.mrf.mxu0
      %v5896 = vadd.f32 0.0, %v5895
      %v5897 = vpop.f32.mrf.mxu0
      %5898 = vmatprep.mubr.f32.mxu0 0.0
      %5899 = vmatmul.mubr.f32.gmra.mxu0 %v3725
      %v5900 = vpop.f32.mrf.mxu0
      %v5901 = vadd.f32 0.0, %v5900
      %v5902 = vpop.f32.mrf.mxu0
      %5903 = vmatprep.mubr.f32.mxu0 0.0
      %5904 = vmatmul.mubr.f32.gmra.mxu0 %v3727
      %v5905 = vpop.f32.mrf.mxu0
      %v5906 = vadd.f32 0.0, %v5905
      %v5907 = vpop.f32.mrf.mxu0
      %5908 = vmatprep.mubr.f32.mxu0 0.0
      %5909 = vmatmul.mubr.f32.gmra.mxu0 %v3729
      %v5910 = vpop.f32.mrf.mxu0
      %v5911 = vadd.f32 0.0, %v5910
      %v5912 = vpop.f32.mrf.mxu0
      %5913 = vmatprep.mubr.f32.mxu0 0.0
      %5914 = vmatmul.mubr.f32.gmra.mxu0 %v3731
      %v5915 = vpop.f32.mrf.mxu0
      %v5916 = vadd.f32 0.0, %v5915
      %v5917 = vpop.f32.mrf.mxu0
      %5918 = vmatprep.mubr.f32.mxu0 0.0
      %5919 = vmatmul.mubr.f32.gmra.mxu0 %v3733
      %v5920 = vpop.f32.mrf.mxu0
      %v5921 = vadd.f32 0.0, %v5920
      %v5922 = vpop.f32.mrf.mxu0
      %5923 = vmatprep.mubr.f32.mxu0 0.0
      %5924 = vmatmul.mubr.f32.gmra.mxu0 %v3735
      %v5925 = vpop.f32.mrf.mxu0
      %v5926 = vadd.f32 0.0, %v5925
      %v5927 = vpop.f32.mrf.mxu0
      %5928 = vmatprep.mubr.f32.mxu0 0.0
      %5929 = vmatmul.mubr.f32.gmra.mxu0 %v3737
      %v5930 = vpop.f32.mrf.mxu0
      %v5931 = vadd.f32 0.0, %v5930
      %v5932 = vpop.f32.mrf.mxu0
      %5933 = vmatprep.mubr.f32.mxu0 0.0
      %5934 = vmatmul.mubr.f32.gmra.mxu0 %v4927
      %v5935 = vpop.f32.mrf.mxu0
      %v5936 = vadd.f32 0.0, %v5935
      %v5937 = vpop.f32.mrf.mxu0
      %5938 = vmatprep.mubr.f32.mxu0 0.0
      %5939 = vmatmul.mubr.f32.gmra.mxu0 %v4929
      %v5940 = vpop.f32.mrf.mxu0
      %v5941 = vadd.f32 0.0, %v5940
      %v5942 = vpop.f32.mrf.mxu0
      %5943 = vmatprep.mubr.f32.mxu0 0.0
      %5944 = vmatmul.mubr.f32.gmra.mxu0 %v3735
      %v5945 = vpop.f32.mrf.mxu0
      %v5946 = vadd.f32 0.0, %v5945
      %v5947 = vpop.f32.mrf.mxu0
      %5948 = vmatprep.mubr.f32.mxu0 0.0
      %5949 = vmatmul.mubr.f32.gmra.mxu0 %v3737
      %v5950 = vpop.f32.mrf.mxu0
      %v5951 = vadd.f32 0.0, %v5950
      %v5952 = vpop.f32.mrf.mxu0
      %5953 = vdwg.mxu0
      %v5954 = vadd.f32 %v5692, %v5796
      %v5955 = vadd.f32 %v5693, %v5801
      %v5956 = vadd.f32 %v5694, %v5806
      %v5957 = vadd.f32 %v5695, %v5811
      %v5958 = vadd.f32 %v5696, %v5816
      %v5959 = vadd.f32 %v5697, %v5821
      %v5960 = vadd.f32 %v5698, %v5826
      %v5961 = vadd.f32 %v5699, %v5831
      %v5962 = vadd.f32 %v5700, %v5836
      %v5963 = vadd.f32 %v5701, %v5841
      %v5964 = vadd.f32 %v5702, %v5846
      %v5965 = vadd.f32 %v5703, %v5851
      %v5966 = vadd.f32 %v5704, %v5856
      %v5967 = vadd.f32 %v5705, %v5861
      %v5968 = vadd.f32 %v5706, %v5866
      %v5969 = vadd.f32 %v5707, %v5871
      %v5970 = vadd.f32 %v5708, %v5876
      %v5971 = vadd.f32 %v5709, %v5881
      %v5972 = vadd.f32 %v5710, %v5886
      %v5973 = vadd.f32 %v5711, %v5891
      %v5974 = vadd.f32 %v5712, %v5896
      %v5975 = vadd.f32 %v5713, %v5901
      %v5976 = vadd.f32 %v5714, %v5906
      %v5977 = vadd.f32 %v5715, %v5911
      %v5978 = vadd.f32 %v5716, %v5916
      %v5979 = vadd.f32 %v5717, %v5921
      %v5980 = vadd.f32 %v5718, %v5926
      %v5981 = vadd.f32 %v5719, %v5931
      %v5982 = vadd.f32 %v5720, %v5936
      %v5983 = vadd.f32 %v5721, %v5941
      %v5984 = vadd.f32 %v5722, %v5946
      %v5985 = vadd.f32 %v5723, %v5951
      %s5986 = scalar_lea.vmem %s2, 32
      %v5987 = vld [vmem:[%s5986] sm:$0xf]
      %v5989 = vsel %vm582, %v5987, 0
      %5991 = vmatprep.subr.mxu0 0.0
      %5992 = vmatpush1.msra.mxu0 0.0
      %5993 = vmatprep.subr.mxu0 0.0
      %5994 = vmatpush1.msra.mxu0 0.0
      %5995 = vmatprep.subr.mxu0 0.0
      %5996 = vmatpush1.msra.mxu0 0.0
      %5997 = vmatprep.subr.mxu0 0.0
      %5998 = vmatpush1.msra.mxu0 0.0
      %5999 = vmatprep.subr.mxu0 0.0
      %6000 = vmatpush1.msra.mxu0 0.0
      %6001 = vmatprep.subr.mxu0 0.0
      %6002 = vmatpush1.msra.mxu0 0.0
      %6003 = vmatprep.subr.mxu0 0.0
      %6004 = vmatpush1.msra.mxu0 0.0
      %6005 = vmatprep.subr.mxu0 0.0
      %6006 = vmatpush1.msra.mxu0 0.0
      %6007 = vmatprep.subr.mxu0 0.0
      %6008 = vmatpush1.msra.mxu0 0.0
      %6009 = vmatprep.subr.mxu0 0.0
      %6010 = vmatpush1.msra.mxu0 0.0
      %6011 = vmatprep.subr.mxu0 0.0
      %6012 = vmatpush1.msra.mxu0 0.0
      %6013 = vmatprep.subr.mxu0 0.0
      %6014 = vmatpush1.msra.mxu0 0.0
      %6015 = vmatprep.subr.mxu0 0.0
      %6016 = vmatpush1.msra.mxu0 0.0
      %6017 = vmatprep.subr.mxu0 0.0
      %6018 = vmatpush1.msra.mxu0 0.0
      %6019 = vmatprep.subr.mxu0 0.0
      %6020 = vmatpush1.msra.mxu0 0.0
      %6021 = vmatprep.subr.mxu0 0.0
      %6022 = vmatpush1.msra.mxu0 %v5989
      %6023 = vmatprep.subr.mxu0 0.0
      %6024 = vmatpush2.msra.mxu0 0.0
      %6025 = vmatprep.subr.mxu0 0.0
      %6026 = vmatpush2.msra.mxu0 0.0
      %6027 = vmatprep.subr.mxu0 0.0
      %6028 = vmatpush2.msra.mxu0 0.0
      %6029 = vmatprep.subr.mxu0 0.0
      %6030 = vmatpush2.msra.mxu0 0.0
      %6031 = vmatprep.subr.mxu0 0.0
      %6032 = vmatpush2.msra.mxu0 0.0
      %6033 = vmatprep.subr.mxu0 0.0
      %6034 = vmatpush2.msra.mxu0 0.0
      %6035 = vmatprep.subr.mxu0 0.0
      %6036 = vmatpush2.msra.mxu0 0.0
      %6037 = vmatprep.subr.mxu0 0.0
      %6038 = vmatpush2.msra.mxu0 0.0
      %6039 = vmatprep.subr.mxu0 0.0
      %6040 = vmatpush2.msra.mxu0 0.0
      %6041 = vmatprep.subr.mxu0 0.0
      %6042 = vmatpush2.msra.mxu0 0.0
      %6043 = vmatprep.subr.mxu0 0.0
      %6044 = vmatpush2.msra.mxu0 0.0
      %6045 = vmatprep.subr.mxu0 0.0
      %6046 = vmatpush2.msra.mxu0 0.0
      %6047 = vmatprep.subr.mxu0 0.0
      %6048 = vmatpush2.msra.mxu0 0.0
      %6049 = vmatprep.subr.mxu0 0.0
      %6050 = vmatpush2.msra.mxu0 0.0
      %6051 = vmatprep.subr.mxu0 0.0
      %6052 = vmatpush2.msra.mxu0 0.0
      %6053 = vmatprep.subr.mxu0 0.0
      %6054 = vmatpush2.msra.mxu0 0.0
      %6055 = vmatprep.mubr.f32.mxu0 0.0
      %6056 = vmatmul.mubr.f32.gmra.mxu0 %v4332
      %v6057 = vpop.f32.mrf.mxu0
      %v6058 = vadd.f32 0.0, %v6057
      %v6059 = vpop.f32.mrf.mxu0
      %6060 = vmatprep.mubr.f32.mxu0 0.0
      %6061 = vmatmul.mubr.f32.gmra.mxu0 %v4334
      %v6062 = vpop.f32.mrf.mxu0
      %v6063 = vadd.f32 0.0, %v6062
      %v6064 = vpop.f32.mrf.mxu0
      %6065 = vmatprep.mubr.f32.mxu0 0.0
      %6066 = vmatmul.mubr.f32.gmra.mxu0 %v4340
      %v6067 = vpop.f32.mrf.mxu0
      %v6068 = vadd.f32 0.0, %v6067
      %v6069 = vpop.f32.mrf.mxu0
      %6070 = vmatprep.mubr.f32.mxu0 0.0
      %6071 = vmatmul.mubr.f32.gmra.mxu0 %v4342
      %v6072 = vpop.f32.mrf.mxu0
      %v6073 = vadd.f32 0.0, %v6072
      %v6074 = vpop.f32.mrf.mxu0
      %6075 = vmatprep.mubr.f32.mxu0 0.0
      %6076 = vmatmul.mubr.f32.gmra.mxu0 %v4344
      %v6077 = vpop.f32.mrf.mxu0
      %v6078 = vadd.f32 0.0, %v6077
      %v6079 = vpop.f32.mrf.mxu0
      %6080 = vmatprep.mubr.f32.mxu0 0.0
      %6081 = vmatmul.mubr.f32.gmra.mxu0 %v4346
      %v6082 = vpop.f32.mrf.mxu0
      %v6083 = vadd.f32 0.0, %v6082
      %v6084 = vpop.f32.mrf.mxu0
      %6085 = vmatprep.mubr.f32.mxu0 0.0
      %6086 = vmatmul.mubr.f32.gmra.mxu0 %v4348
      %v6087 = vpop.f32.mrf.mxu0
      %v6088 = vadd.f32 0.0, %v6087
      %v6089 = vpop.f32.mrf.mxu0
      %6090 = vmatprep.mubr.f32.mxu0 0.0
      %6091 = vmatmul.mubr.f32.gmra.mxu0 %v4350
      %v6092 = vpop.f32.mrf.mxu0
      %v6093 = vadd.f32 0.0, %v6092
      %v6094 = vpop.f32.mrf.mxu0
      %6095 = vmatprep.mubr.f32.mxu0 0.0
      %6096 = vmatmul.mubr.f32.gmra.mxu0 %v4352
      %v6097 = vpop.f32.mrf.mxu0
      %v6098 = vadd.f32 0.0, %v6097
      %v6099 = vpop.f32.mrf.mxu0
      %6100 = vmatprep.mubr.f32.mxu0 0.0
      %6101 = vmatmul.mubr.f32.gmra.mxu0 %v4354
      %v6102 = vpop.f32.mrf.mxu0
      %v6103 = vadd.f32 0.0, %v6102
      %v6104 = vpop.f32.mrf.mxu0
      %6105 = vmatprep.mubr.f32.mxu0 0.0
      %6106 = vmatmul.mubr.f32.gmra.mxu0 %v4356
      %v6107 = vpop.f32.mrf.mxu0
      %v6108 = vadd.f32 0.0, %v6107
      %v6109 = vpop.f32.mrf.mxu0
      %6110 = vmatprep.mubr.f32.mxu0 0.0
      %6111 = vmatmul.mubr.f32.gmra.mxu0 %v4358
      %v6112 = vpop.f32.mrf.mxu0
      %v6113 = vadd.f32 0.0, %v6112
      %v6114 = vpop.f32.mrf.mxu0
      %6115 = vmatprep.mubr.f32.mxu0 0.0
      %6116 = vmatmul.mubr.f32.gmra.mxu0 %v4360
      %v6117 = vpop.f32.mrf.mxu0
      %v6118 = vadd.f32 0.0, %v6117
      %v6119 = vpop.f32.mrf.mxu0
      %6120 = vmatprep.mubr.f32.mxu0 0.0
      %6121 = vmatmul.mubr.f32.gmra.mxu0 %v4362
      %v6122 = vpop.f32.mrf.mxu0
      %v6123 = vadd.f32 0.0, %v6122
      %v6124 = vpop.f32.mrf.mxu0
      %6125 = vmatprep.mubr.f32.mxu0 0.0
      %6126 = vmatmul.mubr.f32.gmra.mxu0 %v4364
      %v6127 = vpop.f32.mrf.mxu0
      %v6128 = vadd.f32 0.0, %v6127
      %v6129 = vpop.f32.mrf.mxu0
      %6130 = vmatprep.mubr.f32.mxu0 0.0
      %6131 = vmatmul.mubr.f32.gmra.mxu0 %v4366
      %v6132 = vpop.f32.mrf.mxu0
      %v6133 = vadd.f32 0.0, %v6132
      %v6134 = vpop.f32.mrf.mxu0
      %6135 = vmatprep.mubr.f32.mxu0 0.0
      %6136 = vmatmul.mubr.f32.gmra.mxu0 %v4368
      %v6137 = vpop.f32.mrf.mxu0
      %v6138 = vadd.f32 0.0, %v6137
      %v6139 = vpop.f32.mrf.mxu0
      %6140 = vmatprep.mubr.f32.mxu0 0.0
      %6141 = vmatmul.mubr.f32.gmra.mxu0 %v4370
      %v6142 = vpop.f32.mrf.mxu0
      %v6143 = vadd.f32 0.0, %v6142
      %v6144 = vpop.f32.mrf.mxu0
      %6145 = vmatprep.mubr.f32.mxu0 0.0
      %6146 = vmatmul.mubr.f32.gmra.mxu0 %v4372
      %v6147 = vpop.f32.mrf.mxu0
      %v6148 = vadd.f32 0.0, %v6147
      %v6149 = vpop.f32.mrf.mxu0
      %6150 = vmatprep.mubr.f32.mxu0 0.0
      %6151 = vmatmul.mubr.f32.gmra.mxu0 %v4374
      %v6152 = vpop.f32.mrf.mxu0
      %v6153 = vadd.f32 0.0, %v6152
      %v6154 = vpop.f32.mrf.mxu0
      %6155 = vmatprep.mubr.f32.mxu0 0.0
      %6156 = vmatmul.mubr.f32.gmra.mxu0 %v4376
      %v6157 = vpop.f32.mrf.mxu0
      %v6158 = vadd.f32 0.0, %v6157
      %v6159 = vpop.f32.mrf.mxu0
      %6160 = vmatprep.mubr.f32.mxu0 0.0
      %6161 = vmatmul.mubr.f32.gmra.mxu0 %v4378
      %v6162 = vpop.f32.mrf.mxu0
      %v6163 = vadd.f32 0.0, %v6162
      %v6164 = vpop.f32.mrf.mxu0
      %6165 = vmatprep.mubr.f32.mxu0 0.0
      %6166 = vmatmul.mubr.f32.gmra.mxu0 %v4380
      %v6167 = vpop.f32.mrf.mxu0
      %v6168 = vadd.f32 0.0, %v6167
      %v6169 = vpop.f32.mrf.mxu0
      %6170 = vmatprep.mubr.f32.mxu0 0.0
      %6171 = vmatmul.mubr.f32.gmra.mxu0 %v4382
      %v6172 = vpop.f32.mrf.mxu0
      %v6173 = vadd.f32 0.0, %v6172
      %v6174 = vpop.f32.mrf.mxu0
      %6175 = vmatprep.mubr.f32.mxu0 0.0
      %6176 = vmatmul.mubr.f32.gmra.mxu0 %v4384
      %v6177 = vpop.f32.mrf.mxu0
      %v6178 = vadd.f32 0.0, %v6177
      %v6179 = vpop.f32.mrf.mxu0
      %6180 = vmatprep.mubr.f32.mxu0 0.0
      %6181 = vmatmul.mubr.f32.gmra.mxu0 %v4386
      %v6182 = vpop.f32.mrf.mxu0
      %v6183 = vadd.f32 0.0, %v6182
      %v6184 = vpop.f32.mrf.mxu0
      %6185 = vmatprep.mubr.f32.mxu0 0.0
      %6186 = vmatmul.mubr.f32.gmra.mxu0 %v4388
      %v6187 = vpop.f32.mrf.mxu0
      %v6188 = vadd.f32 0.0, %v6187
      %v6189 = vpop.f32.mrf.mxu0
      %6190 = vmatprep.mubr.f32.mxu0 0.0
      %6191 = vmatmul.mubr.f32.gmra.mxu0 %v4390
      %v6192 = vpop.f32.mrf.mxu0
      %v6193 = vadd.f32 0.0, %v6192
      %v6194 = vpop.f32.mrf.mxu0
      %6195 = vmatprep.mubr.f32.mxu0 0.0
      %6196 = vmatmul.mubr.f32.gmra.mxu0 %v5198
      %v6197 = vpop.f32.mrf.mxu0
      %v6198 = vadd.f32 0.0, %v6197
      %v6199 = vpop.f32.mrf.mxu0
      %6200 = vmatprep.mubr.f32.mxu0 0.0
      %6201 = vmatmul.mubr.f32.gmra.mxu0 %v5200
      %v6202 = vpop.f32.mrf.mxu0
      %v6203 = vadd.f32 0.0, %v6202
      %v6204 = vpop.f32.mrf.mxu0
      %6205 = vmatprep.mubr.f32.mxu0 0.0
      %6206 = vmatmul.mubr.f32.gmra.mxu0 %v4388
      %v6207 = vpop.f32.mrf.mxu0
      %v6208 = vadd.f32 0.0, %v6207
      %v6209 = vpop.f32.mrf.mxu0
      %6210 = vmatprep.mubr.f32.mxu0 0.0
      %6211 = vmatmul.mubr.f32.gmra.mxu0 %v4390
      %v6212 = vpop.f32.mrf.mxu0
      %v6213 = vadd.f32 0.0, %v6212
      %v6214 = vpop.f32.mrf.mxu0
      %6215 = vdwg.mxu0
      %v6216 = vadd.f32 %v5954, %v6058
      %v6217 = vadd.f32 %v5955, %v6063
      %v6218 = vadd.f32 %v5956, %v6068
      %v6219 = vadd.f32 %v5957, %v6073
      %v6220 = vadd.f32 %v5958, %v6078
      %v6221 = vadd.f32 %v5959, %v6083
      %v6222 = vadd.f32 %v5960, %v6088
      %v6223 = vadd.f32 %v5961, %v6093
      %v6224 = vadd.f32 %v5962, %v6098
      %v6225 = vadd.f32 %v5963, %v6103
      %v6226 = vadd.f32 %v5964, %v6108
      %v6227 = vadd.f32 %v5965, %v6113
      %v6228 = vadd.f32 %v5966, %v6118
      %v6229 = vadd.f32 %v5967, %v6123
      %v6230 = vadd.f32 %v5968, %v6128
      %v6231 = vadd.f32 %v5969, %v6133
      %v6232 = vadd.f32 %v5970, %v6138
      %v6233 = vadd.f32 %v5971, %v6143
      %v6234 = vadd.f32 %v5972, %v6148
      %v6235 = vadd.f32 %v5973, %v6153
      %v6236 = vadd.f32 %v5974, %v6158
      %v6237 = vadd.f32 %v5975, %v6163
      %v6238 = vadd.f32 %v5976, %v6168
      %v6239 = vadd.f32 %v5977, %v6173
      %v6240 = vadd.f32 %v5978, %v6178
      %v6241 = vadd.f32 %v5979, %v6183
      %v6242 = vadd.f32 %v5980, %v6188
      %v6243 = vadd.f32 %v5981, %v6193
      %v6244 = vadd.f32 %v5982, %v6198
      %v6245 = vadd.f32 %v5983, %v6203
      %v6246 = vadd.f32 %v5984, %v6208
      %v6247 = vadd.f32 %v5985, %v6213
      %v6248 = vsel %vm521, %v6216, 0.0
      %v6249 = vsel %vm521, %v6217, 0.0
      %v6250 = vadd.f32 %v6248, %v6249
      %v6251 = vsel %vm521, %v6218, 0.0
      %v6252 = vadd.f32 %v6250, %v6251
      %v6253 = vsel %vm521, %v6219, 0.0
      %v6254 = vadd.f32 %v6252, %v6253
      %v6255 = vsel %vm521, %v6220, 0.0
      %v6256 = vadd.f32 %v6254, %v6255
      %v6257 = vsel %vm521, %v6221, 0.0
      %v6258 = vadd.f32 %v6256, %v6257
      %v6259 = vsel %vm521, %v6222, 0.0
      %v6260 = vadd.f32 %v6258, %v6259
      %v6261 = vsel %vm521, %v6223, 0.0
      %v6262 = vadd.f32 %v6260, %v6261
      %v6263 = vsel %vm521, %v6224, 0.0
      %v6264 = vadd.f32 %v6262, %v6263
      %v6265 = vsel %vm521, %v6225, 0.0
      %v6266 = vadd.f32 %v6264, %v6265
      %v6267 = vsel %vm521, %v6226, 0.0
      %v6268 = vadd.f32 %v6266, %v6267
      %v6269 = vsel %vm521, %v6227, 0.0
      %v6270 = vadd.f32 %v6268, %v6269
      %v6271 = vsel %vm521, %v6228, 0.0
      %v6272 = vadd.f32 %v6270, %v6271
      %v6273 = vsel %vm521, %v6229, 0.0
      %v6274 = vadd.f32 %v6272, %v6273
      %v6275 = vsel %vm521, %v6230, 0.0
      %v6276 = vadd.f32 %v6274, %v6275
      %v6277 = vsel %vm521, %v6231, 0.0
      %v6278 = vadd.f32 %v6276, %v6277
      %v6279 = vsel %vm521, %v6232, 0.0
      %v6280 = vadd.f32 %v6278, %v6279
      %v6281 = vsel %vm521, %v6233, 0.0
      %v6282 = vadd.f32 %v6280, %v6281
      %v6283 = vsel %vm521, %v6234, 0.0
      %v6284 = vadd.f32 %v6282, %v6283
      %v6285 = vsel %vm521, %v6235, 0.0
      %v6286 = vadd.f32 %v6284, %v6285
      %v6287 = vsel %vm521, %v6236, 0.0
      %v6288 = vadd.f32 %v6286, %v6287
      %v6289 = vsel %vm521, %v6237, 0.0
      %v6290 = vadd.f32 %v6288, %v6289
      %v6291 = vsel %vm521, %v6238, 0.0
      %v6292 = vadd.f32 %v6290, %v6291
      %v6293 = vsel %vm521, %v6239, 0.0
      %v6294 = vadd.f32 %v6292, %v6293
      %v6295 = vsel %vm521, %v6240, 0.0
      %v6296 = vadd.f32 %v6294, %v6295
      %v6297 = vsel %vm521, %v6241, 0.0
      %v6298 = vadd.f32 %v6296, %v6297
      %v6299 = vsel %vm521, %v6242, 0.0
      %v6300 = vadd.f32 %v6298, %v6299
      %v6301 = vsel %vm521, %v6243, 0.0
      %v6302 = vadd.f32 %v6300, %v6301
      %v6303 = vsel %vm521, %v6244, 0.0
      %v6304 = vadd.f32 %v6302, %v6303
      %v6305 = vsel %vm521, %v6245, 0.0
      %v6306 = vadd.f32 %v6304, %v6305
      %v6307 = vsel %vm521, %v6246, 0.0
      %v6308 = vadd.f32 %v6306, %v6307
      %v6309 = vsel %vm521, %v6247, 0.0
      %v6310 = vadd.f32 %v6308, %v6309
      %v6311 = vrot.slane %v6310, 4
      %v6312 = vadd.f32 %v6310, %v6311
      %v6313 = vrot.slane %v6312, 2
      %v6314 = vadd.f32 %v6312, %v6313
      %v6315 = vrot.slane %v6314, 1
      %v6316 = vadd.f32 %v6314, %v6315
      %v6317 = vmul.f32 %v6316, 0.00390625
      %v6318 = vsub.f32 %v6216, %v6317
      %v6319 = vsub.f32 %v6217, %v6317
      %v6320 = vsub.f32 %v6218, %v6317
      %v6321 = vsub.f32 %v6219, %v6317
      %v6322 = vsub.f32 %v6220, %v6317
      %v6323 = vsub.f32 %v6221, %v6317
      %v6324 = vsub.f32 %v6222, %v6317
      %v6325 = vsub.f32 %v6223, %v6317
      %v6326 = vsub.f32 %v6224, %v6317
      %v6327 = vsub.f32 %v6225, %v6317
      %v6328 = vsub.f32 %v6226, %v6317
      %v6329 = vsub.f32 %v6227, %v6317
      %v6330 = vsub.f32 %v6228, %v6317
      %v6331 = vsub.f32 %v6229, %v6317
      %v6332 = vsub.f32 %v6230, %v6317
      %v6333 = vsub.f32 %v6231, %v6317
      %v6334 = vsub.f32 %v6232, %v6317
      %v6335 = vsub.f32 %v6233, %v6317
      %v6336 = vsub.f32 %v6234, %v6317
      %v6337 = vsub.f32 %v6235, %v6317
      %v6338 = vsub.f32 %v6236, %v6317
      %v6339 = vsub.f32 %v6237, %v6317
      %v6340 = vsub.f32 %v6238, %v6317
      %v6341 = vsub.f32 %v6239, %v6317
      %v6342 = vsub.f32 %v6240, %v6317
      %v6343 = vsub.f32 %v6241, %v6317
      %v6344 = vsub.f32 %v6242, %v6317
      %v6345 = vsub.f32 %v6243, %v6317
      %v6346 = vsub.f32 %v6244, %v6317
      %v6347 = vsub.f32 %v6245, %v6317
      %v6348 = vsub.f32 %v6246, %v6317
      %v6349 = vsub.f32 %v6247, %v6317
      %v6350 = vmul.f32 %v6318, %v6318
      %v6351 = vmul.f32 %v6319, %v6319
      %v6352 = vmul.f32 %v6320, %v6320
      %v6353 = vmul.f32 %v6321, %v6321
      %v6354 = vmul.f32 %v6322, %v6322
      %v6355 = vmul.f32 %v6323, %v6323
      %v6356 = vmul.f32 %v6324, %v6324
      %v6357 = vmul.f32 %v6325, %v6325
      %v6358 = vmul.f32 %v6326, %v6326
      %v6359 = vmul.f32 %v6327, %v6327
      %v6360 = vmul.f32 %v6328, %v6328
      %v6361 = vmul.f32 %v6329, %v6329
      %v6362 = vmul.f32 %v6330, %v6330
      %v6363 = vmul.f32 %v6331, %v6331
      %v6364 = vmul.f32 %v6332, %v6332
      %v6365 = vmul.f32 %v6333, %v6333
      %v6366 = vmul.f32 %v6334, %v6334
      %v6367 = vmul.f32 %v6335, %v6335
      %v6368 = vmul.f32 %v6336, %v6336
      %v6369 = vmul.f32 %v6337, %v6337
      %v6370 = vmul.f32 %v6338, %v6338
      %v6371 = vmul.f32 %v6339, %v6339
      %v6372 = vmul.f32 %v6340, %v6340
      %v6373 = vmul.f32 %v6341, %v6341
      %v6374 = vmul.f32 %v6342, %v6342
      %v6375 = vmul.f32 %v6343, %v6343
      %v6376 = vmul.f32 %v6344, %v6344
      %v6377 = vmul.f32 %v6345, %v6345
      %v6378 = vmul.f32 %v6346, %v6346
      %v6379 = vmul.f32 %v6347, %v6347
      %v6380 = vmul.f32 %v6348, %v6348
      %v6381 = vmul.f32 %v6349, %v6349
      %v6382 = vsel %vm521, %v6350, 0.0
      %v6383 = vsel %vm521, %v6351, 0.0
      %v6384 = vadd.f32 %v6382, %v6383
      %v6385 = vsel %vm521, %v6352, 0.0
      %v6386 = vadd.f32 %v6384, %v6385
      %v6387 = vsel %vm521, %v6353, 0.0
      %v6388 = vadd.f32 %v6386, %v6387
      %v6389 = vsel %vm521, %v6354, 0.0
      %v6390 = vadd.f32 %v6388, %v6389
      %v6391 = vsel %vm521, %v6355, 0.0
      %v6392 = vadd.f32 %v6390, %v6391
      %v6393 = vsel %vm521, %v6356, 0.0
      %v6394 = vadd.f32 %v6392, %v6393
      %v6395 = vsel %vm521, %v6357, 0.0
      %v6396 = vadd.f32 %v6394, %v6395
      %v6397 = vsel %vm521, %v6358, 0.0
      %v6398 = vadd.f32 %v6396, %v6397
      %v6399 = vsel %vm521, %v6359, 0.0
      %v6400 = vadd.f32 %v6398, %v6399
      %v6401 = vsel %vm521, %v6360, 0.0
      %v6402 = vadd.f32 %v6400, %v6401
      %v6403 = vsel %vm521, %v6361, 0.0
      %v6404 = vadd.f32 %v6402, %v6403
      %v6405 = vsel %vm521, %v6362, 0.0
      %v6406 = vadd.f32 %v6404, %v6405
      %v6407 = vsel %vm521, %v6363, 0.0
      %v6408 = vadd.f32 %v6406, %v6407
      %v6409 = vsel %vm521, %v6364, 0.0
      %v6410 = vadd.f32 %v6408, %v6409
      %v6411 = vsel %vm521, %v6365, 0.0
      %v6412 = vadd.f32 %v6410, %v6411
      %v6413 = vsel %vm521, %v6366, 0.0
      %v6414 = vadd.f32 %v6412, %v6413
      %v6415 = vsel %vm521, %v6367, 0.0
      %v6416 = vadd.f32 %v6414, %v6415
      %v6417 = vsel %vm521, %v6368, 0.0
      %v6418 = vadd.f32 %v6416, %v6417
      %v6419 = vsel %vm521, %v6369, 0.0
      %v6420 = vadd.f32 %v6418, %v6419
      %v6421 = vsel %vm521, %v6370, 0.0
      %v6422 = vadd.f32 %v6420, %v6421
      %v6423 = vsel %vm521, %v6371, 0.0
      %v6424 = vadd.f32 %v6422, %v6423
      %v6425 = vsel %vm521, %v6372, 0.0
      %v6426 = vadd.f32 %v6424, %v6425
      %v6427 = vsel %vm521, %v6373, 0.0
      %v6428 = vadd.f32 %v6426, %v6427
      %v6429 = vsel %vm521, %v6374, 0.0
      %v6430 = vadd.f32 %v6428, %v6429
      %v6431 = vsel %vm521, %v6375, 0.0
      %v6432 = vadd.f32 %v6430, %v6431
      %v6433 = vsel %vm521, %v6376, 0.0
      %v6434 = vadd.f32 %v6432, %v6433
      %v6435 = vsel %vm521, %v6377, 0.0
      %v6436 = vadd.f32 %v6434, %v6435
      %v6437 = vsel %vm521, %v6378, 0.0
      %v6438 = vadd.f32 %v6436, %v6437
      %v6439 = vsel %vm521, %v6379, 0.0
      %v6440 = vadd.f32 %v6438, %v6439
      %v6441 = vsel %vm521, %v6380, 0.0
      %v6442 = vadd.f32 %v6440, %v6441
      %v6443 = vsel %vm521, %v6381, 0.0
      %v6444 = vadd.f32 %v6442, %v6443
      %v6445 = vrot.slane %v6444, 4
      %v6446 = vadd.f32 %v6444, %v6445
      %v6447 = vrot.slane %v6446, 2
      %v6448 = vadd.f32 %v6446, %v6447
      %v6449 = vrot.slane %v6448, 1
      %v6450 = vadd.f32 %v6448, %v6449
      %v6451 = vmul.f32 %v6450, 0.00390625
      %v6452 = vadd.f32 %v6451, 1e-05
      %v6453 = vrsqrt.pop %v6452
      %v6454 = vmul.f32 %v6318, %v6453
      %v6455 = vmul.f32 %v6319, %v6453
      %v6456 = vmul.f32 %v6320, %v6453
      %v6457 = vmul.f32 %v6321, %v6453
      %v6458 = vmul.f32 %v6322, %v6453
      %v6459 = vmul.f32 %v6323, %v6453
      %v6460 = vmul.f32 %v6324, %v6453
      %v6461 = vmul.f32 %v6325, %v6453
      %v6462 = vmul.f32 %v6326, %v6453
      %v6463 = vmul.f32 %v6327, %v6453
      %v6464 = vmul.f32 %v6328, %v6453
      %v6465 = vmul.f32 %v6329, %v6453
      %v6466 = vmul.f32 %v6330, %v6453
      %v6467 = vmul.f32 %v6331, %v6453
      %v6468 = vmul.f32 %v6332, %v6453
      %v6469 = vmul.f32 %v6333, %v6453
      %v6470 = vmul.f32 %v6334, %v6453
      %v6471 = vmul.f32 %v6335, %v6453
      %v6472 = vmul.f32 %v6336, %v6453
      %v6473 = vmul.f32 %v6337, %v6453
      %v6474 = vmul.f32 %v6338, %v6453
      %v6475 = vmul.f32 %v6339, %v6453
      %v6476 = vmul.f32 %v6340, %v6453
      %v6477 = vmul.f32 %v6341, %v6453
      %v6478 = vmul.f32 %v6342, %v6453
      %v6479 = vmul.f32 %v6343, %v6453
      %v6480 = vmul.f32 %v6344, %v6453
      %v6481 = vmul.f32 %v6345, %v6453
      %v6482 = vmul.f32 %v6346, %v6453
      %v6483 = vmul.f32 %v6347, %v6453
      %v6484 = vmul.f32 %v6348, %v6453
      %v6485 = vmul.f32 %v6349, %v6453
      %v6486 = vadd.f32 %v171, %v6454
      %v6487 = vadd.f32 %v172, %v6455
      %v6488 = vadd.f32 %v173, %v6456
      %v6489 = vadd.f32 %v174, %v6457
      %v6490 = vadd.f32 %v175, %v6458
      %v6491 = vadd.f32 %v176, %v6459
      %v6492 = vadd.f32 %v177, %v6460
      %v6493 = vadd.f32 %v178, %v6461
      %v6494 = vadd.f32 %v179, %v6462
      %v6495 = vadd.f32 %v180, %v6463
      %v6496 = vadd.f32 %v181, %v6464
      %v6497 = vadd.f32 %v182, %v6465
      %v6498 = vadd.f32 %v183, %v6466
      %v6499 = vadd.f32 %v184, %v6467
      %v6500 = vadd.f32 %v185, %v6468
      %v6501 = vadd.f32 %v186, %v6469
      %v6502 = vadd.f32 %v187, %v6470
      %v6503 = vadd.f32 %v188, %v6471
      %v6504 = vadd.f32 %v189, %v6472
      %v6505 = vadd.f32 %v190, %v6473
      %v6506 = vadd.f32 %v191, %v6474
      %v6507 = vadd.f32 %v192, %v6475
      %v6508 = vadd.f32 %v193, %v6476
      %v6509 = vadd.f32 %v194, %v6477
      %v6510 = vadd.f32 %v195, %v6478
      %v6511 = vadd.f32 %v196, %v6479
      %v6512 = vadd.f32 %v197, %v6480
      %v6513 = vadd.f32 %v198, %v6481
      %v6514 = vadd.f32 %v199, %v6482
      %v6515 = vadd.f32 %v200, %v6483
      %v6516 = vadd.f32 %v201, %v6484
      %v6517 = vadd.f32 %v202, %v6485
      %6518 = vst.msk [vmem:[%s170] sm:$0xff] %vm521, %v6486
      %6519 = vst.msk [vmem:[%s170 + $0x8] sm:$0xff] %vm521, %v6487
      %6520 = vst.msk [vmem:[%s170 + $0x10] sm:$0xff] %vm521, %v6488
      %6521 = vst.msk [vmem:[%s170 + $0x18] sm:$0xff] %vm521, %v6489
      %6522 = vst.msk [vmem:[%s170 + $0x20] sm:$0xff] %vm521, %v6490
      %6523 = vst.msk [vmem:[%s170 + $0x28] sm:$0xff] %vm521, %v6491
      %6524 = vst.msk [vmem:[%s170 + $0x30] sm:$0xff] %vm521, %v6492
      %6525 = vst.msk [vmem:[%s170 + $0x38] sm:$0xff] %vm521, %v6493
      %6526 = vst.msk [vmem:[%s170 + $0x40] sm:$0xff] %vm521, %v6494
      %6527 = vst.msk [vmem:[%s170 + $0x48] sm:$0xff] %vm521, %v6495
      %6528 = vst.msk [vmem:[%s170 + $0x50] sm:$0xff] %vm521, %v6496
      %6529 = vst.msk [vmem:[%s170 + $0x58] sm:$0xff] %vm521, %v6497
      %6530 = vst.msk [vmem:[%s170 + $0x60] sm:$0xff] %vm521, %v6498
      %6531 = vst.msk [vmem:[%s170 + $0x68] sm:$0xff] %vm521, %v6499
      %6532 = vst.msk [vmem:[%s170 + $0x70] sm:$0xff] %vm521, %v6500
      %6533 = vst.msk [vmem:[%s170 + $0x78] sm:$0xff] %vm521, %v6501
      %6534 = vst.msk [vmem:[%s170 + $0x80] sm:$0xff] %vm521, %v6502
      %6535 = vst.msk [vmem:[%s170 + $0x88] sm:$0xff] %vm521, %v6503
      %6536 = vst.msk [vmem:[%s170 + $0x90] sm:$0xff] %vm521, %v6504
      %6537 = vst.msk [vmem:[%s170 + $0x98] sm:$0xff] %vm521, %v6505
      %6538 = vst.msk [vmem:[%s170 + $0xa0] sm:$0xff] %vm521, %v6506
      %6539 = vst.msk [vmem:[%s170 + $0xa8] sm:$0xff] %vm521, %v6507
      %6540 = vst.msk [vmem:[%s170 + $0xb0] sm:$0xff] %vm521, %v6508
      %6541 = vst.msk [vmem:[%s170 + $0xb8] sm:$0xff] %vm521, %v6509
      %6542 = vst.msk [vmem:[%s170 + $0xc0] sm:$0xff] %vm521, %v6510
      %6543 = vst.msk [vmem:[%s170 + $0xc8] sm:$0xff] %vm521, %v6511
      %6544 = vst.msk [vmem:[%s170 + $0xd0] sm:$0xff] %vm521, %v6512
      %6545 = vst.msk [vmem:[%s170 + $0xd8] sm:$0xff] %vm521, %v6513
      %6546 = vst.msk [vmem:[%s170 + $0xe0] sm:$0xff] %vm521, %v6514
      %6547 = vst.msk [vmem:[%s170 + $0xe8] sm:$0xff] %vm521, %v6515
      %6548 = vst.msk [vmem:[%s170 + $0xf0] sm:$0xff] %vm521, %v6516
      %6549 = vst.msk [vmem:[%s170 + $0xf8] sm:$0xff] %vm521, %v6517
      %p6550 = scmp.lt.s32.totalorder %s14, 1
      %s6551 = scalar_select %p6550, %s14, 1
      %s6552 = smul.addr %s6551, 32
      %s6553 = smul.addr %s6552, 8
      %s6554 = scalar_lea.vmem %s3, %s6553
      // Predicated region
      $region33: #{tpu_custom_call.1} parent=31 // pred_check
        %p6555 = pneg %p100
      $region34: #{tpu_custom_call.1} parent=31 // pred_check_branch
        %6557 = sbr.rel (%p6555) target = $region36
      $region35: #{tpu_custom_call.1} parent=31 // pred_region
        _
      $region36: #{tpu_custom_call.1} parent=31 // pred_fallthru
        _
    $region32: #{tpu_custom_call.1} parent=5 // pred_fallthru
      _
    %p6558 = scmp.le.s32.totalorder 2, %s9
    // Predicated region
    $region37: #{tpu_custom_call.1} parent=5 // pred_check
      %p6559 = pneg %p6558
    $region38: #{tpu_custom_call.1} parent=5 // pred_check_branch
      %6561 = sbr.rel (%p6559) target = $region40
    $region39: #{tpu_custom_call.1} parent=5 // pred_region
      %s6562 = ssub.s32 %s9, 2
      // Predicated region
      $region41: #{tpu_custom_call.1} parent=39 // pred_check
        %p6563 = pneg %p106
      $region42: #{tpu_custom_call.1} parent=39 // pred_check_branch
        %6565 = sbr.rel (%p6563) target = $region44
      $region43: #{tpu_custom_call.1} parent=39 // pred_region
        %p6566 = scmp.lt.s32.totalorder %s15, 1
        %s6567 = scalar_select %p6566, %s15, 1
        %s6568 = smul.addr %s6567, 32
        %s6569 = smul.addr %s6568, 8
        %s6570 = scalar_lea.vmem %s3, %s6569
      $region44: #{tpu_custom_call.1} parent=39 // pred_fallthru
        _
    $region40: #{tpu_custom_call.1} parent=5 // pred_fallthru
      _
  $region6: #{tpu_custom_call.1} parent=0 // loop_footer
    %s13 = sadd.s32 1, %s9
  $region7: #{tpu_custom_call.1} parent=0 // loop_footer_branch
    %8 = sbr.rel target = $region3
  $region8: #{tpu_custom_call.1} parent=0 // loop_exit
    _

</llo_original>
